<compile_context>
chip_gen: v7x
topology: tpu7x:2x2x1
jax: 0.10.0
libtpu: 0.0.40
codegen_flags: <defaults>
</compile_context>

<pallas_src>
import math

import jax
import jax.numpy as jnp
from jax.experimental import pallas as pl

# ---- small, module-consistent config ----------------------------------------
D_MODEL = 32          # configs['d_model']
NHEAD = 4             # configs['nhead']
DFF = 64              # configs['dim_feedforward']
NUM_LAYERS = 2        # configs['num_markov_layers']
N_TYPES = 8
BATCH = 2
SEQ = 8
HEAD_DIM = D_MODEL // NHEAD
LN_EPS = 1e-5         # PyTorch LayerNorm default


def _layer_norm(x, gamma, beta):
    mean = jnp.mean(x, axis=-1, keepdims=True)
    var = jnp.mean((x - mean) ** 2, axis=-1, keepdims=True)
    return (x - mean) * jax.lax.rsqrt(var + LN_EPS) * gamma + beta


# ---- the single fused kernel -------------------------------------------------
def fused_forward_kernel(x_ref, mask_ref,
                         wq_ref, bq_ref, wk_ref, bk_ref, wv_ref, bv_ref,
                         wo_ref, bo_ref,
                         ln1g_ref, ln1b_ref,
                         w1_ref, b1_ref, w2_ref, b2_ref,
                         ln2g_ref, ln2b_ref,
                         lnfg_ref, lnfb_ref,
                         wf1_ref, bf1_ref, wf2_ref, bf2_ref,
                         out_ref):
    B, S, D = x_ref.shape
    H, HD = NHEAD, HEAD_DIM
    N = B * H                                   # flat attention batch axis
    scale = 1.0 / math.sqrt(HD)

    def tile_b(a):
        # (H, ...) -> (B*H, ...), batch-major / head-minor (leading-dim only).
        return jnp.broadcast_to(a[None], (B,) + a.shape).reshape(
            (B * a.shape[0],) + a.shape[1:])

    # additive key-padding mask tiled to the (B*H) axis: (B*H, 1, S)
    mask = mask_ref[...]                                        # (B, 1, S)
    mask_bh = jnp.broadcast_to(mask[:, None], (B, H, 1, S)).reshape(N, 1, S)

    # flattened activations for all non-attention matmuls
    x = x_ref[...].astype(jnp.float32).reshape(B * S, D)        # (B*S, D)

    for l in range(NUM_LAYERS):                 # static unroll; weights read once/layer
        # ---- multi-head self-attention (head-batched dot_generals) ----------
        wq = tile_b(wq_ref[l]); bq = tile_b(bq_ref[l])          # (B*H, D, HD), (B*H, 1, HD)
        wk = tile_b(wk_ref[l]); bk = tile_b(bk_ref[l])
        wv = tile_b(wv_ref[l]); bv = tile_b(bv_ref[l])
        wo = tile_b(wo_ref[l])                                  # (B*H, HD, D)

        xh = jnp.broadcast_to(x.reshape(B, S, D)[:, None],
                              (B, H, S, D)).reshape(N, S, D)    # (B*H, S, D)

        q = jnp.einsum('nsd,ndk->nsk', xh, wq, preferred_element_type=jnp.float32) + bq
        k = jnp.einsum('nsd,ndk->nsk', xh, wk, preferred_element_type=jnp.float32) + bk
        v = jnp.einsum('nsd,ndk->nsk', xh, wv, preferred_element_type=jnp.float32) + bv

        scores = jnp.einsum('nqd,nkd->nqk', q, k,
                            preferred_element_type=jnp.float32) * scale
        scores = scores + mask_bh                               # broadcast over query rows
        scores = scores - jnp.max(scores, axis=-1, keepdims=True)
        p = jnp.exp(scores)
        p = p * pl.reciprocal(jnp.sum(p, axis=-1, keepdims=True), approx=True)

        ctx = jnp.einsum('nqk,nkd->nqd', p, v,
                         preferred_element_type=jnp.float32)    # (B*H, S, HD)
        proj = jnp.einsum('nsd,nde->nse', ctx, wo,
                          preferred_element_type=jnp.float32)   # (B*H, S, D)
        # sum over heads (out-proj already applied per head), back to (B*S, D)
        attn = jnp.sum(proj.reshape(B, H, S, D), axis=1).reshape(B * S, D) + bo_ref[l]

        # residual + LayerNorm 1 (post-norm; dropout is identity in eval mode)
        x = _layer_norm(x + attn, ln1g_ref[l], ln1b_ref[l])

        # ---- feed-forward (ReLU is the PyTorch default activation) ----------
        h1 = jnp.dot(x, w1_ref[l], preferred_element_type=jnp.float32) + b1_ref[l]
        h1 = jnp.maximum(h1, 0.0)
        ff = jnp.dot(h1, w2_ref[l], preferred_element_type=jnp.float32) + b2_ref[l]

        # residual + LayerNorm 2
        x = _layer_norm(x + ff, ln2g_ref[l], ln2b_ref[l])

    # ---- final encoder LayerNorm + Linear -> GELU(erf) -> Linear -------------
    x = _layer_norm(x, lnfg_ref[...], lnfb_ref[...])
    hh = jnp.dot(x, wf1_ref[...], preferred_element_type=jnp.float32) + bf1_ref[...]
    hh = 0.5 * hh * (1.0 + jax.lax.erf(hh * (1.0 / math.sqrt(2.0))))  # exact GELU
    logits = jnp.dot(hh, wf2_ref[...], preferred_element_type=jnp.float32) + bf2_ref[...]

    out_ref[...] = logits.astype(out_ref.dtype)                 # (B*S, n_types) slab


# ---- wrapper ------------------------------------------------------------------
def run_entity_recognizer(x, key_padding_mask, params):
    B, S, _ = x.shape
    # True => position ignored by attention (additive -1e9 over keys).
    mask_add = jnp.where(key_padding_mask, -1e9, 0.0).astype(jnp.float32)[:, None, :]
    flat_logits = pl.pallas_call(
        fused_forward_kernel,
        out_shape=jax.ShapeDtypeStruct((B * S, N_TYPES), x.dtype),
    )(x, mask_add, *params)
    return flat_logits.reshape(B, S, N_TYPES)


# ---- deterministic parameter init (synthetic, not a checkpoint) ---------------
def init_params(key):
    def w(k, shape, scale=0.02):
        return scale * jax.random.normal(k, shape, dtype=jnp.float32)

    names = ['wq', 'bq', 'wk', 'bk', 'wv', 'bv', 'wo', 'bo',
             'ln1g', 'ln1b', 'w1', 'b1', 'w2', 'b2', 'ln2g', 'ln2b']
    per_layer = {n: [] for n in names}

    for _ in range(NUM_LAYERS):
        key, k1, k2, k3, k4 = jax.random.split(key, 5)
        wqkv = w(k1, (D_MODEL, 3 * D_MODEL))          # in_proj_weight.T  (in, out)
        bqkv = jnp.zeros((3 * D_MODEL,), jnp.float32)

        def split_heads(m):                            # (D, D) -> (H, D, HD)
            return m.reshape(D_MODEL, NHEAD, HEAD_DIM).transpose(1, 0, 2)

        per_layer['wq'].append(split_heads(wqkv[:, :D_MODEL]))
        per_layer['wk'].append(split_heads(wqkv[:, D_MODEL:2 * D_MODEL]))
        per_layer['wv'].append(split_heads(wqkv[:, 2 * D_MODEL:]))
        per_layer['bq'].append(bqkv[:D_MODEL].reshape(NHEAD, 1, HEAD_DIM))
        per_layer['bk'].append(bqkv[D_MODEL:2 * D_MODEL].reshape(NHEAD, 1, HEAD_DIM))
        per_layer['bv'].append(bqkv[2 * D_MODEL:].reshape(NHEAD, 1, HEAD_DIM))
        # out_proj.weight.T (D, D) split into per-head row blocks -> (H, HD, D)
        per_layer['wo'].append(w(k2, (D_MODEL, D_MODEL)).reshape(NHEAD, HEAD_DIM, D_MODEL))
        per_layer['bo'].append(jnp.zeros((1, D_MODEL), jnp.float32))
        per_layer['ln1g'].append(jnp.ones((1, D_MODEL), jnp.float32))
        per_layer['ln1b'].append(jnp.zeros((1, D_MODEL), jnp.float32))
        per_layer['w1'].append(w(k3, (D_MODEL, DFF)))             # linear1.T
        per_layer['b1'].append(jnp.zeros((1, DFF), jnp.float32))
        per_layer['w2'].append(w(k4, (DFF, D_MODEL)))             # linear2.T
        per_layer['b2'].append(jnp.zeros((1, D_MODEL), jnp.float32))
        per_layer['ln2g'].append(jnp.ones((1, D_MODEL), jnp.float32))
        per_layer['ln2b'].append(jnp.zeros((1, D_MODEL), jnp.float32))

    stacked = {n: jnp.stack(v) for n, v in per_layer.items()}     # leading layer axis

    key, k5, k6 = jax.random.split(key, 3)
    params = (
        stacked['wq'], stacked['bq'], stacked['wk'], stacked['bk'],
        stacked['wv'], stacked['bv'], stacked['wo'], stacked['bo'],
        stacked['ln1g'], stacked['ln1b'],
        stacked['w1'], stacked['b1'], stacked['w2'], stacked['b2'],
        stacked['ln2g'], stacked['ln2b'],
        jnp.ones((1, D_MODEL), jnp.float32),      # final encoder LN gamma
        jnp.zeros((1, D_MODEL), jnp.float32),     # final encoder LN beta
        w(k5, (D_MODEL, DFF)),                    # ff[0] Linear(d_model, dff).T
        jnp.zeros((1, DFF), jnp.float32),
        w(k6, (DFF, N_TYPES)),                    # ff[2] Linear(dff, n_types).T
        jnp.zeros((1, N_TYPES), jnp.float32),
    )
    return params


if __name__ == "__main__":
    key = jax.random.PRNGKey(0)
    key, kx = jax.random.split(key)
    x = jax.random.normal(kx, (BATCH, SEQ, D_MODEL), dtype=jnp.float32)
    # batch 0: no padding; batch 1: last two positions padded
    key_padding_mask = jnp.array(
        [[False] * SEQ,
         [False] * (SEQ - 2) + [True] * 2], dtype=jnp.bool_)

    params = init_params(key)
    logits = run_entity_recognizer(x, key_padding_mask, params)
    logits = jax.block_until_ready(logits)
    assert logits.shape == (BATCH, SEQ, N_TYPES)
    print("KERNEL_OK")
</pallas_src>

<mosaic_0001>
module attributes {stable_mosaic.version = 11 : i64} {
  func.func @fused_forward_kernel(%arg0: memref<2x8x32xf32, #tpu.memory_space<vmem>>, %arg1: memref<2x1x8xf32, #tpu.memory_space<vmem>>, %arg2: memref<2x4x32x8xf32, #tpu.memory_space<vmem>>, %arg3: memref<2x4x1x8xf32, #tpu.memory_space<vmem>>, %arg4: memref<2x4x32x8xf32, #tpu.memory_space<vmem>>, %arg5: memref<2x4x1x8xf32, #tpu.memory_space<vmem>>, %arg6: memref<2x4x32x8xf32, #tpu.memory_space<vmem>>, %arg7: memref<2x4x1x8xf32, #tpu.memory_space<vmem>>, %arg8: memref<2x4x8x32xf32, #tpu.memory_space<vmem>>, %arg9: memref<2x1x32xf32, #tpu.memory_space<vmem>>, %arg10: memref<2x1x32xf32, #tpu.memory_space<vmem>>, %arg11: memref<2x1x32xf32, #tpu.memory_space<vmem>>, %arg12: memref<2x32x64xf32, #tpu.memory_space<vmem>>, %arg13: memref<2x1x64xf32, #tpu.memory_space<vmem>>, %arg14: memref<2x64x32xf32, #tpu.memory_space<vmem>>, %arg15: memref<2x1x32xf32, #tpu.memory_space<vmem>>, %arg16: memref<2x1x32xf32, #tpu.memory_space<vmem>>, %arg17: memref<2x1x32xf32, #tpu.memory_space<vmem>>, %arg18: memref<1x32xf32, #tpu.memory_space<vmem>>, %arg19: memref<1x32xf32, #tpu.memory_space<vmem>>, %arg20: memref<32x64xf32, #tpu.memory_space<vmem>>, %arg21: memref<1x64xf32, #tpu.memory_space<vmem>>, %arg22: memref<64x8xf32, #tpu.memory_space<vmem>>, %arg23: memref<1x8xf32, #tpu.memory_space<vmem>>, %arg24: memref<16x8xf32, #tpu.memory_space<vmem>>) attributes {dimension_semantics = [], scalar_prefetch = 0 : i64, scratch_operands = 0 : i64, tpu.core_type = #tpu.core_type<tc>} {
    %c0 = arith.constant 0 : index
    %c0_0 = arith.constant 0 : index
    %c0_1 = arith.constant 0 : index
    %0 = vector.load %arg1[%c0, %c0_0, %c0_1] : memref<2x1x8xf32, #tpu.memory_space<vmem>>, vector<2x1x8xf32>
    %1 = vector.shape_cast %0 : vector<2x1x8xf32> to vector<2x1x1x8xf32>
    %2 = vector.shape_cast %1 : vector<2x1x1x8xf32> to vector<2x1x1x8xf32>
    %3 = vector.broadcast %2 : vector<2x1x1x8xf32> to vector<2x4x1x8xf32>
    %4 = vector.shape_cast %3 : vector<2x4x1x8xf32> to vector<8x1x8xf32>
    %c0_2 = arith.constant 0 : index
    %c0_3 = arith.constant 0 : index
    %c0_4 = arith.constant 0 : index
    %5 = vector.load %arg0[%c0_2, %c0_3, %c0_4] : memref<2x8x32xf32, #tpu.memory_space<vmem>>, vector<2x8x32xf32>
    %6 = vector.shape_cast %5 : vector<2x8x32xf32> to vector<16x32xf32>
    %c0_5 = arith.constant 0 : index
    %c0_6 = arith.constant 0 : index
    %c0_7 = arith.constant 0 : index
    %c0_8 = arith.constant 0 : index
    %7 = vector.load %arg2[%c0_5, %c0_6, %c0_7, %c0_8] : memref<2x4x32x8xf32, #tpu.memory_space<vmem>>, vector<1x4x32x8xf32>
    %8 = vector.shape_cast %7 : vector<1x4x32x8xf32> to vector<4x32x8xf32>
    %9 = vector.shape_cast %8 : vector<4x32x8xf32> to vector<1x4x32x8xf32>
    %10 = vector.shape_cast %9 : vector<1x4x32x8xf32> to vector<1x4x32x8xf32>
    %11 = vector.broadcast %10 : vector<1x4x32x8xf32> to vector<2x4x32x8xf32>
    %12 = vector.shape_cast %11 : vector<2x4x32x8xf32> to vector<8x32x8xf32>
    %c0_9 = arith.constant 0 : index
    %c0_10 = arith.constant 0 : index
    %c0_11 = arith.constant 0 : index
    %c0_12 = arith.constant 0 : index
    %13 = vector.load %arg3[%c0_9, %c0_10, %c0_11, %c0_12] : memref<2x4x1x8xf32, #tpu.memory_space<vmem>>, vector<1x4x1x8xf32>
    %14 = vector.shape_cast %13 : vector<1x4x1x8xf32> to vector<4x1x8xf32>
    %15 = vector.shape_cast %14 : vector<4x1x8xf32> to vector<1x4x1x8xf32>
    %16 = vector.shape_cast %15 : vector<1x4x1x8xf32> to vector<1x4x1x8xf32>
    %17 = vector.broadcast %16 : vector<1x4x1x8xf32> to vector<2x4x1x8xf32>
    %18 = vector.shape_cast %17 : vector<2x4x1x8xf32> to vector<8x1x8xf32>
    %c0_13 = arith.constant 0 : index
    %c0_14 = arith.constant 0 : index
    %c0_15 = arith.constant 0 : index
    %c0_16 = arith.constant 0 : index
    %19 = vector.load %arg4[%c0_13, %c0_14, %c0_15, %c0_16] : memref<2x4x32x8xf32, #tpu.memory_space<vmem>>, vector<1x4x32x8xf32>
    %20 = vector.shape_cast %19 : vector<1x4x32x8xf32> to vector<4x32x8xf32>
    %21 = vector.shape_cast %20 : vector<4x32x8xf32> to vector<1x4x32x8xf32>
    %22 = vector.shape_cast %21 : vector<1x4x32x8xf32> to vector<1x4x32x8xf32>
    %23 = vector.broadcast %22 : vector<1x4x32x8xf32> to vector<2x4x32x8xf32>
    %24 = vector.shape_cast %23 : vector<2x4x32x8xf32> to vector<8x32x8xf32>
    %c0_17 = arith.constant 0 : index
    %c0_18 = arith.constant 0 : index
    %c0_19 = arith.constant 0 : index
    %c0_20 = arith.constant 0 : index
    %25 = vector.load %arg5[%c0_17, %c0_18, %c0_19, %c0_20] : memref<2x4x1x8xf32, #tpu.memory_space<vmem>>, vector<1x4x1x8xf32>
    %26 = vector.shape_cast %25 : vector<1x4x1x8xf32> to vector<4x1x8xf32>
    %27 = vector.shape_cast %26 : vector<4x1x8xf32> to vector<1x4x1x8xf32>
    %28 = vector.shape_cast %27 : vector<1x4x1x8xf32> to vector<1x4x1x8xf32>
    %29 = vector.broadcast %28 : vector<1x4x1x8xf32> to vector<2x4x1x8xf32>
    %30 = vector.shape_cast %29 : vector<2x4x1x8xf32> to vector<8x1x8xf32>
    %c0_21 = arith.constant 0 : index
    %c0_22 = arith.constant 0 : index
    %c0_23 = arith.constant 0 : index
    %c0_24 = arith.constant 0 : index
    %31 = vector.load %arg6[%c0_21, %c0_22, %c0_23, %c0_24] : memref<2x4x32x8xf32, #tpu.memory_space<vmem>>, vector<1x4x32x8xf32>
    %32 = vector.shape_cast %31 : vector<1x4x32x8xf32> to vector<4x32x8xf32>
    %33 = vector.shape_cast %32 : vector<4x32x8xf32> to vector<1x4x32x8xf32>
    %34 = vector.shape_cast %33 : vector<1x4x32x8xf32> to vector<1x4x32x8xf32>
    %35 = vector.broadcast %34 : vector<1x4x32x8xf32> to vector<2x4x32x8xf32>
    %36 = vector.shape_cast %35 : vector<2x4x32x8xf32> to vector<8x32x8xf32>
    %c0_25 = arith.constant 0 : index
    %c0_26 = arith.constant 0 : index
    %c0_27 = arith.constant 0 : index
    %c0_28 = arith.constant 0 : index
    %37 = vector.load %arg7[%c0_25, %c0_26, %c0_27, %c0_28] : memref<2x4x1x8xf32, #tpu.memory_space<vmem>>, vector<1x4x1x8xf32>
    %38 = vector.shape_cast %37 : vector<1x4x1x8xf32> to vector<4x1x8xf32>
    %39 = vector.shape_cast %38 : vector<4x1x8xf32> to vector<1x4x1x8xf32>
    %40 = vector.shape_cast %39 : vector<1x4x1x8xf32> to vector<1x4x1x8xf32>
    %41 = vector.broadcast %40 : vector<1x4x1x8xf32> to vector<2x4x1x8xf32>
    %42 = vector.shape_cast %41 : vector<2x4x1x8xf32> to vector<8x1x8xf32>
    %c0_29 = arith.constant 0 : index
    %c0_30 = arith.constant 0 : index
    %c0_31 = arith.constant 0 : index
    %c0_32 = arith.constant 0 : index
    %43 = vector.load %arg8[%c0_29, %c0_30, %c0_31, %c0_32] : memref<2x4x8x32xf32, #tpu.memory_space<vmem>>, vector<1x4x8x32xf32>
    %44 = vector.shape_cast %43 : vector<1x4x8x32xf32> to vector<4x8x32xf32>
    %45 = vector.shape_cast %44 : vector<4x8x32xf32> to vector<1x4x8x32xf32>
    %46 = vector.shape_cast %45 : vector<1x4x8x32xf32> to vector<1x4x8x32xf32>
    %47 = vector.broadcast %46 : vector<1x4x8x32xf32> to vector<2x4x8x32xf32>
    %48 = vector.shape_cast %47 : vector<2x4x8x32xf32> to vector<8x8x32xf32>
    %49 = vector.shape_cast %6 : vector<16x32xf32> to vector<2x8x32xf32>
    %50 = vector.shape_cast %49 : vector<2x8x32xf32> to vector<2x1x8x32xf32>
    %51 = vector.shape_cast %50 : vector<2x1x8x32xf32> to vector<2x1x8x32xf32>
    %52 = vector.broadcast %51 : vector<2x1x8x32xf32> to vector<2x4x8x32xf32>
    %53 = vector.shape_cast %52 : vector<2x4x8x32xf32> to vector<8x8x32xf32>
    "tpu.trace_start"() <{level = 10 : i32, message = "nsd,ndk->nsk"}> : () -> ()
    %cst = arith.constant dense<0.000000e+00> : vector<8x8x8xf32>
    %54 = tpu.matmul %53, %12, %cst {dimension_numbers = #tpu.dot_dimension_numbers<[2], [1], [1], [2], [0, 0, 0, 1, 1, 2], [0], [0]>} : vector<8x8x32xf32>, vector<8x32x8xf32>, vector<8x8x8xf32> -> vector<8x8x8xf32>
    "tpu.trace_stop"() : () -> ()
    %55 = vector.broadcast %18 : vector<8x1x8xf32> to vector<8x8x8xf32>
    %56 = arith.addf %54, %55 : vector<8x8x8xf32>
    "tpu.trace_start"() <{level = 10 : i32, message = "nsd,ndk->nsk"}> : () -> ()
    %cst_33 = arith.constant dense<0.000000e+00> : vector<8x8x8xf32>
    %57 = tpu.matmul %53, %24, %cst_33 {dimension_numbers = #tpu.dot_dimension_numbers<[2], [1], [1], [2], [0, 0, 0, 1, 1, 2], [0], [0]>} : vector<8x8x32xf32>, vector<8x32x8xf32>, vector<8x8x8xf32> -> vector<8x8x8xf32>
    "tpu.trace_stop"() : () -> ()
    %58 = vector.broadcast %30 : vector<8x1x8xf32> to vector<8x8x8xf32>
    %59 = arith.addf %57, %58 : vector<8x8x8xf32>
    "tpu.trace_start"() <{level = 10 : i32, message = "nsd,ndk->nsk"}> : () -> ()
    %cst_34 = arith.constant dense<0.000000e+00> : vector<8x8x8xf32>
    %60 = tpu.matmul %53, %36, %cst_34 {dimension_numbers = #tpu.dot_dimension_numbers<[2], [1], [1], [2], [0, 0, 0, 1, 1, 2], [0], [0]>} : vector<8x8x32xf32>, vector<8x32x8xf32>, vector<8x8x8xf32> -> vector<8x8x8xf32>
    "tpu.trace_stop"() : () -> ()
    %61 = vector.broadcast %42 : vector<8x1x8xf32> to vector<8x8x8xf32>
    %62 = arith.addf %60, %61 : vector<8x8x8xf32>
    "tpu.trace_start"() <{level = 10 : i32, message = "nqd,nkd->nqk"}> : () -> ()
    %cst_35 = arith.constant dense<0.000000e+00> : vector<8x8x8xf32>
    %63 = tpu.matmul %56, %59, %cst_35 {dimension_numbers = #tpu.dot_dimension_numbers<[2], [2], [1], [1], [0, 0, 0, 1, 1, 1], [0], [0]>} : vector<8x8x8xf32>, vector<8x8x8xf32>, vector<8x8x8xf32> -> vector<8x8x8xf32>
    "tpu.trace_stop"() : () -> ()
    %cst_36 = arith.constant 0.353553385 : f32
    %64 = vector.broadcast %cst_36 : f32 to vector<8x8x8xf32>
    %65 = arith.mulf %63, %64 : vector<8x8x8xf32>
    %66 = vector.broadcast %4 : vector<8x1x8xf32> to vector<8x8x8xf32>
    %67 = arith.addf %65, %66 : vector<8x8x8xf32>
    %cst_37 = arith.constant dense<0xFF800000> : vector<8x8xf32>
    %68 = vector.multi_reduction <maximumf>, %67, %cst_37 [2] : vector<8x8x8xf32> to vector<8x8xf32>
    %69 = vector.shape_cast %68 : vector<8x8xf32> to vector<8x8x1xf32>
    %70 = vector.broadcast %69 : vector<8x8x1xf32> to vector<8x8x8xf32>
    %71 = arith.subf %67, %70 : vector<8x8x8xf32>
    %72 = math.exp %71 : vector<8x8x8xf32>
    %cst_38 = arith.constant dense<0.000000e+00> : vector<8x8xf32>
    %73 = vector.multi_reduction <add>, %72, %cst_38 [2] : vector<8x8x8xf32> to vector<8x8xf32>
    %74 = vector.shape_cast %73 : vector<8x8xf32> to vector<8x8x1xf32>
    %75 = tpu.reciprocal %74 {approx = true} : vector<8x8x1xf32> -> vector<8x8x1xf32>
    %76 = vector.broadcast %75 : vector<8x8x1xf32> to vector<8x8x8xf32>
    %77 = arith.mulf %72, %76 : vector<8x8x8xf32>
    "tpu.trace_start"() <{level = 10 : i32, message = "nqk,nkd->nqd"}> : () -> ()
    %cst_39 = arith.constant dense<0.000000e+00> : vector<8x8x8xf32>
    %78 = tpu.matmul %77, %62, %cst_39 {dimension_numbers = #tpu.dot_dimension_numbers<[2], [1], [1], [2], [0, 0, 0, 1, 1, 2], [0], [0]>} : vector<8x8x8xf32>, vector<8x8x8xf32>, vector<8x8x8xf32> -> vector<8x8x8xf32>
    "tpu.trace_stop"() : () -> ()
    "tpu.trace_start"() <{level = 10 : i32, message = "nsd,nde->nse"}> : () -> ()
    %cst_40 = arith.constant dense<0.000000e+00> : vector<8x8x32xf32>
    %79 = tpu.matmul %78, %48, %cst_40 {dimension_numbers = #tpu.dot_dimension_numbers<[2], [1], [1], [2], [0, 0, 0, 1, 1, 2], [0], [0]>} : vector<8x8x8xf32>, vector<8x8x32xf32>, vector<8x8x32xf32> -> vector<8x8x32xf32>
    "tpu.trace_stop"() : () -> ()
    %80 = vector.shape_cast %79 : vector<8x8x32xf32> to vector<2x4x8x32xf32>
    %cst_41 = arith.constant dense<0.000000e+00> : vector<2x8x32xf32>
    %81 = vector.multi_reduction <add>, %80, %cst_41 [1] : vector<2x4x8x32xf32> to vector<2x8x32xf32>
    %82 = vector.shape_cast %81 : vector<2x8x32xf32> to vector<16x32xf32>
    %c0_42 = arith.constant 0 : index
    %c0_43 = arith.constant 0 : index
    %c0_44 = arith.constant 0 : index
    %83 = vector.load %arg9[%c0_42, %c0_43, %c0_44] : memref<2x1x32xf32, #tpu.memory_space<vmem>>, vector<1x1x32xf32>
    %84 = vector.shape_cast %83 : vector<1x1x32xf32> to vector<1x32xf32>
    %85 = vector.broadcast %84 : vector<1x32xf32> to vector<16x32xf32>
    %86 = arith.addf %82, %85 : vector<16x32xf32>
    %87 = arith.addf %6, %86 : vector<16x32xf32>
    %c0_45 = arith.constant 0 : index
    %c0_46 = arith.constant 0 : index
    %c0_47 = arith.constant 0 : index
    %88 = vector.load %arg10[%c0_45, %c0_46, %c0_47] : memref<2x1x32xf32, #tpu.memory_space<vmem>>, vector<1x1x32xf32>
    %89 = vector.shape_cast %88 : vector<1x1x32xf32> to vector<1x32xf32>
    %c0_48 = arith.constant 0 : index
    %c0_49 = arith.constant 0 : index
    %c0_50 = arith.constant 0 : index
    %90 = vector.load %arg11[%c0_48, %c0_49, %c0_50] : memref<2x1x32xf32, #tpu.memory_space<vmem>>, vector<1x1x32xf32>
    %91 = vector.shape_cast %90 : vector<1x1x32xf32> to vector<1x32xf32>
    %cst_51 = arith.constant dense<0.000000e+00> : vector<16xf32>
    %92 = vector.multi_reduction <add>, %87, %cst_51 [1] : vector<16x32xf32> to vector<16xf32>
    %93 = vector.shape_cast %92 : vector<16xf32> to vector<16x1xf32>
    %cst_52 = arith.constant 3.200000e+01 : f32
    %94 = vector.broadcast %cst_52 : f32 to vector<16x1xf32>
    %95 = arith.divf %93, %94 : vector<16x1xf32>
    %96 = vector.broadcast %95 : vector<16x1xf32> to vector<16x32xf32>
    %97 = arith.subf %87, %96 : vector<16x32xf32>
    %98 = arith.mulf %97, %97 : vector<16x32xf32>
    %cst_53 = arith.constant dense<0.000000e+00> : vector<16xf32>
    %99 = vector.multi_reduction <add>, %98, %cst_53 [1] : vector<16x32xf32> to vector<16xf32>
    %100 = vector.shape_cast %99 : vector<16xf32> to vector<16x1xf32>
    %cst_54 = arith.constant 3.200000e+01 : f32
    %101 = vector.broadcast %cst_54 : f32 to vector<16x1xf32>
    %102 = arith.divf %100, %101 : vector<16x1xf32>
    %103 = vector.broadcast %95 : vector<16x1xf32> to vector<16x32xf32>
    %104 = arith.subf %87, %103 : vector<16x32xf32>
    %cst_55 = arith.constant 9.99999974E-6 : f32
    %105 = vector.broadcast %cst_55 : f32 to vector<16x1xf32>
    %106 = arith.addf %102, %105 : vector<16x1xf32>
    %107 = math.rsqrt %106 : vector<16x1xf32>
    %108 = vector.broadcast %107 : vector<16x1xf32> to vector<16x32xf32>
    %109 = arith.mulf %104, %108 : vector<16x32xf32>
    %110 = vector.broadcast %89 : vector<1x32xf32> to vector<16x32xf32>
    %111 = arith.mulf %109, %110 : vector<16x32xf32>
    %112 = vector.broadcast %91 : vector<1x32xf32> to vector<16x32xf32>
    %113 = arith.addf %111, %112 : vector<16x32xf32>
    %c0_56 = arith.constant 0 : index
    %c0_57 = arith.constant 0 : index
    %c0_58 = arith.constant 0 : index
    %114 = vector.load %arg12[%c0_56, %c0_57, %c0_58] : memref<2x32x64xf32, #tpu.memory_space<vmem>>, vector<1x32x64xf32>
    %115 = vector.shape_cast %114 : vector<1x32x64xf32> to vector<32x64xf32>
    %cst_59 = arith.constant dense<0.000000e+00> : vector<16x64xf32>
    %116 = tpu.matmul %113, %115, %cst_59 {dimension_numbers = #tpu.dot_dimension_numbers<[1], [0], [0], [1], [0, 0, 1, 1], [], []>} : vector<16x32xf32>, vector<32x64xf32>, vector<16x64xf32> -> vector<16x64xf32>
    %c0_60 = arith.constant 0 : index
    %c0_61 = arith.constant 0 : index
    %c0_62 = arith.constant 0 : index
    %117 = vector.load %arg13[%c0_60, %c0_61, %c0_62] : memref<2x1x64xf32, #tpu.memory_space<vmem>>, vector<1x1x64xf32>
    %118 = vector.shape_cast %117 : vector<1x1x64xf32> to vector<1x64xf32>
    %119 = vector.broadcast %118 : vector<1x64xf32> to vector<16x64xf32>
    %120 = arith.addf %116, %119 : vector<16x64xf32>
    %cst_63 = arith.constant 0.000000e+00 : f32
    %121 = vector.broadcast %cst_63 : f32 to vector<16x64xf32>
    %122 = arith.maximumf %120, %121 : vector<16x64xf32>
    %c0_64 = arith.constant 0 : index
    %c0_65 = arith.constant 0 : index
    %c0_66 = arith.constant 0 : index
    %123 = vector.load %arg14[%c0_64, %c0_65, %c0_66] : memref<2x64x32xf32, #tpu.memory_space<vmem>>, vector<1x64x32xf32>
    %124 = vector.shape_cast %123 : vector<1x64x32xf32> to vector<64x32xf32>
    %cst_67 = arith.constant dense<0.000000e+00> : vector<16x32xf32>
    %125 = tpu.matmul %122, %124, %cst_67 {dimension_numbers = #tpu.dot_dimension_numbers<[1], [0], [0], [1], [0, 0, 1, 1], [], []>} : vector<16x64xf32>, vector<64x32xf32>, vector<16x32xf32> -> vector<16x32xf32>
    %c0_68 = arith.constant 0 : index
    %c0_69 = arith.constant 0 : index
    %c0_70 = arith.constant 0 : index
    %126 = vector.load %arg15[%c0_68, %c0_69, %c0_70] : memref<2x1x32xf32, #tpu.memory_space<vmem>>, vector<1x1x32xf32>
    %127 = vector.shape_cast %126 : vector<1x1x32xf32> to vector<1x32xf32>
    %128 = vector.broadcast %127 : vector<1x32xf32> to vector<16x32xf32>
    %129 = arith.addf %125, %128 : vector<16x32xf32>
    %130 = arith.addf %113, %129 : vector<16x32xf32>
    %c0_71 = arith.constant 0 : index
    %c0_72 = arith.constant 0 : index
    %c0_73 = arith.constant 0 : index
    %131 = vector.load %arg16[%c0_71, %c0_72, %c0_73] : memref<2x1x32xf32, #tpu.memory_space<vmem>>, vector<1x1x32xf32>
    %132 = vector.shape_cast %131 : vector<1x1x32xf32> to vector<1x32xf32>
    %c0_74 = arith.constant 0 : index
    %c0_75 = arith.constant 0 : index
    %c0_76 = arith.constant 0 : index
    %133 = vector.load %arg17[%c0_74, %c0_75, %c0_76] : memref<2x1x32xf32, #tpu.memory_space<vmem>>, vector<1x1x32xf32>
    %134 = vector.shape_cast %133 : vector<1x1x32xf32> to vector<1x32xf32>
    %cst_77 = arith.constant dense<0.000000e+00> : vector<16xf32>
    %135 = vector.multi_reduction <add>, %130, %cst_77 [1] : vector<16x32xf32> to vector<16xf32>
    %136 = vector.shape_cast %135 : vector<16xf32> to vector<16x1xf32>
    %cst_78 = arith.constant 3.200000e+01 : f32
    %137 = vector.broadcast %cst_78 : f32 to vector<16x1xf32>
    %138 = arith.divf %136, %137 : vector<16x1xf32>
    %139 = vector.broadcast %138 : vector<16x1xf32> to vector<16x32xf32>
    %140 = arith.subf %130, %139 : vector<16x32xf32>
    %141 = arith.mulf %140, %140 : vector<16x32xf32>
    %cst_79 = arith.constant dense<0.000000e+00> : vector<16xf32>
    %142 = vector.multi_reduction <add>, %141, %cst_79 [1] : vector<16x32xf32> to vector<16xf32>
    %143 = vector.shape_cast %142 : vector<16xf32> to vector<16x1xf32>
    %cst_80 = arith.constant 3.200000e+01 : f32
    %144 = vector.broadcast %cst_80 : f32 to vector<16x1xf32>
    %145 = arith.divf %143, %144 : vector<16x1xf32>
    %146 = vector.broadcast %138 : vector<16x1xf32> to vector<16x32xf32>
    %147 = arith.subf %130, %146 : vector<16x32xf32>
    %cst_81 = arith.constant 9.99999974E-6 : f32
    %148 = vector.broadcast %cst_81 : f32 to vector<16x1xf32>
    %149 = arith.addf %145, %148 : vector<16x1xf32>
    %150 = math.rsqrt %149 : vector<16x1xf32>
    %151 = vector.broadcast %150 : vector<16x1xf32> to vector<16x32xf32>
    %152 = arith.mulf %147, %151 : vector<16x32xf32>
    %153 = vector.broadcast %132 : vector<1x32xf32> to vector<16x32xf32>
    %154 = arith.mulf %152, %153 : vector<16x32xf32>
    %155 = vector.broadcast %134 : vector<1x32xf32> to vector<16x32xf32>
    %156 = arith.addf %154, %155 : vector<16x32xf32>
    %c1 = arith.constant 1 : index
    %c0_82 = arith.constant 0 : index
    %c0_83 = arith.constant 0 : index
    %c0_84 = arith.constant 0 : index
    %157 = vector.load %arg2[%c1, %c0_82, %c0_83, %c0_84] : memref<2x4x32x8xf32, #tpu.memory_space<vmem>>, vector<1x4x32x8xf32>
    %158 = vector.shape_cast %157 : vector<1x4x32x8xf32> to vector<4x32x8xf32>
    %159 = vector.shape_cast %158 : vector<4x32x8xf32> to vector<1x4x32x8xf32>
    %160 = vector.shape_cast %159 : vector<1x4x32x8xf32> to vector<1x4x32x8xf32>
    %161 = vector.broadcast %160 : vector<1x4x32x8xf32> to vector<2x4x32x8xf32>
    %162 = vector.shape_cast %161 : vector<2x4x32x8xf32> to vector<8x32x8xf32>
    %c1_85 = arith.constant 1 : index
    %c0_86 = arith.constant 0 : index
    %c0_87 = arith.constant 0 : index
    %c0_88 = arith.constant 0 : index
    %163 = vector.load %arg3[%c1_85, %c0_86, %c0_87, %c0_88] : memref<2x4x1x8xf32, #tpu.memory_space<vmem>>, vector<1x4x1x8xf32>
    %164 = vector.shape_cast %163 : vector<1x4x1x8xf32> to vector<4x1x8xf32>
    %165 = vector.shape_cast %164 : vector<4x1x8xf32> to vector<1x4x1x8xf32>
    %166 = vector.shape_cast %165 : vector<1x4x1x8xf32> to vector<1x4x1x8xf32>
    %167 = vector.broadcast %166 : vector<1x4x1x8xf32> to vector<2x4x1x8xf32>
    %168 = vector.shape_cast %167 : vector<2x4x1x8xf32> to vector<8x1x8xf32>
    %c1_89 = arith.constant 1 : index
    %c0_90 = arith.constant 0 : index
    %c0_91 = arith.constant 0 : index
    %c0_92 = arith.constant 0 : index
    %169 = vector.load %arg4[%c1_89, %c0_90, %c0_91, %c0_92] : memref<2x4x32x8xf32, #tpu.memory_space<vmem>>, vector<1x4x32x8xf32>
    %170 = vector.shape_cast %169 : vector<1x4x32x8xf32> to vector<4x32x8xf32>
    %171 = vector.shape_cast %170 : vector<4x32x8xf32> to vector<1x4x32x8xf32>
    %172 = vector.shape_cast %171 : vector<1x4x32x8xf32> to vector<1x4x32x8xf32>
    %173 = vector.broadcast %172 : vector<1x4x32x8xf32> to vector<2x4x32x8xf32>
    %174 = vector.shape_cast %173 : vector<2x4x32x8xf32> to vector<8x32x8xf32>
    %c1_93 = arith.constant 1 : index
    %c0_94 = arith.constant 0 : index
    %c0_95 = arith.constant 0 : index
    %c0_96 = arith.constant 0 : index
    %175 = vector.load %arg5[%c1_93, %c0_94, %c0_95, %c0_96] : memref<2x4x1x8xf32, #tpu.memory_space<vmem>>, vector<1x4x1x8xf32>
    %176 = vector.shape_cast %175 : vector<1x4x1x8xf32> to vector<4x1x8xf32>
    %177 = vector.shape_cast %176 : vector<4x1x8xf32> to vector<1x4x1x8xf32>
    %178 = vector.shape_cast %177 : vector<1x4x1x8xf32> to vector<1x4x1x8xf32>
    %179 = vector.broadcast %178 : vector<1x4x1x8xf32> to vector<2x4x1x8xf32>
    %180 = vector.shape_cast %179 : vector<2x4x1x8xf32> to vector<8x1x8xf32>
    %c1_97 = arith.constant 1 : index
    %c0_98 = arith.constant 0 : index
    %c0_99 = arith.constant 0 : index
    %c0_100 = arith.constant 0 : index
    %181 = vector.load %arg6[%c1_97, %c0_98, %c0_99, %c0_100] : memref<2x4x32x8xf32, #tpu.memory_space<vmem>>, vector<1x4x32x8xf32>
    %182 = vector.shape_cast %181 : vector<1x4x32x8xf32> to vector<4x32x8xf32>
    %183 = vector.shape_cast %182 : vector<4x32x8xf32> to vector<1x4x32x8xf32>
    %184 = vector.shape_cast %183 : vector<1x4x32x8xf32> to vector<1x4x32x8xf32>
    %185 = vector.broadcast %184 : vector<1x4x32x8xf32> to vector<2x4x32x8xf32>
    %186 = vector.shape_cast %185 : vector<2x4x32x8xf32> to vector<8x32x8xf32>
    %c1_101 = arith.constant 1 : index
    %c0_102 = arith.constant 0 : index
    %c0_103 = arith.constant 0 : index
    %c0_104 = arith.constant 0 : index
    %187 = vector.load %arg7[%c1_101, %c0_102, %c0_103, %c0_104] : memref<2x4x1x8xf32, #tpu.memory_space<vmem>>, vector<1x4x1x8xf32>
    %188 = vector.shape_cast %187 : vector<1x4x1x8xf32> to vector<4x1x8xf32>
    %189 = vector.shape_cast %188 : vector<4x1x8xf32> to vector<1x4x1x8xf32>
    %190 = vector.shape_cast %189 : vector<1x4x1x8xf32> to vector<1x4x1x8xf32>
    %191 = vector.broadcast %190 : vector<1x4x1x8xf32> to vector<2x4x1x8xf32>
    %192 = vector.shape_cast %191 : vector<2x4x1x8xf32> to vector<8x1x8xf32>
    %c1_105 = arith.constant 1 : index
    %c0_106 = arith.constant 0 : index
    %c0_107 = arith.constant 0 : index
    %c0_108 = arith.constant 0 : index
    %193 = vector.load %arg8[%c1_105, %c0_106, %c0_107, %c0_108] : memref<2x4x8x32xf32, #tpu.memory_space<vmem>>, vector<1x4x8x32xf32>
    %194 = vector.shape_cast %193 : vector<1x4x8x32xf32> to vector<4x8x32xf32>
    %195 = vector.shape_cast %194 : vector<4x8x32xf32> to vector<1x4x8x32xf32>
    %196 = vector.shape_cast %195 : vector<1x4x8x32xf32> to vector<1x4x8x32xf32>
    %197 = vector.broadcast %196 : vector<1x4x8x32xf32> to vector<2x4x8x32xf32>
    %198 = vector.shape_cast %197 : vector<2x4x8x32xf32> to vector<8x8x32xf32>
    %199 = vector.shape_cast %156 : vector<16x32xf32> to vector<2x8x32xf32>
    %200 = vector.shape_cast %199 : vector<2x8x32xf32> to vector<2x1x8x32xf32>
    %201 = vector.shape_cast %200 : vector<2x1x8x32xf32> to vector<2x1x8x32xf32>
    %202 = vector.broadcast %201 : vector<2x1x8x32xf32> to vector<2x4x8x32xf32>
    %203 = vector.shape_cast %202 : vector<2x4x8x32xf32> to vector<8x8x32xf32>
    "tpu.trace_start"() <{level = 10 : i32, message = "nsd,ndk->nsk"}> : () -> ()
    %cst_109 = arith.constant dense<0.000000e+00> : vector<8x8x8xf32>
    %204 = tpu.matmul %203, %162, %cst_109 {dimension_numbers = #tpu.dot_dimension_numbers<[2], [1], [1], [2], [0, 0, 0, 1, 1, 2], [0], [0]>} : vector<8x8x32xf32>, vector<8x32x8xf32>, vector<8x8x8xf32> -> vector<8x8x8xf32>
    "tpu.trace_stop"() : () -> ()
    %205 = vector.broadcast %168 : vector<8x1x8xf32> to vector<8x8x8xf32>
    %206 = arith.addf %204, %205 : vector<8x8x8xf32>
    "tpu.trace_start"() <{level = 10 : i32, message = "nsd,ndk->nsk"}> : () -> ()
    %cst_110 = arith.constant dense<0.000000e+00> : vector<8x8x8xf32>
    %207 = tpu.matmul %203, %174, %cst_110 {dimension_numbers = #tpu.dot_dimension_numbers<[2], [1], [1], [2], [0, 0, 0, 1, 1, 2], [0], [0]>} : vector<8x8x32xf32>, vector<8x32x8xf32>, vector<8x8x8xf32> -> vector<8x8x8xf32>
    "tpu.trace_stop"() : () -> ()
    %208 = vector.broadcast %180 : vector<8x1x8xf32> to vector<8x8x8xf32>
    %209 = arith.addf %207, %208 : vector<8x8x8xf32>
    "tpu.trace_start"() <{level = 10 : i32, message = "nsd,ndk->nsk"}> : () -> ()
    %cst_111 = arith.constant dense<0.000000e+00> : vector<8x8x8xf32>
    %210 = tpu.matmul %203, %186, %cst_111 {dimension_numbers = #tpu.dot_dimension_numbers<[2], [1], [1], [2], [0, 0, 0, 1, 1, 2], [0], [0]>} : vector<8x8x32xf32>, vector<8x32x8xf32>, vector<8x8x8xf32> -> vector<8x8x8xf32>
    "tpu.trace_stop"() : () -> ()
    %211 = vector.broadcast %192 : vector<8x1x8xf32> to vector<8x8x8xf32>
    %212 = arith.addf %210, %211 : vector<8x8x8xf32>
    "tpu.trace_start"() <{level = 10 : i32, message = "nqd,nkd->nqk"}> : () -> ()
    %cst_112 = arith.constant dense<0.000000e+00> : vector<8x8x8xf32>
    %213 = tpu.matmul %206, %209, %cst_112 {dimension_numbers = #tpu.dot_dimension_numbers<[2], [2], [1], [1], [0, 0, 0, 1, 1, 1], [0], [0]>} : vector<8x8x8xf32>, vector<8x8x8xf32>, vector<8x8x8xf32> -> vector<8x8x8xf32>
    "tpu.trace_stop"() : () -> ()
    %cst_113 = arith.constant 0.353553385 : f32
    %214 = vector.broadcast %cst_113 : f32 to vector<8x8x8xf32>
    %215 = arith.mulf %213, %214 : vector<8x8x8xf32>
    %216 = vector.broadcast %4 : vector<8x1x8xf32> to vector<8x8x8xf32>
    %217 = arith.addf %215, %216 : vector<8x8x8xf32>
    %cst_114 = arith.constant dense<0xFF800000> : vector<8x8xf32>
    %218 = vector.multi_reduction <maximumf>, %217, %cst_114 [2] : vector<8x8x8xf32> to vector<8x8xf32>
    %219 = vector.shape_cast %218 : vector<8x8xf32> to vector<8x8x1xf32>
    %220 = vector.broadcast %219 : vector<8x8x1xf32> to vector<8x8x8xf32>
    %221 = arith.subf %217, %220 : vector<8x8x8xf32>
    %222 = math.exp %221 : vector<8x8x8xf32>
    %cst_115 = arith.constant dense<0.000000e+00> : vector<8x8xf32>
    %223 = vector.multi_reduction <add>, %222, %cst_115 [2] : vector<8x8x8xf32> to vector<8x8xf32>
    %224 = vector.shape_cast %223 : vector<8x8xf32> to vector<8x8x1xf32>
    %225 = tpu.reciprocal %224 {approx = true} : vector<8x8x1xf32> -> vector<8x8x1xf32>
    %226 = vector.broadcast %225 : vector<8x8x1xf32> to vector<8x8x8xf32>
    %227 = arith.mulf %222, %226 : vector<8x8x8xf32>
    "tpu.trace_start"() <{level = 10 : i32, message = "nqk,nkd->nqd"}> : () -> ()
    %cst_116 = arith.constant dense<0.000000e+00> : vector<8x8x8xf32>
    %228 = tpu.matmul %227, %212, %cst_116 {dimension_numbers = #tpu.dot_dimension_numbers<[2], [1], [1], [2], [0, 0, 0, 1, 1, 2], [0], [0]>} : vector<8x8x8xf32>, vector<8x8x8xf32>, vector<8x8x8xf32> -> vector<8x8x8xf32>
    "tpu.trace_stop"() : () -> ()
    "tpu.trace_start"() <{level = 10 : i32, message = "nsd,nde->nse"}> : () -> ()
    %cst_117 = arith.constant dense<0.000000e+00> : vector<8x8x32xf32>
    %229 = tpu.matmul %228, %198, %cst_117 {dimension_numbers = #tpu.dot_dimension_numbers<[2], [1], [1], [2], [0, 0, 0, 1, 1, 2], [0], [0]>} : vector<8x8x8xf32>, vector<8x8x32xf32>, vector<8x8x32xf32> -> vector<8x8x32xf32>
    "tpu.trace_stop"() : () -> ()
    %230 = vector.shape_cast %229 : vector<8x8x32xf32> to vector<2x4x8x32xf32>
    %cst_118 = arith.constant dense<0.000000e+00> : vector<2x8x32xf32>
    %231 = vector.multi_reduction <add>, %230, %cst_118 [1] : vector<2x4x8x32xf32> to vector<2x8x32xf32>
    %232 = vector.shape_cast %231 : vector<2x8x32xf32> to vector<16x32xf32>
    %c1_119 = arith.constant 1 : index
    %c0_120 = arith.constant 0 : index
    %c0_121 = arith.constant 0 : index
    %233 = vector.load %arg9[%c1_119, %c0_120, %c0_121] : memref<2x1x32xf32, #tpu.memory_space<vmem>>, vector<1x1x32xf32>
    %234 = vector.shape_cast %233 : vector<1x1x32xf32> to vector<1x32xf32>
    %235 = vector.broadcast %234 : vector<1x32xf32> to vector<16x32xf32>
    %236 = arith.addf %232, %235 : vector<16x32xf32>
    %237 = arith.addf %156, %236 : vector<16x32xf32>
    %c1_122 = arith.constant 1 : index
    %c0_123 = arith.constant 0 : index
    %c0_124 = arith.constant 0 : index
    %238 = vector.load %arg10[%c1_122, %c0_123, %c0_124] : memref<2x1x32xf32, #tpu.memory_space<vmem>>, vector<1x1x32xf32>
    %239 = vector.shape_cast %238 : vector<1x1x32xf32> to vector<1x32xf32>
    %c1_125 = arith.constant 1 : index
    %c0_126 = arith.constant 0 : index
    %c0_127 = arith.constant 0 : index
    %240 = vector.load %arg11[%c1_125, %c0_126, %c0_127] : memref<2x1x32xf32, #tpu.memory_space<vmem>>, vector<1x1x32xf32>
    %241 = vector.shape_cast %240 : vector<1x1x32xf32> to vector<1x32xf32>
    %cst_128 = arith.constant dense<0.000000e+00> : vector<16xf32>
    %242 = vector.multi_reduction <add>, %237, %cst_128 [1] : vector<16x32xf32> to vector<16xf32>
    %243 = vector.shape_cast %242 : vector<16xf32> to vector<16x1xf32>
    %cst_129 = arith.constant 3.200000e+01 : f32
    %244 = vector.broadcast %cst_129 : f32 to vector<16x1xf32>
    %245 = arith.divf %243, %244 : vector<16x1xf32>
    %246 = vector.broadcast %245 : vector<16x1xf32> to vector<16x32xf32>
    %247 = arith.subf %237, %246 : vector<16x32xf32>
    %248 = arith.mulf %247, %247 : vector<16x32xf32>
    %cst_130 = arith.constant dense<0.000000e+00> : vector<16xf32>
    %249 = vector.multi_reduction <add>, %248, %cst_130 [1] : vector<16x32xf32> to vector<16xf32>
    %250 = vector.shape_cast %249 : vector<16xf32> to vector<16x1xf32>
    %cst_131 = arith.constant 3.200000e+01 : f32
    %251 = vector.broadcast %cst_131 : f32 to vector<16x1xf32>
    %252 = arith.divf %250, %251 : vector<16x1xf32>
    %253 = vector.broadcast %245 : vector<16x1xf32> to vector<16x32xf32>
    %254 = arith.subf %237, %253 : vector<16x32xf32>
    %cst_132 = arith.constant 9.99999974E-6 : f32
    %255 = vector.broadcast %cst_132 : f32 to vector<16x1xf32>
    %256 = arith.addf %252, %255 : vector<16x1xf32>
    %257 = math.rsqrt %256 : vector<16x1xf32>
    %258 = vector.broadcast %257 : vector<16x1xf32> to vector<16x32xf32>
    %259 = arith.mulf %254, %258 : vector<16x32xf32>
    %260 = vector.broadcast %239 : vector<1x32xf32> to vector<16x32xf32>
    %261 = arith.mulf %259, %260 : vector<16x32xf32>
    %262 = vector.broadcast %241 : vector<1x32xf32> to vector<16x32xf32>
    %263 = arith.addf %261, %262 : vector<16x32xf32>
    %c1_133 = arith.constant 1 : index
    %c0_134 = arith.constant 0 : index
    %c0_135 = arith.constant 0 : index
    %264 = vector.load %arg12[%c1_133, %c0_134, %c0_135] : memref<2x32x64xf32, #tpu.memory_space<vmem>>, vector<1x32x64xf32>
    %265 = vector.shape_cast %264 : vector<1x32x64xf32> to vector<32x64xf32>
    %cst_136 = arith.constant dense<0.000000e+00> : vector<16x64xf32>
    %266 = tpu.matmul %263, %265, %cst_136 {dimension_numbers = #tpu.dot_dimension_numbers<[1], [0], [0], [1], [0, 0, 1, 1], [], []>} : vector<16x32xf32>, vector<32x64xf32>, vector<16x64xf32> -> vector<16x64xf32>
    %c1_137 = arith.constant 1 : index
    %c0_138 = arith.constant 0 : index
    %c0_139 = arith.constant 0 : index
    %267 = vector.load %arg13[%c1_137, %c0_138, %c0_139] : memref<2x1x64xf32, #tpu.memory_space<vmem>>, vector<1x1x64xf32>
    %268 = vector.shape_cast %267 : vector<1x1x64xf32> to vector<1x64xf32>
    %269 = vector.broadcast %268 : vector<1x64xf32> to vector<16x64xf32>
    %270 = arith.addf %266, %269 : vector<16x64xf32>
    %cst_140 = arith.constant 0.000000e+00 : f32
    %271 = vector.broadcast %cst_140 : f32 to vector<16x64xf32>
    %272 = arith.maximumf %270, %271 : vector<16x64xf32>
    %c1_141 = arith.constant 1 : index
    %c0_142 = arith.constant 0 : index
    %c0_143 = arith.constant 0 : index
    %273 = vector.load %arg14[%c1_141, %c0_142, %c0_143] : memref<2x64x32xf32, #tpu.memory_space<vmem>>, vector<1x64x32xf32>
    %274 = vector.shape_cast %273 : vector<1x64x32xf32> to vector<64x32xf32>
    %cst_144 = arith.constant dense<0.000000e+00> : vector<16x32xf32>
    %275 = tpu.matmul %272, %274, %cst_144 {dimension_numbers = #tpu.dot_dimension_numbers<[1], [0], [0], [1], [0, 0, 1, 1], [], []>} : vector<16x64xf32>, vector<64x32xf32>, vector<16x32xf32> -> vector<16x32xf32>
    %c1_145 = arith.constant 1 : index
    %c0_146 = arith.constant 0 : index
    %c0_147 = arith.constant 0 : index
    %276 = vector.load %arg15[%c1_145, %c0_146, %c0_147] : memref<2x1x32xf32, #tpu.memory_space<vmem>>, vector<1x1x32xf32>
    %277 = vector.shape_cast %276 : vector<1x1x32xf32> to vector<1x32xf32>
    %278 = vector.broadcast %277 : vector<1x32xf32> to vector<16x32xf32>
    %279 = arith.addf %275, %278 : vector<16x32xf32>
    %280 = arith.addf %263, %279 : vector<16x32xf32>
    %c1_148 = arith.constant 1 : index
    %c0_149 = arith.constant 0 : index
    %c0_150 = arith.constant 0 : index
    %281 = vector.load %arg16[%c1_148, %c0_149, %c0_150] : memref<2x1x32xf32, #tpu.memory_space<vmem>>, vector<1x1x32xf32>
    %282 = vector.shape_cast %281 : vector<1x1x32xf32> to vector<1x32xf32>
    %c1_151 = arith.constant 1 : index
    %c0_152 = arith.constant 0 : index
    %c0_153 = arith.constant 0 : index
    %283 = vector.load %arg17[%c1_151, %c0_152, %c0_153] : memref<2x1x32xf32, #tpu.memory_space<vmem>>, vector<1x1x32xf32>
    %284 = vector.shape_cast %283 : vector<1x1x32xf32> to vector<1x32xf32>
    %cst_154 = arith.constant dense<0.000000e+00> : vector<16xf32>
    %285 = vector.multi_reduction <add>, %280, %cst_154 [1] : vector<16x32xf32> to vector<16xf32>
    %286 = vector.shape_cast %285 : vector<16xf32> to vector<16x1xf32>
    %cst_155 = arith.constant 3.200000e+01 : f32
    %287 = vector.broadcast %cst_155 : f32 to vector<16x1xf32>
    %288 = arith.divf %286, %287 : vector<16x1xf32>
    %289 = vector.broadcast %288 : vector<16x1xf32> to vector<16x32xf32>
    %290 = arith.subf %280, %289 : vector<16x32xf32>
    %291 = arith.mulf %290, %290 : vector<16x32xf32>
    %cst_156 = arith.constant dense<0.000000e+00> : vector<16xf32>
    %292 = vector.multi_reduction <add>, %291, %cst_156 [1] : vector<16x32xf32> to vector<16xf32>
    %293 = vector.shape_cast %292 : vector<16xf32> to vector<16x1xf32>
    %cst_157 = arith.constant 3.200000e+01 : f32
    %294 = vector.broadcast %cst_157 : f32 to vector<16x1xf32>
    %295 = arith.divf %293, %294 : vector<16x1xf32>
    %296 = vector.broadcast %288 : vector<16x1xf32> to vector<16x32xf32>
    %297 = arith.subf %280, %296 : vector<16x32xf32>
    %cst_158 = arith.constant 9.99999974E-6 : f32
    %298 = vector.broadcast %cst_158 : f32 to vector<16x1xf32>
    %299 = arith.addf %295, %298 : vector<16x1xf32>
    %300 = math.rsqrt %299 : vector<16x1xf32>
    %301 = vector.broadcast %300 : vector<16x1xf32> to vector<16x32xf32>
    %302 = arith.mulf %297, %301 : vector<16x32xf32>
    %303 = vector.broadcast %282 : vector<1x32xf32> to vector<16x32xf32>
    %304 = arith.mulf %302, %303 : vector<16x32xf32>
    %305 = vector.broadcast %284 : vector<1x32xf32> to vector<16x32xf32>
    %306 = arith.addf %304, %305 : vector<16x32xf32>
    %c0_159 = arith.constant 0 : index
    %c0_160 = arith.constant 0 : index
    %307 = vector.load %arg18[%c0_159, %c0_160] : memref<1x32xf32, #tpu.memory_space<vmem>>, vector<1x32xf32>
    %c0_161 = arith.constant 0 : index
    %c0_162 = arith.constant 0 : index
    %308 = vector.load %arg19[%c0_161, %c0_162] : memref<1x32xf32, #tpu.memory_space<vmem>>, vector<1x32xf32>
    %cst_163 = arith.constant dense<0.000000e+00> : vector<16xf32>
    %309 = vector.multi_reduction <add>, %306, %cst_163 [1] : vector<16x32xf32> to vector<16xf32>
    %310 = vector.shape_cast %309 : vector<16xf32> to vector<16x1xf32>
    %cst_164 = arith.constant 3.200000e+01 : f32
    %311 = vector.broadcast %cst_164 : f32 to vector<16x1xf32>
    %312 = arith.divf %310, %311 : vector<16x1xf32>
    %313 = vector.broadcast %312 : vector<16x1xf32> to vector<16x32xf32>
    %314 = arith.subf %306, %313 : vector<16x32xf32>
    %315 = arith.mulf %314, %314 : vector<16x32xf32>
    %cst_165 = arith.constant dense<0.000000e+00> : vector<16xf32>
    %316 = vector.multi_reduction <add>, %315, %cst_165 [1] : vector<16x32xf32> to vector<16xf32>
    %317 = vector.shape_cast %316 : vector<16xf32> to vector<16x1xf32>
    %cst_166 = arith.constant 3.200000e+01 : f32
    %318 = vector.broadcast %cst_166 : f32 to vector<16x1xf32>
    %319 = arith.divf %317, %318 : vector<16x1xf32>
    %320 = vector.broadcast %312 : vector<16x1xf32> to vector<16x32xf32>
    %321 = arith.subf %306, %320 : vector<16x32xf32>
    %cst_167 = arith.constant 9.99999974E-6 : f32
    %322 = vector.broadcast %cst_167 : f32 to vector<16x1xf32>
    %323 = arith.addf %319, %322 : vector<16x1xf32>
    %324 = math.rsqrt %323 : vector<16x1xf32>
    %325 = vector.broadcast %324 : vector<16x1xf32> to vector<16x32xf32>
    %326 = arith.mulf %321, %325 : vector<16x32xf32>
    %327 = vector.broadcast %307 : vector<1x32xf32> to vector<16x32xf32>
    %328 = arith.mulf %326, %327 : vector<16x32xf32>
    %329 = vector.broadcast %308 : vector<1x32xf32> to vector<16x32xf32>
    %330 = arith.addf %328, %329 : vector<16x32xf32>
    %c0_168 = arith.constant 0 : index
    %c0_169 = arith.constant 0 : index
    %331 = vector.load %arg20[%c0_168, %c0_169] : memref<32x64xf32, #tpu.memory_space<vmem>>, vector<32x64xf32>
    %cst_170 = arith.constant dense<0.000000e+00> : vector<16x64xf32>
    %332 = tpu.matmul %330, %331, %cst_170 {dimension_numbers = #tpu.dot_dimension_numbers<[1], [0], [0], [1], [0, 0, 1, 1], [], []>} : vector<16x32xf32>, vector<32x64xf32>, vector<16x64xf32> -> vector<16x64xf32>
    %c0_171 = arith.constant 0 : index
    %c0_172 = arith.constant 0 : index
    %333 = vector.load %arg21[%c0_171, %c0_172] : memref<1x64xf32, #tpu.memory_space<vmem>>, vector<1x64xf32>
    %334 = vector.broadcast %333 : vector<1x64xf32> to vector<16x64xf32>
    %335 = arith.addf %332, %334 : vector<16x64xf32>
    %cst_173 = arith.constant 5.000000e-01 : f32
    %336 = vector.broadcast %cst_173 : f32 to vector<16x64xf32>
    %337 = arith.mulf %336, %335 : vector<16x64xf32>
    %cst_174 = arith.constant 0.707106769 : f32
    %338 = vector.broadcast %cst_174 : f32 to vector<16x64xf32>
    %339 = arith.mulf %335, %338 : vector<16x64xf32>
    %340 = math.erf %339 : vector<16x64xf32>
    %cst_175 = arith.constant 1.000000e+00 : f32
    %341 = vector.broadcast %cst_175 : f32 to vector<16x64xf32>
    %342 = arith.addf %341, %340 : vector<16x64xf32>
    %343 = arith.mulf %337, %342 : vector<16x64xf32>
    %c0_176 = arith.constant 0 : index
    %c0_177 = arith.constant 0 : index
    %344 = vector.load %arg22[%c0_176, %c0_177] : memref<64x8xf32, #tpu.memory_space<vmem>>, vector<64x8xf32>
    %cst_178 = arith.constant dense<0.000000e+00> : vector<16x8xf32>
    %345 = tpu.matmul %343, %344, %cst_178 {dimension_numbers = #tpu.dot_dimension_numbers<[1], [0], [0], [1], [0, 0, 1, 1], [], []>} : vector<16x64xf32>, vector<64x8xf32>, vector<16x8xf32> -> vector<16x8xf32>
    %c0_179 = arith.constant 0 : index
    %c0_180 = arith.constant 0 : index
    %346 = vector.load %arg23[%c0_179, %c0_180] : memref<1x8xf32, #tpu.memory_space<vmem>>, vector<1x8xf32>
    %347 = vector.broadcast %346 : vector<1x8xf32> to vector<16x8xf32>
    %348 = arith.addf %345, %347 : vector<16x8xf32>
    %c0_181 = arith.constant 0 : index
    %c0_182 = arith.constant 0 : index
    %349 = vector.load %arg24[%c0_181, %c0_182] : memref<16x8xf32, #tpu.memory_space<vmem>>, vector<16x8xf32>
    tpu.vector_store %arg24[%c0_181, %c0_182], %348 {strides = array<i32>} : memref<16x8xf32, #tpu.memory_space<vmem>>, vector<16x8xf32>,
    return
  }
}

</mosaic_0001>

<llo_original>
// kernel: tpu_custom_call.1
$region0: #{tpu_custom_call.1}
  #allocation0 [shape = 'u32[]', space=smem, size = 0x4, offset = 0x4, fixed_abs, tag = 'smem constant byte address 0x4 - core index']
  #allocation1 [shape = 'u32[144,128]{1,0:T(1,128)}', space=vmem, size = 0x12000, scoped, tag = 'internal scratch']
  %s0 = inlined_call_operand.vmem [shape: f32[2,8,32], index: 0, kind: input, shape index: {}]
  %s1 = inlined_call_operand.vmem [shape: f32[2,1,8], index: 1, kind: input, shape index: {}]
  %s2 = inlined_call_operand.vmem [shape: f32[2,4,32,8], index: 2, kind: input, shape index: {}]
  %s3 = inlined_call_operand.vmem [shape: f32[2,4,1,8], index: 3, kind: input, shape index: {}]
  %s4 = inlined_call_operand.vmem [shape: f32[2,4,32,8], index: 4, kind: input, shape index: {}]
  %s5 = inlined_call_operand.vmem [shape: f32[2,4,1,8], index: 5, kind: input, shape index: {}]
  %s6 = inlined_call_operand.vmem [shape: f32[2,4,32,8], index: 6, kind: input, shape index: {}]
  %s7 = inlined_call_operand.vmem [shape: f32[2,4,1,8], index: 7, kind: input, shape index: {}]
  %s8 = inlined_call_operand.vmem [shape: f32[2,4,8,32], index: 8, kind: input, shape index: {}]
  %s9 = inlined_call_operand.vmem [shape: f32[2,1,32], index: 9, kind: input, shape index: {}]
  %s10 = inlined_call_operand.vmem [shape: f32[2,1,32], index: 10, kind: input, shape index: {}]
  %s11 = inlined_call_operand.vmem [shape: f32[2,1,32], index: 11, kind: input, shape index: {}]
  %s12 = inlined_call_operand.vmem [shape: f32[2,32,64], index: 12, kind: input, shape index: {}]
  %s13 = inlined_call_operand.vmem [shape: f32[2,1,64], index: 13, kind: input, shape index: {}]
  %s14 = inlined_call_operand.vmem [shape: f32[2,64,32], index: 14, kind: input, shape index: {}]
  %s15 = inlined_call_operand.vmem [shape: f32[2,1,32], index: 15, kind: input, shape index: {}]
  %s16 = inlined_call_operand.vmem [shape: f32[2,1,32], index: 16, kind: input, shape index: {}]
  %s17 = inlined_call_operand.vmem [shape: f32[2,1,32], index: 17, kind: input, shape index: {}]
  %s18 = inlined_call_operand.vmem [shape: f32[1,32], index: 18, kind: input, shape index: {}]
  %s19 = inlined_call_operand.vmem [shape: f32[1,32], index: 19, kind: input, shape index: {}]
  %s20 = inlined_call_operand.vmem [shape: f32[32,64], index: 20, kind: input, shape index: {}]
  %s21 = inlined_call_operand.vmem [shape: f32[1,64], index: 21, kind: input, shape index: {}]
  %s22 = inlined_call_operand.vmem [shape: f32[64,8], index: 22, kind: input, shape index: {}]
  %s23 = inlined_call_operand.vmem [shape: f32[1,8], index: 23, kind: input, shape index: {}]
  %s24 = inlined_call_operand.vmem [shape: f32[16,8], index: 24, kind: output, shape index: {}]
  %s25 = sld [smem:[#allocation0]]
  $region106: #{tpu_custom_call.1} parent=0
    _
  %s27 = ssub.s32 1, %s25
  %s28 = scalar_select 0, %s27, %s25
  // Predicated region
  $region2: #{tpu_custom_call.1} parent=0 // pred_check
    _
  $region3: #{tpu_custom_call.1} parent=0 // pred_check_branch
    %30 = sbr.rel (0) target = $region5
  $region4: #{tpu_custom_call.1} parent=0 // pred_region
    _
  $region5: #{tpu_custom_call.1} parent=0 // pred_fallthru
    _
  // Predicated region
  $region6: #{tpu_custom_call.1} parent=0 // pred_check
    _
  $region7: #{tpu_custom_call.1} parent=0 // pred_check_branch
    %32 = sbr.rel (0) target = $region9
  $region8: #{tpu_custom_call.1} parent=0 // pred_region
    _
  $region9: #{tpu_custom_call.1} parent=0 // pred_fallthru
    _
  // Predicated region
  $region10: #{tpu_custom_call.1} parent=0 // pred_check
    _
  $region11: #{tpu_custom_call.1} parent=0 // pred_check_branch
    %34 = sbr.rel (0) target = $region13
  $region12: #{tpu_custom_call.1} parent=0 // pred_region
    _
  $region13: #{tpu_custom_call.1} parent=0 // pred_fallthru
    _
  // Predicated region
  $region14: #{tpu_custom_call.1} parent=0 // pred_check
    _
  $region15: #{tpu_custom_call.1} parent=0 // pred_check_branch
    %36 = sbr.rel (0) target = $region17
  $region16: #{tpu_custom_call.1} parent=0 // pred_region
    _
  $region17: #{tpu_custom_call.1} parent=0 // pred_fallthru
    _
  // Predicated region
  $region18: #{tpu_custom_call.1} parent=0 // pred_check
    _
  $region19: #{tpu_custom_call.1} parent=0 // pred_check_branch
    %38 = sbr.rel (0) target = $region21
  $region20: #{tpu_custom_call.1} parent=0 // pred_region
    _
  $region21: #{tpu_custom_call.1} parent=0 // pred_fallthru
    _
  // Predicated region
  $region22: #{tpu_custom_call.1} parent=0 // pred_check
    _
  $region23: #{tpu_custom_call.1} parent=0 // pred_check_branch
    %40 = sbr.rel (0) target = $region25
  $region24: #{tpu_custom_call.1} parent=0 // pred_region
    _
  $region25: #{tpu_custom_call.1} parent=0 // pred_fallthru
    _
  // Predicated region
  $region26: #{tpu_custom_call.1} parent=0 // pred_check
    _
  $region27: #{tpu_custom_call.1} parent=0 // pred_check_branch
    %42 = sbr.rel (0) target = $region29
  $region28: #{tpu_custom_call.1} parent=0 // pred_region
    _
  $region29: #{tpu_custom_call.1} parent=0 // pred_fallthru
    _
  // Predicated region
  $region30: #{tpu_custom_call.1} parent=0 // pred_check
    _
  $region31: #{tpu_custom_call.1} parent=0 // pred_check_branch
    %44 = sbr.rel (0) target = $region33
  $region32: #{tpu_custom_call.1} parent=0 // pred_region
    _
  $region33: #{tpu_custom_call.1} parent=0 // pred_fallthru
    _
  // Predicated region
  $region34: #{tpu_custom_call.1} parent=0 // pred_check
    _
  $region35: #{tpu_custom_call.1} parent=0 // pred_check_branch
    %46 = sbr.rel (0) target = $region37
  $region36: #{tpu_custom_call.1} parent=0 // pred_region
    _
  $region37: #{tpu_custom_call.1} parent=0 // pred_fallthru
    _
  // Predicated region
  $region38: #{tpu_custom_call.1} parent=0 // pred_check
    _
  $region39: #{tpu_custom_call.1} parent=0 // pred_check_branch
    %48 = sbr.rel (0) target = $region41
  $region40: #{tpu_custom_call.1} parent=0 // pred_region
    _
  $region41: #{tpu_custom_call.1} parent=0 // pred_fallthru
    _
  // Predicated region
  $region42: #{tpu_custom_call.1} parent=0 // pred_check
    _
  $region43: #{tpu_custom_call.1} parent=0 // pred_check_branch
    %50 = sbr.rel (0) target = $region45
  $region44: #{tpu_custom_call.1} parent=0 // pred_region
    _
  $region45: #{tpu_custom_call.1} parent=0 // pred_fallthru
    _
  // Predicated region
  $region46: #{tpu_custom_call.1} parent=0 // pred_check
    _
  $region47: #{tpu_custom_call.1} parent=0 // pred_check_branch
    %52 = sbr.rel (0) target = $region49
  $region48: #{tpu_custom_call.1} parent=0 // pred_region
    _
  $region49: #{tpu_custom_call.1} parent=0 // pred_fallthru
    _
  // Predicated region
  $region50: #{tpu_custom_call.1} parent=0 // pred_check
    _
  $region51: #{tpu_custom_call.1} parent=0 // pred_check_branch
    %54 = sbr.rel (0) target = $region53
  $region52: #{tpu_custom_call.1} parent=0 // pred_region
    _
  $region53: #{tpu_custom_call.1} parent=0 // pred_fallthru
    _
  // Predicated region
  $region54: #{tpu_custom_call.1} parent=0 // pred_check
    _
  $region55: #{tpu_custom_call.1} parent=0 // pred_check_branch
    %56 = sbr.rel (0) target = $region57
  $region56: #{tpu_custom_call.1} parent=0 // pred_region
    _
  $region57: #{tpu_custom_call.1} parent=0 // pred_fallthru
    _
  // Predicated region
  $region58: #{tpu_custom_call.1} parent=0 // pred_check
    _
  $region59: #{tpu_custom_call.1} parent=0 // pred_check_branch
    %58 = sbr.rel (0) target = $region61
  $region60: #{tpu_custom_call.1} parent=0 // pred_region
    _
  $region61: #{tpu_custom_call.1} parent=0 // pred_fallthru
    _
  // Predicated region
  $region62: #{tpu_custom_call.1} parent=0 // pred_check
    _
  $region63: #{tpu_custom_call.1} parent=0 // pred_check_branch
    %60 = sbr.rel (0) target = $region65
  $region64: #{tpu_custom_call.1} parent=0 // pred_region
    _
  $region65: #{tpu_custom_call.1} parent=0 // pred_fallthru
    _
  // Predicated region
  $region66: #{tpu_custom_call.1} parent=0 // pred_check
    _
  $region67: #{tpu_custom_call.1} parent=0 // pred_check_branch
    %62 = sbr.rel (0) target = $region69
  $region68: #{tpu_custom_call.1} parent=0 // pred_region
    _
  $region69: #{tpu_custom_call.1} parent=0 // pred_fallthru
    _
  // Predicated region
  $region70: #{tpu_custom_call.1} parent=0 // pred_check
    _
  $region71: #{tpu_custom_call.1} parent=0 // pred_check_branch
    %64 = sbr.rel (0) target = $region73
  $region72: #{tpu_custom_call.1} parent=0 // pred_region
    _
  $region73: #{tpu_custom_call.1} parent=0 // pred_fallthru
    _
  // Predicated region
  $region74: #{tpu_custom_call.1} parent=0 // pred_check
    _
  $region75: #{tpu_custom_call.1} parent=0 // pred_check_branch
    %66 = sbr.rel (0) target = $region77
  $region76: #{tpu_custom_call.1} parent=0 // pred_region
    _
  $region77: #{tpu_custom_call.1} parent=0 // pred_fallthru
    _
  // Predicated region
  $region78: #{tpu_custom_call.1} parent=0 // pred_check
    _
  $region79: #{tpu_custom_call.1} parent=0 // pred_check_branch
    %68 = sbr.rel (0) target = $region81
  $region80: #{tpu_custom_call.1} parent=0 // pred_region
    _
  $region81: #{tpu_custom_call.1} parent=0 // pred_fallthru
    _
  // Predicated region
  $region82: #{tpu_custom_call.1} parent=0 // pred_check
    _
  $region83: #{tpu_custom_call.1} parent=0 // pred_check_branch
    %70 = sbr.rel (0) target = $region85
  $region84: #{tpu_custom_call.1} parent=0 // pred_region
    _
  $region85: #{tpu_custom_call.1} parent=0 // pred_fallthru
    _
  // Predicated region
  $region86: #{tpu_custom_call.1} parent=0 // pred_check
    _
  $region87: #{tpu_custom_call.1} parent=0 // pred_check_branch
    %72 = sbr.rel (0) target = $region89
  $region88: #{tpu_custom_call.1} parent=0 // pred_region
    _
  $region89: #{tpu_custom_call.1} parent=0 // pred_fallthru
    _
  // Predicated region
  $region90: #{tpu_custom_call.1} parent=0 // pred_check
    _
  $region91: #{tpu_custom_call.1} parent=0 // pred_check_branch
    %74 = sbr.rel (0) target = $region93
  $region92: #{tpu_custom_call.1} parent=0 // pred_region
    _
  $region93: #{tpu_custom_call.1} parent=0 // pred_fallthru
    _
  // Predicated region
  $region94: #{tpu_custom_call.1} parent=0 // pred_check
    _
  $region95: #{tpu_custom_call.1} parent=0 // pred_check_branch
    %76 = sbr.rel (0) target = $region97
  $region96: #{tpu_custom_call.1} parent=0 // pred_region
    _
  $region97: #{tpu_custom_call.1} parent=0 // pred_fallthru
    _
  %v77 = vld [vmem:[%s1] sm:$0x1]
  %v78 = vld [vmem:[%s1 + $0x1] sm:$0x1]
  %v79 = vld [vmem:[%s0] sm:$0xff]
  %v80 = vld [vmem:[%s0 + $0x8] sm:$0xff]
  %v81 = vld [vmem:[%s2] sm:$0xff]
  %v82 = vld [vmem:[%s2 + $0x8] sm:$0xff]
  %v83 = vld [vmem:[%s2 + $0x10] sm:$0xff]
  %v84 = vld [vmem:[%s2 + $0x18] sm:$0xff]
  %v85 = vld [vmem:[%s2 + $0x20] sm:$0xff]
  %v86 = vld [vmem:[%s2 + $0x28] sm:$0xff]
  %v87 = vld [vmem:[%s2 + $0x30] sm:$0xff]
  %v88 = vld [vmem:[%s2 + $0x38] sm:$0xff]
  %v89 = vld [vmem:[%s2 + $0x40] sm:$0xff]
  %v90 = vld [vmem:[%s2 + $0x48] sm:$0xff]
  %v91 = vld [vmem:[%s2 + $0x50] sm:$0xff]
  %v92 = vld [vmem:[%s2 + $0x58] sm:$0xff]
  %v93 = vld [vmem:[%s2 + $0x60] sm:$0xff]
  %v94 = vld [vmem:[%s2 + $0x68] sm:$0xff]
  %v95 = vld [vmem:[%s2 + $0x70] sm:$0xff]
  %v96 = vld [vmem:[%s2 + $0x78] sm:$0xff]
  %v97 = vld [vmem:[%s3] sm:$0x1]
  %v98 = vld [vmem:[%s3 + $0x1] sm:$0x1]
  %v99 = vld [vmem:[%s3 + $0x2] sm:$0x1]
  %v100 = vld [vmem:[%s3 + $0x3] sm:$0x1]
  %v101 = vld [vmem:[%s4] sm:$0xff]
  %v102 = vld [vmem:[%s4 + $0x8] sm:$0xff]
  %v103 = vld [vmem:[%s4 + $0x10] sm:$0xff]
  %v104 = vld [vmem:[%s4 + $0x18] sm:$0xff]
  %v105 = vld [vmem:[%s4 + $0x20] sm:$0xff]
  %v106 = vld [vmem:[%s4 + $0x28] sm:$0xff]
  %v107 = vld [vmem:[%s4 + $0x30] sm:$0xff]
  %v108 = vld [vmem:[%s4 + $0x38] sm:$0xff]
  %v109 = vld [vmem:[%s4 + $0x40] sm:$0xff]
  %v110 = vld [vmem:[%s4 + $0x48] sm:$0xff]
  %v111 = vld [vmem:[%s4 + $0x50] sm:$0xff]
  %v112 = vld [vmem:[%s4 + $0x58] sm:$0xff]
  %v113 = vld [vmem:[%s4 + $0x60] sm:$0xff]
  %v114 = vld [vmem:[%s4 + $0x68] sm:$0xff]
  %v115 = vld [vmem:[%s4 + $0x70] sm:$0xff]
  %v116 = vld [vmem:[%s4 + $0x78] sm:$0xff]
  %v117 = vld [vmem:[%s5] sm:$0x1]
  %v118 = vld [vmem:[%s5 + $0x1] sm:$0x1]
  %v119 = vld [vmem:[%s5 + $0x2] sm:$0x1]
  %v120 = vld [vmem:[%s5 + $0x3] sm:$0x1]
  %v121 = vld [vmem:[%s6] sm:$0xff]
  %v122 = vld [vmem:[%s6 + $0x8] sm:$0xff]
  %v123 = vld [vmem:[%s6 + $0x10] sm:$0xff]
  %v124 = vld [vmem:[%s6 + $0x18] sm:$0xff]
  %v125 = vld [vmem:[%s6 + $0x20] sm:$0xff]
  %v126 = vld [vmem:[%s6 + $0x28] sm:$0xff]
  %v127 = vld [vmem:[%s6 + $0x30] sm:$0xff]
  %v128 = vld [vmem:[%s6 + $0x38] sm:$0xff]
  %v129 = vld [vmem:[%s6 + $0x40] sm:$0xff]
  %v130 = vld [vmem:[%s6 + $0x48] sm:$0xff]
  %v131 = vld [vmem:[%s6 + $0x50] sm:$0xff]
  %v132 = vld [vmem:[%s6 + $0x58] sm:$0xff]
  %v133 = vld [vmem:[%s6 + $0x60] sm:$0xff]
  %v134 = vld [vmem:[%s6 + $0x68] sm:$0xff]
  %v135 = vld [vmem:[%s6 + $0x70] sm:$0xff]
  %v136 = vld [vmem:[%s6 + $0x78] sm:$0xff]
  %v137 = vld [vmem:[%s7] sm:$0x1]
  %v138 = vld [vmem:[%s7 + $0x1] sm:$0x1]
  %v139 = vld [vmem:[%s7 + $0x2] sm:$0x1]
  %v140 = vld [vmem:[%s7 + $0x3] sm:$0x1]
  %v141 = vld [vmem:[%s8] sm:$0xff]
  %v142 = vld [vmem:[%s8 + $0x8] sm:$0xff]
  %v143 = vld [vmem:[%s8 + $0x10] sm:$0xff]
  %v144 = vld [vmem:[%s8 + $0x18] sm:$0xff]
  %v149 = vlaneseq
  %v150 = vshrl.u32 %v149, 7
  %v151 = vsub.s32 0, %v150
  %v152 = vrot.slane %v97, %v151
  %v153 = vlaneseq
  %v154 = vshrl.u32 %v153, 7
  %v155 = vsub.s32 0, %v154
  %v156 = vrot.slane %v98, %v155
  %v157 = vlaneseq
  %v158 = vshrl.u32 %v157, 7
  %v159 = vsub.s32 0, %v158
  %v160 = vrot.slane %v99, %v159
  %v161 = vlaneseq
  %v162 = vshrl.u32 %v161, 7
  %v163 = vsub.s32 0, %v162
  %v164 = vrot.slane %v100, %v163
  %vm169 = vcmask 261120
  %v171 = vsel %vm169, %v79, 0
  %173 = vmatprep.subr.mxu0 0.0
  %174 = vmatpush1.msra.mxu0 %v81
  %175 = vmatprep.subr.mxu0 0.0
  %176 = vmatpush1.msra.mxu0 %v82
  %177 = vmatprep.subr.mxu0 0.0
  %178 = vmatpush1.msra.mxu0 %v83
  %179 = vmatprep.subr.mxu0 0.0
  %180 = vmatpush1.msra.mxu0 %v84
  %181 = vmatprep.subr.mxu0 0.0
  %182 = vmatpush1.msra.mxu0 0.0
  %183 = vmatprep.subr.mxu0 0.0
  %184 = vmatpush1.msra.mxu0 0.0
  %185 = vmatprep.subr.mxu0 0.0
  %186 = vmatpush1.msra.mxu0 0.0
  %187 = vmatprep.subr.mxu0 0.0
  %188 = vmatpush1.msra.mxu0 0.0
  %189 = vmatprep.subr.mxu0 0.0
  %190 = vmatpush1.msra.mxu0 0.0
  %191 = vmatprep.subr.mxu0 0.0
  %192 = vmatpush1.msra.mxu0 0.0
  %193 = vmatprep.subr.mxu0 0.0
  %194 = vmatpush1.msra.mxu0 0.0
  %195 = vmatprep.subr.mxu0 0.0
  %196 = vmatpush1.msra.mxu0 0.0
  %197 = vmatprep.subr.mxu0 0.0
  %198 = vmatpush1.msra.mxu0 0.0
  %199 = vmatprep.subr.mxu0 0.0
  %200 = vmatpush1.msra.mxu0 0.0
  %201 = vmatprep.subr.mxu0 0.0
  %202 = vmatpush1.msra.mxu0 0.0
  %203 = vmatprep.subr.mxu0 0.0
  %204 = vmatpush1.msra.mxu0 0.0
  %205 = vmatprep.subr.mxu0 0.0
  %206 = vmatpush1.msra.mxu0 0.0
  %207 = vmatprep.subr.mxu0 0.0
  %208 = vmatpush1.msra.mxu0 0.0
  %209 = vmatprep.subr.mxu0 0.0
  %210 = vmatpush1.msra.mxu0 0.0
  %211 = vmatprep.subr.mxu0 0.0
  %212 = vmatpush1.msra.mxu0 0.0
  %213 = vmatprep.subr.mxu0 0.0
  %214 = vmatpush1.msra.mxu0 0.0
  %215 = vmatprep.subr.mxu0 0.0
  %216 = vmatpush1.msra.mxu0 0.0
  %217 = vmatprep.subr.mxu0 0.0
  %218 = vmatpush1.msra.mxu0 0.0
  %219 = vmatprep.subr.mxu0 0.0
  %220 = vmatpush1.msra.mxu0 0.0
  %221 = vmatprep.subr.mxu0 0.0
  %222 = vmatpush1.msra.mxu0 0.0
  %223 = vmatprep.subr.mxu0 0.0
  %224 = vmatpush1.msra.mxu0 0.0
  %225 = vmatprep.subr.mxu0 0.0
  %226 = vmatpush1.msra.mxu0 0.0
  %227 = vmatprep.subr.mxu0 0.0
  %228 = vmatpush1.msra.mxu0 0.0
  %229 = vmatprep.subr.mxu0 0.0
  %230 = vmatpush1.msra.mxu0 0.0
  %231 = vmatprep.subr.mxu0 0.0
  %232 = vmatpush1.msra.mxu0 0.0
  %233 = vmatprep.subr.mxu0 0.0
  %234 = vmatpush1.msra.mxu0 0.0
  %235 = vmatprep.subr.mxu0 0.0
  %236 = vmatpush1.msra.mxu0 0.0
  %237 = vmatprep.mubr.f32.mxu0 0.0
  %238 = vmatmul.mubr.f32.gmra.mrb[0].mxu0 %v171
  %v239 = vpop.f32.mrb[0].mxu0
  %v240 = vadd.f32 %v152, %v239
  %v241 = vpop.f32.mrb[0].mxu0
  %242 = vdwg.mxu0
  %243 = vmatprep.subr.mxu0 0.0
  %244 = vmatpush1.msra.mxu0 %v85
  %245 = vmatprep.subr.mxu0 0.0
  %246 = vmatpush1.msra.mxu0 %v86
  %247 = vmatprep.subr.mxu0 0.0
  %248 = vmatpush1.msra.mxu0 %v87
  %249 = vmatprep.subr.mxu0 0.0
  %250 = vmatpush1.msra.mxu0 %v88
  %251 = vmatprep.subr.mxu0 0.0
  %252 = vmatpush1.msra.mxu0 0.0
  %253 = vmatprep.subr.mxu0 0.0
  %254 = vmatpush1.msra.mxu0 0.0
  %255 = vmatprep.subr.mxu0 0.0
  %256 = vmatpush1.msra.mxu0 0.0
  %257 = vmatprep.subr.mxu0 0.0
  %258 = vmatpush1.msra.mxu0 0.0
  %259 = vmatprep.subr.mxu0 0.0
  %260 = vmatpush1.msra.mxu0 0.0
  %261 = vmatprep.subr.mxu0 0.0
  %262 = vmatpush1.msra.mxu0 0.0
  %263 = vmatprep.subr.mxu0 0.0
  %264 = vmatpush1.msra.mxu0 0.0
  %265 = vmatprep.subr.mxu0 0.0
  %266 = vmatpush1.msra.mxu0 0.0
  %267 = vmatprep.subr.mxu0 0.0
  %268 = vmatpush1.msra.mxu0 0.0
  %269 = vmatprep.subr.mxu0 0.0
  %270 = vmatpush1.msra.mxu0 0.0
  %271 = vmatprep.subr.mxu0 0.0
  %272 = vmatpush1.msra.mxu0 0.0
  %273 = vmatprep.subr.mxu0 0.0
  %274 = vmatpush1.msra.mxu0 0.0
  %275 = vmatprep.subr.mxu0 0.0
  %276 = vmatpush1.msra.mxu0 0.0
  %277 = vmatprep.subr.mxu0 0.0
  %278 = vmatpush1.msra.mxu0 0.0
  %279 = vmatprep.subr.mxu0 0.0
  %280 = vmatpush1.msra.mxu0 0.0
  %281 = vmatprep.subr.mxu0 0.0
  %282 = vmatpush1.msra.mxu0 0.0
  %283 = vmatprep.subr.mxu0 0.0
  %284 = vmatpush1.msra.mxu0 0.0
  %285 = vmatprep.subr.mxu0 0.0
  %286 = vmatpush1.msra.mxu0 0.0
  %287 = vmatprep.subr.mxu0 0.0
  %288 = vmatpush1.msra.mxu0 0.0
  %289 = vmatprep.subr.mxu0 0.0
  %290 = vmatpush1.msra.mxu0 0.0
  %291 = vmatprep.subr.mxu0 0.0
  %292 = vmatpush1.msra.mxu0 0.0
  %293 = vmatprep.subr.mxu0 0.0
  %294 = vmatpush1.msra.mxu0 0.0
  %295 = vmatprep.subr.mxu0 0.0
  %296 = vmatpush1.msra.mxu0 0.0
  %297 = vmatprep.subr.mxu0 0.0
  %298 = vmatpush1.msra.mxu0 0.0
  %299 = vmatprep.subr.mxu0 0.0
  %300 = vmatpush1.msra.mxu0 0.0
  %301 = vmatprep.subr.mxu0 0.0
  %302 = vmatpush1.msra.mxu0 0.0
  %303 = vmatprep.subr.mxu0 0.0
  %304 = vmatpush1.msra.mxu0 0.0
  %305 = vmatprep.subr.mxu0 0.0
  %306 = vmatpush1.msra.mxu0 0.0
  %307 = vmatprep.mubr.f32.mxu0 0.0
  %308 = vmatmul.mubr.f32.gmra.mrb[0].mxu0 %v171
  %v309 = vpop.f32.mrb[0].mxu0
  %v310 = vadd.f32 %v156, %v309
  %v311 = vpop.f32.mrb[0].mxu0
  %312 = vdwg.mxu0
  %313 = vmatprep.subr.mxu0 0.0
  %314 = vmatpush1.msra.mxu0 %v89
  %315 = vmatprep.subr.mxu0 0.0
  %316 = vmatpush1.msra.mxu0 %v90
  %317 = vmatprep.subr.mxu0 0.0
  %318 = vmatpush1.msra.mxu0 %v91
  %319 = vmatprep.subr.mxu0 0.0
  %320 = vmatpush1.msra.mxu0 %v92
  %321 = vmatprep.subr.mxu0 0.0
  %322 = vmatpush1.msra.mxu0 0.0
  %323 = vmatprep.subr.mxu0 0.0
  %324 = vmatpush1.msra.mxu0 0.0
  %325 = vmatprep.subr.mxu0 0.0
  %326 = vmatpush1.msra.mxu0 0.0
  %327 = vmatprep.subr.mxu0 0.0
  %328 = vmatpush1.msra.mxu0 0.0
  %329 = vmatprep.subr.mxu0 0.0
  %330 = vmatpush1.msra.mxu0 0.0
  %331 = vmatprep.subr.mxu0 0.0
  %332 = vmatpush1.msra.mxu0 0.0
  %333 = vmatprep.subr.mxu0 0.0
  %334 = vmatpush1.msra.mxu0 0.0
  %335 = vmatprep.subr.mxu0 0.0
  %336 = vmatpush1.msra.mxu0 0.0
  %337 = vmatprep.subr.mxu0 0.0
  %338 = vmatpush1.msra.mxu0 0.0
  %339 = vmatprep.subr.mxu0 0.0
  %340 = vmatpush1.msra.mxu0 0.0
  %341 = vmatprep.subr.mxu0 0.0
  %342 = vmatpush1.msra.mxu0 0.0
  %343 = vmatprep.subr.mxu0 0.0
  %344 = vmatpush1.msra.mxu0 0.0
  %345 = vmatprep.subr.mxu0 0.0
  %346 = vmatpush1.msra.mxu0 0.0
  %347 = vmatprep.subr.mxu0 0.0
  %348 = vmatpush1.msra.mxu0 0.0
  %349 = vmatprep.subr.mxu0 0.0
  %350 = vmatpush1.msra.mxu0 0.0
  %351 = vmatprep.subr.mxu0 0.0
  %352 = vmatpush1.msra.mxu0 0.0
  %353 = vmatprep.subr.mxu0 0.0
  %354 = vmatpush1.msra.mxu0 0.0
  %355 = vmatprep.subr.mxu0 0.0
  %356 = vmatpush1.msra.mxu0 0.0
  %357 = vmatprep.subr.mxu0 0.0
  %358 = vmatpush1.msra.mxu0 0.0
  %359 = vmatprep.subr.mxu0 0.0
  %360 = vmatpush1.msra.mxu0 0.0
  %361 = vmatprep.subr.mxu0 0.0
  %362 = vmatpush1.msra.mxu0 0.0
  %363 = vmatprep.subr.mxu0 0.0
  %364 = vmatpush1.msra.mxu0 0.0
  %365 = vmatprep.subr.mxu0 0.0
  %366 = vmatpush1.msra.mxu0 0.0
  %367 = vmatprep.subr.mxu0 0.0
  %368 = vmatpush1.msra.mxu0 0.0
  %369 = vmatprep.subr.mxu0 0.0
  %370 = vmatpush1.msra.mxu0 0.0
  %371 = vmatprep.subr.mxu0 0.0
  %372 = vmatpush1.msra.mxu0 0.0
  %373 = vmatprep.subr.mxu0 0.0
  %374 = vmatpush1.msra.mxu0 0.0
  %375 = vmatprep.subr.mxu0 0.0
  %376 = vmatpush1.msra.mxu0 0.0
  %377 = vmatprep.mubr.f32.mxu0 0.0
  %378 = vmatmul.mubr.f32.gmra.mrb[0].mxu0 %v171
  %v379 = vpop.f32.mrb[0].mxu0
  %v380 = vadd.f32 %v160, %v379
  %v381 = vpop.f32.mrb[0].mxu0
  %382 = vdwg.mxu0
  %383 = vmatprep.subr.mxu0 0.0
  %384 = vmatpush1.msra.mxu0 %v93
  %385 = vmatprep.subr.mxu0 0.0
  %386 = vmatpush1.msra.mxu0 %v94
  %387 = vmatprep.subr.mxu0 0.0
  %388 = vmatpush1.msra.mxu0 %v95
  %389 = vmatprep.subr.mxu0 0.0
  %390 = vmatpush1.msra.mxu0 %v96
  %391 = vmatprep.subr.mxu0 0.0
  %392 = vmatpush1.msra.mxu0 0.0
  %393 = vmatprep.subr.mxu0 0.0
  %394 = vmatpush1.msra.mxu0 0.0
  %395 = vmatprep.subr.mxu0 0.0
  %396 = vmatpush1.msra.mxu0 0.0
  %397 = vmatprep.subr.mxu0 0.0
  %398 = vmatpush1.msra.mxu0 0.0
  %399 = vmatprep.subr.mxu0 0.0
  %400 = vmatpush1.msra.mxu0 0.0
  %401 = vmatprep.subr.mxu0 0.0
  %402 = vmatpush1.msra.mxu0 0.0
  %403 = vmatprep.subr.mxu0 0.0
  %404 = vmatpush1.msra.mxu0 0.0
  %405 = vmatprep.subr.mxu0 0.0
  %406 = vmatpush1.msra.mxu0 0.0
  %407 = vmatprep.subr.mxu0 0.0
  %408 = vmatpush1.msra.mxu0 0.0
  %409 = vmatprep.subr.mxu0 0.0
  %410 = vmatpush1.msra.mxu0 0.0
  %411 = vmatprep.subr.mxu0 0.0
  %412 = vmatpush1.msra.mxu0 0.0
  %413 = vmatprep.subr.mxu0 0.0
  %414 = vmatpush1.msra.mxu0 0.0
  %415 = vmatprep.subr.mxu0 0.0
  %416 = vmatpush1.msra.mxu0 0.0
  %417 = vmatprep.subr.mxu0 0.0
  %418 = vmatpush1.msra.mxu0 0.0
  %419 = vmatprep.subr.mxu0 0.0
  %420 = vmatpush1.msra.mxu0 0.0
  %421 = vmatprep.subr.mxu0 0.0
  %422 = vmatpush1.msra.mxu0 0.0
  %423 = vmatprep.subr.mxu0 0.0
  %424 = vmatpush1.msra.mxu0 0.0
  %425 = vmatprep.subr.mxu0 0.0
  %426 = vmatpush1.msra.mxu0 0.0
  %427 = vmatprep.subr.mxu0 0.0
  %428 = vmatpush1.msra.mxu0 0.0
  %429 = vmatprep.subr.mxu0 0.0
  %430 = vmatpush1.msra.mxu0 0.0
  %431 = vmatprep.subr.mxu0 0.0
  %432 = vmatpush1.msra.mxu0 0.0
  %433 = vmatprep.subr.mxu0 0.0
  %434 = vmatpush1.msra.mxu0 0.0
  %435 = vmatprep.subr.mxu0 0.0
  %436 = vmatpush1.msra.mxu0 0.0
  %437 = vmatprep.subr.mxu0 0.0
  %438 = vmatpush1.msra.mxu0 0.0
  %439 = vmatprep.subr.mxu0 0.0
  %440 = vmatpush1.msra.mxu0 0.0
  %441 = vmatprep.subr.mxu0 0.0
  %442 = vmatpush1.msra.mxu0 0.0
  %443 = vmatprep.subr.mxu0 0.0
  %444 = vmatpush1.msra.mxu0 0.0
  %445 = vmatprep.subr.mxu0 0.0
  %446 = vmatpush1.msra.mxu0 0.0
  %447 = vmatprep.mubr.f32.mxu0 0.0
  %448 = vmatmul.mubr.f32.gmra.mrb[0].mxu0 %v171
  %v449 = vpop.f32.mrb[0].mxu0
  %v450 = vadd.f32 %v164, %v449
  %v451 = vpop.f32.mrb[0].mxu0
  %452 = vdwg.mxu0
  %v454 = vsel %vm169, %v80, 0
  %456 = vmatprep.subr.mxu0 0.0
  %457 = vmatpush1.msra.mxu0 %v81
  %458 = vmatprep.subr.mxu0 0.0
  %459 = vmatpush1.msra.mxu0 %v82
  %460 = vmatprep.subr.mxu0 0.0
  %461 = vmatpush1.msra.mxu0 %v83
  %462 = vmatprep.subr.mxu0 0.0
  %463 = vmatpush1.msra.mxu0 %v84
  %464 = vmatprep.subr.mxu0 0.0
  %465 = vmatpush1.msra.mxu0 0.0
  %466 = vmatprep.subr.mxu0 0.0
  %467 = vmatpush1.msra.mxu0 0.0
  %468 = vmatprep.subr.mxu0 0.0
  %469 = vmatpush1.msra.mxu0 0.0
  %470 = vmatprep.subr.mxu0 0.0
  %471 = vmatpush1.msra.mxu0 0.0
  %472 = vmatprep.subr.mxu0 0.0
  %473 = vmatpush1.msra.mxu0 0.0
  %474 = vmatprep.subr.mxu0 0.0
  %475 = vmatpush1.msra.mxu0 0.0
  %476 = vmatprep.subr.mxu0 0.0
  %477 = vmatpush1.msra.mxu0 0.0
  %478 = vmatprep.subr.mxu0 0.0
  %479 = vmatpush1.msra.mxu0 0.0
  %480 = vmatprep.subr.mxu0 0.0
  %481 = vmatpush1.msra.mxu0 0.0
  %482 = vmatprep.subr.mxu0 0.0
  %483 = vmatpush1.msra.mxu0 0.0
  %484 = vmatprep.subr.mxu0 0.0
  %485 = vmatpush1.msra.mxu0 0.0
  %486 = vmatprep.subr.mxu0 0.0
  %487 = vmatpush1.msra.mxu0 0.0
  %488 = vmatprep.subr.mxu0 0.0
  %489 = vmatpush1.msra.mxu0 0.0
  %490 = vmatprep.subr.mxu0 0.0
  %491 = vmatpush1.msra.mxu0 0.0
  %492 = vmatprep.subr.mxu0 0.0
  %493 = vmatpush1.msra.mxu0 0.0
  %494 = vmatprep.subr.mxu0 0.0
  %495 = vmatpush1.msra.mxu0 0.0
  %496 = vmatprep.subr.mxu0 0.0
  %497 = vmatpush1.msra.mxu0 0.0
  %498 = vmatprep.subr.mxu0 0.0
  %499 = vmatpush1.msra.mxu0 0.0
  %500 = vmatprep.subr.mxu0 0.0
  %501 = vmatpush1.msra.mxu0 0.0
  %502 = vmatprep.subr.mxu0 0.0
  %503 = vmatpush1.msra.mxu0 0.0
  %504 = vmatprep.subr.mxu0 0.0
  %505 = vmatpush1.msra.mxu0 0.0
  %506 = vmatprep.subr.mxu0 0.0
  %507 = vmatpush1.msra.mxu0 0.0
  %508 = vmatprep.subr.mxu0 0.0
  %509 = vmatpush1.msra.mxu0 0.0
  %510 = vmatprep.subr.mxu0 0.0
  %511 = vmatpush1.msra.mxu0 0.0
  %512 = vmatprep.subr.mxu0 0.0
  %513 = vmatpush1.msra.mxu0 0.0
  %514 = vmatprep.subr.mxu0 0.0
  %515 = vmatpush1.msra.mxu0 0.0
  %516 = vmatprep.subr.mxu0 0.0
  %517 = vmatpush1.msra.mxu0 0.0
  %518 = vmatprep.subr.mxu0 0.0
  %519 = vmatpush1.msra.mxu0 0.0
  %520 = vmatprep.mubr.f32.mxu0 0.0
  %521 = vmatmul.mubr.f32.gmra.mrb[0].mxu0 %v454
  %v522 = vpop.f32.mrb[0].mxu0
  %v523 = vadd.f32 %v152, %v522
  %v524 = vpop.f32.mrb[0].mxu0
  %525 = vdwg.mxu0
  %526 = vmatprep.subr.mxu0 0.0
  %527 = vmatpush1.msra.mxu0 %v85
  %528 = vmatprep.subr.mxu0 0.0
  %529 = vmatpush1.msra.mxu0 %v86
  %530 = vmatprep.subr.mxu0 0.0
  %531 = vmatpush1.msra.mxu0 %v87
  %532 = vmatprep.subr.mxu0 0.0
  %533 = vmatpush1.msra.mxu0 %v88
  %534 = vmatprep.subr.mxu0 0.0
  %535 = vmatpush1.msra.mxu0 0.0
  %536 = vmatprep.subr.mxu0 0.0
  %537 = vmatpush1.msra.mxu0 0.0
  %538 = vmatprep.subr.mxu0 0.0
  %539 = vmatpush1.msra.mxu0 0.0
  %540 = vmatprep.subr.mxu0 0.0
  %541 = vmatpush1.msra.mxu0 0.0
  %542 = vmatprep.subr.mxu0 0.0
  %543 = vmatpush1.msra.mxu0 0.0
  %544 = vmatprep.subr.mxu0 0.0
  %545 = vmatpush1.msra.mxu0 0.0
  %546 = vmatprep.subr.mxu0 0.0
  %547 = vmatpush1.msra.mxu0 0.0
  %548 = vmatprep.subr.mxu0 0.0
  %549 = vmatpush1.msra.mxu0 0.0
  %550 = vmatprep.subr.mxu0 0.0
  %551 = vmatpush1.msra.mxu0 0.0
  %552 = vmatprep.subr.mxu0 0.0
  %553 = vmatpush1.msra.mxu0 0.0
  %554 = vmatprep.subr.mxu0 0.0
  %555 = vmatpush1.msra.mxu0 0.0
  %556 = vmatprep.subr.mxu0 0.0
  %557 = vmatpush1.msra.mxu0 0.0
  %558 = vmatprep.subr.mxu0 0.0
  %559 = vmatpush1.msra.mxu0 0.0
  %560 = vmatprep.subr.mxu0 0.0
  %561 = vmatpush1.msra.mxu0 0.0
  %562 = vmatprep.subr.mxu0 0.0
  %563 = vmatpush1.msra.mxu0 0.0
  %564 = vmatprep.subr.mxu0 0.0
  %565 = vmatpush1.msra.mxu0 0.0
  %566 = vmatprep.subr.mxu0 0.0
  %567 = vmatpush1.msra.mxu0 0.0
  %568 = vmatprep.subr.mxu0 0.0
  %569 = vmatpush1.msra.mxu0 0.0
  %570 = vmatprep.subr.mxu0 0.0
  %571 = vmatpush1.msra.mxu0 0.0
  %572 = vmatprep.subr.mxu0 0.0
  %573 = vmatpush1.msra.mxu0 0.0
  %574 = vmatprep.subr.mxu0 0.0
  %575 = vmatpush1.msra.mxu0 0.0
  %576 = vmatprep.subr.mxu0 0.0
  %577 = vmatpush1.msra.mxu0 0.0
  %578 = vmatprep.subr.mxu0 0.0
  %579 = vmatpush1.msra.mxu0 0.0
  %580 = vmatprep.subr.mxu0 0.0
  %581 = vmatpush1.msra.mxu0 0.0
  %582 = vmatprep.subr.mxu0 0.0
  %583 = vmatpush1.msra.mxu0 0.0
  %584 = vmatprep.subr.mxu0 0.0
  %585 = vmatpush1.msra.mxu0 0.0
  %586 = vmatprep.subr.mxu0 0.0
  %587 = vmatpush1.msra.mxu0 0.0
  %588 = vmatprep.subr.mxu0 0.0
  %589 = vmatpush1.msra.mxu0 0.0
  %590 = vmatprep.mubr.f32.mxu0 0.0
  %591 = vmatmul.mubr.f32.gmra.mrb[0].mxu0 %v454
  %v592 = vpop.f32.mrb[0].mxu0
  %v593 = vadd.f32 %v156, %v592
  %v594 = vpop.f32.mrb[0].mxu0
  %595 = vdwg.mxu0
  %596 = vmatprep.subr.mxu0 0.0
  %597 = vmatpush1.msra.mxu0 %v89
  %598 = vmatprep.subr.mxu0 0.0
  %599 = vmatpush1.msra.mxu0 %v90
  %600 = vmatprep.subr.mxu0 0.0
  %601 = vmatpush1.msra.mxu0 %v91
  %602 = vmatprep.subr.mxu0 0.0
  %603 = vmatpush1.msra.mxu0 %v92
  %604 = vmatprep.subr.mxu0 0.0
  %605 = vmatpush1.msra.mxu0 0.0
  %606 = vmatprep.subr.mxu0 0.0
  %607 = vmatpush1.msra.mxu0 0.0
  %608 = vmatprep.subr.mxu0 0.0
  %609 = vmatpush1.msra.mxu0 0.0
  %610 = vmatprep.subr.mxu0 0.0
  %611 = vmatpush1.msra.mxu0 0.0
  %612 = vmatprep.subr.mxu0 0.0
  %613 = vmatpush1.msra.mxu0 0.0
  %614 = vmatprep.subr.mxu0 0.0
  %615 = vmatpush1.msra.mxu0 0.0
  %616 = vmatprep.subr.mxu0 0.0
  %617 = vmatpush1.msra.mxu0 0.0
  %618 = vmatprep.subr.mxu0 0.0
  %619 = vmatpush1.msra.mxu0 0.0
  %620 = vmatprep.subr.mxu0 0.0
  %621 = vmatpush1.msra.mxu0 0.0
  %622 = vmatprep.subr.mxu0 0.0
  %623 = vmatpush1.msra.mxu0 0.0
  %624 = vmatprep.subr.mxu0 0.0
  %625 = vmatpush1.msra.mxu0 0.0
  %626 = vmatprep.subr.mxu0 0.0
  %627 = vmatpush1.msra.mxu0 0.0
  %628 = vmatprep.subr.mxu0 0.0
  %629 = vmatpush1.msra.mxu0 0.0
  %630 = vmatprep.subr.mxu0 0.0
  %631 = vmatpush1.msra.mxu0 0.0
  %632 = vmatprep.subr.mxu0 0.0
  %633 = vmatpush1.msra.mxu0 0.0
  %634 = vmatprep.subr.mxu0 0.0
  %635 = vmatpush1.msra.mxu0 0.0
  %636 = vmatprep.subr.mxu0 0.0
  %637 = vmatpush1.msra.mxu0 0.0
  %638 = vmatprep.subr.mxu0 0.0
  %639 = vmatpush1.msra.mxu0 0.0
  %640 = vmatprep.subr.mxu0 0.0
  %641 = vmatpush1.msra.mxu0 0.0
  %642 = vmatprep.subr.mxu0 0.0
  %643 = vmatpush1.msra.mxu0 0.0
  %644 = vmatprep.subr.mxu0 0.0
  %645 = vmatpush1.msra.mxu0 0.0
  %646 = vmatprep.subr.mxu0 0.0
  %647 = vmatpush1.msra.mxu0 0.0
  %648 = vmatprep.subr.mxu0 0.0
  %649 = vmatpush1.msra.mxu0 0.0
  %650 = vmatprep.subr.mxu0 0.0
  %651 = vmatpush1.msra.mxu0 0.0
  %652 = vmatprep.subr.mxu0 0.0
  %653 = vmatpush1.msra.mxu0 0.0
  %654 = vmatprep.subr.mxu0 0.0
  %655 = vmatpush1.msra.mxu0 0.0
  %656 = vmatprep.subr.mxu0 0.0
  %657 = vmatpush1.msra.mxu0 0.0
  %658 = vmatprep.subr.mxu0 0.0
  %659 = vmatpush1.msra.mxu0 0.0
  %660 = vmatprep.mubr.f32.mxu0 0.0
  %661 = vmatmul.mubr.f32.gmra.mrb[0].mxu0 %v454
  %v662 = vpop.f32.mrb[0].mxu0
  %v663 = vadd.f32 %v160, %v662
  %v664 = vpop.f32.mrb[0].mxu0
  %665 = vdwg.mxu0
  %666 = vmatprep.subr.mxu0 0.0
  %667 = vmatpush1.msra.mxu0 %v93
  %668 = vmatprep.subr.mxu0 0.0
  %669 = vmatpush1.msra.mxu0 %v94
  %670 = vmatprep.subr.mxu0 0.0
  %671 = vmatpush1.msra.mxu0 %v95
  %672 = vmatprep.subr.mxu0 0.0
  %673 = vmatpush1.msra.mxu0 %v96
  %674 = vmatprep.subr.mxu0 0.0
  %675 = vmatpush1.msra.mxu0 0.0
  %676 = vmatprep.subr.mxu0 0.0
  %677 = vmatpush1.msra.mxu0 0.0
  %678 = vmatprep.subr.mxu0 0.0
  %679 = vmatpush1.msra.mxu0 0.0
  %680 = vmatprep.subr.mxu0 0.0
  %681 = vmatpush1.msra.mxu0 0.0
  %682 = vmatprep.subr.mxu0 0.0
  %683 = vmatpush1.msra.mxu0 0.0
  %684 = vmatprep.subr.mxu0 0.0
  %685 = vmatpush1.msra.mxu0 0.0
  %686 = vmatprep.subr.mxu0 0.0
  %687 = vmatpush1.msra.mxu0 0.0
  %688 = vmatprep.subr.mxu0 0.0
  %689 = vmatpush1.msra.mxu0 0.0
  %690 = vmatprep.subr.mxu0 0.0
  %691 = vmatpush1.msra.mxu0 0.0
  %692 = vmatprep.subr.mxu0 0.0
  %693 = vmatpush1.msra.mxu0 0.0
  %694 = vmatprep.subr.mxu0 0.0
  %695 = vmatpush1.msra.mxu0 0.0
  %696 = vmatprep.subr.mxu0 0.0
  %697 = vmatpush1.msra.mxu0 0.0
  %698 = vmatprep.subr.mxu0 0.0
  %699 = vmatpush1.msra.mxu0 0.0
  %700 = vmatprep.subr.mxu0 0.0
  %701 = vmatpush1.msra.mxu0 0.0
  %702 = vmatprep.subr.mxu0 0.0
  %703 = vmatpush1.msra.mxu0 0.0
  %704 = vmatprep.subr.mxu0 0.0
  %705 = vmatpush1.msra.mxu0 0.0
  %706 = vmatprep.subr.mxu0 0.0
  %707 = vmatpush1.msra.mxu0 0.0
  %708 = vmatprep.subr.mxu0 0.0
  %709 = vmatpush1.msra.mxu0 0.0
  %710 = vmatprep.subr.mxu0 0.0
  %711 = vmatpush1.msra.mxu0 0.0
  %712 = vmatprep.subr.mxu0 0.0
  %713 = vmatpush1.msra.mxu0 0.0
  %714 = vmatprep.subr.mxu0 0.0
  %715 = vmatpush1.msra.mxu0 0.0
  %716 = vmatprep.subr.mxu0 0.0
  %717 = vmatpush1.msra.mxu0 0.0
  %718 = vmatprep.subr.mxu0 0.0
  %719 = vmatpush1.msra.mxu0 0.0
  %720 = vmatprep.subr.mxu0 0.0
  %721 = vmatpush1.msra.mxu0 0.0
  %722 = vmatprep.subr.mxu0 0.0
  %723 = vmatpush1.msra.mxu0 0.0
  %724 = vmatprep.subr.mxu0 0.0
  %725 = vmatpush1.msra.mxu0 0.0
  %726 = vmatprep.subr.mxu0 0.0
  %727 = vmatpush1.msra.mxu0 0.0
  %728 = vmatprep.subr.mxu0 0.0
  %729 = vmatpush1.msra.mxu0 0.0
  %730 = vmatprep.mubr.f32.mxu0 0.0
  %731 = vmatmul.mubr.f32.gmra.mrb[0].mxu0 %v454
  %v732 = vpop.f32.mrb[0].mxu0
  %v733 = vadd.f32 %v164, %v732
  %v734 = vpop.f32.mrb[0].mxu0
  %735 = vdwg.mxu0
  %v740 = vlaneseq
  %v741 = vshrl.u32 %v740, 7
  %v742 = vsub.s32 0, %v741
  %v743 = vrot.slane %v117, %v742
  %v744 = vlaneseq
  %v745 = vshrl.u32 %v744, 7
  %v746 = vsub.s32 0, %v745
  %v747 = vrot.slane %v118, %v746
  %v748 = vlaneseq
  %v749 = vshrl.u32 %v748, 7
  %v750 = vsub.s32 0, %v749
  %v751 = vrot.slane %v119, %v750
  %v752 = vlaneseq
  %v753 = vshrl.u32 %v752, 7
  %v754 = vsub.s32 0, %v753
  %v755 = vrot.slane %v120, %v754
  %760 = vmatprep.subr.mxu0 0.0
  %761 = vmatpush1.msra.mxu0 %v101
  %762 = vmatprep.subr.mxu0 0.0
  %763 = vmatpush1.msra.mxu0 %v102
  %764 = vmatprep.subr.mxu0 0.0
  %765 = vmatpush1.msra.mxu0 %v103
  %766 = vmatprep.subr.mxu0 0.0
  %767 = vmatpush1.msra.mxu0 %v104
  %768 = vmatprep.subr.mxu0 0.0
  %769 = vmatpush1.msra.mxu0 0.0
  %770 = vmatprep.subr.mxu0 0.0
  %771 = vmatpush1.msra.mxu0 0.0
  %772 = vmatprep.subr.mxu0 0.0
  %773 = vmatpush1.msra.mxu0 0.0
  %774 = vmatprep.subr.mxu0 0.0
  %775 = vmatpush1.msra.mxu0 0.0
  %776 = vmatprep.subr.mxu0 0.0
  %777 = vmatpush1.msra.mxu0 0.0
  %778 = vmatprep.subr.mxu0 0.0
  %779 = vmatpush1.msra.mxu0 0.0
  %780 = vmatprep.subr.mxu0 0.0
  %781 = vmatpush1.msra.mxu0 0.0
  %782 = vmatprep.subr.mxu0 0.0
  %783 = vmatpush1.msra.mxu0 0.0
  %784 = vmatprep.subr.mxu0 0.0
  %785 = vmatpush1.msra.mxu0 0.0
  %786 = vmatprep.subr.mxu0 0.0
  %787 = vmatpush1.msra.mxu0 0.0
  %788 = vmatprep.subr.mxu0 0.0
  %789 = vmatpush1.msra.mxu0 0.0
  %790 = vmatprep.subr.mxu0 0.0
  %791 = vmatpush1.msra.mxu0 0.0
  %792 = vmatprep.subr.mxu0 0.0
  %793 = vmatpush1.msra.mxu0 0.0
  %794 = vmatprep.subr.mxu0 0.0
  %795 = vmatpush1.msra.mxu0 0.0
  %796 = vmatprep.subr.mxu0 0.0
  %797 = vmatpush1.msra.mxu0 0.0
  %798 = vmatprep.subr.mxu0 0.0
  %799 = vmatpush1.msra.mxu0 0.0
  %800 = vmatprep.subr.mxu0 0.0
  %801 = vmatpush1.msra.mxu0 0.0
  %802 = vmatprep.subr.mxu0 0.0
  %803 = vmatpush1.msra.mxu0 0.0
  %804 = vmatprep.subr.mxu0 0.0
  %805 = vmatpush1.msra.mxu0 0.0
  %806 = vmatprep.subr.mxu0 0.0
  %807 = vmatpush1.msra.mxu0 0.0
  %808 = vmatprep.subr.mxu0 0.0
  %809 = vmatpush1.msra.mxu0 0.0
  %810 = vmatprep.subr.mxu0 0.0
  %811 = vmatpush1.msra.mxu0 0.0
  %812 = vmatprep.subr.mxu0 0.0
  %813 = vmatpush1.msra.mxu0 0.0
  %814 = vmatprep.subr.mxu0 0.0
  %815 = vmatpush1.msra.mxu0 0.0
  %816 = vmatprep.subr.mxu0 0.0
  %817 = vmatpush1.msra.mxu0 0.0
  %818 = vmatprep.subr.mxu0 0.0
  %819 = vmatpush1.msra.mxu0 0.0
  %820 = vmatprep.subr.mxu0 0.0
  %821 = vmatpush1.msra.mxu0 0.0
  %822 = vmatprep.subr.mxu0 0.0
  %823 = vmatpush1.msra.mxu0 0.0
  %824 = vmatprep.mubr.f32.mxu0 0.0
  %825 = vmatmul.mubr.f32.gmra.mrb[0].mxu0 %v171
  %v826 = vpop.f32.mrb[0].mxu0
  %v827 = vadd.f32 %v743, %v826
  %v828 = vpop.f32.mrb[0].mxu0
  %829 = vdwg.mxu0
  %830 = vmatprep.subr.mxu0 0.0
  %831 = vmatpush1.msra.mxu0 %v105
  %832 = vmatprep.subr.mxu0 0.0
  %833 = vmatpush1.msra.mxu0 %v106
  %834 = vmatprep.subr.mxu0 0.0
  %835 = vmatpush1.msra.mxu0 %v107
  %836 = vmatprep.subr.mxu0 0.0
  %837 = vmatpush1.msra.mxu0 %v108
  %838 = vmatprep.subr.mxu0 0.0
  %839 = vmatpush1.msra.mxu0 0.0
  %840 = vmatprep.subr.mxu0 0.0
  %841 = vmatpush1.msra.mxu0 0.0
  %842 = vmatprep.subr.mxu0 0.0
  %843 = vmatpush1.msra.mxu0 0.0
  %844 = vmatprep.subr.mxu0 0.0
  %845 = vmatpush1.msra.mxu0 0.0
  %846 = vmatprep.subr.mxu0 0.0
  %847 = vmatpush1.msra.mxu0 0.0
  %848 = vmatprep.subr.mxu0 0.0
  %849 = vmatpush1.msra.mxu0 0.0
  %850 = vmatprep.subr.mxu0 0.0
  %851 = vmatpush1.msra.mxu0 0.0
  %852 = vmatprep.subr.mxu0 0.0
  %853 = vmatpush1.msra.mxu0 0.0
  %854 = vmatprep.subr.mxu0 0.0
  %855 = vmatpush1.msra.mxu0 0.0
  %856 = vmatprep.subr.mxu0 0.0
  %857 = vmatpush1.msra.mxu0 0.0
  %858 = vmatprep.subr.mxu0 0.0
  %859 = vmatpush1.msra.mxu0 0.0
  %860 = vmatprep.subr.mxu0 0.0
  %861 = vmatpush1.msra.mxu0 0.0
  %862 = vmatprep.subr.mxu0 0.0
  %863 = vmatpush1.msra.mxu0 0.0
  %864 = vmatprep.subr.mxu0 0.0
  %865 = vmatpush1.msra.mxu0 0.0
  %866 = vmatprep.subr.mxu0 0.0
  %867 = vmatpush1.msra.mxu0 0.0
  %868 = vmatprep.subr.mxu0 0.0
  %869 = vmatpush1.msra.mxu0 0.0
  %870 = vmatprep.subr.mxu0 0.0
  %871 = vmatpush1.msra.mxu0 0.0
  %872 = vmatprep.subr.mxu0 0.0
  %873 = vmatpush1.msra.mxu0 0.0
  %874 = vmatprep.subr.mxu0 0.0
  %875 = vmatpush1.msra.mxu0 0.0
  %876 = vmatprep.subr.mxu0 0.0
  %877 = vmatpush1.msra.mxu0 0.0
  %878 = vmatprep.subr.mxu0 0.0
  %879 = vmatpush1.msra.mxu0 0.0
  %880 = vmatprep.subr.mxu0 0.0
  %881 = vmatpush1.msra.mxu0 0.0
  %882 = vmatprep.subr.mxu0 0.0
  %883 = vmatpush1.msra.mxu0 0.0
  %884 = vmatprep.subr.mxu0 0.0
  %885 = vmatpush1.msra.mxu0 0.0
  %886 = vmatprep.subr.mxu0 0.0
  %887 = vmatpush1.msra.mxu0 0.0
  %888 = vmatprep.subr.mxu0 0.0
  %889 = vmatpush1.msra.mxu0 0.0
  %890 = vmatprep.subr.mxu0 0.0
  %891 = vmatpush1.msra.mxu0 0.0
  %892 = vmatprep.subr.mxu0 0.0
  %893 = vmatpush1.msra.mxu0 0.0
  %894 = vmatprep.mubr.f32.mxu0 0.0
  %895 = vmatmul.mubr.f32.gmra.mrb[0].mxu0 %v171
  %v896 = vpop.f32.mrb[0].mxu0
  %v897 = vadd.f32 %v747, %v896
  %v898 = vpop.f32.mrb[0].mxu0
  %899 = vdwg.mxu0
  %900 = vmatprep.subr.mxu0 0.0
  %901 = vmatpush1.msra.mxu0 %v109
  %902 = vmatprep.subr.mxu0 0.0
  %903 = vmatpush1.msra.mxu0 %v110
  %904 = vmatprep.subr.mxu0 0.0
  %905 = vmatpush1.msra.mxu0 %v111
  %906 = vmatprep.subr.mxu0 0.0
  %907 = vmatpush1.msra.mxu0 %v112
  %908 = vmatprep.subr.mxu0 0.0
  %909 = vmatpush1.msra.mxu0 0.0
  %910 = vmatprep.subr.mxu0 0.0
  %911 = vmatpush1.msra.mxu0 0.0
  %912 = vmatprep.subr.mxu0 0.0
  %913 = vmatpush1.msra.mxu0 0.0
  %914 = vmatprep.subr.mxu0 0.0
  %915 = vmatpush1.msra.mxu0 0.0
  %916 = vmatprep.subr.mxu0 0.0
  %917 = vmatpush1.msra.mxu0 0.0
  %918 = vmatprep.subr.mxu0 0.0
  %919 = vmatpush1.msra.mxu0 0.0
  %920 = vmatprep.subr.mxu0 0.0
  %921 = vmatpush1.msra.mxu0 0.0
  %922 = vmatprep.subr.mxu0 0.0
  %923 = vmatpush1.msra.mxu0 0.0
  %924 = vmatprep.subr.mxu0 0.0
  %925 = vmatpush1.msra.mxu0 0.0
  %926 = vmatprep.subr.mxu0 0.0
  %927 = vmatpush1.msra.mxu0 0.0
  %928 = vmatprep.subr.mxu0 0.0
  %929 = vmatpush1.msra.mxu0 0.0
  %930 = vmatprep.subr.mxu0 0.0
  %931 = vmatpush1.msra.mxu0 0.0
  %932 = vmatprep.subr.mxu0 0.0
  %933 = vmatpush1.msra.mxu0 0.0
  %934 = vmatprep.subr.mxu0 0.0
  %935 = vmatpush1.msra.mxu0 0.0
  %936 = vmatprep.subr.mxu0 0.0
  %937 = vmatpush1.msra.mxu0 0.0
  %938 = vmatprep.subr.mxu0 0.0
  %939 = vmatpush1.msra.mxu0 0.0
  %940 = vmatprep.subr.mxu0 0.0
  %941 = vmatpush1.msra.mxu0 0.0
  %942 = vmatprep.subr.mxu0 0.0
  %943 = vmatpush1.msra.mxu0 0.0
  %944 = vmatprep.subr.mxu0 0.0
  %945 = vmatpush1.msra.mxu0 0.0
  %946 = vmatprep.subr.mxu0 0.0
  %947 = vmatpush1.msra.mxu0 0.0
  %948 = vmatprep.subr.mxu0 0.0
  %949 = vmatpush1.msra.mxu0 0.0
  %950 = vmatprep.subr.mxu0 0.0
  %951 = vmatpush1.msra.mxu0 0.0
  %952 = vmatprep.subr.mxu0 0.0
  %953 = vmatpush1.msra.mxu0 0.0
  %954 = vmatprep.subr.mxu0 0.0
  %955 = vmatpush1.msra.mxu0 0.0
  %956 = vmatprep.subr.mxu0 0.0
  %957 = vmatpush1.msra.mxu0 0.0
  %958 = vmatprep.subr.mxu0 0.0
  %959 = vmatpush1.msra.mxu0 0.0
  %960 = vmatprep.subr.mxu0 0.0
  %961 = vmatpush1.msra.mxu0 0.0
  %962 = vmatprep.subr.mxu0 0.0
  %963 = vmatpush1.msra.mxu0 0.0
  %964 = vmatprep.mubr.f32.mxu0 0.0
  %965 = vmatmul.mubr.f32.gmra.mrb[0].mxu0 %v171
  %v966 = vpop.f32.mrb[0].mxu0
  %v967 = vadd.f32 %v751, %v966
  %v968 = vpop.f32.mrb[0].mxu0
  %969 = vdwg.mxu0
  %970 = vmatprep.subr.mxu0 0.0
  %971 = vmatpush1.msra.mxu0 %v113
  %972 = vmatprep.subr.mxu0 0.0
  %973 = vmatpush1.msra.mxu0 %v114
  %974 = vmatprep.subr.mxu0 0.0
  %975 = vmatpush1.msra.mxu0 %v115
  %976 = vmatprep.subr.mxu0 0.0
  %977 = vmatpush1.msra.mxu0 %v116
  %978 = vmatprep.subr.mxu0 0.0
  %979 = vmatpush1.msra.mxu0 0.0
  %980 = vmatprep.subr.mxu0 0.0
  %981 = vmatpush1.msra.mxu0 0.0
  %982 = vmatprep.subr.mxu0 0.0
  %983 = vmatpush1.msra.mxu0 0.0
  %984 = vmatprep.subr.mxu0 0.0
  %985 = vmatpush1.msra.mxu0 0.0
  %986 = vmatprep.subr.mxu0 0.0
  %987 = vmatpush1.msra.mxu0 0.0
  %988 = vmatprep.subr.mxu0 0.0
  %989 = vmatpush1.msra.mxu0 0.0
  %990 = vmatprep.subr.mxu0 0.0
  %991 = vmatpush1.msra.mxu0 0.0
  %992 = vmatprep.subr.mxu0 0.0
  %993 = vmatpush1.msra.mxu0 0.0
  %994 = vmatprep.subr.mxu0 0.0
  %995 = vmatpush1.msra.mxu0 0.0
  %996 = vmatprep.subr.mxu0 0.0
  %997 = vmatpush1.msra.mxu0 0.0
  %998 = vmatprep.subr.mxu0 0.0
  %999 = vmatpush1.msra.mxu0 0.0
  %1000 = vmatprep.subr.mxu0 0.0
  %1001 = vmatpush1.msra.mxu0 0.0
  %1002 = vmatprep.subr.mxu0 0.0
  %1003 = vmatpush1.msra.mxu0 0.0
  %1004 = vmatprep.subr.mxu0 0.0
  %1005 = vmatpush1.msra.mxu0 0.0
  %1006 = vmatprep.subr.mxu0 0.0
  %1007 = vmatpush1.msra.mxu0 0.0
  %1008 = vmatprep.subr.mxu0 0.0
  %1009 = vmatpush1.msra.mxu0 0.0
  %1010 = vmatprep.subr.mxu0 0.0
  %1011 = vmatpush1.msra.mxu0 0.0
  %1012 = vmatprep.subr.mxu0 0.0
  %1013 = vmatpush1.msra.mxu0 0.0
  %1014 = vmatprep.subr.mxu0 0.0
  %1015 = vmatpush1.msra.mxu0 0.0
  %1016 = vmatprep.subr.mxu0 0.0
  %1017 = vmatpush1.msra.mxu0 0.0
  %1018 = vmatprep.subr.mxu0 0.0
  %1019 = vmatpush1.msra.mxu0 0.0
  %1020 = vmatprep.subr.mxu0 0.0
  %1021 = vmatpush1.msra.mxu0 0.0
  %1022 = vmatprep.subr.mxu0 0.0
  %1023 = vmatpush1.msra.mxu0 0.0
  %1024 = vmatprep.subr.mxu0 0.0
  %1025 = vmatpush1.msra.mxu0 0.0
  %1026 = vmatprep.subr.mxu0 0.0
  %1027 = vmatpush1.msra.mxu0 0.0
  %1028 = vmatprep.subr.mxu0 0.0
  %1029 = vmatpush1.msra.mxu0 0.0
  %1030 = vmatprep.subr.mxu0 0.0
  %1031 = vmatpush1.msra.mxu0 0.0
  %1032 = vmatprep.subr.mxu0 0.0
  %1033 = vmatpush1.msra.mxu0 0.0
  %1034 = vmatprep.mubr.f32.mxu0 0.0
  %1035 = vmatmul.mubr.f32.gmra.mrb[0].mxu0 %v171
  %v1036 = vpop.f32.mrb[0].mxu0
  %v1037 = vadd.f32 %v755, %v1036
  %v1038 = vpop.f32.mrb[0].mxu0
  %1039 = vdwg.mxu0
  %1040 = vmatprep.subr.mxu0 0.0
  %1041 = vmatpush1.msra.mxu0 %v101
  %1042 = vmatprep.subr.mxu0 0.0
  %1043 = vmatpush1.msra.mxu0 %v102
  %1044 = vmatprep.subr.mxu0 0.0
  %1045 = vmatpush1.msra.mxu0 %v103
  %1046 = vmatprep.subr.mxu0 0.0
  %1047 = vmatpush1.msra.mxu0 %v104
  %1048 = vmatprep.subr.mxu0 0.0
  %1049 = vmatpush1.msra.mxu0 0.0
  %1050 = vmatprep.subr.mxu0 0.0
  %1051 = vmatpush1.msra.mxu0 0.0
  %1052 = vmatprep.subr.mxu0 0.0
  %1053 = vmatpush1.msra.mxu0 0.0
  %1054 = vmatprep.subr.mxu0 0.0
  %1055 = vmatpush1.msra.mxu0 0.0
  %1056 = vmatprep.subr.mxu0 0.0
  %1057 = vmatpush1.msra.mxu0 0.0
  %1058 = vmatprep.subr.mxu0 0.0
  %1059 = vmatpush1.msra.mxu0 0.0
  %1060 = vmatprep.subr.mxu0 0.0
  %1061 = vmatpush1.msra.mxu0 0.0
  %1062 = vmatprep.subr.mxu0 0.0
  %1063 = vmatpush1.msra.mxu0 0.0
  %1064 = vmatprep.subr.mxu0 0.0
  %1065 = vmatpush1.msra.mxu0 0.0
  %1066 = vmatprep.subr.mxu0 0.0
  %1067 = vmatpush1.msra.mxu0 0.0
  %1068 = vmatprep.subr.mxu0 0.0
  %1069 = vmatpush1.msra.mxu0 0.0
  %1070 = vmatprep.subr.mxu0 0.0
  %1071 = vmatpush1.msra.mxu0 0.0
  %1072 = vmatprep.subr.mxu0 0.0
  %1073 = vmatpush1.msra.mxu0 0.0
  %1074 = vmatprep.subr.mxu0 0.0
  %1075 = vmatpush1.msra.mxu0 0.0
  %1076 = vmatprep.subr.mxu0 0.0
  %1077 = vmatpush1.msra.mxu0 0.0
  %1078 = vmatprep.subr.mxu0 0.0
  %1079 = vmatpush1.msra.mxu0 0.0
  %1080 = vmatprep.subr.mxu0 0.0
  %1081 = vmatpush1.msra.mxu0 0.0
  %1082 = vmatprep.subr.mxu0 0.0
  %1083 = vmatpush1.msra.mxu0 0.0
  %1084 = vmatprep.subr.mxu0 0.0
  %1085 = vmatpush1.msra.mxu0 0.0
  %1086 = vmatprep.subr.mxu0 0.0
  %1087 = vmatpush1.msra.mxu0 0.0
  %1088 = vmatprep.subr.mxu0 0.0
  %1089 = vmatpush1.msra.mxu0 0.0
  %1090 = vmatprep.subr.mxu0 0.0
  %1091 = vmatpush1.msra.mxu0 0.0
  %1092 = vmatprep.subr.mxu0 0.0
  %1093 = vmatpush1.msra.mxu0 0.0
  %1094 = vmatprep.subr.mxu0 0.0
  %1095 = vmatpush1.msra.mxu0 0.0
  %1096 = vmatprep.subr.mxu0 0.0
  %1097 = vmatpush1.msra.mxu0 0.0
  %1098 = vmatprep.subr.mxu0 0.0
  %1099 = vmatpush1.msra.mxu0 0.0
  %1100 = vmatprep.subr.mxu0 0.0
  %1101 = vmatpush1.msra.mxu0 0.0
  %1102 = vmatprep.subr.mxu0 0.0
  %1103 = vmatpush1.msra.mxu0 0.0
  %1104 = vmatprep.mubr.f32.mxu0 0.0
  %1105 = vmatmul.mubr.f32.gmra.mrb[0].mxu0 %v454
  %v1106 = vpop.f32.mrb[0].mxu0
  %v1107 = vadd.f32 %v743, %v1106
  %v1108 = vpop.f32.mrb[0].mxu0
  %1109 = vdwg.mxu0
  %1110 = vmatprep.subr.mxu0 0.0
  %1111 = vmatpush1.msra.mxu0 %v105
  %1112 = vmatprep.subr.mxu0 0.0
  %1113 = vmatpush1.msra.mxu0 %v106
  %1114 = vmatprep.subr.mxu0 0.0
  %1115 = vmatpush1.msra.mxu0 %v107
  %1116 = vmatprep.subr.mxu0 0.0
  %1117 = vmatpush1.msra.mxu0 %v108
  %1118 = vmatprep.subr.mxu0 0.0
  %1119 = vmatpush1.msra.mxu0 0.0
  %1120 = vmatprep.subr.mxu0 0.0
  %1121 = vmatpush1.msra.mxu0 0.0
  %1122 = vmatprep.subr.mxu0 0.0
  %1123 = vmatpush1.msra.mxu0 0.0
  %1124 = vmatprep.subr.mxu0 0.0
  %1125 = vmatpush1.msra.mxu0 0.0
  %1126 = vmatprep.subr.mxu0 0.0
  %1127 = vmatpush1.msra.mxu0 0.0
  %1128 = vmatprep.subr.mxu0 0.0
  %1129 = vmatpush1.msra.mxu0 0.0
  %1130 = vmatprep.subr.mxu0 0.0
  %1131 = vmatpush1.msra.mxu0 0.0
  %1132 = vmatprep.subr.mxu0 0.0
  %1133 = vmatpush1.msra.mxu0 0.0
  %1134 = vmatprep.subr.mxu0 0.0
  %1135 = vmatpush1.msra.mxu0 0.0
  %1136 = vmatprep.subr.mxu0 0.0
  %1137 = vmatpush1.msra.mxu0 0.0
  %1138 = vmatprep.subr.mxu0 0.0
  %1139 = vmatpush1.msra.mxu0 0.0
  %1140 = vmatprep.subr.mxu0 0.0
  %1141 = vmatpush1.msra.mxu0 0.0
  %1142 = vmatprep.subr.mxu0 0.0
  %1143 = vmatpush1.msra.mxu0 0.0
  %1144 = vmatprep.subr.mxu0 0.0
  %1145 = vmatpush1.msra.mxu0 0.0
  %1146 = vmatprep.subr.mxu0 0.0
  %1147 = vmatpush1.msra.mxu0 0.0
  %1148 = vmatprep.subr.mxu0 0.0
  %1149 = vmatpush1.msra.mxu0 0.0
  %1150 = vmatprep.subr.mxu0 0.0
  %1151 = vmatpush1.msra.mxu0 0.0
  %1152 = vmatprep.subr.mxu0 0.0
  %1153 = vmatpush1.msra.mxu0 0.0
  %1154 = vmatprep.subr.mxu0 0.0
  %1155 = vmatpush1.msra.mxu0 0.0
  %1156 = vmatprep.subr.mxu0 0.0
  %1157 = vmatpush1.msra.mxu0 0.0
  %1158 = vmatprep.subr.mxu0 0.0
  %1159 = vmatpush1.msra.mxu0 0.0
  %1160 = vmatprep.subr.mxu0 0.0
  %1161 = vmatpush1.msra.mxu0 0.0
  %1162 = vmatprep.subr.mxu0 0.0
  %1163 = vmatpush1.msra.mxu0 0.0
  %1164 = vmatprep.subr.mxu0 0.0
  %1165 = vmatpush1.msra.mxu0 0.0
  %1166 = vmatprep.subr.mxu0 0.0
  %1167 = vmatpush1.msra.mxu0 0.0
  %1168 = vmatprep.subr.mxu0 0.0
  %1169 = vmatpush1.msra.mxu0 0.0
  %1170 = vmatprep.subr.mxu0 0.0
  %1171 = vmatpush1.msra.mxu0 0.0
  %1172 = vmatprep.subr.mxu0 0.0
  %1173 = vmatpush1.msra.mxu0 0.0
  %1174 = vmatprep.mubr.f32.mxu0 0.0
  %1175 = vmatmul.mubr.f32.gmra.mrb[0].mxu0 %v454
  %v1176 = vpop.f32.mrb[0].mxu0
  %v1177 = vadd.f32 %v747, %v1176
  %v1178 = vpop.f32.mrb[0].mxu0
  %1179 = vdwg.mxu0
  %1180 = vmatprep.subr.mxu0 0.0
  %1181 = vmatpush1.msra.mxu0 %v109
  %1182 = vmatprep.subr.mxu0 0.0
  %1183 = vmatpush1.msra.mxu0 %v110
  %1184 = vmatprep.subr.mxu0 0.0
  %1185 = vmatpush1.msra.mxu0 %v111
  %1186 = vmatprep.subr.mxu0 0.0
  %1187 = vmatpush1.msra.mxu0 %v112
  %1188 = vmatprep.subr.mxu0 0.0
  %1189 = vmatpush1.msra.mxu0 0.0
  %1190 = vmatprep.subr.mxu0 0.0
  %1191 = vmatpush1.msra.mxu0 0.0
  %1192 = vmatprep.subr.mxu0 0.0
  %1193 = vmatpush1.msra.mxu0 0.0
  %1194 = vmatprep.subr.mxu0 0.0
  %1195 = vmatpush1.msra.mxu0 0.0
  %1196 = vmatprep.subr.mxu0 0.0
  %1197 = vmatpush1.msra.mxu0 0.0
  %1198 = vmatprep.subr.mxu0 0.0
  %1199 = vmatpush1.msra.mxu0 0.0
  %1200 = vmatprep.subr.mxu0 0.0
  %1201 = vmatpush1.msra.mxu0 0.0
  %1202 = vmatprep.subr.mxu0 0.0
  %1203 = vmatpush1.msra.mxu0 0.0
  %1204 = vmatprep.subr.mxu0 0.0
  %1205 = vmatpush1.msra.mxu0 0.0
  %1206 = vmatprep.subr.mxu0 0.0
  %1207 = vmatpush1.msra.mxu0 0.0
  %1208 = vmatprep.subr.mxu0 0.0
  %1209 = vmatpush1.msra.mxu0 0.0
  %1210 = vmatprep.subr.mxu0 0.0
  %1211 = vmatpush1.msra.mxu0 0.0
  %1212 = vmatprep.subr.mxu0 0.0
  %1213 = vmatpush1.msra.mxu0 0.0
  %1214 = vmatprep.subr.mxu0 0.0
  %1215 = vmatpush1.msra.mxu0 0.0
  %1216 = vmatprep.subr.mxu0 0.0
  %1217 = vmatpush1.msra.mxu0 0.0
  %1218 = vmatprep.subr.mxu0 0.0
  %1219 = vmatpush1.msra.mxu0 0.0
  %1220 = vmatprep.subr.mxu0 0.0
  %1221 = vmatpush1.msra.mxu0 0.0
  %1222 = vmatprep.subr.mxu0 0.0
  %1223 = vmatpush1.msra.mxu0 0.0
  %1224 = vmatprep.subr.mxu0 0.0
  %1225 = vmatpush1.msra.mxu0 0.0
  %1226 = vmatprep.subr.mxu0 0.0
  %1227 = vmatpush1.msra.mxu0 0.0
  %1228 = vmatprep.subr.mxu0 0.0
  %1229 = vmatpush1.msra.mxu0 0.0
  %1230 = vmatprep.subr.mxu0 0.0
  %1231 = vmatpush1.msra.mxu0 0.0
  %1232 = vmatprep.subr.mxu0 0.0
  %1233 = vmatpush1.msra.mxu0 0.0
  %1234 = vmatprep.subr.mxu0 0.0
  %1235 = vmatpush1.msra.mxu0 0.0
  %1236 = vmatprep.subr.mxu0 0.0
  %1237 = vmatpush1.msra.mxu0 0.0
  %1238 = vmatprep.subr.mxu0 0.0
  %1239 = vmatpush1.msra.mxu0 0.0
  %1240 = vmatprep.subr.mxu0 0.0
  %1241 = vmatpush1.msra.mxu0 0.0
  %1242 = vmatprep.subr.mxu0 0.0
  %1243 = vmatpush1.msra.mxu0 0.0
  %1244 = vmatprep.mubr.f32.mxu0 0.0
  %1245 = vmatmul.mubr.f32.gmra.mrb[0].mxu0 %v454
  %v1246 = vpop.f32.mrb[0].mxu0
  %v1247 = vadd.f32 %v751, %v1246
  %v1248 = vpop.f32.mrb[0].mxu0
  %1249 = vdwg.mxu0
  %1250 = vmatprep.subr.mxu0 0.0
  %1251 = vmatpush1.msra.mxu0 %v113
  %1252 = vmatprep.subr.mxu0 0.0
  %1253 = vmatpush1.msra.mxu0 %v114
  %1254 = vmatprep.subr.mxu0 0.0
  %1255 = vmatpush1.msra.mxu0 %v115
  %1256 = vmatprep.subr.mxu0 0.0
  %1257 = vmatpush1.msra.mxu0 %v116
  %1258 = vmatprep.subr.mxu0 0.0
  %1259 = vmatpush1.msra.mxu0 0.0
  %1260 = vmatprep.subr.mxu0 0.0
  %1261 = vmatpush1.msra.mxu0 0.0
  %1262 = vmatprep.subr.mxu0 0.0
  %1263 = vmatpush1.msra.mxu0 0.0
  %1264 = vmatprep.subr.mxu0 0.0
  %1265 = vmatpush1.msra.mxu0 0.0
  %1266 = vmatprep.subr.mxu0 0.0
  %1267 = vmatpush1.msra.mxu0 0.0
  %1268 = vmatprep.subr.mxu0 0.0
  %1269 = vmatpush1.msra.mxu0 0.0
  %1270 = vmatprep.subr.mxu0 0.0
  %1271 = vmatpush1.msra.mxu0 0.0
  %1272 = vmatprep.subr.mxu0 0.0
  %1273 = vmatpush1.msra.mxu0 0.0
  %1274 = vmatprep.subr.mxu0 0.0
  %1275 = vmatpush1.msra.mxu0 0.0
  %1276 = vmatprep.subr.mxu0 0.0
  %1277 = vmatpush1.msra.mxu0 0.0
  %1278 = vmatprep.subr.mxu0 0.0
  %1279 = vmatpush1.msra.mxu0 0.0
  %1280 = vmatprep.subr.mxu0 0.0
  %1281 = vmatpush1.msra.mxu0 0.0
  %1282 = vmatprep.subr.mxu0 0.0
  %1283 = vmatpush1.msra.mxu0 0.0
  %1284 = vmatprep.subr.mxu0 0.0
  %1285 = vmatpush1.msra.mxu0 0.0
  %1286 = vmatprep.subr.mxu0 0.0
  %1287 = vmatpush1.msra.mxu0 0.0
  %1288 = vmatprep.subr.mxu0 0.0
  %1289 = vmatpush1.msra.mxu0 0.0
  %1290 = vmatprep.subr.mxu0 0.0
  %1291 = vmatpush1.msra.mxu0 0.0
  %1292 = vmatprep.subr.mxu0 0.0
  %1293 = vmatpush1.msra.mxu0 0.0
  %1294 = vmatprep.subr.mxu0 0.0
  %1295 = vmatpush1.msra.mxu0 0.0
  %1296 = vmatprep.subr.mxu0 0.0
  %1297 = vmatpush1.msra.mxu0 0.0
  %1298 = vmatprep.subr.mxu0 0.0
  %1299 = vmatpush1.msra.mxu0 0.0
  %1300 = vmatprep.subr.mxu0 0.0
  %1301 = vmatpush1.msra.mxu0 0.0
  %1302 = vmatprep.subr.mxu0 0.0
  %1303 = vmatpush1.msra.mxu0 0.0
  %1304 = vmatprep.subr.mxu0 0.0
  %1305 = vmatpush1.msra.mxu0 0.0
  %1306 = vmatprep.subr.mxu0 0.0
  %1307 = vmatpush1.msra.mxu0 0.0
  %1308 = vmatprep.subr.mxu0 0.0
  %1309 = vmatpush1.msra.mxu0 0.0
  %1310 = vmatprep.subr.mxu0 0.0
  %1311 = vmatpush1.msra.mxu0 0.0
  %1312 = vmatprep.subr.mxu0 0.0
  %1313 = vmatpush1.msra.mxu0 0.0
  %1314 = vmatprep.mubr.f32.mxu0 0.0
  %1315 = vmatmul.mubr.f32.gmra.mrb[0].mxu0 %v454
  %v1316 = vpop.f32.mrb[0].mxu0
  %v1317 = vadd.f32 %v755, %v1316
  %v1318 = vpop.f32.mrb[0].mxu0
  %1319 = vdwg.mxu0
  %v1324 = vlaneseq
  %v1325 = vshrl.u32 %v1324, 7
  %v1326 = vsub.s32 0, %v1325
  %v1327 = vrot.slane %v137, %v1326
  %v1328 = vlaneseq
  %v1329 = vshrl.u32 %v1328, 7
  %v1330 = vsub.s32 0, %v1329
  %v1331 = vrot.slane %v138, %v1330
  %v1332 = vlaneseq
  %v1333 = vshrl.u32 %v1332, 7
  %v1334 = vsub.s32 0, %v1333
  %v1335 = vrot.slane %v139, %v1334
  %v1336 = vlaneseq
  %v1337 = vshrl.u32 %v1336, 7
  %v1338 = vsub.s32 0, %v1337
  %v1339 = vrot.slane %v140, %v1338
  %1344 = vmatprep.subr.mxu0 0.0
  %1345 = vmatpush1.msra.mxu0 %v121
  %1346 = vmatprep.subr.mxu0 0.0
  %1347 = vmatpush1.msra.mxu0 %v122
  %1348 = vmatprep.subr.mxu0 0.0
  %1349 = vmatpush1.msra.mxu0 %v123
  %1350 = vmatprep.subr.mxu0 0.0
  %1351 = vmatpush1.msra.mxu0 %v124
  %1352 = vmatprep.subr.mxu0 0.0
  %1353 = vmatpush1.msra.mxu0 0.0
  %1354 = vmatprep.subr.mxu0 0.0
  %1355 = vmatpush1.msra.mxu0 0.0
  %1356 = vmatprep.subr.mxu0 0.0
  %1357 = vmatpush1.msra.mxu0 0.0
  %1358 = vmatprep.subr.mxu0 0.0
  %1359 = vmatpush1.msra.mxu0 0.0
  %1360 = vmatprep.subr.mxu0 0.0
  %1361 = vmatpush1.msra.mxu0 0.0
  %1362 = vmatprep.subr.mxu0 0.0
  %1363 = vmatpush1.msra.mxu0 0.0
  %1364 = vmatprep.subr.mxu0 0.0
  %1365 = vmatpush1.msra.mxu0 0.0
  %1366 = vmatprep.subr.mxu0 0.0
  %1367 = vmatpush1.msra.mxu0 0.0
  %1368 = vmatprep.subr.mxu0 0.0
  %1369 = vmatpush1.msra.mxu0 0.0
  %1370 = vmatprep.subr.mxu0 0.0
  %1371 = vmatpush1.msra.mxu0 0.0
  %1372 = vmatprep.subr.mxu0 0.0
  %1373 = vmatpush1.msra.mxu0 0.0
  %1374 = vmatprep.subr.mxu0 0.0
  %1375 = vmatpush1.msra.mxu0 0.0
  %1376 = vmatprep.subr.mxu0 0.0
  %1377 = vmatpush1.msra.mxu0 0.0
  %1378 = vmatprep.subr.mxu0 0.0
  %1379 = vmatpush1.msra.mxu0 0.0
  %1380 = vmatprep.subr.mxu0 0.0
  %1381 = vmatpush1.msra.mxu0 0.0
  %1382 = vmatprep.subr.mxu0 0.0
  %1383 = vmatpush1.msra.mxu0 0.0
  %1384 = vmatprep.subr.mxu0 0.0
  %1385 = vmatpush1.msra.mxu0 0.0
  %1386 = vmatprep.subr.mxu0 0.0
  %1387 = vmatpush1.msra.mxu0 0.0
  %1388 = vmatprep.subr.mxu0 0.0
  %1389 = vmatpush1.msra.mxu0 0.0
  %1390 = vmatprep.subr.mxu0 0.0
  %1391 = vmatpush1.msra.mxu0 0.0
  %1392 = vmatprep.subr.mxu0 0.0
  %1393 = vmatpush1.msra.mxu0 0.0
  %1394 = vmatprep.subr.mxu0 0.0
  %1395 = vmatpush1.msra.mxu0 0.0
  %1396 = vmatprep.subr.mxu0 0.0
  %1397 = vmatpush1.msra.mxu0 0.0
  %1398 = vmatprep.subr.mxu0 0.0
  %1399 = vmatpush1.msra.mxu0 0.0
  %1400 = vmatprep.subr.mxu0 0.0
  %1401 = vmatpush1.msra.mxu0 0.0
  %1402 = vmatprep.subr.mxu0 0.0
  %1403 = vmatpush1.msra.mxu0 0.0
  %1404 = vmatprep.subr.mxu0 0.0
  %1405 = vmatpush1.msra.mxu0 0.0
  %1406 = vmatprep.subr.mxu0 0.0
  %1407 = vmatpush1.msra.mxu0 0.0
  %1408 = vmatprep.mubr.f32.mxu0 0.0
  %1409 = vmatmul.mubr.f32.gmra.mrb[0].mxu0 %v171
  %v1410 = vpop.f32.mrb[0].mxu0
  %v1411 = vadd.f32 %v1327, %v1410
  %v1412 = vpop.f32.mrb[0].mxu0
  %1413 = vdwg.mxu0
  %1414 = vmatprep.subr.mxu0 0.0
  %1415 = vmatpush1.msra.mxu0 %v125
  %1416 = vmatprep.subr.mxu0 0.0
  %1417 = vmatpush1.msra.mxu0 %v126
  %1418 = vmatprep.subr.mxu0 0.0
  %1419 = vmatpush1.msra.mxu0 %v127
  %1420 = vmatprep.subr.mxu0 0.0
  %1421 = vmatpush1.msra.mxu0 %v128
  %1422 = vmatprep.subr.mxu0 0.0
  %1423 = vmatpush1.msra.mxu0 0.0
  %1424 = vmatprep.subr.mxu0 0.0
  %1425 = vmatpush1.msra.mxu0 0.0
  %1426 = vmatprep.subr.mxu0 0.0
  %1427 = vmatpush1.msra.mxu0 0.0
  %1428 = vmatprep.subr.mxu0 0.0
  %1429 = vmatpush1.msra.mxu0 0.0
  %1430 = vmatprep.subr.mxu0 0.0
  %1431 = vmatpush1.msra.mxu0 0.0
  %1432 = vmatprep.subr.mxu0 0.0
  %1433 = vmatpush1.msra.mxu0 0.0
  %1434 = vmatprep.subr.mxu0 0.0
  %1435 = vmatpush1.msra.mxu0 0.0
  %1436 = vmatprep.subr.mxu0 0.0
  %1437 = vmatpush1.msra.mxu0 0.0
  %1438 = vmatprep.subr.mxu0 0.0
  %1439 = vmatpush1.msra.mxu0 0.0
  %1440 = vmatprep.subr.mxu0 0.0
  %1441 = vmatpush1.msra.mxu0 0.0
  %1442 = vmatprep.subr.mxu0 0.0
  %1443 = vmatpush1.msra.mxu0 0.0
  %1444 = vmatprep.subr.mxu0 0.0
  %1445 = vmatpush1.msra.mxu0 0.0
  %1446 = vmatprep.subr.mxu0 0.0
  %1447 = vmatpush1.msra.mxu0 0.0
  %1448 = vmatprep.subr.mxu0 0.0
  %1449 = vmatpush1.msra.mxu0 0.0
  %1450 = vmatprep.subr.mxu0 0.0
  %1451 = vmatpush1.msra.mxu0 0.0
  %1452 = vmatprep.subr.mxu0 0.0
  %1453 = vmatpush1.msra.mxu0 0.0
  %1454 = vmatprep.subr.mxu0 0.0
  %1455 = vmatpush1.msra.mxu0 0.0
  %1456 = vmatprep.subr.mxu0 0.0
  %1457 = vmatpush1.msra.mxu0 0.0
  %1458 = vmatprep.subr.mxu0 0.0
  %1459 = vmatpush1.msra.mxu0 0.0
  %1460 = vmatprep.subr.mxu0 0.0
  %1461 = vmatpush1.msra.mxu0 0.0
  %1462 = vmatprep.subr.mxu0 0.0
  %1463 = vmatpush1.msra.mxu0 0.0
  %1464 = vmatprep.subr.mxu0 0.0
  %1465 = vmatpush1.msra.mxu0 0.0
  %1466 = vmatprep.subr.mxu0 0.0
  %1467 = vmatpush1.msra.mxu0 0.0
  %1468 = vmatprep.subr.mxu0 0.0
  %1469 = vmatpush1.msra.mxu0 0.0
  %1470 = vmatprep.subr.mxu0 0.0
  %1471 = vmatpush1.msra.mxu0 0.0
  %1472 = vmatprep.subr.mxu0 0.0
  %1473 = vmatpush1.msra.mxu0 0.0
  %1474 = vmatprep.subr.mxu0 0.0
  %1475 = vmatpush1.msra.mxu0 0.0
  %1476 = vmatprep.subr.mxu0 0.0
  %1477 = vmatpush1.msra.mxu0 0.0
  %1478 = vmatprep.mubr.f32.mxu0 0.0
  %1479 = vmatmul.mubr.f32.gmra.mrb[0].mxu0 %v171
  %v1480 = vpop.f32.mrb[0].mxu0
  %v1481 = vadd.f32 %v1331, %v1480
  %v1482 = vpop.f32.mrb[0].mxu0
  %1483 = vdwg.mxu0
  %1484 = vmatprep.subr.mxu0 0.0
  %1485 = vmatpush1.msra.mxu0 %v129
  %1486 = vmatprep.subr.mxu0 0.0
  %1487 = vmatpush1.msra.mxu0 %v130
  %1488 = vmatprep.subr.mxu0 0.0
  %1489 = vmatpush1.msra.mxu0 %v131
  %1490 = vmatprep.subr.mxu0 0.0
  %1491 = vmatpush1.msra.mxu0 %v132
  %1492 = vmatprep.subr.mxu0 0.0
  %1493 = vmatpush1.msra.mxu0 0.0
  %1494 = vmatprep.subr.mxu0 0.0
  %1495 = vmatpush1.msra.mxu0 0.0
  %1496 = vmatprep.subr.mxu0 0.0
  %1497 = vmatpush1.msra.mxu0 0.0
  %1498 = vmatprep.subr.mxu0 0.0
  %1499 = vmatpush1.msra.mxu0 0.0
  %1500 = vmatprep.subr.mxu0 0.0
  %1501 = vmatpush1.msra.mxu0 0.0
  %1502 = vmatprep.subr.mxu0 0.0
  %1503 = vmatpush1.msra.mxu0 0.0
  %1504 = vmatprep.subr.mxu0 0.0
  %1505 = vmatpush1.msra.mxu0 0.0
  %1506 = vmatprep.subr.mxu0 0.0
  %1507 = vmatpush1.msra.mxu0 0.0
  %1508 = vmatprep.subr.mxu0 0.0
  %1509 = vmatpush1.msra.mxu0 0.0
  %1510 = vmatprep.subr.mxu0 0.0
  %1511 = vmatpush1.msra.mxu0 0.0
  %1512 = vmatprep.subr.mxu0 0.0
  %1513 = vmatpush1.msra.mxu0 0.0
  %1514 = vmatprep.subr.mxu0 0.0
  %1515 = vmatpush1.msra.mxu0 0.0
  %1516 = vmatprep.subr.mxu0 0.0
  %1517 = vmatpush1.msra.mxu0 0.0
  %1518 = vmatprep.subr.mxu0 0.0
  %1519 = vmatpush1.msra.mxu0 0.0
  %1520 = vmatprep.subr.mxu0 0.0
  %1521 = vmatpush1.msra.mxu0 0.0
  %1522 = vmatprep.subr.mxu0 0.0
  %1523 = vmatpush1.msra.mxu0 0.0
  %1524 = vmatprep.subr.mxu0 0.0
  %1525 = vmatpush1.msra.mxu0 0.0
  %1526 = vmatprep.subr.mxu0 0.0
  %1527 = vmatpush1.msra.mxu0 0.0
  %1528 = vmatprep.subr.mxu0 0.0
  %1529 = vmatpush1.msra.mxu0 0.0
  %1530 = vmatprep.subr.mxu0 0.0
  %1531 = vmatpush1.msra.mxu0 0.0
  %1532 = vmatprep.subr.mxu0 0.0
  %1533 = vmatpush1.msra.mxu0 0.0
  %1534 = vmatprep.subr.mxu0 0.0
  %1535 = vmatpush1.msra.mxu0 0.0
  %1536 = vmatprep.subr.mxu0 0.0
  %1537 = vmatpush1.msra.mxu0 0.0
  %1538 = vmatprep.subr.mxu0 0.0
  %1539 = vmatpush1.msra.mxu0 0.0
  %1540 = vmatprep.subr.mxu0 0.0
  %1541 = vmatpush1.msra.mxu0 0.0
  %1542 = vmatprep.subr.mxu0 0.0
  %1543 = vmatpush1.msra.mxu0 0.0
  %1544 = vmatprep.subr.mxu0 0.0
  %1545 = vmatpush1.msra.mxu0 0.0
  %1546 = vmatprep.subr.mxu0 0.0
  %1547 = vmatpush1.msra.mxu0 0.0
  %1548 = vmatprep.mubr.f32.mxu0 0.0
  %1549 = vmatmul.mubr.f32.gmra.mrb[0].mxu0 %v171
  %v1550 = vpop.f32.mrb[0].mxu0
  %v1551 = vadd.f32 %v1335, %v1550
  %v1552 = vpop.f32.mrb[0].mxu0
  %1553 = vdwg.mxu0
  %1554 = vmatprep.subr.mxu0 0.0
  %1555 = vmatpush1.msra.mxu0 %v133
  %1556 = vmatprep.subr.mxu0 0.0
  %1557 = vmatpush1.msra.mxu0 %v134
  %1558 = vmatprep.subr.mxu0 0.0
  %1559 = vmatpush1.msra.mxu0 %v135
  %1560 = vmatprep.subr.mxu0 0.0
  %1561 = vmatpush1.msra.mxu0 %v136
  %1562 = vmatprep.subr.mxu0 0.0
  %1563 = vmatpush1.msra.mxu0 0.0
  %1564 = vmatprep.subr.mxu0 0.0
  %1565 = vmatpush1.msra.mxu0 0.0
  %1566 = vmatprep.subr.mxu0 0.0
  %1567 = vmatpush1.msra.mxu0 0.0
  %1568 = vmatprep.subr.mxu0 0.0
  %1569 = vmatpush1.msra.mxu0 0.0
  %1570 = vmatprep.subr.mxu0 0.0
  %1571 = vmatpush1.msra.mxu0 0.0
  %1572 = vmatprep.subr.mxu0 0.0
  %1573 = vmatpush1.msra.mxu0 0.0
  %1574 = vmatprep.subr.mxu0 0.0
  %1575 = vmatpush1.msra.mxu0 0.0
  %1576 = vmatprep.subr.mxu0 0.0
  %1577 = vmatpush1.msra.mxu0 0.0
  %1578 = vmatprep.subr.mxu0 0.0
  %1579 = vmatpush1.msra.mxu0 0.0
  %1580 = vmatprep.subr.mxu0 0.0
  %1581 = vmatpush1.msra.mxu0 0.0
  %1582 = vmatprep.subr.mxu0 0.0
  %1583 = vmatpush1.msra.mxu0 0.0
  %1584 = vmatprep.subr.mxu0 0.0
  %1585 = vmatpush1.msra.mxu0 0.0
  %1586 = vmatprep.subr.mxu0 0.0
  %1587 = vmatpush1.msra.mxu0 0.0
  %1588 = vmatprep.subr.mxu0 0.0
  %1589 = vmatpush1.msra.mxu0 0.0
  %1590 = vmatprep.subr.mxu0 0.0
  %1591 = vmatpush1.msra.mxu0 0.0
  %1592 = vmatprep.subr.mxu0 0.0
  %1593 = vmatpush1.msra.mxu0 0.0
  %1594 = vmatprep.subr.mxu0 0.0
  %1595 = vmatpush1.msra.mxu0 0.0
  %1596 = vmatprep.subr.mxu0 0.0
  %1597 = vmatpush1.msra.mxu0 0.0
  %1598 = vmatprep.subr.mxu0 0.0
  %1599 = vmatpush1.msra.mxu0 0.0
  %1600 = vmatprep.subr.mxu0 0.0
  %1601 = vmatpush1.msra.mxu0 0.0
  %1602 = vmatprep.subr.mxu0 0.0
  %1603 = vmatpush1.msra.mxu0 0.0
  %1604 = vmatprep.subr.mxu0 0.0
  %1605 = vmatpush1.msra.mxu0 0.0
  %1606 = vmatprep.subr.mxu0 0.0
  %1607 = vmatpush1.msra.mxu0 0.0
  %1608 = vmatprep.subr.mxu0 0.0
  %1609 = vmatpush1.msra.mxu0 0.0
  %1610 = vmatprep.subr.mxu0 0.0
  %1611 = vmatpush1.msra.mxu0 0.0
  %1612 = vmatprep.subr.mxu0 0.0
  %1613 = vmatpush1.msra.mxu0 0.0
  %1614 = vmatprep.subr.mxu0 0.0
  %1615 = vmatpush1.msra.mxu0 0.0
  %1616 = vmatprep.subr.mxu0 0.0
  %1617 = vmatpush1.msra.mxu0 0.0
  %1618 = vmatprep.mubr.f32.mxu0 0.0
  %1619 = vmatmul.mubr.f32.gmra.mrb[0].mxu0 %v171
  %v1620 = vpop.f32.mrb[0].mxu0
  %v1621 = vadd.f32 %v1339, %v1620
  %v1622 = vpop.f32.mrb[0].mxu0
  %1623 = vdwg.mxu0
  %1624 = vmatprep.subr.mxu0 0.0
  %1625 = vmatpush1.msra.mxu0 %v121
  %1626 = vmatprep.subr.mxu0 0.0
  %1627 = vmatpush1.msra.mxu0 %v122
  %1628 = vmatprep.subr.mxu0 0.0
  %1629 = vmatpush1.msra.mxu0 %v123
  %1630 = vmatprep.subr.mxu0 0.0
  %1631 = vmatpush1.msra.mxu0 %v124
  %1632 = vmatprep.subr.mxu0 0.0
  %1633 = vmatpush1.msra.mxu0 0.0
  %1634 = vmatprep.subr.mxu0 0.0
  %1635 = vmatpush1.msra.mxu0 0.0
  %1636 = vmatprep.subr.mxu0 0.0
  %1637 = vmatpush1.msra.mxu0 0.0
  %1638 = vmatprep.subr.mxu0 0.0
  %1639 = vmatpush1.msra.mxu0 0.0
  %1640 = vmatprep.subr.mxu0 0.0
  %1641 = vmatpush1.msra.mxu0 0.0
  %1642 = vmatprep.subr.mxu0 0.0
  %1643 = vmatpush1.msra.mxu0 0.0
  %1644 = vmatprep.subr.mxu0 0.0
  %1645 = vmatpush1.msra.mxu0 0.0
  %1646 = vmatprep.subr.mxu0 0.0
  %1647 = vmatpush1.msra.mxu0 0.0
  %1648 = vmatprep.subr.mxu0 0.0
  %1649 = vmatpush1.msra.mxu0 0.0
  %1650 = vmatprep.subr.mxu0 0.0
  %1651 = vmatpush1.msra.mxu0 0.0
  %1652 = vmatprep.subr.mxu0 0.0
  %1653 = vmatpush1.msra.mxu0 0.0
  %1654 = vmatprep.subr.mxu0 0.0
  %1655 = vmatpush1.msra.mxu0 0.0
  %1656 = vmatprep.subr.mxu0 0.0
  %1657 = vmatpush1.msra.mxu0 0.0
  %1658 = vmatprep.subr.mxu0 0.0
  %1659 = vmatpush1.msra.mxu0 0.0
  %1660 = vmatprep.subr.mxu0 0.0
  %1661 = vmatpush1.msra.mxu0 0.0
  %1662 = vmatprep.subr.mxu0 0.0
  %1663 = vmatpush1.msra.mxu0 0.0
  %1664 = vmatprep.subr.mxu0 0.0
  %1665 = vmatpush1.msra.mxu0 0.0
  %1666 = vmatprep.subr.mxu0 0.0
  %1667 = vmatpush1.msra.mxu0 0.0
  %1668 = vmatprep.subr.mxu0 0.0
  %1669 = vmatpush1.msra.mxu0 0.0
  %1670 = vmatprep.subr.mxu0 0.0
  %1671 = vmatpush1.msra.mxu0 0.0
  %1672 = vmatprep.subr.mxu0 0.0
  %1673 = vmatpush1.msra.mxu0 0.0
  %1674 = vmatprep.subr.mxu0 0.0
  %1675 = vmatpush1.msra.mxu0 0.0
  %1676 = vmatprep.subr.mxu0 0.0
  %1677 = vmatpush1.msra.mxu0 0.0
  %1678 = vmatprep.subr.mxu0 0.0
  %1679 = vmatpush1.msra.mxu0 0.0
  %1680 = vmatprep.subr.mxu0 0.0
  %1681 = vmatpush1.msra.mxu0 0.0
  %1682 = vmatprep.subr.mxu0 0.0
  %1683 = vmatpush1.msra.mxu0 0.0
  %1684 = vmatprep.subr.mxu0 0.0
  %1685 = vmatpush1.msra.mxu0 0.0
  %1686 = vmatprep.subr.mxu0 0.0
  %1687 = vmatpush1.msra.mxu0 0.0
  %1688 = vmatprep.mubr.f32.mxu0 0.0
  %1689 = vmatmul.mubr.f32.gmra.mrb[0].mxu0 %v454
  %v1690 = vpop.f32.mrb[0].mxu0
  %v1691 = vadd.f32 %v1327, %v1690
  %v1692 = vpop.f32.mrb[0].mxu0
  %1693 = vdwg.mxu0
  %1694 = vmatprep.subr.mxu0 0.0
  %1695 = vmatpush1.msra.mxu0 %v125
  %1696 = vmatprep.subr.mxu0 0.0
  %1697 = vmatpush1.msra.mxu0 %v126
  %1698 = vmatprep.subr.mxu0 0.0
  %1699 = vmatpush1.msra.mxu0 %v127
  %1700 = vmatprep.subr.mxu0 0.0
  %1701 = vmatpush1.msra.mxu0 %v128
  %1702 = vmatprep.subr.mxu0 0.0
  %1703 = vmatpush1.msra.mxu0 0.0
  %1704 = vmatprep.subr.mxu0 0.0
  %1705 = vmatpush1.msra.mxu0 0.0
  %1706 = vmatprep.subr.mxu0 0.0
  %1707 = vmatpush1.msra.mxu0 0.0
  %1708 = vmatprep.subr.mxu0 0.0
  %1709 = vmatpush1.msra.mxu0 0.0
  %1710 = vmatprep.subr.mxu0 0.0
  %1711 = vmatpush1.msra.mxu0 0.0
  %1712 = vmatprep.subr.mxu0 0.0
  %1713 = vmatpush1.msra.mxu0 0.0
  %1714 = vmatprep.subr.mxu0 0.0
  %1715 = vmatpush1.msra.mxu0 0.0
  %1716 = vmatprep.subr.mxu0 0.0
  %1717 = vmatpush1.msra.mxu0 0.0
  %1718 = vmatprep.subr.mxu0 0.0
  %1719 = vmatpush1.msra.mxu0 0.0
  %1720 = vmatprep.subr.mxu0 0.0
  %1721 = vmatpush1.msra.mxu0 0.0
  %1722 = vmatprep.subr.mxu0 0.0
  %1723 = vmatpush1.msra.mxu0 0.0
  %1724 = vmatprep.subr.mxu0 0.0
  %1725 = vmatpush1.msra.mxu0 0.0
  %1726 = vmatprep.subr.mxu0 0.0
  %1727 = vmatpush1.msra.mxu0 0.0
  %1728 = vmatprep.subr.mxu0 0.0
  %1729 = vmatpush1.msra.mxu0 0.0
  %1730 = vmatprep.subr.mxu0 0.0
  %1731 = vmatpush1.msra.mxu0 0.0
  %1732 = vmatprep.subr.mxu0 0.0
  %1733 = vmatpush1.msra.mxu0 0.0
  %1734 = vmatprep.subr.mxu0 0.0
  %1735 = vmatpush1.msra.mxu0 0.0
  %1736 = vmatprep.subr.mxu0 0.0
  %1737 = vmatpush1.msra.mxu0 0.0
  %1738 = vmatprep.subr.mxu0 0.0
  %1739 = vmatpush1.msra.mxu0 0.0
  %1740 = vmatprep.subr.mxu0 0.0
  %1741 = vmatpush1.msra.mxu0 0.0
  %1742 = vmatprep.subr.mxu0 0.0
  %1743 = vmatpush1.msra.mxu0 0.0
  %1744 = vmatprep.subr.mxu0 0.0
  %1745 = vmatpush1.msra.mxu0 0.0
  %1746 = vmatprep.subr.mxu0 0.0
  %1747 = vmatpush1.msra.mxu0 0.0
  %1748 = vmatprep.subr.mxu0 0.0
  %1749 = vmatpush1.msra.mxu0 0.0
  %1750 = vmatprep.subr.mxu0 0.0
  %1751 = vmatpush1.msra.mxu0 0.0
  %1752 = vmatprep.subr.mxu0 0.0
  %1753 = vmatpush1.msra.mxu0 0.0
  %1754 = vmatprep.subr.mxu0 0.0
  %1755 = vmatpush1.msra.mxu0 0.0
  %1756 = vmatprep.subr.mxu0 0.0
  %1757 = vmatpush1.msra.mxu0 0.0
  %1758 = vmatprep.mubr.f32.mxu0 0.0
  %1759 = vmatmul.mubr.f32.gmra.mrb[0].mxu0 %v454
  %v1760 = vpop.f32.mrb[0].mxu0
  %v1761 = vadd.f32 %v1331, %v1760
  %v1762 = vpop.f32.mrb[0].mxu0
  %1763 = vdwg.mxu0
  %1764 = vmatprep.subr.mxu0 0.0
  %1765 = vmatpush1.msra.mxu0 %v129
  %1766 = vmatprep.subr.mxu0 0.0
  %1767 = vmatpush1.msra.mxu0 %v130
  %1768 = vmatprep.subr.mxu0 0.0
  %1769 = vmatpush1.msra.mxu0 %v131
  %1770 = vmatprep.subr.mxu0 0.0
  %1771 = vmatpush1.msra.mxu0 %v132
  %1772 = vmatprep.subr.mxu0 0.0
  %1773 = vmatpush1.msra.mxu0 0.0
  %1774 = vmatprep.subr.mxu0 0.0
  %1775 = vmatpush1.msra.mxu0 0.0
  %1776 = vmatprep.subr.mxu0 0.0
  %1777 = vmatpush1.msra.mxu0 0.0
  %1778 = vmatprep.subr.mxu0 0.0
  %1779 = vmatpush1.msra.mxu0 0.0
  %1780 = vmatprep.subr.mxu0 0.0
  %1781 = vmatpush1.msra.mxu0 0.0
  %1782 = vmatprep.subr.mxu0 0.0
  %1783 = vmatpush1.msra.mxu0 0.0
  %1784 = vmatprep.subr.mxu0 0.0
  %1785 = vmatpush1.msra.mxu0 0.0
  %1786 = vmatprep.subr.mxu0 0.0
  %1787 = vmatpush1.msra.mxu0 0.0
  %1788 = vmatprep.subr.mxu0 0.0
  %1789 = vmatpush1.msra.mxu0 0.0
  %1790 = vmatprep.subr.mxu0 0.0
  %1791 = vmatpush1.msra.mxu0 0.0
  %1792 = vmatprep.subr.mxu0 0.0
  %1793 = vmatpush1.msra.mxu0 0.0
  %1794 = vmatprep.subr.mxu0 0.0
  %1795 = vmatpush1.msra.mxu0 0.0
  %1796 = vmatprep.subr.mxu0 0.0
  %1797 = vmatpush1.msra.mxu0 0.0
  %1798 = vmatprep.subr.mxu0 0.0
  %1799 = vmatpush1.msra.mxu0 0.0
  %1800 = vmatprep.subr.mxu0 0.0
  %1801 = vmatpush1.msra.mxu0 0.0
  %1802 = vmatprep.subr.mxu0 0.0
  %1803 = vmatpush1.msra.mxu0 0.0
  %1804 = vmatprep.subr.mxu0 0.0
  %1805 = vmatpush1.msra.mxu0 0.0
  %1806 = vmatprep.subr.mxu0 0.0
  %1807 = vmatpush1.msra.mxu0 0.0
  %1808 = vmatprep.subr.mxu0 0.0
  %1809 = vmatpush1.msra.mxu0 0.0
  %1810 = vmatprep.subr.mxu0 0.0
  %1811 = vmatpush1.msra.mxu0 0.0
  %1812 = vmatprep.subr.mxu0 0.0
  %1813 = vmatpush1.msra.mxu0 0.0
  %1814 = vmatprep.subr.mxu0 0.0
  %1815 = vmatpush1.msra.mxu0 0.0
  %1816 = vmatprep.subr.mxu0 0.0
  %1817 = vmatpush1.msra.mxu0 0.0
  %1818 = vmatprep.subr.mxu0 0.0
  %1819 = vmatpush1.msra.mxu0 0.0
  %1820 = vmatprep.subr.mxu0 0.0
  %1821 = vmatpush1.msra.mxu0 0.0
  %1822 = vmatprep.subr.mxu0 0.0
  %1823 = vmatpush1.msra.mxu0 0.0
  %1824 = vmatprep.subr.mxu0 0.0
  %1825 = vmatpush1.msra.mxu0 0.0
  %1826 = vmatprep.subr.mxu0 0.0
  %1827 = vmatpush1.msra.mxu0 0.0
  %1828 = vmatprep.mubr.f32.mxu0 0.0
  %1829 = vmatmul.mubr.f32.gmra.mrb[0].mxu0 %v454
  %v1830 = vpop.f32.mrb[0].mxu0
  %v1831 = vadd.f32 %v1335, %v1830
  %v1832 = vpop.f32.mrb[0].mxu0
  %1833 = vdwg.mxu0
  %1834 = vmatprep.subr.mxu0 0.0
  %1835 = vmatpush1.msra.mxu0 %v133
  %1836 = vmatprep.subr.mxu0 0.0
  %1837 = vmatpush1.msra.mxu0 %v134
  %1838 = vmatprep.subr.mxu0 0.0
  %1839 = vmatpush1.msra.mxu0 %v135
  %1840 = vmatprep.subr.mxu0 0.0
  %1841 = vmatpush1.msra.mxu0 %v136
  %1842 = vmatprep.subr.mxu0 0.0
  %1843 = vmatpush1.msra.mxu0 0.0
  %1844 = vmatprep.subr.mxu0 0.0
  %1845 = vmatpush1.msra.mxu0 0.0
  %1846 = vmatprep.subr.mxu0 0.0
  %1847 = vmatpush1.msra.mxu0 0.0
  %1848 = vmatprep.subr.mxu0 0.0
  %1849 = vmatpush1.msra.mxu0 0.0
  %1850 = vmatprep.subr.mxu0 0.0
  %1851 = vmatpush1.msra.mxu0 0.0
  %1852 = vmatprep.subr.mxu0 0.0
  %1853 = vmatpush1.msra.mxu0 0.0
  %1854 = vmatprep.subr.mxu0 0.0
  %1855 = vmatpush1.msra.mxu0 0.0
  %1856 = vmatprep.subr.mxu0 0.0
  %1857 = vmatpush1.msra.mxu0 0.0
  %1858 = vmatprep.subr.mxu0 0.0
  %1859 = vmatpush1.msra.mxu0 0.0
  %1860 = vmatprep.subr.mxu0 0.0
  %1861 = vmatpush1.msra.mxu0 0.0
  %1862 = vmatprep.subr.mxu0 0.0
  %1863 = vmatpush1.msra.mxu0 0.0
  %1864 = vmatprep.subr.mxu0 0.0
  %1865 = vmatpush1.msra.mxu0 0.0
  %1866 = vmatprep.subr.mxu0 0.0
  %1867 = vmatpush1.msra.mxu0 0.0
  %1868 = vmatprep.subr.mxu0 0.0
  %1869 = vmatpush1.msra.mxu0 0.0
  %1870 = vmatprep.subr.mxu0 0.0
  %1871 = vmatpush1.msra.mxu0 0.0
  %1872 = vmatprep.subr.mxu0 0.0
  %1873 = vmatpush1.msra.mxu0 0.0
  %1874 = vmatprep.subr.mxu0 0.0
  %1875 = vmatpush1.msra.mxu0 0.0
  %1876 = vmatprep.subr.mxu0 0.0
  %1877 = vmatpush1.msra.mxu0 0.0
  %1878 = vmatprep.subr.mxu0 0.0
  %1879 = vmatpush1.msra.mxu0 0.0
  %1880 = vmatprep.subr.mxu0 0.0
  %1881 = vmatpush1.msra.mxu0 0.0
  %1882 = vmatprep.subr.mxu0 0.0
  %1883 = vmatpush1.msra.mxu0 0.0
  %1884 = vmatprep.subr.mxu0 0.0
  %1885 = vmatpush1.msra.mxu0 0.0
  %1886 = vmatprep.subr.mxu0 0.0
  %1887 = vmatpush1.msra.mxu0 0.0
  %1888 = vmatprep.subr.mxu0 0.0
  %1889 = vmatpush1.msra.mxu0 0.0
  %1890 = vmatprep.subr.mxu0 0.0
  %1891 = vmatpush1.msra.mxu0 0.0
  %1892 = vmatprep.subr.mxu0 0.0
  %1893 = vmatpush1.msra.mxu0 0.0
  %1894 = vmatprep.subr.mxu0 0.0
  %1895 = vmatpush1.msra.mxu0 0.0
  %1896 = vmatprep.subr.mxu0 0.0
  %1897 = vmatpush1.msra.mxu0 0.0
  %1898 = vmatprep.mubr.f32.mxu0 0.0
  %1899 = vmatmul.mubr.f32.gmra.mrb[0].mxu0 %v454
  %v1900 = vpop.f32.mrb[0].mxu0
  %v1901 = vadd.f32 %v1339, %v1900
  %v1902 = vpop.f32.mrb[0].mxu0
  %1903 = vdwg.mxu0
  %vm1904 = vcmask 64512
  %v1906 = vsel %vm1904, %v240, 0
  %v1909 = vsel %vm1904, %v827, 0
  %1911 = vmatprep.subr.mxu0 0.0
  %1912 = vmatpush1.xpose.msra.mxu0 %v1909
  %1913 = vmatprep.subr.mxu0 0.0
  %1914 = vmatpush1.xpose.msra.mxu0 0.0
  %1915 = vmatprep.subr.mxu0 0.0
  %1916 = vmatpush1.xpose.msra.mxu0 0.0
  %1917 = vmatprep.subr.mxu0 0.0
  %1918 = vmatpush1.xpose.msra.mxu0 0.0
  %1919 = vmatprep.subr.mxu0 0.0
  %1920 = vmatpush1.xpose.msra.mxu0 0.0
  %1921 = vmatprep.subr.mxu0 0.0
  %1922 = vmatpush1.xpose.msra.mxu0 0.0
  %1923 = vmatprep.subr.mxu0 0.0
  %1924 = vmatpush1.xpose.msra.mxu0 0.0
  %1925 = vmatprep.subr.mxu0 0.0
  %1926 = vmatpush1.xpose.msra.mxu0 0.0
  %1927 = vmatprep.subr.mxu0 0.0
  %1928 = vmatpush1.xpose.msra.mxu0 0.0
  %1929 = vmatprep.subr.mxu0 0.0
  %1930 = vmatpush1.xpose.msra.mxu0 0.0
  %1931 = vmatprep.subr.mxu0 0.0
  %1932 = vmatpush1.xpose.msra.mxu0 0.0
  %1933 = vmatprep.subr.mxu0 0.0
  %1934 = vmatpush1.xpose.msra.mxu0 0.0
  %1935 = vmatprep.subr.mxu0 0.0
  %1936 = vmatpush1.xpose.msra.mxu0 0.0
  %1937 = vmatprep.subr.mxu0 0.0
  %1938 = vmatpush1.xpose.msra.mxu0 0.0
  %1939 = vmatprep.subr.mxu0 0.0
  %1940 = vmatpush1.xpose.msra.mxu0 0.0
  %1941 = vmatprep.subr.mxu0 0.0
  %1942 = vmatpush1.xpose.msra.mxu0 0.0
  %1943 = vmatprep.subr.mxu0 0.0
  %1944 = vmatpush1.xpose.msra.mxu0 0.0
  %1945 = vmatprep.subr.mxu0 0.0
  %1946 = vmatpush1.xpose.msra.mxu0 0.0
  %1947 = vmatprep.subr.mxu0 0.0
  %1948 = vmatpush1.xpose.msra.mxu0 0.0
  %1949 = vmatprep.subr.mxu0 0.0
  %1950 = vmatpush1.xpose.msra.mxu0 0.0
  %1951 = vmatprep.subr.mxu0 0.0
  %1952 = vmatpush1.xpose.msra.mxu0 0.0
  %1953 = vmatprep.subr.mxu0 0.0
  %1954 = vmatpush1.xpose.msra.mxu0 0.0
  %1955 = vmatprep.subr.mxu0 0.0
  %1956 = vmatpush1.xpose.msra.mxu0 0.0
  %1957 = vmatprep.subr.mxu0 0.0
  %1958 = vmatpush1.xpose.msra.mxu0 0.0
  %1959 = vmatprep.subr.mxu0 0.0
  %1960 = vmatpush1.xpose.msra.mxu0 0.0
  %1961 = vmatprep.subr.mxu0 0.0
  %1962 = vmatpush1.xpose.msra.mxu0 0.0
  %1963 = vmatprep.subr.mxu0 0.0
  %1964 = vmatpush1.xpose.msra.mxu0 0.0
  %1965 = vmatprep.subr.mxu0 0.0
  %1966 = vmatpush1.xpose.msra.mxu0 0.0
  %1967 = vmatprep.subr.mxu0 0.0
  %1968 = vmatpush1.xpose.msra.mxu0 0.0
  %1969 = vmatprep.subr.mxu0 0.0
  %1970 = vmatpush1.xpose.msra.mxu0 0.0
  %1971 = vmatprep.subr.mxu0 0.0
  %1972 = vmatpush1.xpose.msra.mxu0 0.0
  %1973 = vmatprep.subr.mxu0 0.0
  %1974 = vmatpush1.xpose.msra.mxu0 0.0
  %1975 = vmatprep.mubr.f32.mxu0 0.0
  %1976 = vmatmul.mubr.f32.gmra.mrb[0].mxu0 %v1906
  %v1977 = vpop.f32.mrb[0].mxu0
  %v1978 = vadd.f32 0.0, %v1977
  %v1979 = vpop.f32.mrb[0].mxu0
  %1980 = vdwg.mxu0
  %v1982 = vsel %vm1904, %v310, 0
  %v1985 = vsel %vm1904, %v897, 0
  %1987 = vmatprep.subr.mxu0 0.0
  %1988 = vmatpush1.xpose.msra.mxu0 %v1985
  %1989 = vmatprep.subr.mxu0 0.0
  %1990 = vmatpush1.xpose.msra.mxu0 0.0
  %1991 = vmatprep.subr.mxu0 0.0
  %1992 = vmatpush1.xpose.msra.mxu0 0.0
  %1993 = vmatprep.subr.mxu0 0.0
  %1994 = vmatpush1.xpose.msra.mxu0 0.0
  %1995 = vmatprep.subr.mxu0 0.0
  %1996 = vmatpush1.xpose.msra.mxu0 0.0
  %1997 = vmatprep.subr.mxu0 0.0
  %1998 = vmatpush1.xpose.msra.mxu0 0.0
  %1999 = vmatprep.subr.mxu0 0.0
  %2000 = vmatpush1.xpose.msra.mxu0 0.0
  %2001 = vmatprep.subr.mxu0 0.0
  %2002 = vmatpush1.xpose.msra.mxu0 0.0
  %2003 = vmatprep.subr.mxu0 0.0
  %2004 = vmatpush1.xpose.msra.mxu0 0.0
  %2005 = vmatprep.subr.mxu0 0.0
  %2006 = vmatpush1.xpose.msra.mxu0 0.0
  %2007 = vmatprep.subr.mxu0 0.0
  %2008 = vmatpush1.xpose.msra.mxu0 0.0
  %2009 = vmatprep.subr.mxu0 0.0
  %2010 = vmatpush1.xpose.msra.mxu0 0.0
  %2011 = vmatprep.subr.mxu0 0.0
  %2012 = vmatpush1.xpose.msra.mxu0 0.0
  %2013 = vmatprep.subr.mxu0 0.0
  %2014 = vmatpush1.xpose.msra.mxu0 0.0
  %2015 = vmatprep.subr.mxu0 0.0
  %2016 = vmatpush1.xpose.msra.mxu0 0.0
  %2017 = vmatprep.subr.mxu0 0.0
  %2018 = vmatpush1.xpose.msra.mxu0 0.0
  %2019 = vmatprep.subr.mxu0 0.0
  %2020 = vmatpush1.xpose.msra.mxu0 0.0
  %2021 = vmatprep.subr.mxu0 0.0
  %2022 = vmatpush1.xpose.msra.mxu0 0.0
  %2023 = vmatprep.subr.mxu0 0.0
  %2024 = vmatpush1.xpose.msra.mxu0 0.0
  %2025 = vmatprep.subr.mxu0 0.0
  %2026 = vmatpush1.xpose.msra.mxu0 0.0
  %2027 = vmatprep.subr.mxu0 0.0
  %2028 = vmatpush1.xpose.msra.mxu0 0.0
  %2029 = vmatprep.subr.mxu0 0.0
  %2030 = vmatpush1.xpose.msra.mxu0 0.0
  %2031 = vmatprep.subr.mxu0 0.0
  %2032 = vmatpush1.xpose.msra.mxu0 0.0
  %2033 = vmatprep.subr.mxu0 0.0
  %2034 = vmatpush1.xpose.msra.mxu0 0.0
  %2035 = vmatprep.subr.mxu0 0.0
  %2036 = vmatpush1.xpose.msra.mxu0 0.0
  %2037 = vmatprep.subr.mxu0 0.0
  %2038 = vmatpush1.xpose.msra.mxu0 0.0
  %2039 = vmatprep.subr.mxu0 0.0
  %2040 = vmatpush1.xpose.msra.mxu0 0.0
  %2041 = vmatprep.subr.mxu0 0.0
  %2042 = vmatpush1.xpose.msra.mxu0 0.0
  %2043 = vmatprep.subr.mxu0 0.0
  %2044 = vmatpush1.xpose.msra.mxu0 0.0
  %2045 = vmatprep.subr.mxu0 0.0
  %2046 = vmatpush1.xpose.msra.mxu0 0.0
  %2047 = vmatprep.subr.mxu0 0.0
  %2048 = vmatpush1.xpose.msra.mxu0 0.0
  %2049 = vmatprep.subr.mxu0 0.0
  %2050 = vmatpush1.xpose.msra.mxu0 0.0
  %2051 = vmatprep.mubr.f32.mxu0 0.0
  %2052 = vmatmul.mubr.f32.gmra.mrb[0].mxu0 %v1982
  %v2053 = vpop.f32.mrb[0].mxu0
  %v2054 = vadd.f32 0.0, %v2053
  %v2055 = vpop.f32.mrb[0].mxu0
  %2056 = vdwg.mxu0
  %v2058 = vsel %vm1904, %v380, 0
  %v2061 = vsel %vm1904, %v967, 0
  %2063 = vmatprep.subr.mxu0 0.0
  %2064 = vmatpush1.xpose.msra.mxu0 %v2061
  %2065 = vmatprep.subr.mxu0 0.0
  %2066 = vmatpush1.xpose.msra.mxu0 0.0
  %2067 = vmatprep.subr.mxu0 0.0
  %2068 = vmatpush1.xpose.msra.mxu0 0.0
  %2069 = vmatprep.subr.mxu0 0.0
  %2070 = vmatpush1.xpose.msra.mxu0 0.0
  %2071 = vmatprep.subr.mxu0 0.0
  %2072 = vmatpush1.xpose.msra.mxu0 0.0
  %2073 = vmatprep.subr.mxu0 0.0
  %2074 = vmatpush1.xpose.msra.mxu0 0.0
  %2075 = vmatprep.subr.mxu0 0.0
  %2076 = vmatpush1.xpose.msra.mxu0 0.0
  %2077 = vmatprep.subr.mxu0 0.0
  %2078 = vmatpush1.xpose.msra.mxu0 0.0
  %2079 = vmatprep.subr.mxu0 0.0
  %2080 = vmatpush1.xpose.msra.mxu0 0.0
  %2081 = vmatprep.subr.mxu0 0.0
  %2082 = vmatpush1.xpose.msra.mxu0 0.0
  %2083 = vmatprep.subr.mxu0 0.0
  %2084 = vmatpush1.xpose.msra.mxu0 0.0
  %2085 = vmatprep.subr.mxu0 0.0
  %2086 = vmatpush1.xpose.msra.mxu0 0.0
  %2087 = vmatprep.subr.mxu0 0.0
  %2088 = vmatpush1.xpose.msra.mxu0 0.0
  %2089 = vmatprep.subr.mxu0 0.0
  %2090 = vmatpush1.xpose.msra.mxu0 0.0
  %2091 = vmatprep.subr.mxu0 0.0
  %2092 = vmatpush1.xpose.msra.mxu0 0.0
  %2093 = vmatprep.subr.mxu0 0.0
  %2094 = vmatpush1.xpose.msra.mxu0 0.0
  %2095 = vmatprep.subr.mxu0 0.0
  %2096 = vmatpush1.xpose.msra.mxu0 0.0
  %2097 = vmatprep.subr.mxu0 0.0
  %2098 = vmatpush1.xpose.msra.mxu0 0.0
  %2099 = vmatprep.subr.mxu0 0.0
  %2100 = vmatpush1.xpose.msra.mxu0 0.0
  %2101 = vmatprep.subr.mxu0 0.0
  %2102 = vmatpush1.xpose.msra.mxu0 0.0
  %2103 = vmatprep.subr.mxu0 0.0
  %2104 = vmatpush1.xpose.msra.mxu0 0.0
  %2105 = vmatprep.subr.mxu0 0.0
  %2106 = vmatpush1.xpose.msra.mxu0 0.0
  %2107 = vmatprep.subr.mxu0 0.0
  %2108 = vmatpush1.xpose.msra.mxu0 0.0
  %2109 = vmatprep.subr.mxu0 0.0
  %2110 = vmatpush1.xpose.msra.mxu0 0.0
  %2111 = vmatprep.subr.mxu0 0.0
  %2112 = vmatpush1.xpose.msra.mxu0 0.0
  %2113 = vmatprep.subr.mxu0 0.0
  %2114 = vmatpush1.xpose.msra.mxu0 0.0
  %2115 = vmatprep.subr.mxu0 0.0
  %2116 = vmatpush1.xpose.msra.mxu0 0.0
  %2117 = vmatprep.subr.mxu0 0.0
  %2118 = vmatpush1.xpose.msra.mxu0 0.0
  %2119 = vmatprep.subr.mxu0 0.0
  %2120 = vmatpush1.xpose.msra.mxu0 0.0
  %2121 = vmatprep.subr.mxu0 0.0
  %2122 = vmatpush1.xpose.msra.mxu0 0.0
  %2123 = vmatprep.subr.mxu0 0.0
  %2124 = vmatpush1.xpose.msra.mxu0 0.0
  %2125 = vmatprep.subr.mxu0 0.0
  %2126 = vmatpush1.xpose.msra.mxu0 0.0
  %2127 = vmatprep.mubr.f32.mxu0 0.0
  %2128 = vmatmul.mubr.f32.gmra.mrb[0].mxu0 %v2058
  %v2129 = vpop.f32.mrb[0].mxu0
  %v2130 = vadd.f32 0.0, %v2129
  %v2131 = vpop.f32.mrb[0].mxu0
  %2132 = vdwg.mxu0
  %v2134 = vsel %vm1904, %v450, 0
  %v2137 = vsel %vm1904, %v1037, 0
  %2139 = vmatprep.subr.mxu0 0.0
  %2140 = vmatpush1.xpose.msra.mxu0 %v2137
  %2141 = vmatprep.subr.mxu0 0.0
  %2142 = vmatpush1.xpose.msra.mxu0 0.0
  %2143 = vmatprep.subr.mxu0 0.0
  %2144 = vmatpush1.xpose.msra.mxu0 0.0
  %2145 = vmatprep.subr.mxu0 0.0
  %2146 = vmatpush1.xpose.msra.mxu0 0.0
  %2147 = vmatprep.subr.mxu0 0.0
  %2148 = vmatpush1.xpose.msra.mxu0 0.0
  %2149 = vmatprep.subr.mxu0 0.0
  %2150 = vmatpush1.xpose.msra.mxu0 0.0
  %2151 = vmatprep.subr.mxu0 0.0
  %2152 = vmatpush1.xpose.msra.mxu0 0.0
  %2153 = vmatprep.subr.mxu0 0.0
  %2154 = vmatpush1.xpose.msra.mxu0 0.0
  %2155 = vmatprep.subr.mxu0 0.0
  %2156 = vmatpush1.xpose.msra.mxu0 0.0
  %2157 = vmatprep.subr.mxu0 0.0
  %2158 = vmatpush1.xpose.msra.mxu0 0.0
  %2159 = vmatprep.subr.mxu0 0.0
  %2160 = vmatpush1.xpose.msra.mxu0 0.0
  %2161 = vmatprep.subr.mxu0 0.0
  %2162 = vmatpush1.xpose.msra.mxu0 0.0
  %2163 = vmatprep.subr.mxu0 0.0
  %2164 = vmatpush1.xpose.msra.mxu0 0.0
  %2165 = vmatprep.subr.mxu0 0.0
  %2166 = vmatpush1.xpose.msra.mxu0 0.0
  %2167 = vmatprep.subr.mxu0 0.0
  %2168 = vmatpush1.xpose.msra.mxu0 0.0
  %2169 = vmatprep.subr.mxu0 0.0
  %2170 = vmatpush1.xpose.msra.mxu0 0.0
  %2171 = vmatprep.subr.mxu0 0.0
  %2172 = vmatpush1.xpose.msra.mxu0 0.0
  %2173 = vmatprep.subr.mxu0 0.0
  %2174 = vmatpush1.xpose.msra.mxu0 0.0
  %2175 = vmatprep.subr.mxu0 0.0
  %2176 = vmatpush1.xpose.msra.mxu0 0.0
  %2177 = vmatprep.subr.mxu0 0.0
  %2178 = vmatpush1.xpose.msra.mxu0 0.0
  %2179 = vmatprep.subr.mxu0 0.0
  %2180 = vmatpush1.xpose.msra.mxu0 0.0
  %2181 = vmatprep.subr.mxu0 0.0
  %2182 = vmatpush1.xpose.msra.mxu0 0.0
  %2183 = vmatprep.subr.mxu0 0.0
  %2184 = vmatpush1.xpose.msra.mxu0 0.0
  %2185 = vmatprep.subr.mxu0 0.0
  %2186 = vmatpush1.xpose.msra.mxu0 0.0
  %2187 = vmatprep.subr.mxu0 0.0
  %2188 = vmatpush1.xpose.msra.mxu0 0.0
  %2189 = vmatprep.subr.mxu0 0.0
  %2190 = vmatpush1.xpose.msra.mxu0 0.0
  %2191 = vmatprep.subr.mxu0 0.0
  %2192 = vmatpush1.xpose.msra.mxu0 0.0
  %2193 = vmatprep.subr.mxu0 0.0
  %2194 = vmatpush1.xpose.msra.mxu0 0.0
  %2195 = vmatprep.subr.mxu0 0.0
  %2196 = vmatpush1.xpose.msra.mxu0 0.0
  %2197 = vmatprep.subr.mxu0 0.0
  %2198 = vmatpush1.xpose.msra.mxu0 0.0
  %2199 = vmatprep.subr.mxu0 0.0
  %2200 = vmatpush1.xpose.msra.mxu0 0.0
  %2201 = vmatprep.subr.mxu0 0.0
  %2202 = vmatpush1.xpose.msra.mxu0 0.0
  %2203 = vmatprep.mubr.f32.mxu0 0.0
  %2204 = vmatmul.mubr.f32.gmra.mrb[0].mxu0 %v2134
  %v2205 = vpop.f32.mrb[0].mxu0
  %v2206 = vadd.f32 0.0, %v2205
  %v2207 = vpop.f32.mrb[0].mxu0
  %2208 = vdwg.mxu0
  %v2210 = vsel %vm1904, %v523, 0
  %v2213 = vsel %vm1904, %v1107, 0
  %2215 = vmatprep.subr.mxu0 0.0
  %2216 = vmatpush1.xpose.msra.mxu0 %v2213
  %2217 = vmatprep.subr.mxu0 0.0
  %2218 = vmatpush1.xpose.msra.mxu0 0.0
  %2219 = vmatprep.subr.mxu0 0.0
  %2220 = vmatpush1.xpose.msra.mxu0 0.0
  %2221 = vmatprep.subr.mxu0 0.0
  %2222 = vmatpush1.xpose.msra.mxu0 0.0
  %2223 = vmatprep.subr.mxu0 0.0
  %2224 = vmatpush1.xpose.msra.mxu0 0.0
  %2225 = vmatprep.subr.mxu0 0.0
  %2226 = vmatpush1.xpose.msra.mxu0 0.0
  %2227 = vmatprep.subr.mxu0 0.0
  %2228 = vmatpush1.xpose.msra.mxu0 0.0
  %2229 = vmatprep.subr.mxu0 0.0
  %2230 = vmatpush1.xpose.msra.mxu0 0.0
  %2231 = vmatprep.subr.mxu0 0.0
  %2232 = vmatpush1.xpose.msra.mxu0 0.0
  %2233 = vmatprep.subr.mxu0 0.0
  %2234 = vmatpush1.xpose.msra.mxu0 0.0
  %2235 = vmatprep.subr.mxu0 0.0
  %2236 = vmatpush1.xpose.msra.mxu0 0.0
  %2237 = vmatprep.subr.mxu0 0.0
  %2238 = vmatpush1.xpose.msra.mxu0 0.0
  %2239 = vmatprep.subr.mxu0 0.0
  %2240 = vmatpush1.xpose.msra.mxu0 0.0
  %2241 = vmatprep.subr.mxu0 0.0
  %2242 = vmatpush1.xpose.msra.mxu0 0.0
  %2243 = vmatprep.subr.mxu0 0.0
  %2244 = vmatpush1.xpose.msra.mxu0 0.0
  %2245 = vmatprep.subr.mxu0 0.0
  %2246 = vmatpush1.xpose.msra.mxu0 0.0
  %2247 = vmatprep.subr.mxu0 0.0
  %2248 = vmatpush1.xpose.msra.mxu0 0.0
  %2249 = vmatprep.subr.mxu0 0.0
  %2250 = vmatpush1.xpose.msra.mxu0 0.0
  %2251 = vmatprep.subr.mxu0 0.0
  %2252 = vmatpush1.xpose.msra.mxu0 0.0
  %2253 = vmatprep.subr.mxu0 0.0
  %2254 = vmatpush1.xpose.msra.mxu0 0.0
  %2255 = vmatprep.subr.mxu0 0.0
  %2256 = vmatpush1.xpose.msra.mxu0 0.0
  %2257 = vmatprep.subr.mxu0 0.0
  %2258 = vmatpush1.xpose.msra.mxu0 0.0
  %2259 = vmatprep.subr.mxu0 0.0
  %2260 = vmatpush1.xpose.msra.mxu0 0.0
  %2261 = vmatprep.subr.mxu0 0.0
  %2262 = vmatpush1.xpose.msra.mxu0 0.0
  %2263 = vmatprep.subr.mxu0 0.0
  %2264 = vmatpush1.xpose.msra.mxu0 0.0
  %2265 = vmatprep.subr.mxu0 0.0
  %2266 = vmatpush1.xpose.msra.mxu0 0.0
  %2267 = vmatprep.subr.mxu0 0.0
  %2268 = vmatpush1.xpose.msra.mxu0 0.0
  %2269 = vmatprep.subr.mxu0 0.0
  %2270 = vmatpush1.xpose.msra.mxu0 0.0
  %2271 = vmatprep.subr.mxu0 0.0
  %2272 = vmatpush1.xpose.msra.mxu0 0.0
  %2273 = vmatprep.subr.mxu0 0.0
  %2274 = vmatpush1.xpose.msra.mxu0 0.0
  %2275 = vmatprep.subr.mxu0 0.0
  %2276 = vmatpush1.xpose.msra.mxu0 0.0
  %2277 = vmatprep.subr.mxu0 0.0
  %2278 = vmatpush1.xpose.msra.mxu0 0.0
  %2279 = vmatprep.mubr.f32.mxu0 0.0
  %2280 = vmatmul.mubr.f32.gmra.mrb[0].mxu0 %v2210
  %v2281 = vpop.f32.mrb[0].mxu0
  %v2282 = vadd.f32 0.0, %v2281
  %v2283 = vpop.f32.mrb[0].mxu0
  %2284 = vdwg.mxu0
  %v2286 = vsel %vm1904, %v593, 0
  %v2289 = vsel %vm1904, %v1177, 0
  %2291 = vmatprep.subr.mxu0 0.0
  %2292 = vmatpush1.xpose.msra.mxu0 %v2289
  %2293 = vmatprep.subr.mxu0 0.0
  %2294 = vmatpush1.xpose.msra.mxu0 0.0
  %2295 = vmatprep.subr.mxu0 0.0
  %2296 = vmatpush1.xpose.msra.mxu0 0.0
  %2297 = vmatprep.subr.mxu0 0.0
  %2298 = vmatpush1.xpose.msra.mxu0 0.0
  %2299 = vmatprep.subr.mxu0 0.0
  %2300 = vmatpush1.xpose.msra.mxu0 0.0
  %2301 = vmatprep.subr.mxu0 0.0
  %2302 = vmatpush1.xpose.msra.mxu0 0.0
  %2303 = vmatprep.subr.mxu0 0.0
  %2304 = vmatpush1.xpose.msra.mxu0 0.0
  %2305 = vmatprep.subr.mxu0 0.0
  %2306 = vmatpush1.xpose.msra.mxu0 0.0
  %2307 = vmatprep.subr.mxu0 0.0
  %2308 = vmatpush1.xpose.msra.mxu0 0.0
  %2309 = vmatprep.subr.mxu0 0.0
  %2310 = vmatpush1.xpose.msra.mxu0 0.0
  %2311 = vmatprep.subr.mxu0 0.0
  %2312 = vmatpush1.xpose.msra.mxu0 0.0
  %2313 = vmatprep.subr.mxu0 0.0
  %2314 = vmatpush1.xpose.msra.mxu0 0.0
  %2315 = vmatprep.subr.mxu0 0.0
  %2316 = vmatpush1.xpose.msra.mxu0 0.0
  %2317 = vmatprep.subr.mxu0 0.0
  %2318 = vmatpush1.xpose.msra.mxu0 0.0
  %2319 = vmatprep.subr.mxu0 0.0
  %2320 = vmatpush1.xpose.msra.mxu0 0.0
  %2321 = vmatprep.subr.mxu0 0.0
  %2322 = vmatpush1.xpose.msra.mxu0 0.0
  %2323 = vmatprep.subr.mxu0 0.0
  %2324 = vmatpush1.xpose.msra.mxu0 0.0
  %2325 = vmatprep.subr.mxu0 0.0
  %2326 = vmatpush1.xpose.msra.mxu0 0.0
  %2327 = vmatprep.subr.mxu0 0.0
  %2328 = vmatpush1.xpose.msra.mxu0 0.0
  %2329 = vmatprep.subr.mxu0 0.0
  %2330 = vmatpush1.xpose.msra.mxu0 0.0
  %2331 = vmatprep.subr.mxu0 0.0
  %2332 = vmatpush1.xpose.msra.mxu0 0.0
  %2333 = vmatprep.subr.mxu0 0.0
  %2334 = vmatpush1.xpose.msra.mxu0 0.0
  %2335 = vmatprep.subr.mxu0 0.0
  %2336 = vmatpush1.xpose.msra.mxu0 0.0
  %2337 = vmatprep.subr.mxu0 0.0
  %2338 = vmatpush1.xpose.msra.mxu0 0.0
  %2339 = vmatprep.subr.mxu0 0.0
  %2340 = vmatpush1.xpose.msra.mxu0 0.0
  %2341 = vmatprep.subr.mxu0 0.0
  %2342 = vmatpush1.xpose.msra.mxu0 0.0
  %2343 = vmatprep.subr.mxu0 0.0
  %2344 = vmatpush1.xpose.msra.mxu0 0.0
  %2345 = vmatprep.subr.mxu0 0.0
  %2346 = vmatpush1.xpose.msra.mxu0 0.0
  %2347 = vmatprep.subr.mxu0 0.0
  %2348 = vmatpush1.xpose.msra.mxu0 0.0
  %2349 = vmatprep.subr.mxu0 0.0
  %2350 = vmatpush1.xpose.msra.mxu0 0.0
  %2351 = vmatprep.subr.mxu0 0.0
  %2352 = vmatpush1.xpose.msra.mxu0 0.0
  %2353 = vmatprep.subr.mxu0 0.0
  %2354 = vmatpush1.xpose.msra.mxu0 0.0
  %2355 = vmatprep.mubr.f32.mxu0 0.0
  %2356 = vmatmul.mubr.f32.gmra.mrb[0].mxu0 %v2286
  %v2357 = vpop.f32.mrb[0].mxu0
  %v2358 = vadd.f32 0.0, %v2357
  %v2359 = vpop.f32.mrb[0].mxu0
  %2360 = vdwg.mxu0
  %v2362 = vsel %vm1904, %v663, 0
  %v2365 = vsel %vm1904, %v1247, 0
  %2367 = vmatprep.subr.mxu0 0.0
  %2368 = vmatpush1.xpose.msra.mxu0 %v2365
  %2369 = vmatprep.subr.mxu0 0.0
  %2370 = vmatpush1.xpose.msra.mxu0 0.0
  %2371 = vmatprep.subr.mxu0 0.0
  %2372 = vmatpush1.xpose.msra.mxu0 0.0
  %2373 = vmatprep.subr.mxu0 0.0
  %2374 = vmatpush1.xpose.msra.mxu0 0.0
  %2375 = vmatprep.subr.mxu0 0.0
  %2376 = vmatpush1.xpose.msra.mxu0 0.0
  %2377 = vmatprep.subr.mxu0 0.0
  %2378 = vmatpush1.xpose.msra.mxu0 0.0
  %2379 = vmatprep.subr.mxu0 0.0
  %2380 = vmatpush1.xpose.msra.mxu0 0.0
  %2381 = vmatprep.subr.mxu0 0.0
  %2382 = vmatpush1.xpose.msra.mxu0 0.0
  %2383 = vmatprep.subr.mxu0 0.0
  %2384 = vmatpush1.xpose.msra.mxu0 0.0
  %2385 = vmatprep.subr.mxu0 0.0
  %2386 = vmatpush1.xpose.msra.mxu0 0.0
  %2387 = vmatprep.subr.mxu0 0.0
  %2388 = vmatpush1.xpose.msra.mxu0 0.0
  %2389 = vmatprep.subr.mxu0 0.0
  %2390 = vmatpush1.xpose.msra.mxu0 0.0
  %2391 = vmatprep.subr.mxu0 0.0
  %2392 = vmatpush1.xpose.msra.mxu0 0.0
  %2393 = vmatprep.subr.mxu0 0.0
  %2394 = vmatpush1.xpose.msra.mxu0 0.0
  %2395 = vmatprep.subr.mxu0 0.0
  %2396 = vmatpush1.xpose.msra.mxu0 0.0
  %2397 = vmatprep.subr.mxu0 0.0
  %2398 = vmatpush1.xpose.msra.mxu0 0.0
  %2399 = vmatprep.subr.mxu0 0.0
  %2400 = vmatpush1.xpose.msra.mxu0 0.0
  %2401 = vmatprep.subr.mxu0 0.0
  %2402 = vmatpush1.xpose.msra.mxu0 0.0
  %2403 = vmatprep.subr.mxu0 0.0
  %2404 = vmatpush1.xpose.msra.mxu0 0.0
  %2405 = vmatprep.subr.mxu0 0.0
  %2406 = vmatpush1.xpose.msra.mxu0 0.0
  %2407 = vmatprep.subr.mxu0 0.0
  %2408 = vmatpush1.xpose.msra.mxu0 0.0
  %2409 = vmatprep.subr.mxu0 0.0
  %2410 = vmatpush1.xpose.msra.mxu0 0.0
  %2411 = vmatprep.subr.mxu0 0.0
  %2412 = vmatpush1.xpose.msra.mxu0 0.0
  %2413 = vmatprep.subr.mxu0 0.0
  %2414 = vmatpush1.xpose.msra.mxu0 0.0
  %2415 = vmatprep.subr.mxu0 0.0
  %2416 = vmatpush1.xpose.msra.mxu0 0.0
  %2417 = vmatprep.subr.mxu0 0.0
  %2418 = vmatpush1.xpose.msra.mxu0 0.0
  %2419 = vmatprep.subr.mxu0 0.0
  %2420 = vmatpush1.xpose.msra.mxu0 0.0
  %2421 = vmatprep.subr.mxu0 0.0
  %2422 = vmatpush1.xpose.msra.mxu0 0.0
  %2423 = vmatprep.subr.mxu0 0.0
  %2424 = vmatpush1.xpose.msra.mxu0 0.0
  %2425 = vmatprep.subr.mxu0 0.0
  %2426 = vmatpush1.xpose.msra.mxu0 0.0
  %2427 = vmatprep.subr.mxu0 0.0
  %2428 = vmatpush1.xpose.msra.mxu0 0.0
  %2429 = vmatprep.subr.mxu0 0.0
  %2430 = vmatpush1.xpose.msra.mxu0 0.0
  %2431 = vmatprep.mubr.f32.mxu0 0.0
  %2432 = vmatmul.mubr.f32.gmra.mrb[0].mxu0 %v2362
  %v2433 = vpop.f32.mrb[0].mxu0
  %v2434 = vadd.f32 0.0, %v2433
  %v2435 = vpop.f32.mrb[0].mxu0
  %2436 = vdwg.mxu0
  %v2438 = vsel %vm1904, %v733, 0
  %v2441 = vsel %vm1904, %v1317, 0
  %2443 = vmatprep.subr.mxu0 0.0
  %2444 = vmatpush1.xpose.msra.mxu0 %v2441
  %2445 = vmatprep.subr.mxu0 0.0
  %2446 = vmatpush1.xpose.msra.mxu0 0.0
  %2447 = vmatprep.subr.mxu0 0.0
  %2448 = vmatpush1.xpose.msra.mxu0 0.0
  %2449 = vmatprep.subr.mxu0 0.0
  %2450 = vmatpush1.xpose.msra.mxu0 0.0
  %2451 = vmatprep.subr.mxu0 0.0
  %2452 = vmatpush1.xpose.msra.mxu0 0.0
  %2453 = vmatprep.subr.mxu0 0.0
  %2454 = vmatpush1.xpose.msra.mxu0 0.0
  %2455 = vmatprep.subr.mxu0 0.0
  %2456 = vmatpush1.xpose.msra.mxu0 0.0
  %2457 = vmatprep.subr.mxu0 0.0
  %2458 = vmatpush1.xpose.msra.mxu0 0.0
  %2459 = vmatprep.subr.mxu0 0.0
  %2460 = vmatpush1.xpose.msra.mxu0 0.0
  %2461 = vmatprep.subr.mxu0 0.0
  %2462 = vmatpush1.xpose.msra.mxu0 0.0
  %2463 = vmatprep.subr.mxu0 0.0
  %2464 = vmatpush1.xpose.msra.mxu0 0.0
  %2465 = vmatprep.subr.mxu0 0.0
  %2466 = vmatpush1.xpose.msra.mxu0 0.0
  %2467 = vmatprep.subr.mxu0 0.0
  %2468 = vmatpush1.xpose.msra.mxu0 0.0
  %2469 = vmatprep.subr.mxu0 0.0
  %2470 = vmatpush1.xpose.msra.mxu0 0.0
  %2471 = vmatprep.subr.mxu0 0.0
  %2472 = vmatpush1.xpose.msra.mxu0 0.0
  %2473 = vmatprep.subr.mxu0 0.0
  %2474 = vmatpush1.xpose.msra.mxu0 0.0
  %2475 = vmatprep.subr.mxu0 0.0
  %2476 = vmatpush1.xpose.msra.mxu0 0.0
  %2477 = vmatprep.subr.mxu0 0.0
  %2478 = vmatpush1.xpose.msra.mxu0 0.0
  %2479 = vmatprep.subr.mxu0 0.0
  %2480 = vmatpush1.xpose.msra.mxu0 0.0
  %2481 = vmatprep.subr.mxu0 0.0
  %2482 = vmatpush1.xpose.msra.mxu0 0.0
  %2483 = vmatprep.subr.mxu0 0.0
  %2484 = vmatpush1.xpose.msra.mxu0 0.0
  %2485 = vmatprep.subr.mxu0 0.0
  %2486 = vmatpush1.xpose.msra.mxu0 0.0
  %2487 = vmatprep.subr.mxu0 0.0
  %2488 = vmatpush1.xpose.msra.mxu0 0.0
  %2489 = vmatprep.subr.mxu0 0.0
  %2490 = vmatpush1.xpose.msra.mxu0 0.0
  %2491 = vmatprep.subr.mxu0 0.0
  %2492 = vmatpush1.xpose.msra.mxu0 0.0
  %2493 = vmatprep.subr.mxu0 0.0
  %2494 = vmatpush1.xpose.msra.mxu0 0.0
  %2495 = vmatprep.subr.mxu0 0.0
  %2496 = vmatpush1.xpose.msra.mxu0 0.0
  %2497 = vmatprep.subr.mxu0 0.0
  %2498 = vmatpush1.xpose.msra.mxu0 0.0
  %2499 = vmatprep.subr.mxu0 0.0
  %2500 = vmatpush1.xpose.msra.mxu0 0.0
  %2501 = vmatprep.subr.mxu0 0.0
  %2502 = vmatpush1.xpose.msra.mxu0 0.0
  %2503 = vmatprep.subr.mxu0 0.0
  %2504 = vmatpush1.xpose.msra.mxu0 0.0
  %2505 = vmatprep.subr.mxu0 0.0
  %2506 = vmatpush1.xpose.msra.mxu0 0.0
  %2507 = vmatprep.mubr.f32.mxu0 0.0
  %2508 = vmatmul.mubr.f32.gmra.mrb[0].mxu0 %v2438
  %v2509 = vpop.f32.mrb[0].mxu0
  %v2510 = vadd.f32 0.0, %v2509
  %v2511 = vpop.f32.mrb[0].mxu0
  %2512 = vdwg.mxu0
  %v2513 = vmul.f32 %v1978, 0.35355338
  %v2514 = vmul.f32 %v2054, 0.35355338
  %v2515 = vmul.f32 %v2130, 0.35355338
  %v2516 = vmul.f32 %v2206, 0.35355338
  %v2517 = vmul.f32 %v2282, 0.35355338
  %v2518 = vmul.f32 %v2358, 0.35355338
  %v2519 = vmul.f32 %v2434, 0.35355338
  %v2520 = vmul.f32 %v2510, 0.35355338
  %v2523 = vlaneseq
  %v2524 = vshrl.u32 %v2523, 7
  %v2525 = vsub.s32 0, %v2524
  %v2526 = vrot.slane %v77, %v2525
  %v2527 = vlaneseq
  %v2528 = vshrl.u32 %v2527, 7
  %v2529 = vsub.s32 0, %v2528
  %v2530 = vrot.slane %v78, %v2529
  %v2533 = vadd.f32 %v2513, %v2526
  %v2534 = vadd.f32 %v2514, %v2526
  %v2535 = vadd.f32 %v2515, %v2526
  %v2536 = vadd.f32 %v2516, %v2526
  %v2537 = vadd.f32 %v2517, %v2530
  %v2538 = vadd.f32 %v2518, %v2530
  %v2539 = vadd.f32 %v2519, %v2530
  %v2540 = vadd.f32 %v2520, %v2530
  %v2541 = vsel %vm1904, %v2533, -inf
  %2542 = vmax.xlane.f32.xlu0 %v2541
  %v2543 = vpop.xlane.xlu0 %2542
  %v2544 = vsel %vm1904, %v2534, -inf
  %2545 = vmax.xlane.f32.xlu0 %v2544
  %v2546 = vpop.xlane.xlu0 %2545
  %v2547 = vsel %vm1904, %v2535, -inf
  %2548 = vmax.xlane.f32.xlu0 %v2547
  %v2549 = vpop.xlane.xlu0 %2548
  %v2550 = vsel %vm1904, %v2536, -inf
  %2551 = vmax.xlane.f32.xlu0 %v2550
  %v2552 = vpop.xlane.xlu0 %2551
  %v2553 = vsel %vm1904, %v2537, -inf
  %2554 = vmax.xlane.f32.xlu0 %v2553
  %v2555 = vpop.xlane.xlu0 %2554
  %v2556 = vsel %vm1904, %v2538, -inf
  %2557 = vmax.xlane.f32.xlu0 %v2556
  %v2558 = vpop.xlane.xlu0 %2557
  %v2559 = vsel %vm1904, %v2539, -inf
  %2560 = vmax.xlane.f32.xlu0 %v2559
  %v2561 = vpop.xlane.xlu0 %2560
  %v2562 = vsel %vm1904, %v2540, -inf
  %2563 = vmax.xlane.f32.xlu0 %v2562
  %v2564 = vpop.xlane.xlu0 %2563
  %v2565 = vsub.f32 %v2533, %v2543
  %v2566 = vsub.f32 %v2534, %v2546
  %v2567 = vsub.f32 %v2535, %v2549
  %v2568 = vsub.f32 %v2536, %v2552
  %v2569 = vsub.f32 %v2537, %v2555
  %v2570 = vsub.f32 %v2538, %v2558
  %v2571 = vsub.f32 %v2539, %v2561
  %v2572 = vsub.f32 %v2540, %v2564
  %v2573 = vmul.f32 %v2565, 1.442695
  %v2574 = vpow.pop %v2573
  %v2575 = vmul.f32 %v2566, 1.442695
  %v2576 = vpow.pop %v2575
  %v2577 = vmul.f32 %v2567, 1.442695
  %v2578 = vpow.pop %v2577
  %v2579 = vmul.f32 %v2568, 1.442695
  %v2580 = vpow.pop %v2579
  %v2581 = vmul.f32 %v2569, 1.442695
  %v2582 = vpow.pop %v2581
  %v2583 = vmul.f32 %v2570, 1.442695
  %v2584 = vpow.pop %v2583
  %v2585 = vmul.f32 %v2571, 1.442695
  %v2586 = vpow.pop %v2585
  %v2587 = vmul.f32 %v2572, 1.442695
  %v2588 = vpow.pop %v2587
  %v2589 = vsel %vm1904, %v2574, 0.0
  %2590 = vadd.xlane.f32.xlu0 %v2589
  %v2591 = vpop.xlane.xlu0 %2590
  %v2592 = vsel %vm1904, %v2576, 0.0
  %2593 = vadd.xlane.f32.xlu0 %v2592
  %v2594 = vpop.xlane.xlu0 %2593
  %v2595 = vsel %vm1904, %v2578, 0.0
  %2596 = vadd.xlane.f32.xlu0 %v2595
  %v2597 = vpop.xlane.xlu0 %2596
  %v2598 = vsel %vm1904, %v2580, 0.0
  %2599 = vadd.xlane.f32.xlu0 %v2598
  %v2600 = vpop.xlane.xlu0 %2599
  %v2601 = vsel %vm1904, %v2582, 0.0
  %2602 = vadd.xlane.f32.xlu0 %v2601
  %v2603 = vpop.xlane.xlu0 %2602
  %v2604 = vsel %vm1904, %v2584, 0.0
  %2605 = vadd.xlane.f32.xlu0 %v2604
  %v2606 = vpop.xlane.xlu0 %2605
  %v2607 = vsel %vm1904, %v2586, 0.0
  %2608 = vadd.xlane.f32.xlu0 %v2607
  %v2609 = vpop.xlane.xlu0 %2608
  %v2610 = vsel %vm1904, %v2588, 0.0
  %2611 = vadd.xlane.f32.xlu0 %v2610
  %v2612 = vpop.xlane.xlu0 %2611
  %v2613 = vrcp.pop %v2591
  %v2614 = vrcp.pop %v2594
  %v2615 = vrcp.pop %v2597
  %v2616 = vrcp.pop %v2600
  %v2617 = vrcp.pop %v2603
  %v2618 = vrcp.pop %v2606
  %v2619 = vrcp.pop %v2609
  %v2620 = vrcp.pop %v2612
  %v2621 = vmul.f32 %v2574, %v2613
  %v2622 = vmul.f32 %v2576, %v2614
  %v2623 = vmul.f32 %v2578, %v2615
  %v2624 = vmul.f32 %v2580, %v2616
  %v2625 = vmul.f32 %v2582, %v2617
  %v2626 = vmul.f32 %v2584, %v2618
  %v2627 = vmul.f32 %v2586, %v2619
  %v2628 = vmul.f32 %v2588, %v2620
  %v2630 = vsel %vm1904, %v2621, 0
  %2632 = vmatprep.subr.mxu0 0.0
  %2633 = vmatpush1.msra.mxu0 %v1411
  %2634 = vmatprep.subr.mxu0 0.0
  %2635 = vmatpush1.msra.mxu0 0.0
  %2636 = vmatprep.subr.mxu0 0.0
  %2637 = vmatpush1.msra.mxu0 0.0
  %2638 = vmatprep.subr.mxu0 0.0
  %2639 = vmatpush1.msra.mxu0 0.0
  %2640 = vmatprep.subr.mxu0 0.0
  %2641 = vmatpush1.msra.mxu0 0.0
  %2642 = vmatprep.subr.mxu0 0.0
  %2643 = vmatpush1.msra.mxu0 0.0
  %2644 = vmatprep.subr.mxu0 0.0
  %2645 = vmatpush1.msra.mxu0 0.0
  %2646 = vmatprep.subr.mxu0 0.0
  %2647 = vmatpush1.msra.mxu0 0.0
  %2648 = vmatprep.subr.mxu0 0.0
  %2649 = vmatpush1.msra.mxu0 0.0
  %2650 = vmatprep.subr.mxu0 0.0
  %2651 = vmatpush1.msra.mxu0 0.0
  %2652 = vmatprep.subr.mxu0 0.0
  %2653 = vmatpush1.msra.mxu0 0.0
  %2654 = vmatprep.subr.mxu0 0.0
  %2655 = vmatpush1.msra.mxu0 0.0
  %2656 = vmatprep.subr.mxu0 0.0
  %2657 = vmatpush1.msra.mxu0 0.0
  %2658 = vmatprep.subr.mxu0 0.0
  %2659 = vmatpush1.msra.mxu0 0.0
  %2660 = vmatprep.subr.mxu0 0.0
  %2661 = vmatpush1.msra.mxu0 0.0
  %2662 = vmatprep.subr.mxu0 0.0
  %2663 = vmatpush1.msra.mxu0 0.0
  %2664 = vmatprep.subr.mxu0 0.0
  %2665 = vmatpush1.msra.mxu0 0.0
  %2666 = vmatprep.subr.mxu0 0.0
  %2667 = vmatpush1.msra.mxu0 0.0
  %2668 = vmatprep.subr.mxu0 0.0
  %2669 = vmatpush1.msra.mxu0 0.0
  %2670 = vmatprep.subr.mxu0 0.0
  %2671 = vmatpush1.msra.mxu0 0.0
  %2672 = vmatprep.subr.mxu0 0.0
  %2673 = vmatpush1.msra.mxu0 0.0
  %2674 = vmatprep.subr.mxu0 0.0
  %2675 = vmatpush1.msra.mxu0 0.0
  %2676 = vmatprep.subr.mxu0 0.0
  %2677 = vmatpush1.msra.mxu0 0.0
  %2678 = vmatprep.subr.mxu0 0.0
  %2679 = vmatpush1.msra.mxu0 0.0
  %2680 = vmatprep.subr.mxu0 0.0
  %2681 = vmatpush1.msra.mxu0 0.0
  %2682 = vmatprep.subr.mxu0 0.0
  %2683 = vmatpush1.msra.mxu0 0.0
  %2684 = vmatprep.subr.mxu0 0.0
  %2685 = vmatpush1.msra.mxu0 0.0
  %2686 = vmatprep.subr.mxu0 0.0
  %2687 = vmatpush1.msra.mxu0 0.0
  %2688 = vmatprep.subr.mxu0 0.0
  %2689 = vmatpush1.msra.mxu0 0.0
  %2690 = vmatprep.subr.mxu0 0.0
  %2691 = vmatpush1.msra.mxu0 0.0
  %2692 = vmatprep.subr.mxu0 0.0
  %2693 = vmatpush1.msra.mxu0 0.0
  %2694 = vmatprep.subr.mxu0 0.0
  %2695 = vmatpush1.msra.mxu0 0.0
  %2696 = vmatprep.mubr.f32.mxu0 0.0
  %2697 = vmatmul.mubr.f32.gmra.mrb[0].mxu0 %v2630
  %v2698 = vpop.f32.mrb[0].mxu0
  %v2699 = vadd.f32 0.0, %v2698
  %v2700 = vpop.f32.mrb[0].mxu0
  %2701 = vdwg.mxu0
  %v2703 = vsel %vm1904, %v2622, 0
  %2705 = vmatprep.subr.mxu0 0.0
  %2706 = vmatpush1.msra.mxu0 %v1481
  %2707 = vmatprep.subr.mxu0 0.0
  %2708 = vmatpush1.msra.mxu0 0.0
  %2709 = vmatprep.subr.mxu0 0.0
  %2710 = vmatpush1.msra.mxu0 0.0
  %2711 = vmatprep.subr.mxu0 0.0
  %2712 = vmatpush1.msra.mxu0 0.0
  %2713 = vmatprep.subr.mxu0 0.0
  %2714 = vmatpush1.msra.mxu0 0.0
  %2715 = vmatprep.subr.mxu0 0.0
  %2716 = vmatpush1.msra.mxu0 0.0
  %2717 = vmatprep.subr.mxu0 0.0
  %2718 = vmatpush1.msra.mxu0 0.0
  %2719 = vmatprep.subr.mxu0 0.0
  %2720 = vmatpush1.msra.mxu0 0.0
  %2721 = vmatprep.subr.mxu0 0.0
  %2722 = vmatpush1.msra.mxu0 0.0
  %2723 = vmatprep.subr.mxu0 0.0
  %2724 = vmatpush1.msra.mxu0 0.0
  %2725 = vmatprep.subr.mxu0 0.0
  %2726 = vmatpush1.msra.mxu0 0.0
  %2727 = vmatprep.subr.mxu0 0.0
  %2728 = vmatpush1.msra.mxu0 0.0
  %2729 = vmatprep.subr.mxu0 0.0
  %2730 = vmatpush1.msra.mxu0 0.0
  %2731 = vmatprep.subr.mxu0 0.0
  %2732 = vmatpush1.msra.mxu0 0.0
  %2733 = vmatprep.subr.mxu0 0.0
  %2734 = vmatpush1.msra.mxu0 0.0
  %2735 = vmatprep.subr.mxu0 0.0
  %2736 = vmatpush1.msra.mxu0 0.0
  %2737 = vmatprep.subr.mxu0 0.0
  %2738 = vmatpush1.msra.mxu0 0.0
  %2739 = vmatprep.subr.mxu0 0.0
  %2740 = vmatpush1.msra.mxu0 0.0
  %2741 = vmatprep.subr.mxu0 0.0
  %2742 = vmatpush1.msra.mxu0 0.0
  %2743 = vmatprep.subr.mxu0 0.0
  %2744 = vmatpush1.msra.mxu0 0.0
  %2745 = vmatprep.subr.mxu0 0.0
  %2746 = vmatpush1.msra.mxu0 0.0
  %2747 = vmatprep.subr.mxu0 0.0
  %2748 = vmatpush1.msra.mxu0 0.0
  %2749 = vmatprep.subr.mxu0 0.0
  %2750 = vmatpush1.msra.mxu0 0.0
  %2751 = vmatprep.subr.mxu0 0.0
  %2752 = vmatpush1.msra.mxu0 0.0
  %2753 = vmatprep.subr.mxu0 0.0
  %2754 = vmatpush1.msra.mxu0 0.0
  %2755 = vmatprep.subr.mxu0 0.0
  %2756 = vmatpush1.msra.mxu0 0.0
  %2757 = vmatprep.subr.mxu0 0.0
  %2758 = vmatpush1.msra.mxu0 0.0
  %2759 = vmatprep.subr.mxu0 0.0
  %2760 = vmatpush1.msra.mxu0 0.0
  %2761 = vmatprep.subr.mxu0 0.0
  %2762 = vmatpush1.msra.mxu0 0.0
  %2763 = vmatprep.subr.mxu0 0.0
  %2764 = vmatpush1.msra.mxu0 0.0
  %2765 = vmatprep.subr.mxu0 0.0
  %2766 = vmatpush1.msra.mxu0 0.0
  %2767 = vmatprep.subr.mxu0 0.0
  %2768 = vmatpush1.msra.mxu0 0.0
  %2769 = vmatprep.mubr.f32.mxu0 0.0
  %2770 = vmatmul.mubr.f32.gmra.mrb[0].mxu0 %v2703
  %v2771 = vpop.f32.mrb[0].mxu0
  %v2772 = vadd.f32 0.0, %v2771
  %v2773 = vpop.f32.mrb[0].mxu0
  %2774 = vdwg.mxu0
  %v2776 = vsel %vm1904, %v2623, 0
  %2778 = vmatprep.subr.mxu0 0.0
  %2779 = vmatpush1.msra.mxu0 %v1551
  %2780 = vmatprep.subr.mxu0 0.0
  %2781 = vmatpush1.msra.mxu0 0.0
  %2782 = vmatprep.subr.mxu0 0.0
  %2783 = vmatpush1.msra.mxu0 0.0
  %2784 = vmatprep.subr.mxu0 0.0
  %2785 = vmatpush1.msra.mxu0 0.0
  %2786 = vmatprep.subr.mxu0 0.0
  %2787 = vmatpush1.msra.mxu0 0.0
  %2788 = vmatprep.subr.mxu0 0.0
  %2789 = vmatpush1.msra.mxu0 0.0
  %2790 = vmatprep.subr.mxu0 0.0
  %2791 = vmatpush1.msra.mxu0 0.0
  %2792 = vmatprep.subr.mxu0 0.0
  %2793 = vmatpush1.msra.mxu0 0.0
  %2794 = vmatprep.subr.mxu0 0.0
  %2795 = vmatpush1.msra.mxu0 0.0
  %2796 = vmatprep.subr.mxu0 0.0
  %2797 = vmatpush1.msra.mxu0 0.0
  %2798 = vmatprep.subr.mxu0 0.0
  %2799 = vmatpush1.msra.mxu0 0.0
  %2800 = vmatprep.subr.mxu0 0.0
  %2801 = vmatpush1.msra.mxu0 0.0
  %2802 = vmatprep.subr.mxu0 0.0
  %2803 = vmatpush1.msra.mxu0 0.0
  %2804 = vmatprep.subr.mxu0 0.0
  %2805 = vmatpush1.msra.mxu0 0.0
  %2806 = vmatprep.subr.mxu0 0.0
  %2807 = vmatpush1.msra.mxu0 0.0
  %2808 = vmatprep.subr.mxu0 0.0
  %2809 = vmatpush1.msra.mxu0 0.0
  %2810 = vmatprep.subr.mxu0 0.0
  %2811 = vmatpush1.msra.mxu0 0.0
  %2812 = vmatprep.subr.mxu0 0.0
  %2813 = vmatpush1.msra.mxu0 0.0
  %2814 = vmatprep.subr.mxu0 0.0
  %2815 = vmatpush1.msra.mxu0 0.0
  %2816 = vmatprep.subr.mxu0 0.0
  %2817 = vmatpush1.msra.mxu0 0.0
  %2818 = vmatprep.subr.mxu0 0.0
  %2819 = vmatpush1.msra.mxu0 0.0
  %2820 = vmatprep.subr.mxu0 0.0
  %2821 = vmatpush1.msra.mxu0 0.0
  %2822 = vmatprep.subr.mxu0 0.0
  %2823 = vmatpush1.msra.mxu0 0.0
  %2824 = vmatprep.subr.mxu0 0.0
  %2825 = vmatpush1.msra.mxu0 0.0
  %2826 = vmatprep.subr.mxu0 0.0
  %2827 = vmatpush1.msra.mxu0 0.0
  %2828 = vmatprep.subr.mxu0 0.0
  %2829 = vmatpush1.msra.mxu0 0.0
  %2830 = vmatprep.subr.mxu0 0.0
  %2831 = vmatpush1.msra.mxu0 0.0
  %2832 = vmatprep.subr.mxu0 0.0
  %2833 = vmatpush1.msra.mxu0 0.0
  %2834 = vmatprep.subr.mxu0 0.0
  %2835 = vmatpush1.msra.mxu0 0.0
  %2836 = vmatprep.subr.mxu0 0.0
  %2837 = vmatpush1.msra.mxu0 0.0
  %2838 = vmatprep.subr.mxu0 0.0
  %2839 = vmatpush1.msra.mxu0 0.0
  %2840 = vmatprep.subr.mxu0 0.0
  %2841 = vmatpush1.msra.mxu0 0.0
  %2842 = vmatprep.mubr.f32.mxu0 0.0
  %2843 = vmatmul.mubr.f32.gmra.mrb[0].mxu0 %v2776
  %v2844 = vpop.f32.mrb[0].mxu0
  %v2845 = vadd.f32 0.0, %v2844
  %v2846 = vpop.f32.mrb[0].mxu0
  %2847 = vdwg.mxu0
  %v2849 = vsel %vm1904, %v2624, 0
  %2851 = vmatprep.subr.mxu0 0.0
  %2852 = vmatpush1.msra.mxu0 %v1621
  %2853 = vmatprep.subr.mxu0 0.0
  %2854 = vmatpush1.msra.mxu0 0.0
  %2855 = vmatprep.subr.mxu0 0.0
  %2856 = vmatpush1.msra.mxu0 0.0
  %2857 = vmatprep.subr.mxu0 0.0
  %2858 = vmatpush1.msra.mxu0 0.0
  %2859 = vmatprep.subr.mxu0 0.0
  %2860 = vmatpush1.msra.mxu0 0.0
  %2861 = vmatprep.subr.mxu0 0.0
  %2862 = vmatpush1.msra.mxu0 0.0
  %2863 = vmatprep.subr.mxu0 0.0
  %2864 = vmatpush1.msra.mxu0 0.0
  %2865 = vmatprep.subr.mxu0 0.0
  %2866 = vmatpush1.msra.mxu0 0.0
  %2867 = vmatprep.subr.mxu0 0.0
  %2868 = vmatpush1.msra.mxu0 0.0
  %2869 = vmatprep.subr.mxu0 0.0
  %2870 = vmatpush1.msra.mxu0 0.0
  %2871 = vmatprep.subr.mxu0 0.0
  %2872 = vmatpush1.msra.mxu0 0.0
  %2873 = vmatprep.subr.mxu0 0.0
  %2874 = vmatpush1.msra.mxu0 0.0
  %2875 = vmatprep.subr.mxu0 0.0
  %2876 = vmatpush1.msra.mxu0 0.0
  %2877 = vmatprep.subr.mxu0 0.0
  %2878 = vmatpush1.msra.mxu0 0.0
  %2879 = vmatprep.subr.mxu0 0.0
  %2880 = vmatpush1.msra.mxu0 0.0
  %2881 = vmatprep.subr.mxu0 0.0
  %2882 = vmatpush1.msra.mxu0 0.0
  %2883 = vmatprep.subr.mxu0 0.0
  %2884 = vmatpush1.msra.mxu0 0.0
  %2885 = vmatprep.subr.mxu0 0.0
  %2886 = vmatpush1.msra.mxu0 0.0
  %2887 = vmatprep.subr.mxu0 0.0
  %2888 = vmatpush1.msra.mxu0 0.0
  %2889 = vmatprep.subr.mxu0 0.0
  %2890 = vmatpush1.msra.mxu0 0.0
  %2891 = vmatprep.subr.mxu0 0.0
  %2892 = vmatpush1.msra.mxu0 0.0
  %2893 = vmatprep.subr.mxu0 0.0
  %2894 = vmatpush1.msra.mxu0 0.0
  %2895 = vmatprep.subr.mxu0 0.0
  %2896 = vmatpush1.msra.mxu0 0.0
  %2897 = vmatprep.subr.mxu0 0.0
  %2898 = vmatpush1.msra.mxu0 0.0
  %2899 = vmatprep.subr.mxu0 0.0
  %2900 = vmatpush1.msra.mxu0 0.0
  %2901 = vmatprep.subr.mxu0 0.0
  %2902 = vmatpush1.msra.mxu0 0.0
  %2903 = vmatprep.subr.mxu0 0.0
  %2904 = vmatpush1.msra.mxu0 0.0
  %2905 = vmatprep.subr.mxu0 0.0
  %2906 = vmatpush1.msra.mxu0 0.0
  %2907 = vmatprep.subr.mxu0 0.0
  %2908 = vmatpush1.msra.mxu0 0.0
  %2909 = vmatprep.subr.mxu0 0.0
  %2910 = vmatpush1.msra.mxu0 0.0
  %2911 = vmatprep.subr.mxu0 0.0
  %2912 = vmatpush1.msra.mxu0 0.0
  %2913 = vmatprep.subr.mxu0 0.0
  %2914 = vmatpush1.msra.mxu0 0.0
  %2915 = vmatprep.mubr.f32.mxu0 0.0
  %2916 = vmatmul.mubr.f32.gmra.mrb[0].mxu0 %v2849
  %v2917 = vpop.f32.mrb[0].mxu0
  %v2918 = vadd.f32 0.0, %v2917
  %v2919 = vpop.f32.mrb[0].mxu0
  %2920 = vdwg.mxu0
  %v2922 = vsel %vm1904, %v2625, 0
  %2924 = vmatprep.subr.mxu0 0.0
  %2925 = vmatpush1.msra.mxu0 %v1691
  %2926 = vmatprep.subr.mxu0 0.0
  %2927 = vmatpush1.msra.mxu0 0.0
  %2928 = vmatprep.subr.mxu0 0.0
  %2929 = vmatpush1.msra.mxu0 0.0
  %2930 = vmatprep.subr.mxu0 0.0
  %2931 = vmatpush1.msra.mxu0 0.0
  %2932 = vmatprep.subr.mxu0 0.0
  %2933 = vmatpush1.msra.mxu0 0.0
  %2934 = vmatprep.subr.mxu0 0.0
  %2935 = vmatpush1.msra.mxu0 0.0
  %2936 = vmatprep.subr.mxu0 0.0
  %2937 = vmatpush1.msra.mxu0 0.0
  %2938 = vmatprep.subr.mxu0 0.0
  %2939 = vmatpush1.msra.mxu0 0.0
  %2940 = vmatprep.subr.mxu0 0.0
  %2941 = vmatpush1.msra.mxu0 0.0
  %2942 = vmatprep.subr.mxu0 0.0
  %2943 = vmatpush1.msra.mxu0 0.0
  %2944 = vmatprep.subr.mxu0 0.0
  %2945 = vmatpush1.msra.mxu0 0.0
  %2946 = vmatprep.subr.mxu0 0.0
  %2947 = vmatpush1.msra.mxu0 0.0
  %2948 = vmatprep.subr.mxu0 0.0
  %2949 = vmatpush1.msra.mxu0 0.0
  %2950 = vmatprep.subr.mxu0 0.0
  %2951 = vmatpush1.msra.mxu0 0.0
  %2952 = vmatprep.subr.mxu0 0.0
  %2953 = vmatpush1.msra.mxu0 0.0
  %2954 = vmatprep.subr.mxu0 0.0
  %2955 = vmatpush1.msra.mxu0 0.0
  %2956 = vmatprep.subr.mxu0 0.0
  %2957 = vmatpush1.msra.mxu0 0.0
  %2958 = vmatprep.subr.mxu0 0.0
  %2959 = vmatpush1.msra.mxu0 0.0
  %2960 = vmatprep.subr.mxu0 0.0
  %2961 = vmatpush1.msra.mxu0 0.0
  %2962 = vmatprep.subr.mxu0 0.0
  %2963 = vmatpush1.msra.mxu0 0.0
  %2964 = vmatprep.subr.mxu0 0.0
  %2965 = vmatpush1.msra.mxu0 0.0
  %2966 = vmatprep.subr.mxu0 0.0
  %2967 = vmatpush1.msra.mxu0 0.0
  %2968 = vmatprep.subr.mxu0 0.0
  %2969 = vmatpush1.msra.mxu0 0.0
  %2970 = vmatprep.subr.mxu0 0.0
  %2971 = vmatpush1.msra.mxu0 0.0
  %2972 = vmatprep.subr.mxu0 0.0
  %2973 = vmatpush1.msra.mxu0 0.0
  %2974 = vmatprep.subr.mxu0 0.0
  %2975 = vmatpush1.msra.mxu0 0.0
  %2976 = vmatprep.subr.mxu0 0.0
  %2977 = vmatpush1.msra.mxu0 0.0
  %2978 = vmatprep.subr.mxu0 0.0
  %2979 = vmatpush1.msra.mxu0 0.0
  %2980 = vmatprep.subr.mxu0 0.0
  %2981 = vmatpush1.msra.mxu0 0.0
  %2982 = vmatprep.subr.mxu0 0.0
  %2983 = vmatpush1.msra.mxu0 0.0
  %2984 = vmatprep.subr.mxu0 0.0
  %2985 = vmatpush1.msra.mxu0 0.0
  %2986 = vmatprep.subr.mxu0 0.0
  %2987 = vmatpush1.msra.mxu0 0.0
  %2988 = vmatprep.mubr.f32.mxu0 0.0
  %2989 = vmatmul.mubr.f32.gmra.mrb[0].mxu0 %v2922
  %v2990 = vpop.f32.mrb[0].mxu0
  %v2991 = vadd.f32 0.0, %v2990
  %v2992 = vpop.f32.mrb[0].mxu0
  %2993 = vdwg.mxu0
  %v2995 = vsel %vm1904, %v2626, 0
  %2997 = vmatprep.subr.mxu0 0.0
  %2998 = vmatpush1.msra.mxu0 %v1761
  %2999 = vmatprep.subr.mxu0 0.0
  %3000 = vmatpush1.msra.mxu0 0.0
  %3001 = vmatprep.subr.mxu0 0.0
  %3002 = vmatpush1.msra.mxu0 0.0
  %3003 = vmatprep.subr.mxu0 0.0
  %3004 = vmatpush1.msra.mxu0 0.0
  %3005 = vmatprep.subr.mxu0 0.0
  %3006 = vmatpush1.msra.mxu0 0.0
  %3007 = vmatprep.subr.mxu0 0.0
  %3008 = vmatpush1.msra.mxu0 0.0
  %3009 = vmatprep.subr.mxu0 0.0
  %3010 = vmatpush1.msra.mxu0 0.0
  %3011 = vmatprep.subr.mxu0 0.0
  %3012 = vmatpush1.msra.mxu0 0.0
  %3013 = vmatprep.subr.mxu0 0.0
  %3014 = vmatpush1.msra.mxu0 0.0
  %3015 = vmatprep.subr.mxu0 0.0
  %3016 = vmatpush1.msra.mxu0 0.0
  %3017 = vmatprep.subr.mxu0 0.0
  %3018 = vmatpush1.msra.mxu0 0.0
  %3019 = vmatprep.subr.mxu0 0.0
  %3020 = vmatpush1.msra.mxu0 0.0
  %3021 = vmatprep.subr.mxu0 0.0
  %3022 = vmatpush1.msra.mxu0 0.0
  %3023 = vmatprep.subr.mxu0 0.0
  %3024 = vmatpush1.msra.mxu0 0.0
  %3025 = vmatprep.subr.mxu0 0.0
  %3026 = vmatpush1.msra.mxu0 0.0
  %3027 = vmatprep.subr.mxu0 0.0
  %3028 = vmatpush1.msra.mxu0 0.0
  %3029 = vmatprep.subr.mxu0 0.0
  %3030 = vmatpush1.msra.mxu0 0.0
  %3031 = vmatprep.subr.mxu0 0.0
  %3032 = vmatpush1.msra.mxu0 0.0
  %3033 = vmatprep.subr.mxu0 0.0
  %3034 = vmatpush1.msra.mxu0 0.0
  %3035 = vmatprep.subr.mxu0 0.0
  %3036 = vmatpush1.msra.mxu0 0.0
  %3037 = vmatprep.subr.mxu0 0.0
  %3038 = vmatpush1.msra.mxu0 0.0
  %3039 = vmatprep.subr.mxu0 0.0
  %3040 = vmatpush1.msra.mxu0 0.0
  %3041 = vmatprep.subr.mxu0 0.0
  %3042 = vmatpush1.msra.mxu0 0.0
  %3043 = vmatprep.subr.mxu0 0.0
  %3044 = vmatpush1.msra.mxu0 0.0
  %3045 = vmatprep.subr.mxu0 0.0
  %3046 = vmatpush1.msra.mxu0 0.0
  %3047 = vmatprep.subr.mxu0 0.0
  %3048 = vmatpush1.msra.mxu0 0.0
  %3049 = vmatprep.subr.mxu0 0.0
  %3050 = vmatpush1.msra.mxu0 0.0
  %3051 = vmatprep.subr.mxu0 0.0
  %3052 = vmatpush1.msra.mxu0 0.0
  %3053 = vmatprep.subr.mxu0 0.0
  %3054 = vmatpush1.msra.mxu0 0.0
  %3055 = vmatprep.subr.mxu0 0.0
  %3056 = vmatpush1.msra.mxu0 0.0
  %3057 = vmatprep.subr.mxu0 0.0
  %3058 = vmatpush1.msra.mxu0 0.0
  %3059 = vmatprep.subr.mxu0 0.0
  %3060 = vmatpush1.msra.mxu0 0.0
  %3061 = vmatprep.mubr.f32.mxu0 0.0
  %3062 = vmatmul.mubr.f32.gmra.mrb[0].mxu0 %v2995
  %v3063 = vpop.f32.mrb[0].mxu0
  %v3064 = vadd.f32 0.0, %v3063
  %v3065 = vpop.f32.mrb[0].mxu0
  %3066 = vdwg.mxu0
  %v3068 = vsel %vm1904, %v2627, 0
  %3070 = vmatprep.subr.mxu0 0.0
  %3071 = vmatpush1.msra.mxu0 %v1831
  %3072 = vmatprep.subr.mxu0 0.0
  %3073 = vmatpush1.msra.mxu0 0.0
  %3074 = vmatprep.subr.mxu0 0.0
  %3075 = vmatpush1.msra.mxu0 0.0
  %3076 = vmatprep.subr.mxu0 0.0
  %3077 = vmatpush1.msra.mxu0 0.0
  %3078 = vmatprep.subr.mxu0 0.0
  %3079 = vmatpush1.msra.mxu0 0.0
  %3080 = vmatprep.subr.mxu0 0.0
  %3081 = vmatpush1.msra.mxu0 0.0
  %3082 = vmatprep.subr.mxu0 0.0
  %3083 = vmatpush1.msra.mxu0 0.0
  %3084 = vmatprep.subr.mxu0 0.0
  %3085 = vmatpush1.msra.mxu0 0.0
  %3086 = vmatprep.subr.mxu0 0.0
  %3087 = vmatpush1.msra.mxu0 0.0
  %3088 = vmatprep.subr.mxu0 0.0
  %3089 = vmatpush1.msra.mxu0 0.0
  %3090 = vmatprep.subr.mxu0 0.0
  %3091 = vmatpush1.msra.mxu0 0.0
  %3092 = vmatprep.subr.mxu0 0.0
  %3093 = vmatpush1.msra.mxu0 0.0
  %3094 = vmatprep.subr.mxu0 0.0
  %3095 = vmatpush1.msra.mxu0 0.0
  %3096 = vmatprep.subr.mxu0 0.0
  %3097 = vmatpush1.msra.mxu0 0.0
  %3098 = vmatprep.subr.mxu0 0.0
  %3099 = vmatpush1.msra.mxu0 0.0
  %3100 = vmatprep.subr.mxu0 0.0
  %3101 = vmatpush1.msra.mxu0 0.0
  %3102 = vmatprep.subr.mxu0 0.0
  %3103 = vmatpush1.msra.mxu0 0.0
  %3104 = vmatprep.subr.mxu0 0.0
  %3105 = vmatpush1.msra.mxu0 0.0
  %3106 = vmatprep.subr.mxu0 0.0
  %3107 = vmatpush1.msra.mxu0 0.0
  %3108 = vmatprep.subr.mxu0 0.0
  %3109 = vmatpush1.msra.mxu0 0.0
  %3110 = vmatprep.subr.mxu0 0.0
  %3111 = vmatpush1.msra.mxu0 0.0
  %3112 = vmatprep.subr.mxu0 0.0
  %3113 = vmatpush1.msra.mxu0 0.0
  %3114 = vmatprep.subr.mxu0 0.0
  %3115 = vmatpush1.msra.mxu0 0.0
  %3116 = vmatprep.subr.mxu0 0.0
  %3117 = vmatpush1.msra.mxu0 0.0
  %3118 = vmatprep.subr.mxu0 0.0
  %3119 = vmatpush1.msra.mxu0 0.0
  %3120 = vmatprep.subr.mxu0 0.0
  %3121 = vmatpush1.msra.mxu0 0.0
  %3122 = vmatprep.subr.mxu0 0.0
  %3123 = vmatpush1.msra.mxu0 0.0
  %3124 = vmatprep.subr.mxu0 0.0
  %3125 = vmatpush1.msra.mxu0 0.0
  %3126 = vmatprep.subr.mxu0 0.0
  %3127 = vmatpush1.msra.mxu0 0.0
  %3128 = vmatprep.subr.mxu0 0.0
  %3129 = vmatpush1.msra.mxu0 0.0
  %3130 = vmatprep.subr.mxu0 0.0
  %3131 = vmatpush1.msra.mxu0 0.0
  %3132 = vmatprep.subr.mxu0 0.0
  %3133 = vmatpush1.msra.mxu0 0.0
  %3134 = vmatprep.mubr.f32.mxu0 0.0
  %3135 = vmatmul.mubr.f32.gmra.mrb[0].mxu0 %v3068
  %v3136 = vpop.f32.mrb[0].mxu0
  %v3137 = vadd.f32 0.0, %v3136
  %v3138 = vpop.f32.mrb[0].mxu0
  %3139 = vdwg.mxu0
  %v3141 = vsel %vm1904, %v2628, 0
  %3143 = vmatprep.subr.mxu0 0.0
  %3144 = vmatpush1.msra.mxu0 %v1901
  %3145 = vmatprep.subr.mxu0 0.0
  %3146 = vmatpush1.msra.mxu0 0.0
  %3147 = vmatprep.subr.mxu0 0.0
  %3148 = vmatpush1.msra.mxu0 0.0
  %3149 = vmatprep.subr.mxu0 0.0
  %3150 = vmatpush1.msra.mxu0 0.0
  %3151 = vmatprep.subr.mxu0 0.0
  %3152 = vmatpush1.msra.mxu0 0.0
  %3153 = vmatprep.subr.mxu0 0.0
  %3154 = vmatpush1.msra.mxu0 0.0
  %3155 = vmatprep.subr.mxu0 0.0
  %3156 = vmatpush1.msra.mxu0 0.0
  %3157 = vmatprep.subr.mxu0 0.0
  %3158 = vmatpush1.msra.mxu0 0.0
  %3159 = vmatprep.subr.mxu0 0.0
  %3160 = vmatpush1.msra.mxu0 0.0
  %3161 = vmatprep.subr.mxu0 0.0
  %3162 = vmatpush1.msra.mxu0 0.0
  %3163 = vmatprep.subr.mxu0 0.0
  %3164 = vmatpush1.msra.mxu0 0.0
  %3165 = vmatprep.subr.mxu0 0.0
  %3166 = vmatpush1.msra.mxu0 0.0
  %3167 = vmatprep.subr.mxu0 0.0
  %3168 = vmatpush1.msra.mxu0 0.0
  %3169 = vmatprep.subr.mxu0 0.0
  %3170 = vmatpush1.msra.mxu0 0.0
  %3171 = vmatprep.subr.mxu0 0.0
  %3172 = vmatpush1.msra.mxu0 0.0
  %3173 = vmatprep.subr.mxu0 0.0
  %3174 = vmatpush1.msra.mxu0 0.0
  %3175 = vmatprep.subr.mxu0 0.0
  %3176 = vmatpush1.msra.mxu0 0.0
  %3177 = vmatprep.subr.mxu0 0.0
  %3178 = vmatpush1.msra.mxu0 0.0
  %3179 = vmatprep.subr.mxu0 0.0
  %3180 = vmatpush1.msra.mxu0 0.0
  %3181 = vmatprep.subr.mxu0 0.0
  %3182 = vmatpush1.msra.mxu0 0.0
  %3183 = vmatprep.subr.mxu0 0.0
  %3184 = vmatpush1.msra.mxu0 0.0
  %3185 = vmatprep.subr.mxu0 0.0
  %3186 = vmatpush1.msra.mxu0 0.0
  %3187 = vmatprep.subr.mxu0 0.0
  %3188 = vmatpush1.msra.mxu0 0.0
  %3189 = vmatprep.subr.mxu0 0.0
  %3190 = vmatpush1.msra.mxu0 0.0
  %3191 = vmatprep.subr.mxu0 0.0
  %3192 = vmatpush1.msra.mxu0 0.0
  %3193 = vmatprep.subr.mxu0 0.0
  %3194 = vmatpush1.msra.mxu0 0.0
  %3195 = vmatprep.subr.mxu0 0.0
  %3196 = vmatpush1.msra.mxu0 0.0
  %3197 = vmatprep.subr.mxu0 0.0
  %3198 = vmatpush1.msra.mxu0 0.0
  %3199 = vmatprep.subr.mxu0 0.0
  %3200 = vmatpush1.msra.mxu0 0.0
  %3201 = vmatprep.subr.mxu0 0.0
  %3202 = vmatpush1.msra.mxu0 0.0
  %3203 = vmatprep.subr.mxu0 0.0
  %3204 = vmatpush1.msra.mxu0 0.0
  %3205 = vmatprep.subr.mxu0 0.0
  %3206 = vmatpush1.msra.mxu0 0.0
  %3207 = vmatprep.mubr.f32.mxu0 0.0
  %3208 = vmatmul.mubr.f32.gmra.mrb[0].mxu0 %v3141
  %v3209 = vpop.f32.mrb[0].mxu0
  %v3210 = vadd.f32 0.0, %v3209
  %v3211 = vpop.f32.mrb[0].mxu0
  %3212 = vdwg.mxu0
  %v3214 = vsel %vm1904, %v2699, 0
  %3216 = vmatprep.subr.mxu0 0.0
  %3217 = vmatpush1.msra.mxu0 %v141
  %3218 = vmatprep.subr.mxu0 0.0
  %3219 = vmatpush1.msra.mxu0 0.0
  %3220 = vmatprep.subr.mxu0 0.0
  %3221 = vmatpush1.msra.mxu0 0.0
  %3222 = vmatprep.subr.mxu0 0.0
  %3223 = vmatpush1.msra.mxu0 0.0
  %3224 = vmatprep.subr.mxu0 0.0
  %3225 = vmatpush1.msra.mxu0 0.0
  %3226 = vmatprep.subr.mxu0 0.0
  %3227 = vmatpush1.msra.mxu0 0.0
  %3228 = vmatprep.subr.mxu0 0.0
  %3229 = vmatpush1.msra.mxu0 0.0
  %3230 = vmatprep.subr.mxu0 0.0
  %3231 = vmatpush1.msra.mxu0 0.0
  %3232 = vmatprep.subr.mxu0 0.0
  %3233 = vmatpush1.msra.mxu0 0.0
  %3234 = vmatprep.subr.mxu0 0.0
  %3235 = vmatpush1.msra.mxu0 0.0
  %3236 = vmatprep.subr.mxu0 0.0
  %3237 = vmatpush1.msra.mxu0 0.0
  %3238 = vmatprep.subr.mxu0 0.0
  %3239 = vmatpush1.msra.mxu0 0.0
  %3240 = vmatprep.subr.mxu0 0.0
  %3241 = vmatpush1.msra.mxu0 0.0
  %3242 = vmatprep.subr.mxu0 0.0
  %3243 = vmatpush1.msra.mxu0 0.0
  %3244 = vmatprep.subr.mxu0 0.0
  %3245 = vmatpush1.msra.mxu0 0.0
  %3246 = vmatprep.subr.mxu0 0.0
  %3247 = vmatpush1.msra.mxu0 0.0
  %3248 = vmatprep.subr.mxu0 0.0
  %3249 = vmatpush1.msra.mxu0 0.0
  %3250 = vmatprep.subr.mxu0 0.0
  %3251 = vmatpush1.msra.mxu0 0.0
  %3252 = vmatprep.subr.mxu0 0.0
  %3253 = vmatpush1.msra.mxu0 0.0
  %3254 = vmatprep.subr.mxu0 0.0
  %3255 = vmatpush1.msra.mxu0 0.0
  %3256 = vmatprep.subr.mxu0 0.0
  %3257 = vmatpush1.msra.mxu0 0.0
  %3258 = vmatprep.subr.mxu0 0.0
  %3259 = vmatpush1.msra.mxu0 0.0
  %3260 = vmatprep.subr.mxu0 0.0
  %3261 = vmatpush1.msra.mxu0 0.0
  %3262 = vmatprep.subr.mxu0 0.0
  %3263 = vmatpush1.msra.mxu0 0.0
  %3264 = vmatprep.subr.mxu0 0.0
  %3265 = vmatpush1.msra.mxu0 0.0
  %3266 = vmatprep.subr.mxu0 0.0
  %3267 = vmatpush1.msra.mxu0 0.0
  %3268 = vmatprep.subr.mxu0 0.0
  %3269 = vmatpush1.msra.mxu0 0.0
  %3270 = vmatprep.subr.mxu0 0.0
  %3271 = vmatpush1.msra.mxu0 0.0
  %3272 = vmatprep.subr.mxu0 0.0
  %3273 = vmatpush1.msra.mxu0 0.0
  %3274 = vmatprep.subr.mxu0 0.0
  %3275 = vmatpush1.msra.mxu0 0.0
  %3276 = vmatprep.subr.mxu0 0.0
  %3277 = vmatpush1.msra.mxu0 0.0
  %3278 = vmatprep.subr.mxu0 0.0
  %3279 = vmatpush1.msra.mxu0 0.0
  %3280 = vmatprep.mubr.f32.mxu0 0.0
  %3281 = vmatmul.mubr.f32.gmra.mrb[0].mxu0 %v3214
  %v3282 = vpop.f32.mrb[0].mxu0
  %v3283 = vadd.f32 0.0, %v3282
  %v3284 = vpop.f32.mrb[0].mxu0
  %3285 = vdwg.mxu0
  %v3287 = vsel %vm1904, %v2772, 0
  %3289 = vmatprep.subr.mxu0 0.0
  %3290 = vmatpush1.msra.mxu0 %v142
  %3291 = vmatprep.subr.mxu0 0.0
  %3292 = vmatpush1.msra.mxu0 0.0
  %3293 = vmatprep.subr.mxu0 0.0
  %3294 = vmatpush1.msra.mxu0 0.0
  %3295 = vmatprep.subr.mxu0 0.0
  %3296 = vmatpush1.msra.mxu0 0.0
  %3297 = vmatprep.subr.mxu0 0.0
  %3298 = vmatpush1.msra.mxu0 0.0
  %3299 = vmatprep.subr.mxu0 0.0
  %3300 = vmatpush1.msra.mxu0 0.0
  %3301 = vmatprep.subr.mxu0 0.0
  %3302 = vmatpush1.msra.mxu0 0.0
  %3303 = vmatprep.subr.mxu0 0.0
  %3304 = vmatpush1.msra.mxu0 0.0
  %3305 = vmatprep.subr.mxu0 0.0
  %3306 = vmatpush1.msra.mxu0 0.0
  %3307 = vmatprep.subr.mxu0 0.0
  %3308 = vmatpush1.msra.mxu0 0.0
  %3309 = vmatprep.subr.mxu0 0.0
  %3310 = vmatpush1.msra.mxu0 0.0
  %3311 = vmatprep.subr.mxu0 0.0
  %3312 = vmatpush1.msra.mxu0 0.0
  %3313 = vmatprep.subr.mxu0 0.0
  %3314 = vmatpush1.msra.mxu0 0.0
  %3315 = vmatprep.subr.mxu0 0.0
  %3316 = vmatpush1.msra.mxu0 0.0
  %3317 = vmatprep.subr.mxu0 0.0
  %3318 = vmatpush1.msra.mxu0 0.0
  %3319 = vmatprep.subr.mxu0 0.0
  %3320 = vmatpush1.msra.mxu0 0.0
  %3321 = vmatprep.subr.mxu0 0.0
  %3322 = vmatpush1.msra.mxu0 0.0
  %3323 = vmatprep.subr.mxu0 0.0
  %3324 = vmatpush1.msra.mxu0 0.0
  %3325 = vmatprep.subr.mxu0 0.0
  %3326 = vmatpush1.msra.mxu0 0.0
  %3327 = vmatprep.subr.mxu0 0.0
  %3328 = vmatpush1.msra.mxu0 0.0
  %3329 = vmatprep.subr.mxu0 0.0
  %3330 = vmatpush1.msra.mxu0 0.0
  %3331 = vmatprep.subr.mxu0 0.0
  %3332 = vmatpush1.msra.mxu0 0.0
  %3333 = vmatprep.subr.mxu0 0.0
  %3334 = vmatpush1.msra.mxu0 0.0
  %3335 = vmatprep.subr.mxu0 0.0
  %3336 = vmatpush1.msra.mxu0 0.0
  %3337 = vmatprep.subr.mxu0 0.0
  %3338 = vmatpush1.msra.mxu0 0.0
  %3339 = vmatprep.subr.mxu0 0.0
  %3340 = vmatpush1.msra.mxu0 0.0
  %3341 = vmatprep.subr.mxu0 0.0
  %3342 = vmatpush1.msra.mxu0 0.0
  %3343 = vmatprep.subr.mxu0 0.0
  %3344 = vmatpush1.msra.mxu0 0.0
  %3345 = vmatprep.subr.mxu0 0.0
  %3346 = vmatpush1.msra.mxu0 0.0
  %3347 = vmatprep.subr.mxu0 0.0
  %3348 = vmatpush1.msra.mxu0 0.0
  %3349 = vmatprep.subr.mxu0 0.0
  %3350 = vmatpush1.msra.mxu0 0.0
  %3351 = vmatprep.subr.mxu0 0.0
  %3352 = vmatpush1.msra.mxu0 0.0
  %3353 = vmatprep.mubr.f32.mxu0 0.0
  %3354 = vmatmul.mubr.f32.gmra.mrb[0].mxu0 %v3287
  %v3355 = vpop.f32.mrb[0].mxu0
  %v3356 = vadd.f32 0.0, %v3355
  %v3357 = vpop.f32.mrb[0].mxu0
  %3358 = vdwg.mxu0
  %v3360 = vsel %vm1904, %v2845, 0
  %3362 = vmatprep.subr.mxu0 0.0
  %3363 = vmatpush1.msra.mxu0 %v143
  %3364 = vmatprep.subr.mxu0 0.0
  %3365 = vmatpush1.msra.mxu0 0.0
  %3366 = vmatprep.subr.mxu0 0.0
  %3367 = vmatpush1.msra.mxu0 0.0
  %3368 = vmatprep.subr.mxu0 0.0
  %3369 = vmatpush1.msra.mxu0 0.0
  %3370 = vmatprep.subr.mxu0 0.0
  %3371 = vmatpush1.msra.mxu0 0.0
  %3372 = vmatprep.subr.mxu0 0.0
  %3373 = vmatpush1.msra.mxu0 0.0
  %3374 = vmatprep.subr.mxu0 0.0
  %3375 = vmatpush1.msra.mxu0 0.0
  %3376 = vmatprep.subr.mxu0 0.0
  %3377 = vmatpush1.msra.mxu0 0.0
  %3378 = vmatprep.subr.mxu0 0.0
  %3379 = vmatpush1.msra.mxu0 0.0
  %3380 = vmatprep.subr.mxu0 0.0
  %3381 = vmatpush1.msra.mxu0 0.0
  %3382 = vmatprep.subr.mxu0 0.0
  %3383 = vmatpush1.msra.mxu0 0.0
  %3384 = vmatprep.subr.mxu0 0.0
  %3385 = vmatpush1.msra.mxu0 0.0
  %3386 = vmatprep.subr.mxu0 0.0
  %3387 = vmatpush1.msra.mxu0 0.0
  %3388 = vmatprep.subr.mxu0 0.0
  %3389 = vmatpush1.msra.mxu0 0.0
  %3390 = vmatprep.subr.mxu0 0.0
  %3391 = vmatpush1.msra.mxu0 0.0
  %3392 = vmatprep.subr.mxu0 0.0
  %3393 = vmatpush1.msra.mxu0 0.0
  %3394 = vmatprep.subr.mxu0 0.0
  %3395 = vmatpush1.msra.mxu0 0.0
  %3396 = vmatprep.subr.mxu0 0.0
  %3397 = vmatpush1.msra.mxu0 0.0
  %3398 = vmatprep.subr.mxu0 0.0
  %3399 = vmatpush1.msra.mxu0 0.0
  %3400 = vmatprep.subr.mxu0 0.0
  %3401 = vmatpush1.msra.mxu0 0.0
  %3402 = vmatprep.subr.mxu0 0.0
  %3403 = vmatpush1.msra.mxu0 0.0
  %3404 = vmatprep.subr.mxu0 0.0
  %3405 = vmatpush1.msra.mxu0 0.0
  %3406 = vmatprep.subr.mxu0 0.0
  %3407 = vmatpush1.msra.mxu0 0.0
  %3408 = vmatprep.subr.mxu0 0.0
  %3409 = vmatpush1.msra.mxu0 0.0
  %3410 = vmatprep.subr.mxu0 0.0
  %3411 = vmatpush1.msra.mxu0 0.0
  %3412 = vmatprep.subr.mxu0 0.0
  %3413 = vmatpush1.msra.mxu0 0.0
  %3414 = vmatprep.subr.mxu0 0.0
  %3415 = vmatpush1.msra.mxu0 0.0
  %3416 = vmatprep.subr.mxu0 0.0
  %3417 = vmatpush1.msra.mxu0 0.0
  %3418 = vmatprep.subr.mxu0 0.0
  %3419 = vmatpush1.msra.mxu0 0.0
  %3420 = vmatprep.subr.mxu0 0.0
  %3421 = vmatpush1.msra.mxu0 0.0
  %3422 = vmatprep.subr.mxu0 0.0
  %3423 = vmatpush1.msra.mxu0 0.0
  %3424 = vmatprep.subr.mxu0 0.0
  %3425 = vmatpush1.msra.mxu0 0.0
  %3426 = vmatprep.mubr.f32.mxu0 0.0
  %3427 = vmatmul.mubr.f32.gmra.mrb[0].mxu0 %v3360
  %v3428 = vpop.f32.mrb[0].mxu0
  %v3429 = vadd.f32 0.0, %v3428
  %v3430 = vpop.f32.mrb[0].mxu0
  %3431 = vdwg.mxu0
  %v3433 = vsel %vm1904, %v2918, 0
  %3435 = vmatprep.subr.mxu0 0.0
  %3436 = vmatpush1.msra.mxu0 %v144
  %3437 = vmatprep.subr.mxu0 0.0
  %3438 = vmatpush1.msra.mxu0 0.0
  %3439 = vmatprep.subr.mxu0 0.0
  %3440 = vmatpush1.msra.mxu0 0.0
  %3441 = vmatprep.subr.mxu0 0.0
  %3442 = vmatpush1.msra.mxu0 0.0
  %3443 = vmatprep.subr.mxu0 0.0
  %3444 = vmatpush1.msra.mxu0 0.0
  %3445 = vmatprep.subr.mxu0 0.0
  %3446 = vmatpush1.msra.mxu0 0.0
  %3447 = vmatprep.subr.mxu0 0.0
  %3448 = vmatpush1.msra.mxu0 0.0
  %3449 = vmatprep.subr.mxu0 0.0
  %3450 = vmatpush1.msra.mxu0 0.0
  %3451 = vmatprep.subr.mxu0 0.0
  %3452 = vmatpush1.msra.mxu0 0.0
  %3453 = vmatprep.subr.mxu0 0.0
  %3454 = vmatpush1.msra.mxu0 0.0
  %3455 = vmatprep.subr.mxu0 0.0
  %3456 = vmatpush1.msra.mxu0 0.0
  %3457 = vmatprep.subr.mxu0 0.0
  %3458 = vmatpush1.msra.mxu0 0.0
  %3459 = vmatprep.subr.mxu0 0.0
  %3460 = vmatpush1.msra.mxu0 0.0
  %3461 = vmatprep.subr.mxu0 0.0
  %3462 = vmatpush1.msra.mxu0 0.0
  %3463 = vmatprep.subr.mxu0 0.0
  %3464 = vmatpush1.msra.mxu0 0.0
  %3465 = vmatprep.subr.mxu0 0.0
  %3466 = vmatpush1.msra.mxu0 0.0
  %3467 = vmatprep.subr.mxu0 0.0
  %3468 = vmatpush1.msra.mxu0 0.0
  %3469 = vmatprep.subr.mxu0 0.0
  %3470 = vmatpush1.msra.mxu0 0.0
  %3471 = vmatprep.subr.mxu0 0.0
  %3472 = vmatpush1.msra.mxu0 0.0
  %3473 = vmatprep.subr.mxu0 0.0
  %3474 = vmatpush1.msra.mxu0 0.0
  %3475 = vmatprep.subr.mxu0 0.0
  %3476 = vmatpush1.msra.mxu0 0.0
  %3477 = vmatprep.subr.mxu0 0.0
  %3478 = vmatpush1.msra.mxu0 0.0
  %3479 = vmatprep.subr.mxu0 0.0
  %3480 = vmatpush1.msra.mxu0 0.0
  %3481 = vmatprep.subr.mxu0 0.0
  %3482 = vmatpush1.msra.mxu0 0.0
  %3483 = vmatprep.subr.mxu0 0.0
  %3484 = vmatpush1.msra.mxu0 0.0
  %3485 = vmatprep.subr.mxu0 0.0
  %3486 = vmatpush1.msra.mxu0 0.0
  %3487 = vmatprep.subr.mxu0 0.0
  %3488 = vmatpush1.msra.mxu0 0.0
  %3489 = vmatprep.subr.mxu0 0.0
  %3490 = vmatpush1.msra.mxu0 0.0
  %3491 = vmatprep.subr.mxu0 0.0
  %3492 = vmatpush1.msra.mxu0 0.0
  %3493 = vmatprep.subr.mxu0 0.0
  %3494 = vmatpush1.msra.mxu0 0.0
  %3495 = vmatprep.subr.mxu0 0.0
  %3496 = vmatpush1.msra.mxu0 0.0
  %3497 = vmatprep.subr.mxu0 0.0
  %3498 = vmatpush1.msra.mxu0 0.0
  %3499 = vmatprep.mubr.f32.mxu0 0.0
  %3500 = vmatmul.mubr.f32.gmra.mrb[0].mxu0 %v3433
  %v3501 = vpop.f32.mrb[0].mxu0
  %v3502 = vadd.f32 0.0, %v3501
  %v3503 = vpop.f32.mrb[0].mxu0
  %3504 = vdwg.mxu0
  %v3506 = vsel %vm1904, %v2991, 0
  %3508 = vmatprep.subr.mxu0 0.0
  %3509 = vmatpush1.msra.mxu0 %v141
  %3510 = vmatprep.subr.mxu0 0.0
  %3511 = vmatpush1.msra.mxu0 0.0
  %3512 = vmatprep.subr.mxu0 0.0
  %3513 = vmatpush1.msra.mxu0 0.0
  %3514 = vmatprep.subr.mxu0 0.0
  %3515 = vmatpush1.msra.mxu0 0.0
  %3516 = vmatprep.subr.mxu0 0.0
  %3517 = vmatpush1.msra.mxu0 0.0
  %3518 = vmatprep.subr.mxu0 0.0
  %3519 = vmatpush1.msra.mxu0 0.0
  %3520 = vmatprep.subr.mxu0 0.0
  %3521 = vmatpush1.msra.mxu0 0.0
  %3522 = vmatprep.subr.mxu0 0.0
  %3523 = vmatpush1.msra.mxu0 0.0
  %3524 = vmatprep.subr.mxu0 0.0
  %3525 = vmatpush1.msra.mxu0 0.0
  %3526 = vmatprep.subr.mxu0 0.0
  %3527 = vmatpush1.msra.mxu0 0.0
  %3528 = vmatprep.subr.mxu0 0.0
  %3529 = vmatpush1.msra.mxu0 0.0
  %3530 = vmatprep.subr.mxu0 0.0
  %3531 = vmatpush1.msra.mxu0 0.0
  %3532 = vmatprep.subr.mxu0 0.0
  %3533 = vmatpush1.msra.mxu0 0.0
  %3534 = vmatprep.subr.mxu0 0.0
  %3535 = vmatpush1.msra.mxu0 0.0
  %3536 = vmatprep.subr.mxu0 0.0
  %3537 = vmatpush1.msra.mxu0 0.0
  %3538 = vmatprep.subr.mxu0 0.0
  %3539 = vmatpush1.msra.mxu0 0.0
  %3540 = vmatprep.subr.mxu0 0.0
  %3541 = vmatpush1.msra.mxu0 0.0
  %3542 = vmatprep.subr.mxu0 0.0
  %3543 = vmatpush1.msra.mxu0 0.0
  %3544 = vmatprep.subr.mxu0 0.0
  %3545 = vmatpush1.msra.mxu0 0.0
  %3546 = vmatprep.subr.mxu0 0.0
  %3547 = vmatpush1.msra.mxu0 0.0
  %3548 = vmatprep.subr.mxu0 0.0
  %3549 = vmatpush1.msra.mxu0 0.0
  %3550 = vmatprep.subr.mxu0 0.0
  %3551 = vmatpush1.msra.mxu0 0.0
  %3552 = vmatprep.subr.mxu0 0.0
  %3553 = vmatpush1.msra.mxu0 0.0
  %3554 = vmatprep.subr.mxu0 0.0
  %3555 = vmatpush1.msra.mxu0 0.0
  %3556 = vmatprep.subr.mxu0 0.0
  %3557 = vmatpush1.msra.mxu0 0.0
  %3558 = vmatprep.subr.mxu0 0.0
  %3559 = vmatpush1.msra.mxu0 0.0
  %3560 = vmatprep.subr.mxu0 0.0
  %3561 = vmatpush1.msra.mxu0 0.0
  %3562 = vmatprep.subr.mxu0 0.0
  %3563 = vmatpush1.msra.mxu0 0.0
  %3564 = vmatprep.subr.mxu0 0.0
  %3565 = vmatpush1.msra.mxu0 0.0
  %3566 = vmatprep.subr.mxu0 0.0
  %3567 = vmatpush1.msra.mxu0 0.0
  %3568 = vmatprep.subr.mxu0 0.0
  %3569 = vmatpush1.msra.mxu0 0.0
  %3570 = vmatprep.subr.mxu0 0.0
  %3571 = vmatpush1.msra.mxu0 0.0
  %3572 = vmatprep.mubr.f32.mxu0 0.0
  %3573 = vmatmul.mubr.f32.gmra.mrb[0].mxu0 %v3506
  %v3574 = vpop.f32.mrb[0].mxu0
  %v3575 = vadd.f32 0.0, %v3574
  %v3576 = vpop.f32.mrb[0].mxu0
  %3577 = vdwg.mxu0
  %v3579 = vsel %vm1904, %v3064, 0
  %3581 = vmatprep.subr.mxu0 0.0
  %3582 = vmatpush1.msra.mxu0 %v142
  %3583 = vmatprep.subr.mxu0 0.0
  %3584 = vmatpush1.msra.mxu0 0.0
  %3585 = vmatprep.subr.mxu0 0.0
  %3586 = vmatpush1.msra.mxu0 0.0
  %3587 = vmatprep.subr.mxu0 0.0
  %3588 = vmatpush1.msra.mxu0 0.0
  %3589 = vmatprep.subr.mxu0 0.0
  %3590 = vmatpush1.msra.mxu0 0.0
  %3591 = vmatprep.subr.mxu0 0.0
  %3592 = vmatpush1.msra.mxu0 0.0
  %3593 = vmatprep.subr.mxu0 0.0
  %3594 = vmatpush1.msra.mxu0 0.0
  %3595 = vmatprep.subr.mxu0 0.0
  %3596 = vmatpush1.msra.mxu0 0.0
  %3597 = vmatprep.subr.mxu0 0.0
  %3598 = vmatpush1.msra.mxu0 0.0
  %3599 = vmatprep.subr.mxu0 0.0
  %3600 = vmatpush1.msra.mxu0 0.0
  %3601 = vmatprep.subr.mxu0 0.0
  %3602 = vmatpush1.msra.mxu0 0.0
  %3603 = vmatprep.subr.mxu0 0.0
  %3604 = vmatpush1.msra.mxu0 0.0
  %3605 = vmatprep.subr.mxu0 0.0
  %3606 = vmatpush1.msra.mxu0 0.0
  %3607 = vmatprep.subr.mxu0 0.0
  %3608 = vmatpush1.msra.mxu0 0.0
  %3609 = vmatprep.subr.mxu0 0.0
  %3610 = vmatpush1.msra.mxu0 0.0
  %3611 = vmatprep.subr.mxu0 0.0
  %3612 = vmatpush1.msra.mxu0 0.0
  %3613 = vmatprep.subr.mxu0 0.0
  %3614 = vmatpush1.msra.mxu0 0.0
  %3615 = vmatprep.subr.mxu0 0.0
  %3616 = vmatpush1.msra.mxu0 0.0
  %3617 = vmatprep.subr.mxu0 0.0
  %3618 = vmatpush1.msra.mxu0 0.0
  %3619 = vmatprep.subr.mxu0 0.0
  %3620 = vmatpush1.msra.mxu0 0.0
  %3621 = vmatprep.subr.mxu0 0.0
  %3622 = vmatpush1.msra.mxu0 0.0
  %3623 = vmatprep.subr.mxu0 0.0
  %3624 = vmatpush1.msra.mxu0 0.0
  %3625 = vmatprep.subr.mxu0 0.0
  %3626 = vmatpush1.msra.mxu0 0.0
  %3627 = vmatprep.subr.mxu0 0.0
  %3628 = vmatpush1.msra.mxu0 0.0
  %3629 = vmatprep.subr.mxu0 0.0
  %3630 = vmatpush1.msra.mxu0 0.0
  %3631 = vmatprep.subr.mxu0 0.0
  %3632 = vmatpush1.msra.mxu0 0.0
  %3633 = vmatprep.subr.mxu0 0.0
  %3634 = vmatpush1.msra.mxu0 0.0
  %3635 = vmatprep.subr.mxu0 0.0
  %3636 = vmatpush1.msra.mxu0 0.0
  %3637 = vmatprep.subr.mxu0 0.0
  %3638 = vmatpush1.msra.mxu0 0.0
  %3639 = vmatprep.subr.mxu0 0.0
  %3640 = vmatpush1.msra.mxu0 0.0
  %3641 = vmatprep.subr.mxu0 0.0
  %3642 = vmatpush1.msra.mxu0 0.0
  %3643 = vmatprep.subr.mxu0 0.0
  %3644 = vmatpush1.msra.mxu0 0.0
  %3645 = vmatprep.mubr.f32.mxu0 0.0
  %3646 = vmatmul.mubr.f32.gmra.mrb[0].mxu0 %v3579
  %v3647 = vpop.f32.mrb[0].mxu0
  %v3648 = vadd.f32 0.0, %v3647
  %v3649 = vpop.f32.mrb[0].mxu0
  %3650 = vdwg.mxu0
  %v3652 = vsel %vm1904, %v3137, 0
  %3654 = vmatprep.subr.mxu0 0.0
  %3655 = vmatpush1.msra.mxu0 %v143
  %3656 = vmatprep.subr.mxu0 0.0
  %3657 = vmatpush1.msra.mxu0 0.0
  %3658 = vmatprep.subr.mxu0 0.0
  %3659 = vmatpush1.msra.mxu0 0.0
  %3660 = vmatprep.subr.mxu0 0.0
  %3661 = vmatpush1.msra.mxu0 0.0
  %3662 = vmatprep.subr.mxu0 0.0
  %3663 = vmatpush1.msra.mxu0 0.0
  %3664 = vmatprep.subr.mxu0 0.0
  %3665 = vmatpush1.msra.mxu0 0.0
  %3666 = vmatprep.subr.mxu0 0.0
  %3667 = vmatpush1.msra.mxu0 0.0
  %3668 = vmatprep.subr.mxu0 0.0
  %3669 = vmatpush1.msra.mxu0 0.0
  %3670 = vmatprep.subr.mxu0 0.0
  %3671 = vmatpush1.msra.mxu0 0.0
  %3672 = vmatprep.subr.mxu0 0.0
  %3673 = vmatpush1.msra.mxu0 0.0
  %3674 = vmatprep.subr.mxu0 0.0
  %3675 = vmatpush1.msra.mxu0 0.0
  %3676 = vmatprep.subr.mxu0 0.0
  %3677 = vmatpush1.msra.mxu0 0.0
  %3678 = vmatprep.subr.mxu0 0.0
  %3679 = vmatpush1.msra.mxu0 0.0
  %3680 = vmatprep.subr.mxu0 0.0
  %3681 = vmatpush1.msra.mxu0 0.0
  %3682 = vmatprep.subr.mxu0 0.0
  %3683 = vmatpush1.msra.mxu0 0.0
  %3684 = vmatprep.subr.mxu0 0.0
  %3685 = vmatpush1.msra.mxu0 0.0
  %3686 = vmatprep.subr.mxu0 0.0
  %3687 = vmatpush1.msra.mxu0 0.0
  %3688 = vmatprep.subr.mxu0 0.0
  %3689 = vmatpush1.msra.mxu0 0.0
  %3690 = vmatprep.subr.mxu0 0.0
  %3691 = vmatpush1.msra.mxu0 0.0
  %3692 = vmatprep.subr.mxu0 0.0
  %3693 = vmatpush1.msra.mxu0 0.0
  %3694 = vmatprep.subr.mxu0 0.0
  %3695 = vmatpush1.msra.mxu0 0.0
  %3696 = vmatprep.subr.mxu0 0.0
  %3697 = vmatpush1.msra.mxu0 0.0
  %3698 = vmatprep.subr.mxu0 0.0
  %3699 = vmatpush1.msra.mxu0 0.0
  %3700 = vmatprep.subr.mxu0 0.0
  %3701 = vmatpush1.msra.mxu0 0.0
  %3702 = vmatprep.subr.mxu0 0.0
  %3703 = vmatpush1.msra.mxu0 0.0
  %3704 = vmatprep.subr.mxu0 0.0
  %3705 = vmatpush1.msra.mxu0 0.0
  %3706 = vmatprep.subr.mxu0 0.0
  %3707 = vmatpush1.msra.mxu0 0.0
  %3708 = vmatprep.subr.mxu0 0.0
  %3709 = vmatpush1.msra.mxu0 0.0
  %3710 = vmatprep.subr.mxu0 0.0
  %3711 = vmatpush1.msra.mxu0 0.0
  %3712 = vmatprep.subr.mxu0 0.0
  %3713 = vmatpush1.msra.mxu0 0.0
  %3714 = vmatprep.subr.mxu0 0.0
  %3715 = vmatpush1.msra.mxu0 0.0
  %3716 = vmatprep.subr.mxu0 0.0
  %3717 = vmatpush1.msra.mxu0 0.0
  %3718 = vmatprep.mubr.f32.mxu0 0.0
  %3719 = vmatmul.mubr.f32.gmra.mrb[0].mxu0 %v3652
  %v3720 = vpop.f32.mrb[0].mxu0
  %v3721 = vadd.f32 0.0, %v3720
  %v3722 = vpop.f32.mrb[0].mxu0
  %3723 = vdwg.mxu0
  %v3725 = vsel %vm1904, %v3210, 0
  %3727 = vmatprep.subr.mxu0 0.0
  %3728 = vmatpush1.msra.mxu0 %v144
  %3729 = vmatprep.subr.mxu0 0.0
  %3730 = vmatpush1.msra.mxu0 0.0
  %3731 = vmatprep.subr.mxu0 0.0
  %3732 = vmatpush1.msra.mxu0 0.0
  %3733 = vmatprep.subr.mxu0 0.0
  %3734 = vmatpush1.msra.mxu0 0.0
  %3735 = vmatprep.subr.mxu0 0.0
  %3736 = vmatpush1.msra.mxu0 0.0
  %3737 = vmatprep.subr.mxu0 0.0
  %3738 = vmatpush1.msra.mxu0 0.0
  %3739 = vmatprep.subr.mxu0 0.0
  %3740 = vmatpush1.msra.mxu0 0.0
  %3741 = vmatprep.subr.mxu0 0.0
  %3742 = vmatpush1.msra.mxu0 0.0
  %3743 = vmatprep.subr.mxu0 0.0
  %3744 = vmatpush1.msra.mxu0 0.0
  %3745 = vmatprep.subr.mxu0 0.0
  %3746 = vmatpush1.msra.mxu0 0.0
  %3747 = vmatprep.subr.mxu0 0.0
  %3748 = vmatpush1.msra.mxu0 0.0
  %3749 = vmatprep.subr.mxu0 0.0
  %3750 = vmatpush1.msra.mxu0 0.0
  %3751 = vmatprep.subr.mxu0 0.0
  %3752 = vmatpush1.msra.mxu0 0.0
  %3753 = vmatprep.subr.mxu0 0.0
  %3754 = vmatpush1.msra.mxu0 0.0
  %3755 = vmatprep.subr.mxu0 0.0
  %3756 = vmatpush1.msra.mxu0 0.0
  %3757 = vmatprep.subr.mxu0 0.0
  %3758 = vmatpush1.msra.mxu0 0.0
  %3759 = vmatprep.subr.mxu0 0.0
  %3760 = vmatpush1.msra.mxu0 0.0
  %3761 = vmatprep.subr.mxu0 0.0
  %3762 = vmatpush1.msra.mxu0 0.0
  %3763 = vmatprep.subr.mxu0 0.0
  %3764 = vmatpush1.msra.mxu0 0.0
  %3765 = vmatprep.subr.mxu0 0.0
  %3766 = vmatpush1.msra.mxu0 0.0
  %3767 = vmatprep.subr.mxu0 0.0
  %3768 = vmatpush1.msra.mxu0 0.0
  %3769 = vmatprep.subr.mxu0 0.0
  %3770 = vmatpush1.msra.mxu0 0.0
  %3771 = vmatprep.subr.mxu0 0.0
  %3772 = vmatpush1.msra.mxu0 0.0
  %3773 = vmatprep.subr.mxu0 0.0
  %3774 = vmatpush1.msra.mxu0 0.0
  %3775 = vmatprep.subr.mxu0 0.0
  %3776 = vmatpush1.msra.mxu0 0.0
  %3777 = vmatprep.subr.mxu0 0.0
  %3778 = vmatpush1.msra.mxu0 0.0
  %3779 = vmatprep.subr.mxu0 0.0
  %3780 = vmatpush1.msra.mxu0 0.0
  %3781 = vmatprep.subr.mxu0 0.0
  %3782 = vmatpush1.msra.mxu0 0.0
  %3783 = vmatprep.subr.mxu0 0.0
  %3784 = vmatpush1.msra.mxu0 0.0
  %3785 = vmatprep.subr.mxu0 0.0
  %3786 = vmatpush1.msra.mxu0 0.0
  %3787 = vmatprep.subr.mxu0 0.0
  %3788 = vmatpush1.msra.mxu0 0.0
  %3789 = vmatprep.subr.mxu0 0.0
  %3790 = vmatpush1.msra.mxu0 0.0
  %3791 = vmatprep.mubr.f32.mxu0 0.0
  %3792 = vmatmul.mubr.f32.gmra.mrb[0].mxu0 %v3725
  %v3793 = vpop.f32.mrb[0].mxu0
  %v3794 = vadd.f32 0.0, %v3793
  %v3795 = vpop.f32.mrb[0].mxu0
  %3796 = vdwg.mxu0
  %v3797 = vsel %vm169, %v3283, 0.0
  %v3798 = vsel %vm169, %v3356, 0.0
  %v3799 = vadd.f32 %v3797, %v3798
  %v3800 = vsel %vm169, %v3429, 0.0
  %v3801 = vadd.f32 %v3799, %v3800
  %v3802 = vsel %vm169, %v3502, 0.0
  %v3803 = vadd.f32 %v3801, %v3802
  %v3804 = vsel %vm169, %v3575, 0.0
  %v3805 = vsel %vm169, %v3648, 0.0
  %v3806 = vadd.f32 %v3804, %v3805
  %v3807 = vsel %vm169, %v3721, 0.0
  %v3808 = vadd.f32 %v3806, %v3807
  %v3809 = vsel %vm169, %v3794, 0.0
  %v3810 = vadd.f32 %v3808, %v3809
  %v3811 = vld [vmem:[%s9] sm:$0x1]
  %v3813 = vlaneseq
  %v3814 = vshrl.u32 %v3813, 7
  %v3815 = vsub.s32 0, %v3814
  %v3816 = vrot.slane %v3811, %v3815
  %v3818 = vadd.f32 %v3803, %v3816
  %v3819 = vadd.f32 %v3810, %v3816
  %v3820 = vadd.f32 %v79, %v3818
  %v3821 = vadd.f32 %v80, %v3819
  %v3822 = vld [vmem:[%s10] sm:$0x1]
  %v3823 = vld [vmem:[%s11] sm:$0x1]
  %v3824 = vsel %vm169, %v3820, 0.0
  %3825 = vadd.xlane.f32.xlu0 %v3824
  %v3826 = vpop.xlane.xlu0 %3825
  %v3827 = vsel %vm169, %v3821, 0.0
  %3828 = vadd.xlane.f32.xlu0 %v3827
  %v3829 = vpop.xlane.xlu0 %3828
  %v3830 = vrcp.pop 32.0
  %v3831 = vmul.f32 %v3826, %v3830
  %v3832 = vmul.f32 %v3829, %v3830
  %v3833 = vsub.f32 %v3820, %v3831
  %v3834 = vsub.f32 %v3821, %v3832
  %v3835 = vmul.f32 %v3833, %v3833
  %v3836 = vmul.f32 %v3834, %v3834
  %v3837 = vsel %vm169, %v3835, 0.0
  %3838 = vadd.xlane.f32.xlu0 %v3837
  %v3839 = vpop.xlane.xlu0 %3838
  %v3840 = vsel %vm169, %v3836, 0.0
  %3841 = vadd.xlane.f32.xlu0 %v3840
  %v3842 = vpop.xlane.xlu0 %3841
  %v3843 = vmul.f32 %v3839, %v3830
  %v3844 = vmul.f32 %v3842, %v3830
  %v3845 = vadd.f32 %v3843, 1e-05
  %v3846 = vadd.f32 %v3844, 1e-05
  %v3847 = vrsqrt.pop %v3845
  %v3848 = vrsqrt.pop %v3846
  %v3849 = vmul.f32 %v3833, %v3847
  %v3850 = vmul.f32 %v3834, %v3848
  %v3852 = vlaneseq
  %v3853 = vshrl.u32 %v3852, 7
  %v3854 = vsub.s32 0, %v3853
  %v3855 = vrot.slane %v3822, %v3854
  %v3857 = vmul.f32 %v3849, %v3855
  %v3858 = vmul.f32 %v3850, %v3855
  %v3860 = vlaneseq
  %v3861 = vshrl.u32 %v3860, 7
  %v3862 = vsub.s32 0, %v3861
  %v3863 = vrot.slane %v3823, %v3862
  %v3865 = vadd.f32 %v3857, %v3863
  %v3866 = vadd.f32 %v3858, %v3863
  %v3867 = vld [vmem:[%s12] sm:$0xff]
  %v3868 = vld [vmem:[%s12 + $0x8] sm:$0xff]
  %v3869 = vld [vmem:[%s12 + $0x10] sm:$0xff]
  %v3870 = vld [vmem:[%s12 + $0x18] sm:$0xff]
  %v3871 = vld [vmem:[%s13] sm:$0x1]
  %v3873 = vlaneseq
  %v3874 = vshrl.u32 %v3873, 7
  %v3875 = vsub.s32 0, %v3874
  %v3876 = vrot.slane %v3871, %v3875
  %v3879 = vsel %vm169, %v3865, 0
  %v3882 = vsel %vm169, %v3866, 0
  %3884 = vmatprep.subr.mxu0 0.0
  %3885 = vmatpush1.msra.mxu0 %v3867
  %3886 = vmatprep.subr.mxu0 0.0
  %3887 = vmatpush1.msra.mxu0 %v3868
  %3888 = vmatprep.subr.mxu0 0.0
  %3889 = vmatpush1.msra.mxu0 %v3869
  %3890 = vmatprep.subr.mxu0 0.0
  %3891 = vmatpush1.msra.mxu0 %v3870
  %3892 = vmatprep.subr.mxu0 0.0
  %3893 = vmatpush1.msra.mxu0 0.0
  %3894 = vmatprep.subr.mxu0 0.0
  %3895 = vmatpush1.msra.mxu0 0.0
  %3896 = vmatprep.subr.mxu0 0.0
  %3897 = vmatpush1.msra.mxu0 0.0
  %3898 = vmatprep.subr.mxu0 0.0
  %3899 = vmatpush1.msra.mxu0 0.0
  %3900 = vmatprep.subr.mxu0 0.0
  %3901 = vmatpush1.msra.mxu0 0.0
  %3902 = vmatprep.subr.mxu0 0.0
  %3903 = vmatpush1.msra.mxu0 0.0
  %3904 = vmatprep.subr.mxu0 0.0
  %3905 = vmatpush1.msra.mxu0 0.0
  %3906 = vmatprep.subr.mxu0 0.0
  %3907 = vmatpush1.msra.mxu0 0.0
  %3908 = vmatprep.subr.mxu0 0.0
  %3909 = vmatpush1.msra.mxu0 0.0
  %3910 = vmatprep.subr.mxu0 0.0
  %3911 = vmatpush1.msra.mxu0 0.0
  %3912 = vmatprep.subr.mxu0 0.0
  %3913 = vmatpush1.msra.mxu0 0.0
  %3914 = vmatprep.subr.mxu0 0.0
  %3915 = vmatpush1.msra.mxu0 0.0
  %3916 = vmatprep.subr.mxu0 0.0
  %3917 = vmatpush1.msra.mxu0 0.0
  %3918 = vmatprep.subr.mxu0 0.0
  %3919 = vmatpush1.msra.mxu0 0.0
  %3920 = vmatprep.subr.mxu0 0.0
  %3921 = vmatpush1.msra.mxu0 0.0
  %3922 = vmatprep.subr.mxu0 0.0
  %3923 = vmatpush1.msra.mxu0 0.0
  %3924 = vmatprep.subr.mxu0 0.0
  %3925 = vmatpush1.msra.mxu0 0.0
  %3926 = vmatprep.subr.mxu0 0.0
  %3927 = vmatpush1.msra.mxu0 0.0
  %3928 = vmatprep.subr.mxu0 0.0
  %3929 = vmatpush1.msra.mxu0 0.0
  %3930 = vmatprep.subr.mxu0 0.0
  %3931 = vmatpush1.msra.mxu0 0.0
  %3932 = vmatprep.subr.mxu0 0.0
  %3933 = vmatpush1.msra.mxu0 0.0
  %3934 = vmatprep.subr.mxu0 0.0
  %3935 = vmatpush1.msra.mxu0 0.0
  %3936 = vmatprep.subr.mxu0 0.0
  %3937 = vmatpush1.msra.mxu0 0.0
  %3938 = vmatprep.subr.mxu0 0.0
  %3939 = vmatpush1.msra.mxu0 0.0
  %3940 = vmatprep.subr.mxu0 0.0
  %3941 = vmatpush1.msra.mxu0 0.0
  %3942 = vmatprep.subr.mxu0 0.0
  %3943 = vmatpush1.msra.mxu0 0.0
  %3944 = vmatprep.subr.mxu0 0.0
  %3945 = vmatpush1.msra.mxu0 0.0
  %3946 = vmatprep.subr.mxu0 0.0
  %3947 = vmatpush1.msra.mxu0 0.0
  %3948 = vmatprep.mubr.f32.mxu0 0.0
  %3949 = vmatmul.mubr.f32.gmra.mrb[0].mxu0 %v3879
  %v3950 = vpop.f32.mrb[0].mxu0
  %v3951 = vadd.f32 %v3876, %v3950
  %v3952 = vpop.f32.mrb[0].mxu0
  %3953 = vmatprep.mubr.f32.mxu0 0.0
  %3954 = vmatmul.mubr.f32.gmra.mrb[0].mxu0 %v3882
  %v3955 = vpop.f32.mrb[0].mxu0
  %v3956 = vadd.f32 %v3876, %v3955
  %v3957 = vpop.f32.mrb[0].mxu0
  %3958 = vdwg.mxu0
  %v3959 = vmax.f32 %v3951, 0.0
  %v3960 = vmax.f32 %v3956, 0.0
  %v3961 = vld [vmem:[%s14] sm:$0xff]
  %v3962 = vld [vmem:[%s14 + $0x8] sm:$0xff]
  %v3963 = vld [vmem:[%s14 + $0x10] sm:$0xff]
  %v3964 = vld [vmem:[%s14 + $0x18] sm:$0xff]
  %v3965 = vld [vmem:[%s14 + $0x20] sm:$0xff]
  %v3966 = vld [vmem:[%s14 + $0x28] sm:$0xff]
  %v3967 = vld [vmem:[%s14 + $0x30] sm:$0xff]
  %v3968 = vld [vmem:[%s14 + $0x38] sm:$0xff]
  %v3969 = vld [vmem:[%s15] sm:$0x1]
  %v3971 = vlaneseq
  %v3972 = vshrl.u32 %v3971, 7
  %v3973 = vsub.s32 0, %v3972
  %v3974 = vrot.slane %v3969, %v3973
  %vm3976 = vcmask 523264
  %v3978 = vsel %vm3976, %v3959, 0
  %v3981 = vsel %vm3976, %v3960, 0
  %3983 = vmatprep.subr.mxu0 0.0
  %3984 = vmatpush1.msra.mxu0 %v3961
  %3985 = vmatprep.subr.mxu0 0.0
  %3986 = vmatpush1.msra.mxu0 %v3962
  %3987 = vmatprep.subr.mxu0 0.0
  %3988 = vmatpush1.msra.mxu0 %v3963
  %3989 = vmatprep.subr.mxu0 0.0
  %3990 = vmatpush1.msra.mxu0 %v3964
  %3991 = vmatprep.subr.mxu0 0.0
  %3992 = vmatpush1.msra.mxu0 %v3965
  %3993 = vmatprep.subr.mxu0 0.0
  %3994 = vmatpush1.msra.mxu0 %v3966
  %3995 = vmatprep.subr.mxu0 0.0
  %3996 = vmatpush1.msra.mxu0 %v3967
  %3997 = vmatprep.subr.mxu0 0.0
  %3998 = vmatpush1.msra.mxu0 %v3968
  %3999 = vmatprep.subr.mxu0 0.0
  %4000 = vmatpush1.msra.mxu0 0.0
  %4001 = vmatprep.subr.mxu0 0.0
  %4002 = vmatpush1.msra.mxu0 0.0
  %4003 = vmatprep.subr.mxu0 0.0
  %4004 = vmatpush1.msra.mxu0 0.0
  %4005 = vmatprep.subr.mxu0 0.0
  %4006 = vmatpush1.msra.mxu0 0.0
  %4007 = vmatprep.subr.mxu0 0.0
  %4008 = vmatpush1.msra.mxu0 0.0
  %4009 = vmatprep.subr.mxu0 0.0
  %4010 = vmatpush1.msra.mxu0 0.0
  %4011 = vmatprep.subr.mxu0 0.0
  %4012 = vmatpush1.msra.mxu0 0.0
  %4013 = vmatprep.subr.mxu0 0.0
  %4014 = vmatpush1.msra.mxu0 0.0
  %4015 = vmatprep.subr.mxu0 0.0
  %4016 = vmatpush1.msra.mxu0 0.0
  %4017 = vmatprep.subr.mxu0 0.0
  %4018 = vmatpush1.msra.mxu0 0.0
  %4019 = vmatprep.subr.mxu0 0.0
  %4020 = vmatpush1.msra.mxu0 0.0
  %4021 = vmatprep.subr.mxu0 0.0
  %4022 = vmatpush1.msra.mxu0 0.0
  %4023 = vmatprep.subr.mxu0 0.0
  %4024 = vmatpush1.msra.mxu0 0.0
  %4025 = vmatprep.subr.mxu0 0.0
  %4026 = vmatpush1.msra.mxu0 0.0
  %4027 = vmatprep.subr.mxu0 0.0
  %4028 = vmatpush1.msra.mxu0 0.0
  %4029 = vmatprep.subr.mxu0 0.0
  %4030 = vmatpush1.msra.mxu0 0.0
  %4031 = vmatprep.subr.mxu0 0.0
  %4032 = vmatpush1.msra.mxu0 0.0
  %4033 = vmatprep.subr.mxu0 0.0
  %4034 = vmatpush1.msra.mxu0 0.0
  %4035 = vmatprep.subr.mxu0 0.0
  %4036 = vmatpush1.msra.mxu0 0.0
  %4037 = vmatprep.subr.mxu0 0.0
  %4038 = vmatpush1.msra.mxu0 0.0
  %4039 = vmatprep.subr.mxu0 0.0
  %4040 = vmatpush1.msra.mxu0 0.0
  %4041 = vmatprep.subr.mxu0 0.0
  %4042 = vmatpush1.msra.mxu0 0.0
  %4043 = vmatprep.subr.mxu0 0.0
  %4044 = vmatpush1.msra.mxu0 0.0
  %4045 = vmatprep.subr.mxu0 0.0
  %4046 = vmatpush1.msra.mxu0 0.0
  %4047 = vmatprep.mubr.f32.mxu0 0.0
  %4048 = vmatmul.mubr.f32.gmra.mrb[0].mxu0 %v3978
  %v4049 = vpop.f32.mrb[0].mxu0
  %v4050 = vadd.f32 %v3974, %v4049
  %v4051 = vpop.f32.mrb[0].mxu0
  %4052 = vmatprep.mubr.f32.mxu0 0.0
  %4053 = vmatmul.mubr.f32.gmra.mrb[0].mxu0 %v3981
  %v4054 = vpop.f32.mrb[0].mxu0
  %v4055 = vadd.f32 %v3974, %v4054
  %v4056 = vpop.f32.mrb[0].mxu0
  %4057 = vdwg.mxu0
  %v4058 = vadd.f32 %v3865, %v4050
  %v4059 = vadd.f32 %v3866, %v4055
  %v4060 = vld [vmem:[%s16] sm:$0x1]
  %v4061 = vld [vmem:[%s17] sm:$0x1]
  %v4062 = vsel %vm169, %v4058, 0.0
  %4063 = vadd.xlane.f32.xlu0 %v4062
  %v4064 = vpop.xlane.xlu0 %4063
  %v4065 = vsel %vm169, %v4059, 0.0
  %4066 = vadd.xlane.f32.xlu0 %v4065
  %v4067 = vpop.xlane.xlu0 %4066
  %v4068 = vmul.f32 %v4064, %v3830
  %v4069 = vmul.f32 %v4067, %v3830
  %v4070 = vsub.f32 %v4058, %v4068
  %v4071 = vsub.f32 %v4059, %v4069
  %v4072 = vmul.f32 %v4070, %v4070
  %v4073 = vmul.f32 %v4071, %v4071
  %v4074 = vsel %vm169, %v4072, 0.0
  %4075 = vadd.xlane.f32.xlu0 %v4074
  %v4076 = vpop.xlane.xlu0 %4075
  %v4077 = vsel %vm169, %v4073, 0.0
  %4078 = vadd.xlane.f32.xlu0 %v4077
  %v4079 = vpop.xlane.xlu0 %4078
  %v4080 = vmul.f32 %v4076, %v3830
  %v4081 = vmul.f32 %v4079, %v3830
  %v4082 = vadd.f32 %v4080, 1e-05
  %v4083 = vadd.f32 %v4081, 1e-05
  %v4084 = vrsqrt.pop %v4082
  %v4085 = vrsqrt.pop %v4083
  %v4086 = vmul.f32 %v4070, %v4084
  %v4087 = vmul.f32 %v4071, %v4085
  %v4089 = vlaneseq
  %v4090 = vshrl.u32 %v4089, 7
  %v4091 = vsub.s32 0, %v4090
  %v4092 = vrot.slane %v4060, %v4091
  %v4094 = vmul.f32 %v4086, %v4092
  %v4095 = vmul.f32 %v4087, %v4092
  %v4097 = vlaneseq
  %v4098 = vshrl.u32 %v4097, 7
  %v4099 = vsub.s32 0, %v4098
  %v4100 = vrot.slane %v4061, %v4099
  %v4102 = vadd.f32 %v4094, %v4100
  %v4103 = vadd.f32 %v4095, %v4100
  %s4104 = scalar_lea.vmem %s2, 128
  %v4105 = vld [vmem:[%s4104] sm:$0xff]
  %v4106 = vld [vmem:[%s4104 + $0x8] sm:$0xff]
  %v4107 = vld [vmem:[%s4104 + $0x10] sm:$0xff]
  %v4108 = vld [vmem:[%s4104 + $0x18] sm:$0xff]
  %v4109 = vld [vmem:[%s4104 + $0x20] sm:$0xff]
  %v4110 = vld [vmem:[%s4104 + $0x28] sm:$0xff]
  %v4111 = vld [vmem:[%s4104 + $0x30] sm:$0xff]
  %v4112 = vld [vmem:[%s4104 + $0x38] sm:$0xff]
  %v4113 = vld [vmem:[%s4104 + $0x40] sm:$0xff]
  %v4114 = vld [vmem:[%s4104 + $0x48] sm:$0xff]
  %v4115 = vld [vmem:[%s4104 + $0x50] sm:$0xff]
  %v4116 = vld [vmem:[%s4104 + $0x58] sm:$0xff]
  %v4117 = vld [vmem:[%s4104 + $0x60] sm:$0xff]
  %v4118 = vld [vmem:[%s4104 + $0x68] sm:$0xff]
  %v4119 = vld [vmem:[%s4104 + $0x70] sm:$0xff]
  %v4120 = vld [vmem:[%s4104 + $0x78] sm:$0xff]
  %s4121 = scalar_lea.vmem %s3, 4
  %v4122 = vld [vmem:[%s4121] sm:$0x1]
  %v4123 = vld [vmem:[%s4121 + $0x1] sm:$0x1]
  %v4124 = vld [vmem:[%s4121 + $0x2] sm:$0x1]
  %v4125 = vld [vmem:[%s4121 + $0x3] sm:$0x1]
  %s4126 = scalar_lea.vmem %s4, 128
  %v4127 = vld [vmem:[%s4126] sm:$0xff]
  %v4128 = vld [vmem:[%s4126 + $0x8] sm:$0xff]
  %v4129 = vld [vmem:[%s4126 + $0x10] sm:$0xff]
  %v4130 = vld [vmem:[%s4126 + $0x18] sm:$0xff]
  %v4131 = vld [vmem:[%s4126 + $0x20] sm:$0xff]
  %v4132 = vld [vmem:[%s4126 + $0x28] sm:$0xff]
  %v4133 = vld [vmem:[%s4126 + $0x30] sm:$0xff]
  %v4134 = vld [vmem:[%s4126 + $0x38] sm:$0xff]
  %v4135 = vld [vmem:[%s4126 + $0x40] sm:$0xff]
  %v4136 = vld [vmem:[%s4126 + $0x48] sm:$0xff]
  %v4137 = vld [vmem:[%s4126 + $0x50] sm:$0xff]
  %v4138 = vld [vmem:[%s4126 + $0x58] sm:$0xff]
  %v4139 = vld [vmem:[%s4126 + $0x60] sm:$0xff]
  %v4140 = vld [vmem:[%s4126 + $0x68] sm:$0xff]
  %v4141 = vld [vmem:[%s4126 + $0x70] sm:$0xff]
  %v4142 = vld [vmem:[%s4126 + $0x78] sm:$0xff]
  %s4143 = scalar_lea.vmem %s5, 4
  %v4144 = vld [vmem:[%s4143] sm:$0x1]
  %v4145 = vld [vmem:[%s4143 + $0x1] sm:$0x1]
  %v4146 = vld [vmem:[%s4143 + $0x2] sm:$0x1]
  %v4147 = vld [vmem:[%s4143 + $0x3] sm:$0x1]
  %s4148 = scalar_lea.vmem %s6, 128
  %v4149 = vld [vmem:[%s4148] sm:$0xff]
  %v4150 = vld [vmem:[%s4148 + $0x8] sm:$0xff]
  %v4151 = vld [vmem:[%s4148 + $0x10] sm:$0xff]
  %v4152 = vld [vmem:[%s4148 + $0x18] sm:$0xff]
  %v4153 = vld [vmem:[%s4148 + $0x20] sm:$0xff]
  %v4154 = vld [vmem:[%s4148 + $0x28] sm:$0xff]
  %v4155 = vld [vmem:[%s4148 + $0x30] sm:$0xff]
  %v4156 = vld [vmem:[%s4148 + $0x38] sm:$0xff]
  %v4157 = vld [vmem:[%s4148 + $0x40] sm:$0xff]
  %v4158 = vld [vmem:[%s4148 + $0x48] sm:$0xff]
  %v4159 = vld [vmem:[%s4148 + $0x50] sm:$0xff]
  %v4160 = vld [vmem:[%s4148 + $0x58] sm:$0xff]
  %v4161 = vld [vmem:[%s4148 + $0x60] sm:$0xff]
  %v4162 = vld [vmem:[%s4148 + $0x68] sm:$0xff]
  %v4163 = vld [vmem:[%s4148 + $0x70] sm:$0xff]
  %v4164 = vld [vmem:[%s4148 + $0x78] sm:$0xff]
  %s4165 = scalar_lea.vmem %s7, 4
  %v4166 = vld [vmem:[%s4165] sm:$0x1]
  %v4167 = vld [vmem:[%s4165 + $0x1] sm:$0x1]
  %v4168 = vld [vmem:[%s4165 + $0x2] sm:$0x1]
  %v4169 = vld [vmem:[%s4165 + $0x3] sm:$0x1]
  %s4170 = scalar_lea.vmem %s8, 32
  %v4171 = vld [vmem:[%s4170] sm:$0xff]
  %v4172 = vld [vmem:[%s4170 + $0x8] sm:$0xff]
  %v4173 = vld [vmem:[%s4170 + $0x10] sm:$0xff]
  %v4174 = vld [vmem:[%s4170 + $0x18] sm:$0xff]
  %v4179 = vlaneseq
  %v4180 = vshrl.u32 %v4179, 7
  %v4181 = vsub.s32 0, %v4180
  %v4182 = vrot.slane %v4122, %v4181
  %v4183 = vlaneseq
  %v4184 = vshrl.u32 %v4183, 7
  %v4185 = vsub.s32 0, %v4184
  %v4186 = vrot.slane %v4123, %v4185
  %v4187 = vlaneseq
  %v4188 = vshrl.u32 %v4187, 7
  %v4189 = vsub.s32 0, %v4188
  %v4190 = vrot.slane %v4124, %v4189
  %v4191 = vlaneseq
  %v4192 = vshrl.u32 %v4191, 7
  %v4193 = vsub.s32 0, %v4192
  %v4194 = vrot.slane %v4125, %v4193
  %v4200 = vsel %vm169, %v4102, 0
  %4202 = vmatprep.subr.mxu0 0.0
  %4203 = vmatpush1.msra.mxu0 %v4105
  %4204 = vmatprep.subr.mxu0 0.0
  %4205 = vmatpush1.msra.mxu0 %v4106
  %4206 = vmatprep.subr.mxu0 0.0
  %4207 = vmatpush1.msra.mxu0 %v4107
  %4208 = vmatprep.subr.mxu0 0.0
  %4209 = vmatpush1.msra.mxu0 %v4108
  %4210 = vmatprep.subr.mxu0 0.0
  %4211 = vmatpush1.msra.mxu0 0.0
  %4212 = vmatprep.subr.mxu0 0.0
  %4213 = vmatpush1.msra.mxu0 0.0
  %4214 = vmatprep.subr.mxu0 0.0
  %4215 = vmatpush1.msra.mxu0 0.0
  %4216 = vmatprep.subr.mxu0 0.0
  %4217 = vmatpush1.msra.mxu0 0.0
  %4218 = vmatprep.subr.mxu0 0.0
  %4219 = vmatpush1.msra.mxu0 0.0
  %4220 = vmatprep.subr.mxu0 0.0
  %4221 = vmatpush1.msra.mxu0 0.0
  %4222 = vmatprep.subr.mxu0 0.0
  %4223 = vmatpush1.msra.mxu0 0.0
  %4224 = vmatprep.subr.mxu0 0.0
  %4225 = vmatpush1.msra.mxu0 0.0
  %4226 = vmatprep.subr.mxu0 0.0
  %4227 = vmatpush1.msra.mxu0 0.0
  %4228 = vmatprep.subr.mxu0 0.0
  %4229 = vmatpush1.msra.mxu0 0.0
  %4230 = vmatprep.subr.mxu0 0.0
  %4231 = vmatpush1.msra.mxu0 0.0
  %4232 = vmatprep.subr.mxu0 0.0
  %4233 = vmatpush1.msra.mxu0 0.0
  %4234 = vmatprep.subr.mxu0 0.0
  %4235 = vmatpush1.msra.mxu0 0.0
  %4236 = vmatprep.subr.mxu0 0.0
  %4237 = vmatpush1.msra.mxu0 0.0
  %4238 = vmatprep.subr.mxu0 0.0
  %4239 = vmatpush1.msra.mxu0 0.0
  %4240 = vmatprep.subr.mxu0 0.0
  %4241 = vmatpush1.msra.mxu0 0.0
  %4242 = vmatprep.subr.mxu0 0.0
  %4243 = vmatpush1.msra.mxu0 0.0
  %4244 = vmatprep.subr.mxu0 0.0
  %4245 = vmatpush1.msra.mxu0 0.0
  %4246 = vmatprep.subr.mxu0 0.0
  %4247 = vmatpush1.msra.mxu0 0.0
  %4248 = vmatprep.subr.mxu0 0.0
  %4249 = vmatpush1.msra.mxu0 0.0
  %4250 = vmatprep.subr.mxu0 0.0
  %4251 = vmatpush1.msra.mxu0 0.0
  %4252 = vmatprep.subr.mxu0 0.0
  %4253 = vmatpush1.msra.mxu0 0.0
  %4254 = vmatprep.subr.mxu0 0.0
  %4255 = vmatpush1.msra.mxu0 0.0
  %4256 = vmatprep.subr.mxu0 0.0
  %4257 = vmatpush1.msra.mxu0 0.0
  %4258 = vmatprep.subr.mxu0 0.0
  %4259 = vmatpush1.msra.mxu0 0.0
  %4260 = vmatprep.subr.mxu0 0.0
  %4261 = vmatpush1.msra.mxu0 0.0
  %4262 = vmatprep.subr.mxu0 0.0
  %4263 = vmatpush1.msra.mxu0 0.0
  %4264 = vmatprep.subr.mxu0 0.0
  %4265 = vmatpush1.msra.mxu0 0.0
  %4266 = vmatprep.mubr.f32.mxu0 0.0
  %4267 = vmatmul.mubr.f32.gmra.mrb[0].mxu0 %v4200
  %v4268 = vpop.f32.mrb[0].mxu0
  %v4269 = vadd.f32 %v4182, %v4268
  %v4270 = vpop.f32.mrb[0].mxu0
  %4271 = vdwg.mxu0
  %4272 = vmatprep.subr.mxu0 0.0
  %4273 = vmatpush1.msra.mxu0 %v4109
  %4274 = vmatprep.subr.mxu0 0.0
  %4275 = vmatpush1.msra.mxu0 %v4110
  %4276 = vmatprep.subr.mxu0 0.0
  %4277 = vmatpush1.msra.mxu0 %v4111
  %4278 = vmatprep.subr.mxu0 0.0
  %4279 = vmatpush1.msra.mxu0 %v4112
  %4280 = vmatprep.subr.mxu0 0.0
  %4281 = vmatpush1.msra.mxu0 0.0
  %4282 = vmatprep.subr.mxu0 0.0
  %4283 = vmatpush1.msra.mxu0 0.0
  %4284 = vmatprep.subr.mxu0 0.0
  %4285 = vmatpush1.msra.mxu0 0.0
  %4286 = vmatprep.subr.mxu0 0.0
  %4287 = vmatpush1.msra.mxu0 0.0
  %4288 = vmatprep.subr.mxu0 0.0
  %4289 = vmatpush1.msra.mxu0 0.0
  %4290 = vmatprep.subr.mxu0 0.0
  %4291 = vmatpush1.msra.mxu0 0.0
  %4292 = vmatprep.subr.mxu0 0.0
  %4293 = vmatpush1.msra.mxu0 0.0
  %4294 = vmatprep.subr.mxu0 0.0
  %4295 = vmatpush1.msra.mxu0 0.0
  %4296 = vmatprep.subr.mxu0 0.0
  %4297 = vmatpush1.msra.mxu0 0.0
  %4298 = vmatprep.subr.mxu0 0.0
  %4299 = vmatpush1.msra.mxu0 0.0
  %4300 = vmatprep.subr.mxu0 0.0
  %4301 = vmatpush1.msra.mxu0 0.0
  %4302 = vmatprep.subr.mxu0 0.0
  %4303 = vmatpush1.msra.mxu0 0.0
  %4304 = vmatprep.subr.mxu0 0.0
  %4305 = vmatpush1.msra.mxu0 0.0
  %4306 = vmatprep.subr.mxu0 0.0
  %4307 = vmatpush1.msra.mxu0 0.0
  %4308 = vmatprep.subr.mxu0 0.0
  %4309 = vmatpush1.msra.mxu0 0.0
  %4310 = vmatprep.subr.mxu0 0.0
  %4311 = vmatpush1.msra.mxu0 0.0
  %4312 = vmatprep.subr.mxu0 0.0
  %4313 = vmatpush1.msra.mxu0 0.0
  %4314 = vmatprep.subr.mxu0 0.0
  %4315 = vmatpush1.msra.mxu0 0.0
  %4316 = vmatprep.subr.mxu0 0.0
  %4317 = vmatpush1.msra.mxu0 0.0
  %4318 = vmatprep.subr.mxu0 0.0
  %4319 = vmatpush1.msra.mxu0 0.0
  %4320 = vmatprep.subr.mxu0 0.0
  %4321 = vmatpush1.msra.mxu0 0.0
  %4322 = vmatprep.subr.mxu0 0.0
  %4323 = vmatpush1.msra.mxu0 0.0
  %4324 = vmatprep.subr.mxu0 0.0
  %4325 = vmatpush1.msra.mxu0 0.0
  %4326 = vmatprep.subr.mxu0 0.0
  %4327 = vmatpush1.msra.mxu0 0.0
  %4328 = vmatprep.subr.mxu0 0.0
  %4329 = vmatpush1.msra.mxu0 0.0
  %4330 = vmatprep.subr.mxu0 0.0
  %4331 = vmatpush1.msra.mxu0 0.0
  %4332 = vmatprep.subr.mxu0 0.0
  %4333 = vmatpush1.msra.mxu0 0.0
  %4334 = vmatprep.subr.mxu0 0.0
  %4335 = vmatpush1.msra.mxu0 0.0
  %4336 = vmatprep.mubr.f32.mxu0 0.0
  %4337 = vmatmul.mubr.f32.gmra.mrb[0].mxu0 %v4200
  %v4338 = vpop.f32.mrb[0].mxu0
  %v4339 = vadd.f32 %v4186, %v4338
  %v4340 = vpop.f32.mrb[0].mxu0
  %4341 = vdwg.mxu0
  %4342 = vmatprep.subr.mxu0 0.0
  %4343 = vmatpush1.msra.mxu0 %v4113
  %4344 = vmatprep.subr.mxu0 0.0
  %4345 = vmatpush1.msra.mxu0 %v4114
  %4346 = vmatprep.subr.mxu0 0.0
  %4347 = vmatpush1.msra.mxu0 %v4115
  %4348 = vmatprep.subr.mxu0 0.0
  %4349 = vmatpush1.msra.mxu0 %v4116
  %4350 = vmatprep.subr.mxu0 0.0
  %4351 = vmatpush1.msra.mxu0 0.0
  %4352 = vmatprep.subr.mxu0 0.0
  %4353 = vmatpush1.msra.mxu0 0.0
  %4354 = vmatprep.subr.mxu0 0.0
  %4355 = vmatpush1.msra.mxu0 0.0
  %4356 = vmatprep.subr.mxu0 0.0
  %4357 = vmatpush1.msra.mxu0 0.0
  %4358 = vmatprep.subr.mxu0 0.0
  %4359 = vmatpush1.msra.mxu0 0.0
  %4360 = vmatprep.subr.mxu0 0.0
  %4361 = vmatpush1.msra.mxu0 0.0
  %4362 = vmatprep.subr.mxu0 0.0
  %4363 = vmatpush1.msra.mxu0 0.0
  %4364 = vmatprep.subr.mxu0 0.0
  %4365 = vmatpush1.msra.mxu0 0.0
  %4366 = vmatprep.subr.mxu0 0.0
  %4367 = vmatpush1.msra.mxu0 0.0
  %4368 = vmatprep.subr.mxu0 0.0
  %4369 = vmatpush1.msra.mxu0 0.0
  %4370 = vmatprep.subr.mxu0 0.0
  %4371 = vmatpush1.msra.mxu0 0.0
  %4372 = vmatprep.subr.mxu0 0.0
  %4373 = vmatpush1.msra.mxu0 0.0
  %4374 = vmatprep.subr.mxu0 0.0
  %4375 = vmatpush1.msra.mxu0 0.0
  %4376 = vmatprep.subr.mxu0 0.0
  %4377 = vmatpush1.msra.mxu0 0.0
  %4378 = vmatprep.subr.mxu0 0.0
  %4379 = vmatpush1.msra.mxu0 0.0
  %4380 = vmatprep.subr.mxu0 0.0
  %4381 = vmatpush1.msra.mxu0 0.0
  %4382 = vmatprep.subr.mxu0 0.0
  %4383 = vmatpush1.msra.mxu0 0.0
  %4384 = vmatprep.subr.mxu0 0.0
  %4385 = vmatpush1.msra.mxu0 0.0
  %4386 = vmatprep.subr.mxu0 0.0
  %4387 = vmatpush1.msra.mxu0 0.0
  %4388 = vmatprep.subr.mxu0 0.0
  %4389 = vmatpush1.msra.mxu0 0.0
  %4390 = vmatprep.subr.mxu0 0.0
  %4391 = vmatpush1.msra.mxu0 0.0
  %4392 = vmatprep.subr.mxu0 0.0
  %4393 = vmatpush1.msra.mxu0 0.0
  %4394 = vmatprep.subr.mxu0 0.0
  %4395 = vmatpush1.msra.mxu0 0.0
  %4396 = vmatprep.subr.mxu0 0.0
  %4397 = vmatpush1.msra.mxu0 0.0
  %4398 = vmatprep.subr.mxu0 0.0
  %4399 = vmatpush1.msra.mxu0 0.0
  %4400 = vmatprep.subr.mxu0 0.0
  %4401 = vmatpush1.msra.mxu0 0.0
  %4402 = vmatprep.subr.mxu0 0.0
  %4403 = vmatpush1.msra.mxu0 0.0
  %4404 = vmatprep.subr.mxu0 0.0
  %4405 = vmatpush1.msra.mxu0 0.0
  %4406 = vmatprep.mubr.f32.mxu0 0.0
  %4407 = vmatmul.mubr.f32.gmra.mrb[0].mxu0 %v4200
  %v4408 = vpop.f32.mrb[0].mxu0
  %v4409 = vadd.f32 %v4190, %v4408
  %v4410 = vpop.f32.mrb[0].mxu0
  %4411 = vdwg.mxu0
  %4412 = vmatprep.subr.mxu0 0.0
  %4413 = vmatpush1.msra.mxu0 %v4117
  %4414 = vmatprep.subr.mxu0 0.0
  %4415 = vmatpush1.msra.mxu0 %v4118
  %4416 = vmatprep.subr.mxu0 0.0
  %4417 = vmatpush1.msra.mxu0 %v4119
  %4418 = vmatprep.subr.mxu0 0.0
  %4419 = vmatpush1.msra.mxu0 %v4120
  %4420 = vmatprep.subr.mxu0 0.0
  %4421 = vmatpush1.msra.mxu0 0.0
  %4422 = vmatprep.subr.mxu0 0.0
  %4423 = vmatpush1.msra.mxu0 0.0
  %4424 = vmatprep.subr.mxu0 0.0
  %4425 = vmatpush1.msra.mxu0 0.0
  %4426 = vmatprep.subr.mxu0 0.0
  %4427 = vmatpush1.msra.mxu0 0.0
  %4428 = vmatprep.subr.mxu0 0.0
  %4429 = vmatpush1.msra.mxu0 0.0
  %4430 = vmatprep.subr.mxu0 0.0
  %4431 = vmatpush1.msra.mxu0 0.0
  %4432 = vmatprep.subr.mxu0 0.0
  %4433 = vmatpush1.msra.mxu0 0.0
  %4434 = vmatprep.subr.mxu0 0.0
  %4435 = vmatpush1.msra.mxu0 0.0
  %4436 = vmatprep.subr.mxu0 0.0
  %4437 = vmatpush1.msra.mxu0 0.0
  %4438 = vmatprep.subr.mxu0 0.0
  %4439 = vmatpush1.msra.mxu0 0.0
  %4440 = vmatprep.subr.mxu0 0.0
  %4441 = vmatpush1.msra.mxu0 0.0
  %4442 = vmatprep.subr.mxu0 0.0
  %4443 = vmatpush1.msra.mxu0 0.0
  %4444 = vmatprep.subr.mxu0 0.0
  %4445 = vmatpush1.msra.mxu0 0.0
  %4446 = vmatprep.subr.mxu0 0.0
  %4447 = vmatpush1.msra.mxu0 0.0
  %4448 = vmatprep.subr.mxu0 0.0
  %4449 = vmatpush1.msra.mxu0 0.0
  %4450 = vmatprep.subr.mxu0 0.0
  %4451 = vmatpush1.msra.mxu0 0.0
  %4452 = vmatprep.subr.mxu0 0.0
  %4453 = vmatpush1.msra.mxu0 0.0
  %4454 = vmatprep.subr.mxu0 0.0
  %4455 = vmatpush1.msra.mxu0 0.0
  %4456 = vmatprep.subr.mxu0 0.0
  %4457 = vmatpush1.msra.mxu0 0.0
  %4458 = vmatprep.subr.mxu0 0.0
  %4459 = vmatpush1.msra.mxu0 0.0
  %4460 = vmatprep.subr.mxu0 0.0
  %4461 = vmatpush1.msra.mxu0 0.0
  %4462 = vmatprep.subr.mxu0 0.0
  %4463 = vmatpush1.msra.mxu0 0.0
  %4464 = vmatprep.subr.mxu0 0.0
  %4465 = vmatpush1.msra.mxu0 0.0
  %4466 = vmatprep.subr.mxu0 0.0
  %4467 = vmatpush1.msra.mxu0 0.0
  %4468 = vmatprep.subr.mxu0 0.0
  %4469 = vmatpush1.msra.mxu0 0.0
  %4470 = vmatprep.subr.mxu0 0.0
  %4471 = vmatpush1.msra.mxu0 0.0
  %4472 = vmatprep.subr.mxu0 0.0
  %4473 = vmatpush1.msra.mxu0 0.0
  %4474 = vmatprep.subr.mxu0 0.0
  %4475 = vmatpush1.msra.mxu0 0.0
  %4476 = vmatprep.mubr.f32.mxu0 0.0
  %4477 = vmatmul.mubr.f32.gmra.mrb[0].mxu0 %v4200
  %v4478 = vpop.f32.mrb[0].mxu0
  %v4479 = vadd.f32 %v4194, %v4478
  %v4480 = vpop.f32.mrb[0].mxu0
  %4481 = vdwg.mxu0
  %v4483 = vsel %vm169, %v4103, 0
  %4485 = vmatprep.subr.mxu0 0.0
  %4486 = vmatpush1.msra.mxu0 %v4105
  %4487 = vmatprep.subr.mxu0 0.0
  %4488 = vmatpush1.msra.mxu0 %v4106
  %4489 = vmatprep.subr.mxu0 0.0
  %4490 = vmatpush1.msra.mxu0 %v4107
  %4491 = vmatprep.subr.mxu0 0.0
  %4492 = vmatpush1.msra.mxu0 %v4108
  %4493 = vmatprep.subr.mxu0 0.0
  %4494 = vmatpush1.msra.mxu0 0.0
  %4495 = vmatprep.subr.mxu0 0.0
  %4496 = vmatpush1.msra.mxu0 0.0
  %4497 = vmatprep.subr.mxu0 0.0
  %4498 = vmatpush1.msra.mxu0 0.0
  %4499 = vmatprep.subr.mxu0 0.0
  %4500 = vmatpush1.msra.mxu0 0.0
  %4501 = vmatprep.subr.mxu0 0.0
  %4502 = vmatpush1.msra.mxu0 0.0
  %4503 = vmatprep.subr.mxu0 0.0
  %4504 = vmatpush1.msra.mxu0 0.0
  %4505 = vmatprep.subr.mxu0 0.0
  %4506 = vmatpush1.msra.mxu0 0.0
  %4507 = vmatprep.subr.mxu0 0.0
  %4508 = vmatpush1.msra.mxu0 0.0
  %4509 = vmatprep.subr.mxu0 0.0
  %4510 = vmatpush1.msra.mxu0 0.0
  %4511 = vmatprep.subr.mxu0 0.0
  %4512 = vmatpush1.msra.mxu0 0.0
  %4513 = vmatprep.subr.mxu0 0.0
  %4514 = vmatpush1.msra.mxu0 0.0
  %4515 = vmatprep.subr.mxu0 0.0
  %4516 = vmatpush1.msra.mxu0 0.0
  %4517 = vmatprep.subr.mxu0 0.0
  %4518 = vmatpush1.msra.mxu0 0.0
  %4519 = vmatprep.subr.mxu0 0.0
  %4520 = vmatpush1.msra.mxu0 0.0
  %4521 = vmatprep.subr.mxu0 0.0
  %4522 = vmatpush1.msra.mxu0 0.0
  %4523 = vmatprep.subr.mxu0 0.0
  %4524 = vmatpush1.msra.mxu0 0.0
  %4525 = vmatprep.subr.mxu0 0.0
  %4526 = vmatpush1.msra.mxu0 0.0
  %4527 = vmatprep.subr.mxu0 0.0
  %4528 = vmatpush1.msra.mxu0 0.0
  %4529 = vmatprep.subr.mxu0 0.0
  %4530 = vmatpush1.msra.mxu0 0.0
  %4531 = vmatprep.subr.mxu0 0.0
  %4532 = vmatpush1.msra.mxu0 0.0
  %4533 = vmatprep.subr.mxu0 0.0
  %4534 = vmatpush1.msra.mxu0 0.0
  %4535 = vmatprep.subr.mxu0 0.0
  %4536 = vmatpush1.msra.mxu0 0.0
  %4537 = vmatprep.subr.mxu0 0.0
  %4538 = vmatpush1.msra.mxu0 0.0
  %4539 = vmatprep.subr.mxu0 0.0
  %4540 = vmatpush1.msra.mxu0 0.0
  %4541 = vmatprep.subr.mxu0 0.0
  %4542 = vmatpush1.msra.mxu0 0.0
  %4543 = vmatprep.subr.mxu0 0.0
  %4544 = vmatpush1.msra.mxu0 0.0
  %4545 = vmatprep.subr.mxu0 0.0
  %4546 = vmatpush1.msra.mxu0 0.0
  %4547 = vmatprep.subr.mxu0 0.0
  %4548 = vmatpush1.msra.mxu0 0.0
  %4549 = vmatprep.mubr.f32.mxu0 0.0
  %4550 = vmatmul.mubr.f32.gmra.mrb[0].mxu0 %v4483
  %v4551 = vpop.f32.mrb[0].mxu0
  %v4552 = vadd.f32 %v4182, %v4551
  %v4553 = vpop.f32.mrb[0].mxu0
  %4554 = vdwg.mxu0
  %4555 = vmatprep.subr.mxu0 0.0
  %4556 = vmatpush1.msra.mxu0 %v4109
  %4557 = vmatprep.subr.mxu0 0.0
  %4558 = vmatpush1.msra.mxu0 %v4110
  %4559 = vmatprep.subr.mxu0 0.0
  %4560 = vmatpush1.msra.mxu0 %v4111
  %4561 = vmatprep.subr.mxu0 0.0
  %4562 = vmatpush1.msra.mxu0 %v4112
  %4563 = vmatprep.subr.mxu0 0.0
  %4564 = vmatpush1.msra.mxu0 0.0
  %4565 = vmatprep.subr.mxu0 0.0
  %4566 = vmatpush1.msra.mxu0 0.0
  %4567 = vmatprep.subr.mxu0 0.0
  %4568 = vmatpush1.msra.mxu0 0.0
  %4569 = vmatprep.subr.mxu0 0.0
  %4570 = vmatpush1.msra.mxu0 0.0
  %4571 = vmatprep.subr.mxu0 0.0
  %4572 = vmatpush1.msra.mxu0 0.0
  %4573 = vmatprep.subr.mxu0 0.0
  %4574 = vmatpush1.msra.mxu0 0.0
  %4575 = vmatprep.subr.mxu0 0.0
  %4576 = vmatpush1.msra.mxu0 0.0
  %4577 = vmatprep.subr.mxu0 0.0
  %4578 = vmatpush1.msra.mxu0 0.0
  %4579 = vmatprep.subr.mxu0 0.0
  %4580 = vmatpush1.msra.mxu0 0.0
  %4581 = vmatprep.subr.mxu0 0.0
  %4582 = vmatpush1.msra.mxu0 0.0
  %4583 = vmatprep.subr.mxu0 0.0
  %4584 = vmatpush1.msra.mxu0 0.0
  %4585 = vmatprep.subr.mxu0 0.0
  %4586 = vmatpush1.msra.mxu0 0.0
  %4587 = vmatprep.subr.mxu0 0.0
  %4588 = vmatpush1.msra.mxu0 0.0
  %4589 = vmatprep.subr.mxu0 0.0
  %4590 = vmatpush1.msra.mxu0 0.0
  %4591 = vmatprep.subr.mxu0 0.0
  %4592 = vmatpush1.msra.mxu0 0.0
  %4593 = vmatprep.subr.mxu0 0.0
  %4594 = vmatpush1.msra.mxu0 0.0
  %4595 = vmatprep.subr.mxu0 0.0
  %4596 = vmatpush1.msra.mxu0 0.0
  %4597 = vmatprep.subr.mxu0 0.0
  %4598 = vmatpush1.msra.mxu0 0.0
  %4599 = vmatprep.subr.mxu0 0.0
  %4600 = vmatpush1.msra.mxu0 0.0
  %4601 = vmatprep.subr.mxu0 0.0
  %4602 = vmatpush1.msra.mxu0 0.0
  %4603 = vmatprep.subr.mxu0 0.0
  %4604 = vmatpush1.msra.mxu0 0.0
  %4605 = vmatprep.subr.mxu0 0.0
  %4606 = vmatpush1.msra.mxu0 0.0
  %4607 = vmatprep.subr.mxu0 0.0
  %4608 = vmatpush1.msra.mxu0 0.0
  %4609 = vmatprep.subr.mxu0 0.0
  %4610 = vmatpush1.msra.mxu0 0.0
  %4611 = vmatprep.subr.mxu0 0.0
  %4612 = vmatpush1.msra.mxu0 0.0
  %4613 = vmatprep.subr.mxu0 0.0
  %4614 = vmatpush1.msra.mxu0 0.0
  %4615 = vmatprep.subr.mxu0 0.0
  %4616 = vmatpush1.msra.mxu0 0.0
  %4617 = vmatprep.subr.mxu0 0.0
  %4618 = vmatpush1.msra.mxu0 0.0
  %4619 = vmatprep.mubr.f32.mxu0 0.0
  %4620 = vmatmul.mubr.f32.gmra.mrb[0].mxu0 %v4483
  %v4621 = vpop.f32.mrb[0].mxu0
  %v4622 = vadd.f32 %v4186, %v4621
  %v4623 = vpop.f32.mrb[0].mxu0
  %4624 = vdwg.mxu0
  %4625 = vmatprep.subr.mxu0 0.0
  %4626 = vmatpush1.msra.mxu0 %v4113
  %4627 = vmatprep.subr.mxu0 0.0
  %4628 = vmatpush1.msra.mxu0 %v4114
  %4629 = vmatprep.subr.mxu0 0.0
  %4630 = vmatpush1.msra.mxu0 %v4115
  %4631 = vmatprep.subr.mxu0 0.0
  %4632 = vmatpush1.msra.mxu0 %v4116
  %4633 = vmatprep.subr.mxu0 0.0
  %4634 = vmatpush1.msra.mxu0 0.0
  %4635 = vmatprep.subr.mxu0 0.0
  %4636 = vmatpush1.msra.mxu0 0.0
  %4637 = vmatprep.subr.mxu0 0.0
  %4638 = vmatpush1.msra.mxu0 0.0
  %4639 = vmatprep.subr.mxu0 0.0
  %4640 = vmatpush1.msra.mxu0 0.0
  %4641 = vmatprep.subr.mxu0 0.0
  %4642 = vmatpush1.msra.mxu0 0.0
  %4643 = vmatprep.subr.mxu0 0.0
  %4644 = vmatpush1.msra.mxu0 0.0
  %4645 = vmatprep.subr.mxu0 0.0
  %4646 = vmatpush1.msra.mxu0 0.0
  %4647 = vmatprep.subr.mxu0 0.0
  %4648 = vmatpush1.msra.mxu0 0.0
  %4649 = vmatprep.subr.mxu0 0.0
  %4650 = vmatpush1.msra.mxu0 0.0
  %4651 = vmatprep.subr.mxu0 0.0
  %4652 = vmatpush1.msra.mxu0 0.0
  %4653 = vmatprep.subr.mxu0 0.0
  %4654 = vmatpush1.msra.mxu0 0.0
  %4655 = vmatprep.subr.mxu0 0.0
  %4656 = vmatpush1.msra.mxu0 0.0
  %4657 = vmatprep.subr.mxu0 0.0
  %4658 = vmatpush1.msra.mxu0 0.0
  %4659 = vmatprep.subr.mxu0 0.0
  %4660 = vmatpush1.msra.mxu0 0.0
  %4661 = vmatprep.subr.mxu0 0.0
  %4662 = vmatpush1.msra.mxu0 0.0
  %4663 = vmatprep.subr.mxu0 0.0
  %4664 = vmatpush1.msra.mxu0 0.0
  %4665 = vmatprep.subr.mxu0 0.0
  %4666 = vmatpush1.msra.mxu0 0.0
  %4667 = vmatprep.subr.mxu0 0.0
  %4668 = vmatpush1.msra.mxu0 0.0
  %4669 = vmatprep.subr.mxu0 0.0
  %4670 = vmatpush1.msra.mxu0 0.0
  %4671 = vmatprep.subr.mxu0 0.0
  %4672 = vmatpush1.msra.mxu0 0.0
  %4673 = vmatprep.subr.mxu0 0.0
  %4674 = vmatpush1.msra.mxu0 0.0
  %4675 = vmatprep.subr.mxu0 0.0
  %4676 = vmatpush1.msra.mxu0 0.0
  %4677 = vmatprep.subr.mxu0 0.0
  %4678 = vmatpush1.msra.mxu0 0.0
  %4679 = vmatprep.subr.mxu0 0.0
  %4680 = vmatpush1.msra.mxu0 0.0
  %4681 = vmatprep.subr.mxu0 0.0
  %4682 = vmatpush1.msra.mxu0 0.0
  %4683 = vmatprep.subr.mxu0 0.0
  %4684 = vmatpush1.msra.mxu0 0.0
  %4685 = vmatprep.subr.mxu0 0.0
  %4686 = vmatpush1.msra.mxu0 0.0
  %4687 = vmatprep.subr.mxu0 0.0
  %4688 = vmatpush1.msra.mxu0 0.0
  %4689 = vmatprep.mubr.f32.mxu0 0.0
  %4690 = vmatmul.mubr.f32.gmra.mrb[0].mxu0 %v4483
  %v4691 = vpop.f32.mrb[0].mxu0
  %v4692 = vadd.f32 %v4190, %v4691
  %v4693 = vpop.f32.mrb[0].mxu0
  %4694 = vdwg.mxu0
  %4695 = vmatprep.subr.mxu0 0.0
  %4696 = vmatpush1.msra.mxu0 %v4117
  %4697 = vmatprep.subr.mxu0 0.0
  %4698 = vmatpush1.msra.mxu0 %v4118
  %4699 = vmatprep.subr.mxu0 0.0
  %4700 = vmatpush1.msra.mxu0 %v4119
  %4701 = vmatprep.subr.mxu0 0.0
  %4702 = vmatpush1.msra.mxu0 %v4120
  %4703 = vmatprep.subr.mxu0 0.0
  %4704 = vmatpush1.msra.mxu0 0.0
  %4705 = vmatprep.subr.mxu0 0.0
  %4706 = vmatpush1.msra.mxu0 0.0
  %4707 = vmatprep.subr.mxu0 0.0
  %4708 = vmatpush1.msra.mxu0 0.0
  %4709 = vmatprep.subr.mxu0 0.0
  %4710 = vmatpush1.msra.mxu0 0.0
  %4711 = vmatprep.subr.mxu0 0.0
  %4712 = vmatpush1.msra.mxu0 0.0
  %4713 = vmatprep.subr.mxu0 0.0
  %4714 = vmatpush1.msra.mxu0 0.0
  %4715 = vmatprep.subr.mxu0 0.0
  %4716 = vmatpush1.msra.mxu0 0.0
  %4717 = vmatprep.subr.mxu0 0.0
  %4718 = vmatpush1.msra.mxu0 0.0
  %4719 = vmatprep.subr.mxu0 0.0
  %4720 = vmatpush1.msra.mxu0 0.0
  %4721 = vmatprep.subr.mxu0 0.0
  %4722 = vmatpush1.msra.mxu0 0.0
  %4723 = vmatprep.subr.mxu0 0.0
  %4724 = vmatpush1.msra.mxu0 0.0
  %4725 = vmatprep.subr.mxu0 0.0
  %4726 = vmatpush1.msra.mxu0 0.0
  %4727 = vmatprep.subr.mxu0 0.0
  %4728 = vmatpush1.msra.mxu0 0.0
  %4729 = vmatprep.subr.mxu0 0.0
  %4730 = vmatpush1.msra.mxu0 0.0
  %4731 = vmatprep.subr.mxu0 0.0
  %4732 = vmatpush1.msra.mxu0 0.0
  %4733 = vmatprep.subr.mxu0 0.0
  %4734 = vmatpush1.msra.mxu0 0.0
  %4735 = vmatprep.subr.mxu0 0.0
  %4736 = vmatpush1.msra.mxu0 0.0
  %4737 = vmatprep.subr.mxu0 0.0
  %4738 = vmatpush1.msra.mxu0 0.0
  %4739 = vmatprep.subr.mxu0 0.0
  %4740 = vmatpush1.msra.mxu0 0.0
  %4741 = vmatprep.subr.mxu0 0.0
  %4742 = vmatpush1.msra.mxu0 0.0
  %4743 = vmatprep.subr.mxu0 0.0
  %4744 = vmatpush1.msra.mxu0 0.0
  %4745 = vmatprep.subr.mxu0 0.0
  %4746 = vmatpush1.msra.mxu0 0.0
  %4747 = vmatprep.subr.mxu0 0.0
  %4748 = vmatpush1.msra.mxu0 0.0
  %4749 = vmatprep.subr.mxu0 0.0
  %4750 = vmatpush1.msra.mxu0 0.0
  %4751 = vmatprep.subr.mxu0 0.0
  %4752 = vmatpush1.msra.mxu0 0.0
  %4753 = vmatprep.subr.mxu0 0.0
  %4754 = vmatpush1.msra.mxu0 0.0
  %4755 = vmatprep.subr.mxu0 0.0
  %4756 = vmatpush1.msra.mxu0 0.0
  %4757 = vmatprep.subr.mxu0 0.0
  %4758 = vmatpush1.msra.mxu0 0.0
  %4759 = vmatprep.mubr.f32.mxu0 0.0
  %4760 = vmatmul.mubr.f32.gmra.mrb[0].mxu0 %v4483
  %v4761 = vpop.f32.mrb[0].mxu0
  %v4762 = vadd.f32 %v4194, %v4761
  %v4763 = vpop.f32.mrb[0].mxu0
  %4764 = vdwg.mxu0
  %v4769 = vlaneseq
  %v4770 = vshrl.u32 %v4769, 7
  %v4771 = vsub.s32 0, %v4770
  %v4772 = vrot.slane %v4144, %v4771
  %v4773 = vlaneseq
  %v4774 = vshrl.u32 %v4773, 7
  %v4775 = vsub.s32 0, %v4774
  %v4776 = vrot.slane %v4145, %v4775
  %v4777 = vlaneseq
  %v4778 = vshrl.u32 %v4777, 7
  %v4779 = vsub.s32 0, %v4778
  %v4780 = vrot.slane %v4146, %v4779
  %v4781 = vlaneseq
  %v4782 = vshrl.u32 %v4781, 7
  %v4783 = vsub.s32 0, %v4782
  %v4784 = vrot.slane %v4147, %v4783
  %4789 = vmatprep.subr.mxu0 0.0
  %4790 = vmatpush1.msra.mxu0 %v4127
  %4791 = vmatprep.subr.mxu0 0.0
  %4792 = vmatpush1.msra.mxu0 %v4128
  %4793 = vmatprep.subr.mxu0 0.0
  %4794 = vmatpush1.msra.mxu0 %v4129
  %4795 = vmatprep.subr.mxu0 0.0
  %4796 = vmatpush1.msra.mxu0 %v4130
  %4797 = vmatprep.subr.mxu0 0.0
  %4798 = vmatpush1.msra.mxu0 0.0
  %4799 = vmatprep.subr.mxu0 0.0
  %4800 = vmatpush1.msra.mxu0 0.0
  %4801 = vmatprep.subr.mxu0 0.0
  %4802 = vmatpush1.msra.mxu0 0.0
  %4803 = vmatprep.subr.mxu0 0.0
  %4804 = vmatpush1.msra.mxu0 0.0
  %4805 = vmatprep.subr.mxu0 0.0
  %4806 = vmatpush1.msra.mxu0 0.0
  %4807 = vmatprep.subr.mxu0 0.0
  %4808 = vmatpush1.msra.mxu0 0.0
  %4809 = vmatprep.subr.mxu0 0.0
  %4810 = vmatpush1.msra.mxu0 0.0
  %4811 = vmatprep.subr.mxu0 0.0
  %4812 = vmatpush1.msra.mxu0 0.0
  %4813 = vmatprep.subr.mxu0 0.0
  %4814 = vmatpush1.msra.mxu0 0.0
  %4815 = vmatprep.subr.mxu0 0.0
  %4816 = vmatpush1.msra.mxu0 0.0
  %4817 = vmatprep.subr.mxu0 0.0
  %4818 = vmatpush1.msra.mxu0 0.0
  %4819 = vmatprep.subr.mxu0 0.0
  %4820 = vmatpush1.msra.mxu0 0.0
  %4821 = vmatprep.subr.mxu0 0.0
  %4822 = vmatpush1.msra.mxu0 0.0
  %4823 = vmatprep.subr.mxu0 0.0
  %4824 = vmatpush1.msra.mxu0 0.0
  %4825 = vmatprep.subr.mxu0 0.0
  %4826 = vmatpush1.msra.mxu0 0.0
  %4827 = vmatprep.subr.mxu0 0.0
  %4828 = vmatpush1.msra.mxu0 0.0
  %4829 = vmatprep.subr.mxu0 0.0
  %4830 = vmatpush1.msra.mxu0 0.0
  %4831 = vmatprep.subr.mxu0 0.0
  %4832 = vmatpush1.msra.mxu0 0.0
  %4833 = vmatprep.subr.mxu0 0.0
  %4834 = vmatpush1.msra.mxu0 0.0
  %4835 = vmatprep.subr.mxu0 0.0
  %4836 = vmatpush1.msra.mxu0 0.0
  %4837 = vmatprep.subr.mxu0 0.0
  %4838 = vmatpush1.msra.mxu0 0.0
  %4839 = vmatprep.subr.mxu0 0.0
  %4840 = vmatpush1.msra.mxu0 0.0
  %4841 = vmatprep.subr.mxu0 0.0
  %4842 = vmatpush1.msra.mxu0 0.0
  %4843 = vmatprep.subr.mxu0 0.0
  %4844 = vmatpush1.msra.mxu0 0.0
  %4845 = vmatprep.subr.mxu0 0.0
  %4846 = vmatpush1.msra.mxu0 0.0
  %4847 = vmatprep.subr.mxu0 0.0
  %4848 = vmatpush1.msra.mxu0 0.0
  %4849 = vmatprep.subr.mxu0 0.0
  %4850 = vmatpush1.msra.mxu0 0.0
  %4851 = vmatprep.subr.mxu0 0.0
  %4852 = vmatpush1.msra.mxu0 0.0
  %4853 = vmatprep.mubr.f32.mxu0 0.0
  %4854 = vmatmul.mubr.f32.gmra.mrb[0].mxu0 %v4200
  %v4855 = vpop.f32.mrb[0].mxu0
  %v4856 = vadd.f32 %v4772, %v4855
  %v4857 = vpop.f32.mrb[0].mxu0
  %4858 = vdwg.mxu0
  %4859 = vmatprep.subr.mxu0 0.0
  %4860 = vmatpush1.msra.mxu0 %v4131
  %4861 = vmatprep.subr.mxu0 0.0
  %4862 = vmatpush1.msra.mxu0 %v4132
  %4863 = vmatprep.subr.mxu0 0.0
  %4864 = vmatpush1.msra.mxu0 %v4133
  %4865 = vmatprep.subr.mxu0 0.0
  %4866 = vmatpush1.msra.mxu0 %v4134
  %4867 = vmatprep.subr.mxu0 0.0
  %4868 = vmatpush1.msra.mxu0 0.0
  %4869 = vmatprep.subr.mxu0 0.0
  %4870 = vmatpush1.msra.mxu0 0.0
  %4871 = vmatprep.subr.mxu0 0.0
  %4872 = vmatpush1.msra.mxu0 0.0
  %4873 = vmatprep.subr.mxu0 0.0
  %4874 = vmatpush1.msra.mxu0 0.0
  %4875 = vmatprep.subr.mxu0 0.0
  %4876 = vmatpush1.msra.mxu0 0.0
  %4877 = vmatprep.subr.mxu0 0.0
  %4878 = vmatpush1.msra.mxu0 0.0
  %4879 = vmatprep.subr.mxu0 0.0
  %4880 = vmatpush1.msra.mxu0 0.0
  %4881 = vmatprep.subr.mxu0 0.0
  %4882 = vmatpush1.msra.mxu0 0.0
  %4883 = vmatprep.subr.mxu0 0.0
  %4884 = vmatpush1.msra.mxu0 0.0
  %4885 = vmatprep.subr.mxu0 0.0
  %4886 = vmatpush1.msra.mxu0 0.0
  %4887 = vmatprep.subr.mxu0 0.0
  %4888 = vmatpush1.msra.mxu0 0.0
  %4889 = vmatprep.subr.mxu0 0.0
  %4890 = vmatpush1.msra.mxu0 0.0
  %4891 = vmatprep.subr.mxu0 0.0
  %4892 = vmatpush1.msra.mxu0 0.0
  %4893 = vmatprep.subr.mxu0 0.0
  %4894 = vmatpush1.msra.mxu0 0.0
  %4895 = vmatprep.subr.mxu0 0.0
  %4896 = vmatpush1.msra.mxu0 0.0
  %4897 = vmatprep.subr.mxu0 0.0
  %4898 = vmatpush1.msra.mxu0 0.0
  %4899 = vmatprep.subr.mxu0 0.0
  %4900 = vmatpush1.msra.mxu0 0.0
  %4901 = vmatprep.subr.mxu0 0.0
  %4902 = vmatpush1.msra.mxu0 0.0
  %4903 = vmatprep.subr.mxu0 0.0
  %4904 = vmatpush1.msra.mxu0 0.0
  %4905 = vmatprep.subr.mxu0 0.0
  %4906 = vmatpush1.msra.mxu0 0.0
  %4907 = vmatprep.subr.mxu0 0.0
  %4908 = vmatpush1.msra.mxu0 0.0
  %4909 = vmatprep.subr.mxu0 0.0
  %4910 = vmatpush1.msra.mxu0 0.0
  %4911 = vmatprep.subr.mxu0 0.0
  %4912 = vmatpush1.msra.mxu0 0.0
  %4913 = vmatprep.subr.mxu0 0.0
  %4914 = vmatpush1.msra.mxu0 0.0
  %4915 = vmatprep.subr.mxu0 0.0
  %4916 = vmatpush1.msra.mxu0 0.0
  %4917 = vmatprep.subr.mxu0 0.0
  %4918 = vmatpush1.msra.mxu0 0.0
  %4919 = vmatprep.subr.mxu0 0.0
  %4920 = vmatpush1.msra.mxu0 0.0
  %4921 = vmatprep.subr.mxu0 0.0
  %4922 = vmatpush1.msra.mxu0 0.0
  %4923 = vmatprep.mubr.f32.mxu0 0.0
  %4924 = vmatmul.mubr.f32.gmra.mrb[0].mxu0 %v4200
  %v4925 = vpop.f32.mrb[0].mxu0
  %v4926 = vadd.f32 %v4776, %v4925
  %v4927 = vpop.f32.mrb[0].mxu0
  %4928 = vdwg.mxu0
  %4929 = vmatprep.subr.mxu0 0.0
  %4930 = vmatpush1.msra.mxu0 %v4135
  %4931 = vmatprep.subr.mxu0 0.0
  %4932 = vmatpush1.msra.mxu0 %v4136
  %4933 = vmatprep.subr.mxu0 0.0
  %4934 = vmatpush1.msra.mxu0 %v4137
  %4935 = vmatprep.subr.mxu0 0.0
  %4936 = vmatpush1.msra.mxu0 %v4138
  %4937 = vmatprep.subr.mxu0 0.0
  %4938 = vmatpush1.msra.mxu0 0.0
  %4939 = vmatprep.subr.mxu0 0.0
  %4940 = vmatpush1.msra.mxu0 0.0
  %4941 = vmatprep.subr.mxu0 0.0
  %4942 = vmatpush1.msra.mxu0 0.0
  %4943 = vmatprep.subr.mxu0 0.0
  %4944 = vmatpush1.msra.mxu0 0.0
  %4945 = vmatprep.subr.mxu0 0.0
  %4946 = vmatpush1.msra.mxu0 0.0
  %4947 = vmatprep.subr.mxu0 0.0
  %4948 = vmatpush1.msra.mxu0 0.0
  %4949 = vmatprep.subr.mxu0 0.0
  %4950 = vmatpush1.msra.mxu0 0.0
  %4951 = vmatprep.subr.mxu0 0.0
  %4952 = vmatpush1.msra.mxu0 0.0
  %4953 = vmatprep.subr.mxu0 0.0
  %4954 = vmatpush1.msra.mxu0 0.0
  %4955 = vmatprep.subr.mxu0 0.0
  %4956 = vmatpush1.msra.mxu0 0.0
  %4957 = vmatprep.subr.mxu0 0.0
  %4958 = vmatpush1.msra.mxu0 0.0
  %4959 = vmatprep.subr.mxu0 0.0
  %4960 = vmatpush1.msra.mxu0 0.0
  %4961 = vmatprep.subr.mxu0 0.0
  %4962 = vmatpush1.msra.mxu0 0.0
  %4963 = vmatprep.subr.mxu0 0.0
  %4964 = vmatpush1.msra.mxu0 0.0
  %4965 = vmatprep.subr.mxu0 0.0
  %4966 = vmatpush1.msra.mxu0 0.0
  %4967 = vmatprep.subr.mxu0 0.0
  %4968 = vmatpush1.msra.mxu0 0.0
  %4969 = vmatprep.subr.mxu0 0.0
  %4970 = vmatpush1.msra.mxu0 0.0
  %4971 = vmatprep.subr.mxu0 0.0
  %4972 = vmatpush1.msra.mxu0 0.0
  %4973 = vmatprep.subr.mxu0 0.0
  %4974 = vmatpush1.msra.mxu0 0.0
  %4975 = vmatprep.subr.mxu0 0.0
  %4976 = vmatpush1.msra.mxu0 0.0
  %4977 = vmatprep.subr.mxu0 0.0
  %4978 = vmatpush1.msra.mxu0 0.0
  %4979 = vmatprep.subr.mxu0 0.0
  %4980 = vmatpush1.msra.mxu0 0.0
  %4981 = vmatprep.subr.mxu0 0.0
  %4982 = vmatpush1.msra.mxu0 0.0
  %4983 = vmatprep.subr.mxu0 0.0
  %4984 = vmatpush1.msra.mxu0 0.0
  %4985 = vmatprep.subr.mxu0 0.0
  %4986 = vmatpush1.msra.mxu0 0.0
  %4987 = vmatprep.subr.mxu0 0.0
  %4988 = vmatpush1.msra.mxu0 0.0
  %4989 = vmatprep.subr.mxu0 0.0
  %4990 = vmatpush1.msra.mxu0 0.0
  %4991 = vmatprep.subr.mxu0 0.0
  %4992 = vmatpush1.msra.mxu0 0.0
  %4993 = vmatprep.mubr.f32.mxu0 0.0
  %4994 = vmatmul.mubr.f32.gmra.mrb[0].mxu0 %v4200
  %v4995 = vpop.f32.mrb[0].mxu0
  %v4996 = vadd.f32 %v4780, %v4995
  %v4997 = vpop.f32.mrb[0].mxu0
  %4998 = vdwg.mxu0
  %4999 = vmatprep.subr.mxu0 0.0
  %5000 = vmatpush1.msra.mxu0 %v4139
  %5001 = vmatprep.subr.mxu0 0.0
  %5002 = vmatpush1.msra.mxu0 %v4140
  %5003 = vmatprep.subr.mxu0 0.0
  %5004 = vmatpush1.msra.mxu0 %v4141
  %5005 = vmatprep.subr.mxu0 0.0
  %5006 = vmatpush1.msra.mxu0 %v4142
  %5007 = vmatprep.subr.mxu0 0.0
  %5008 = vmatpush1.msra.mxu0 0.0
  %5009 = vmatprep.subr.mxu0 0.0
  %5010 = vmatpush1.msra.mxu0 0.0
  %5011 = vmatprep.subr.mxu0 0.0
  %5012 = vmatpush1.msra.mxu0 0.0
  %5013 = vmatprep.subr.mxu0 0.0
  %5014 = vmatpush1.msra.mxu0 0.0
  %5015 = vmatprep.subr.mxu0 0.0
  %5016 = vmatpush1.msra.mxu0 0.0
  %5017 = vmatprep.subr.mxu0 0.0
  %5018 = vmatpush1.msra.mxu0 0.0
  %5019 = vmatprep.subr.mxu0 0.0
  %5020 = vmatpush1.msra.mxu0 0.0
  %5021 = vmatprep.subr.mxu0 0.0
  %5022 = vmatpush1.msra.mxu0 0.0
  %5023 = vmatprep.subr.mxu0 0.0
  %5024 = vmatpush1.msra.mxu0 0.0
  %5025 = vmatprep.subr.mxu0 0.0
  %5026 = vmatpush1.msra.mxu0 0.0
  %5027 = vmatprep.subr.mxu0 0.0
  %5028 = vmatpush1.msra.mxu0 0.0
  %5029 = vmatprep.subr.mxu0 0.0
  %5030 = vmatpush1.msra.mxu0 0.0
  %5031 = vmatprep.subr.mxu0 0.0
  %5032 = vmatpush1.msra.mxu0 0.0
  %5033 = vmatprep.subr.mxu0 0.0
  %5034 = vmatpush1.msra.mxu0 0.0
  %5035 = vmatprep.subr.mxu0 0.0
  %5036 = vmatpush1.msra.mxu0 0.0
  %5037 = vmatprep.subr.mxu0 0.0
  %5038 = vmatpush1.msra.mxu0 0.0
  %5039 = vmatprep.subr.mxu0 0.0
  %5040 = vmatpush1.msra.mxu0 0.0
  %5041 = vmatprep.subr.mxu0 0.0
  %5042 = vmatpush1.msra.mxu0 0.0
  %5043 = vmatprep.subr.mxu0 0.0
  %5044 = vmatpush1.msra.mxu0 0.0
  %5045 = vmatprep.subr.mxu0 0.0
  %5046 = vmatpush1.msra.mxu0 0.0
  %5047 = vmatprep.subr.mxu0 0.0
  %5048 = vmatpush1.msra.mxu0 0.0
  %5049 = vmatprep.subr.mxu0 0.0
  %5050 = vmatpush1.msra.mxu0 0.0
  %5051 = vmatprep.subr.mxu0 0.0
  %5052 = vmatpush1.msra.mxu0 0.0
  %5053 = vmatprep.subr.mxu0 0.0
  %5054 = vmatpush1.msra.mxu0 0.0
  %5055 = vmatprep.subr.mxu0 0.0
  %5056 = vmatpush1.msra.mxu0 0.0
  %5057 = vmatprep.subr.mxu0 0.0
  %5058 = vmatpush1.msra.mxu0 0.0
  %5059 = vmatprep.subr.mxu0 0.0
  %5060 = vmatpush1.msra.mxu0 0.0
  %5061 = vmatprep.subr.mxu0 0.0
  %5062 = vmatpush1.msra.mxu0 0.0
  %5063 = vmatprep.mubr.f32.mxu0 0.0
  %5064 = vmatmul.mubr.f32.gmra.mrb[0].mxu0 %v4200
  %v5065 = vpop.f32.mrb[0].mxu0
  %v5066 = vadd.f32 %v4784, %v5065
  %v5067 = vpop.f32.mrb[0].mxu0
  %5068 = vdwg.mxu0
  %5069 = vmatprep.subr.mxu0 0.0
  %5070 = vmatpush1.msra.mxu0 %v4127
  %5071 = vmatprep.subr.mxu0 0.0
  %5072 = vmatpush1.msra.mxu0 %v4128
  %5073 = vmatprep.subr.mxu0 0.0
  %5074 = vmatpush1.msra.mxu0 %v4129
  %5075 = vmatprep.subr.mxu0 0.0
  %5076 = vmatpush1.msra.mxu0 %v4130
  %5077 = vmatprep.subr.mxu0 0.0
  %5078 = vmatpush1.msra.mxu0 0.0
  %5079 = vmatprep.subr.mxu0 0.0
  %5080 = vmatpush1.msra.mxu0 0.0
  %5081 = vmatprep.subr.mxu0 0.0
  %5082 = vmatpush1.msra.mxu0 0.0
  %5083 = vmatprep.subr.mxu0 0.0
  %5084 = vmatpush1.msra.mxu0 0.0
  %5085 = vmatprep.subr.mxu0 0.0
  %5086 = vmatpush1.msra.mxu0 0.0
  %5087 = vmatprep.subr.mxu0 0.0
  %5088 = vmatpush1.msra.mxu0 0.0
  %5089 = vmatprep.subr.mxu0 0.0
  %5090 = vmatpush1.msra.mxu0 0.0
  %5091 = vmatprep.subr.mxu0 0.0
  %5092 = vmatpush1.msra.mxu0 0.0
  %5093 = vmatprep.subr.mxu0 0.0
  %5094 = vmatpush1.msra.mxu0 0.0
  %5095 = vmatprep.subr.mxu0 0.0
  %5096 = vmatpush1.msra.mxu0 0.0
  %5097 = vmatprep.subr.mxu0 0.0
  %5098 = vmatpush1.msra.mxu0 0.0
  %5099 = vmatprep.subr.mxu0 0.0
  %5100 = vmatpush1.msra.mxu0 0.0
  %5101 = vmatprep.subr.mxu0 0.0
  %5102 = vmatpush1.msra.mxu0 0.0
  %5103 = vmatprep.subr.mxu0 0.0
  %5104 = vmatpush1.msra.mxu0 0.0
  %5105 = vmatprep.subr.mxu0 0.0
  %5106 = vmatpush1.msra.mxu0 0.0
  %5107 = vmatprep.subr.mxu0 0.0
  %5108 = vmatpush1.msra.mxu0 0.0
  %5109 = vmatprep.subr.mxu0 0.0
  %5110 = vmatpush1.msra.mxu0 0.0
  %5111 = vmatprep.subr.mxu0 0.0
  %5112 = vmatpush1.msra.mxu0 0.0
  %5113 = vmatprep.subr.mxu0 0.0
  %5114 = vmatpush1.msra.mxu0 0.0
  %5115 = vmatprep.subr.mxu0 0.0
  %5116 = vmatpush1.msra.mxu0 0.0
  %5117 = vmatprep.subr.mxu0 0.0
  %5118 = vmatpush1.msra.mxu0 0.0
  %5119 = vmatprep.subr.mxu0 0.0
  %5120 = vmatpush1.msra.mxu0 0.0
  %5121 = vmatprep.subr.mxu0 0.0
  %5122 = vmatpush1.msra.mxu0 0.0
  %5123 = vmatprep.subr.mxu0 0.0
  %5124 = vmatpush1.msra.mxu0 0.0
  %5125 = vmatprep.subr.mxu0 0.0
  %5126 = vmatpush1.msra.mxu0 0.0
  %5127 = vmatprep.subr.mxu0 0.0
  %5128 = vmatpush1.msra.mxu0 0.0
  %5129 = vmatprep.subr.mxu0 0.0
  %5130 = vmatpush1.msra.mxu0 0.0
  %5131 = vmatprep.subr.mxu0 0.0
  %5132 = vmatpush1.msra.mxu0 0.0
  %5133 = vmatprep.mubr.f32.mxu0 0.0
  %5134 = vmatmul.mubr.f32.gmra.mrb[0].mxu0 %v4483
  %v5135 = vpop.f32.mrb[0].mxu0
  %v5136 = vadd.f32 %v4772, %v5135
  %v5137 = vpop.f32.mrb[0].mxu0
  %5138 = vdwg.mxu0
  %5139 = vmatprep.subr.mxu0 0.0
  %5140 = vmatpush1.msra.mxu0 %v4131
  %5141 = vmatprep.subr.mxu0 0.0
  %5142 = vmatpush1.msra.mxu0 %v4132
  %5143 = vmatprep.subr.mxu0 0.0
  %5144 = vmatpush1.msra.mxu0 %v4133
  %5145 = vmatprep.subr.mxu0 0.0
  %5146 = vmatpush1.msra.mxu0 %v4134
  %5147 = vmatprep.subr.mxu0 0.0
  %5148 = vmatpush1.msra.mxu0 0.0
  %5149 = vmatprep.subr.mxu0 0.0
  %5150 = vmatpush1.msra.mxu0 0.0
  %5151 = vmatprep.subr.mxu0 0.0
  %5152 = vmatpush1.msra.mxu0 0.0
  %5153 = vmatprep.subr.mxu0 0.0
  %5154 = vmatpush1.msra.mxu0 0.0
  %5155 = vmatprep.subr.mxu0 0.0
  %5156 = vmatpush1.msra.mxu0 0.0
  %5157 = vmatprep.subr.mxu0 0.0
  %5158 = vmatpush1.msra.mxu0 0.0
  %5159 = vmatprep.subr.mxu0 0.0
  %5160 = vmatpush1.msra.mxu0 0.0
  %5161 = vmatprep.subr.mxu0 0.0
  %5162 = vmatpush1.msra.mxu0 0.0
  %5163 = vmatprep.subr.mxu0 0.0
  %5164 = vmatpush1.msra.mxu0 0.0
  %5165 = vmatprep.subr.mxu0 0.0
  %5166 = vmatpush1.msra.mxu0 0.0
  %5167 = vmatprep.subr.mxu0 0.0
  %5168 = vmatpush1.msra.mxu0 0.0
  %5169 = vmatprep.subr.mxu0 0.0
  %5170 = vmatpush1.msra.mxu0 0.0
  %5171 = vmatprep.subr.mxu0 0.0
  %5172 = vmatpush1.msra.mxu0 0.0
  %5173 = vmatprep.subr.mxu0 0.0
  %5174 = vmatpush1.msra.mxu0 0.0
  %5175 = vmatprep.subr.mxu0 0.0
  %5176 = vmatpush1.msra.mxu0 0.0
  %5177 = vmatprep.subr.mxu0 0.0
  %5178 = vmatpush1.msra.mxu0 0.0
  %5179 = vmatprep.subr.mxu0 0.0
  %5180 = vmatpush1.msra.mxu0 0.0
  %5181 = vmatprep.subr.mxu0 0.0
  %5182 = vmatpush1.msra.mxu0 0.0
  %5183 = vmatprep.subr.mxu0 0.0
  %5184 = vmatpush1.msra.mxu0 0.0
  %5185 = vmatprep.subr.mxu0 0.0
  %5186 = vmatpush1.msra.mxu0 0.0
  %5187 = vmatprep.subr.mxu0 0.0
  %5188 = vmatpush1.msra.mxu0 0.0
  %5189 = vmatprep.subr.mxu0 0.0
  %5190 = vmatpush1.msra.mxu0 0.0
  %5191 = vmatprep.subr.mxu0 0.0
  %5192 = vmatpush1.msra.mxu0 0.0
  %5193 = vmatprep.subr.mxu0 0.0
  %5194 = vmatpush1.msra.mxu0 0.0
  %5195 = vmatprep.subr.mxu0 0.0
  %5196 = vmatpush1.msra.mxu0 0.0
  %5197 = vmatprep.subr.mxu0 0.0
  %5198 = vmatpush1.msra.mxu0 0.0
  %5199 = vmatprep.subr.mxu0 0.0
  %5200 = vmatpush1.msra.mxu0 0.0
  %5201 = vmatprep.subr.mxu0 0.0
  %5202 = vmatpush1.msra.mxu0 0.0
  %5203 = vmatprep.mubr.f32.mxu0 0.0
  %5204 = vmatmul.mubr.f32.gmra.mrb[0].mxu0 %v4483
  %v5205 = vpop.f32.mrb[0].mxu0
  %v5206 = vadd.f32 %v4776, %v5205
  %v5207 = vpop.f32.mrb[0].mxu0
  %5208 = vdwg.mxu0
  %5209 = vmatprep.subr.mxu0 0.0
  %5210 = vmatpush1.msra.mxu0 %v4135
  %5211 = vmatprep.subr.mxu0 0.0
  %5212 = vmatpush1.msra.mxu0 %v4136
  %5213 = vmatprep.subr.mxu0 0.0
  %5214 = vmatpush1.msra.mxu0 %v4137
  %5215 = vmatprep.subr.mxu0 0.0
  %5216 = vmatpush1.msra.mxu0 %v4138
  %5217 = vmatprep.subr.mxu0 0.0
  %5218 = vmatpush1.msra.mxu0 0.0
  %5219 = vmatprep.subr.mxu0 0.0
  %5220 = vmatpush1.msra.mxu0 0.0
  %5221 = vmatprep.subr.mxu0 0.0
  %5222 = vmatpush1.msra.mxu0 0.0
  %5223 = vmatprep.subr.mxu0 0.0
  %5224 = vmatpush1.msra.mxu0 0.0
  %5225 = vmatprep.subr.mxu0 0.0
  %5226 = vmatpush1.msra.mxu0 0.0
  %5227 = vmatprep.subr.mxu0 0.0
  %5228 = vmatpush1.msra.mxu0 0.0
  %5229 = vmatprep.subr.mxu0 0.0
  %5230 = vmatpush1.msra.mxu0 0.0
  %5231 = vmatprep.subr.mxu0 0.0
  %5232 = vmatpush1.msra.mxu0 0.0
  %5233 = vmatprep.subr.mxu0 0.0
  %5234 = vmatpush1.msra.mxu0 0.0
  %5235 = vmatprep.subr.mxu0 0.0
  %5236 = vmatpush1.msra.mxu0 0.0
  %5237 = vmatprep.subr.mxu0 0.0
  %5238 = vmatpush1.msra.mxu0 0.0
  %5239 = vmatprep.subr.mxu0 0.0
  %5240 = vmatpush1.msra.mxu0 0.0
  %5241 = vmatprep.subr.mxu0 0.0
  %5242 = vmatpush1.msra.mxu0 0.0
  %5243 = vmatprep.subr.mxu0 0.0
  %5244 = vmatpush1.msra.mxu0 0.0
  %5245 = vmatprep.subr.mxu0 0.0
  %5246 = vmatpush1.msra.mxu0 0.0
  %5247 = vmatprep.subr.mxu0 0.0
  %5248 = vmatpush1.msra.mxu0 0.0
  %5249 = vmatprep.subr.mxu0 0.0
  %5250 = vmatpush1.msra.mxu0 0.0
  %5251 = vmatprep.subr.mxu0 0.0
  %5252 = vmatpush1.msra.mxu0 0.0
  %5253 = vmatprep.subr.mxu0 0.0
  %5254 = vmatpush1.msra.mxu0 0.0
  %5255 = vmatprep.subr.mxu0 0.0
  %5256 = vmatpush1.msra.mxu0 0.0
  %5257 = vmatprep.subr.mxu0 0.0
  %5258 = vmatpush1.msra.mxu0 0.0
  %5259 = vmatprep.subr.mxu0 0.0
  %5260 = vmatpush1.msra.mxu0 0.0
  %5261 = vmatprep.subr.mxu0 0.0
  %5262 = vmatpush1.msra.mxu0 0.0
  %5263 = vmatprep.subr.mxu0 0.0
  %5264 = vmatpush1.msra.mxu0 0.0
  %5265 = vmatprep.subr.mxu0 0.0
  %5266 = vmatpush1.msra.mxu0 0.0
  %5267 = vmatprep.subr.mxu0 0.0
  %5268 = vmatpush1.msra.mxu0 0.0
  %5269 = vmatprep.subr.mxu0 0.0
  %5270 = vmatpush1.msra.mxu0 0.0
  %5271 = vmatprep.subr.mxu0 0.0
  %5272 = vmatpush1.msra.mxu0 0.0
  %5273 = vmatprep.mubr.f32.mxu0 0.0
  %5274 = vmatmul.mubr.f32.gmra.mrb[0].mxu0 %v4483
  %v5275 = vpop.f32.mrb[0].mxu0
  %v5276 = vadd.f32 %v4780, %v5275
  %v5277 = vpop.f32.mrb[0].mxu0
  %5278 = vdwg.mxu0
  %5279 = vmatprep.subr.mxu0 0.0
  %5280 = vmatpush1.msra.mxu0 %v4139
  %5281 = vmatprep.subr.mxu0 0.0
  %5282 = vmatpush1.msra.mxu0 %v4140
  %5283 = vmatprep.subr.mxu0 0.0
  %5284 = vmatpush1.msra.mxu0 %v4141
  %5285 = vmatprep.subr.mxu0 0.0
  %5286 = vmatpush1.msra.mxu0 %v4142
  %5287 = vmatprep.subr.mxu0 0.0
  %5288 = vmatpush1.msra.mxu0 0.0
  %5289 = vmatprep.subr.mxu0 0.0
  %5290 = vmatpush1.msra.mxu0 0.0
  %5291 = vmatprep.subr.mxu0 0.0
  %5292 = vmatpush1.msra.mxu0 0.0
  %5293 = vmatprep.subr.mxu0 0.0
  %5294 = vmatpush1.msra.mxu0 0.0
  %5295 = vmatprep.subr.mxu0 0.0
  %5296 = vmatpush1.msra.mxu0 0.0
  %5297 = vmatprep.subr.mxu0 0.0
  %5298 = vmatpush1.msra.mxu0 0.0
  %5299 = vmatprep.subr.mxu0 0.0
  %5300 = vmatpush1.msra.mxu0 0.0
  %5301 = vmatprep.subr.mxu0 0.0
  %5302 = vmatpush1.msra.mxu0 0.0
  %5303 = vmatprep.subr.mxu0 0.0
  %5304 = vmatpush1.msra.mxu0 0.0
  %5305 = vmatprep.subr.mxu0 0.0
  %5306 = vmatpush1.msra.mxu0 0.0
  %5307 = vmatprep.subr.mxu0 0.0
  %5308 = vmatpush1.msra.mxu0 0.0
  %5309 = vmatprep.subr.mxu0 0.0
  %5310 = vmatpush1.msra.mxu0 0.0
  %5311 = vmatprep.subr.mxu0 0.0
  %5312 = vmatpush1.msra.mxu0 0.0
  %5313 = vmatprep.subr.mxu0 0.0
  %5314 = vmatpush1.msra.mxu0 0.0
  %5315 = vmatprep.subr.mxu0 0.0
  %5316 = vmatpush1.msra.mxu0 0.0
  %5317 = vmatprep.subr.mxu0 0.0
  %5318 = vmatpush1.msra.mxu0 0.0
  %5319 = vmatprep.subr.mxu0 0.0
  %5320 = vmatpush1.msra.mxu0 0.0
  %5321 = vmatprep.subr.mxu0 0.0
  %5322 = vmatpush1.msra.mxu0 0.0
  %5323 = vmatprep.subr.mxu0 0.0
  %5324 = vmatpush1.msra.mxu0 0.0
  %5325 = vmatprep.subr.mxu0 0.0
  %5326 = vmatpush1.msra.mxu0 0.0
  %5327 = vmatprep.subr.mxu0 0.0
  %5328 = vmatpush1.msra.mxu0 0.0
  %5329 = vmatprep.subr.mxu0 0.0
  %5330 = vmatpush1.msra.mxu0 0.0
  %5331 = vmatprep.subr.mxu0 0.0
  %5332 = vmatpush1.msra.mxu0 0.0
  %5333 = vmatprep.subr.mxu0 0.0
  %5334 = vmatpush1.msra.mxu0 0.0
  %5335 = vmatprep.subr.mxu0 0.0
  %5336 = vmatpush1.msra.mxu0 0.0
  %5337 = vmatprep.subr.mxu0 0.0
  %5338 = vmatpush1.msra.mxu0 0.0
  %5339 = vmatprep.subr.mxu0 0.0
  %5340 = vmatpush1.msra.mxu0 0.0
  %5341 = vmatprep.subr.mxu0 0.0
  %5342 = vmatpush1.msra.mxu0 0.0
  %5343 = vmatprep.mubr.f32.mxu0 0.0
  %5344 = vmatmul.mubr.f32.gmra.mrb[0].mxu0 %v4483
  %v5345 = vpop.f32.mrb[0].mxu0
  %v5346 = vadd.f32 %v4784, %v5345
  %v5347 = vpop.f32.mrb[0].mxu0
  %5348 = vdwg.mxu0
  %v5353 = vlaneseq
  %v5354 = vshrl.u32 %v5353, 7
  %v5355 = vsub.s32 0, %v5354
  %v5356 = vrot.slane %v4166, %v5355
  %v5357 = vlaneseq
  %v5358 = vshrl.u32 %v5357, 7
  %v5359 = vsub.s32 0, %v5358
  %v5360 = vrot.slane %v4167, %v5359
  %v5361 = vlaneseq
  %v5362 = vshrl.u32 %v5361, 7
  %v5363 = vsub.s32 0, %v5362
  %v5364 = vrot.slane %v4168, %v5363
  %v5365 = vlaneseq
  %v5366 = vshrl.u32 %v5365, 7
  %v5367 = vsub.s32 0, %v5366
  %v5368 = vrot.slane %v4169, %v5367
  %5373 = vmatprep.subr.mxu0 0.0
  %5374 = vmatpush1.msra.mxu0 %v4149
  %5375 = vmatprep.subr.mxu0 0.0
  %5376 = vmatpush1.msra.mxu0 %v4150
  %5377 = vmatprep.subr.mxu0 0.0
  %5378 = vmatpush1.msra.mxu0 %v4151
  %5379 = vmatprep.subr.mxu0 0.0
  %5380 = vmatpush1.msra.mxu0 %v4152
  %5381 = vmatprep.subr.mxu0 0.0
  %5382 = vmatpush1.msra.mxu0 0.0
  %5383 = vmatprep.subr.mxu0 0.0
  %5384 = vmatpush1.msra.mxu0 0.0
  %5385 = vmatprep.subr.mxu0 0.0
  %5386 = vmatpush1.msra.mxu0 0.0
  %5387 = vmatprep.subr.mxu0 0.0
  %5388 = vmatpush1.msra.mxu0 0.0
  %5389 = vmatprep.subr.mxu0 0.0
  %5390 = vmatpush1.msra.mxu0 0.0
  %5391 = vmatprep.subr.mxu0 0.0
  %5392 = vmatpush1.msra.mxu0 0.0
  %5393 = vmatprep.subr.mxu0 0.0
  %5394 = vmatpush1.msra.mxu0 0.0
  %5395 = vmatprep.subr.mxu0 0.0
  %5396 = vmatpush1.msra.mxu0 0.0
  %5397 = vmatprep.subr.mxu0 0.0
  %5398 = vmatpush1.msra.mxu0 0.0
  %5399 = vmatprep.subr.mxu0 0.0
  %5400 = vmatpush1.msra.mxu0 0.0
  %5401 = vmatprep.subr.mxu0 0.0
  %5402 = vmatpush1.msra.mxu0 0.0
  %5403 = vmatprep.subr.mxu0 0.0
  %5404 = vmatpush1.msra.mxu0 0.0
  %5405 = vmatprep.subr.mxu0 0.0
  %5406 = vmatpush1.msra.mxu0 0.0
  %5407 = vmatprep.subr.mxu0 0.0
  %5408 = vmatpush1.msra.mxu0 0.0
  %5409 = vmatprep.subr.mxu0 0.0
  %5410 = vmatpush1.msra.mxu0 0.0
  %5411 = vmatprep.subr.mxu0 0.0
  %5412 = vmatpush1.msra.mxu0 0.0
  %5413 = vmatprep.subr.mxu0 0.0
  %5414 = vmatpush1.msra.mxu0 0.0
  %5415 = vmatprep.subr.mxu0 0.0
  %5416 = vmatpush1.msra.mxu0 0.0
  %5417 = vmatprep.subr.mxu0 0.0
  %5418 = vmatpush1.msra.mxu0 0.0
  %5419 = vmatprep.subr.mxu0 0.0
  %5420 = vmatpush1.msra.mxu0 0.0
  %5421 = vmatprep.subr.mxu0 0.0
  %5422 = vmatpush1.msra.mxu0 0.0
  %5423 = vmatprep.subr.mxu0 0.0
  %5424 = vmatpush1.msra.mxu0 0.0
  %5425 = vmatprep.subr.mxu0 0.0
  %5426 = vmatpush1.msra.mxu0 0.0
  %5427 = vmatprep.subr.mxu0 0.0
  %5428 = vmatpush1.msra.mxu0 0.0
  %5429 = vmatprep.subr.mxu0 0.0
  %5430 = vmatpush1.msra.mxu0 0.0
  %5431 = vmatprep.subr.mxu0 0.0
  %5432 = vmatpush1.msra.mxu0 0.0
  %5433 = vmatprep.subr.mxu0 0.0
  %5434 = vmatpush1.msra.mxu0 0.0
  %5435 = vmatprep.subr.mxu0 0.0
  %5436 = vmatpush1.msra.mxu0 0.0
  %5437 = vmatprep.mubr.f32.mxu0 0.0
  %5438 = vmatmul.mubr.f32.gmra.mrb[0].mxu0 %v4200
  %v5439 = vpop.f32.mrb[0].mxu0
  %v5440 = vadd.f32 %v5356, %v5439
  %v5441 = vpop.f32.mrb[0].mxu0
  %5442 = vdwg.mxu0
  %5443 = vmatprep.subr.mxu0 0.0
  %5444 = vmatpush1.msra.mxu0 %v4153
  %5445 = vmatprep.subr.mxu0 0.0
  %5446 = vmatpush1.msra.mxu0 %v4154
  %5447 = vmatprep.subr.mxu0 0.0
  %5448 = vmatpush1.msra.mxu0 %v4155
  %5449 = vmatprep.subr.mxu0 0.0
  %5450 = vmatpush1.msra.mxu0 %v4156
  %5451 = vmatprep.subr.mxu0 0.0
  %5452 = vmatpush1.msra.mxu0 0.0
  %5453 = vmatprep.subr.mxu0 0.0
  %5454 = vmatpush1.msra.mxu0 0.0
  %5455 = vmatprep.subr.mxu0 0.0
  %5456 = vmatpush1.msra.mxu0 0.0
  %5457 = vmatprep.subr.mxu0 0.0
  %5458 = vmatpush1.msra.mxu0 0.0
  %5459 = vmatprep.subr.mxu0 0.0
  %5460 = vmatpush1.msra.mxu0 0.0
  %5461 = vmatprep.subr.mxu0 0.0
  %5462 = vmatpush1.msra.mxu0 0.0
  %5463 = vmatprep.subr.mxu0 0.0
  %5464 = vmatpush1.msra.mxu0 0.0
  %5465 = vmatprep.subr.mxu0 0.0
  %5466 = vmatpush1.msra.mxu0 0.0
  %5467 = vmatprep.subr.mxu0 0.0
  %5468 = vmatpush1.msra.mxu0 0.0
  %5469 = vmatprep.subr.mxu0 0.0
  %5470 = vmatpush1.msra.mxu0 0.0
  %5471 = vmatprep.subr.mxu0 0.0
  %5472 = vmatpush1.msra.mxu0 0.0
  %5473 = vmatprep.subr.mxu0 0.0
  %5474 = vmatpush1.msra.mxu0 0.0
  %5475 = vmatprep.subr.mxu0 0.0
  %5476 = vmatpush1.msra.mxu0 0.0
  %5477 = vmatprep.subr.mxu0 0.0
  %5478 = vmatpush1.msra.mxu0 0.0
  %5479 = vmatprep.subr.mxu0 0.0
  %5480 = vmatpush1.msra.mxu0 0.0
  %5481 = vmatprep.subr.mxu0 0.0
  %5482 = vmatpush1.msra.mxu0 0.0
  %5483 = vmatprep.subr.mxu0 0.0
  %5484 = vmatpush1.msra.mxu0 0.0
  %5485 = vmatprep.subr.mxu0 0.0
  %5486 = vmatpush1.msra.mxu0 0.0
  %5487 = vmatprep.subr.mxu0 0.0
  %5488 = vmatpush1.msra.mxu0 0.0
  %5489 = vmatprep.subr.mxu0 0.0
  %5490 = vmatpush1.msra.mxu0 0.0
  %5491 = vmatprep.subr.mxu0 0.0
  %5492 = vmatpush1.msra.mxu0 0.0
  %5493 = vmatprep.subr.mxu0 0.0
  %5494 = vmatpush1.msra.mxu0 0.0
  %5495 = vmatprep.subr.mxu0 0.0
  %5496 = vmatpush1.msra.mxu0 0.0
  %5497 = vmatprep.subr.mxu0 0.0
  %5498 = vmatpush1.msra.mxu0 0.0
  %5499 = vmatprep.subr.mxu0 0.0
  %5500 = vmatpush1.msra.mxu0 0.0
  %5501 = vmatprep.subr.mxu0 0.0
  %5502 = vmatpush1.msra.mxu0 0.0
  %5503 = vmatprep.subr.mxu0 0.0
  %5504 = vmatpush1.msra.mxu0 0.0
  %5505 = vmatprep.subr.mxu0 0.0
  %5506 = vmatpush1.msra.mxu0 0.0
  %5507 = vmatprep.mubr.f32.mxu0 0.0
  %5508 = vmatmul.mubr.f32.gmra.mrb[0].mxu0 %v4200
  %v5509 = vpop.f32.mrb[0].mxu0
  %v5510 = vadd.f32 %v5360, %v5509
  %v5511 = vpop.f32.mrb[0].mxu0
  %5512 = vdwg.mxu0
  %5513 = vmatprep.subr.mxu0 0.0
  %5514 = vmatpush1.msra.mxu0 %v4157
  %5515 = vmatprep.subr.mxu0 0.0
  %5516 = vmatpush1.msra.mxu0 %v4158
  %5517 = vmatprep.subr.mxu0 0.0
  %5518 = vmatpush1.msra.mxu0 %v4159
  %5519 = vmatprep.subr.mxu0 0.0
  %5520 = vmatpush1.msra.mxu0 %v4160
  %5521 = vmatprep.subr.mxu0 0.0
  %5522 = vmatpush1.msra.mxu0 0.0
  %5523 = vmatprep.subr.mxu0 0.0
  %5524 = vmatpush1.msra.mxu0 0.0
  %5525 = vmatprep.subr.mxu0 0.0
  %5526 = vmatpush1.msra.mxu0 0.0
  %5527 = vmatprep.subr.mxu0 0.0
  %5528 = vmatpush1.msra.mxu0 0.0
  %5529 = vmatprep.subr.mxu0 0.0
  %5530 = vmatpush1.msra.mxu0 0.0
  %5531 = vmatprep.subr.mxu0 0.0
  %5532 = vmatpush1.msra.mxu0 0.0
  %5533 = vmatprep.subr.mxu0 0.0
  %5534 = vmatpush1.msra.mxu0 0.0
  %5535 = vmatprep.subr.mxu0 0.0
  %5536 = vmatpush1.msra.mxu0 0.0
  %5537 = vmatprep.subr.mxu0 0.0
  %5538 = vmatpush1.msra.mxu0 0.0
  %5539 = vmatprep.subr.mxu0 0.0
  %5540 = vmatpush1.msra.mxu0 0.0
  %5541 = vmatprep.subr.mxu0 0.0
  %5542 = vmatpush1.msra.mxu0 0.0
  %5543 = vmatprep.subr.mxu0 0.0
  %5544 = vmatpush1.msra.mxu0 0.0
  %5545 = vmatprep.subr.mxu0 0.0
  %5546 = vmatpush1.msra.mxu0 0.0
  %5547 = vmatprep.subr.mxu0 0.0
  %5548 = vmatpush1.msra.mxu0 0.0
  %5549 = vmatprep.subr.mxu0 0.0
  %5550 = vmatpush1.msra.mxu0 0.0
  %5551 = vmatprep.subr.mxu0 0.0
  %5552 = vmatpush1.msra.mxu0 0.0
  %5553 = vmatprep.subr.mxu0 0.0
  %5554 = vmatpush1.msra.mxu0 0.0
  %5555 = vmatprep.subr.mxu0 0.0
  %5556 = vmatpush1.msra.mxu0 0.0
  %5557 = vmatprep.subr.mxu0 0.0
  %5558 = vmatpush1.msra.mxu0 0.0
  %5559 = vmatprep.subr.mxu0 0.0
  %5560 = vmatpush1.msra.mxu0 0.0
  %5561 = vmatprep.subr.mxu0 0.0
  %5562 = vmatpush1.msra.mxu0 0.0
  %5563 = vmatprep.subr.mxu0 0.0
  %5564 = vmatpush1.msra.mxu0 0.0
  %5565 = vmatprep.subr.mxu0 0.0
  %5566 = vmatpush1.msra.mxu0 0.0
  %5567 = vmatprep.subr.mxu0 0.0
  %5568 = vmatpush1.msra.mxu0 0.0
  %5569 = vmatprep.subr.mxu0 0.0
  %5570 = vmatpush1.msra.mxu0 0.0
  %5571 = vmatprep.subr.mxu0 0.0
  %5572 = vmatpush1.msra.mxu0 0.0
  %5573 = vmatprep.subr.mxu0 0.0
  %5574 = vmatpush1.msra.mxu0 0.0
  %5575 = vmatprep.subr.mxu0 0.0
  %5576 = vmatpush1.msra.mxu0 0.0
  %5577 = vmatprep.mubr.f32.mxu0 0.0
  %5578 = vmatmul.mubr.f32.gmra.mrb[0].mxu0 %v4200
  %v5579 = vpop.f32.mrb[0].mxu0
  %v5580 = vadd.f32 %v5364, %v5579
  %v5581 = vpop.f32.mrb[0].mxu0
  %5582 = vdwg.mxu0
  %5583 = vmatprep.subr.mxu0 0.0
  %5584 = vmatpush1.msra.mxu0 %v4161
  %5585 = vmatprep.subr.mxu0 0.0
  %5586 = vmatpush1.msra.mxu0 %v4162
  %5587 = vmatprep.subr.mxu0 0.0
  %5588 = vmatpush1.msra.mxu0 %v4163
  %5589 = vmatprep.subr.mxu0 0.0
  %5590 = vmatpush1.msra.mxu0 %v4164
  %5591 = vmatprep.subr.mxu0 0.0
  %5592 = vmatpush1.msra.mxu0 0.0
  %5593 = vmatprep.subr.mxu0 0.0
  %5594 = vmatpush1.msra.mxu0 0.0
  %5595 = vmatprep.subr.mxu0 0.0
  %5596 = vmatpush1.msra.mxu0 0.0
  %5597 = vmatprep.subr.mxu0 0.0
  %5598 = vmatpush1.msra.mxu0 0.0
  %5599 = vmatprep.subr.mxu0 0.0
  %5600 = vmatpush1.msra.mxu0 0.0
  %5601 = vmatprep.subr.mxu0 0.0
  %5602 = vmatpush1.msra.mxu0 0.0
  %5603 = vmatprep.subr.mxu0 0.0
  %5604 = vmatpush1.msra.mxu0 0.0
  %5605 = vmatprep.subr.mxu0 0.0
  %5606 = vmatpush1.msra.mxu0 0.0
  %5607 = vmatprep.subr.mxu0 0.0
  %5608 = vmatpush1.msra.mxu0 0.0
  %5609 = vmatprep.subr.mxu0 0.0
  %5610 = vmatpush1.msra.mxu0 0.0
  %5611 = vmatprep.subr.mxu0 0.0
  %5612 = vmatpush1.msra.mxu0 0.0
  %5613 = vmatprep.subr.mxu0 0.0
  %5614 = vmatpush1.msra.mxu0 0.0
  %5615 = vmatprep.subr.mxu0 0.0
  %5616 = vmatpush1.msra.mxu0 0.0
  %5617 = vmatprep.subr.mxu0 0.0
  %5618 = vmatpush1.msra.mxu0 0.0
  %5619 = vmatprep.subr.mxu0 0.0
  %5620 = vmatpush1.msra.mxu0 0.0
  %5621 = vmatprep.subr.mxu0 0.0
  %5622 = vmatpush1.msra.mxu0 0.0
  %5623 = vmatprep.subr.mxu0 0.0
  %5624 = vmatpush1.msra.mxu0 0.0
  %5625 = vmatprep.subr.mxu0 0.0
  %5626 = vmatpush1.msra.mxu0 0.0
  %5627 = vmatprep.subr.mxu0 0.0
  %5628 = vmatpush1.msra.mxu0 0.0
  %5629 = vmatprep.subr.mxu0 0.0
  %5630 = vmatpush1.msra.mxu0 0.0
  %5631 = vmatprep.subr.mxu0 0.0
  %5632 = vmatpush1.msra.mxu0 0.0
  %5633 = vmatprep.subr.mxu0 0.0
  %5634 = vmatpush1.msra.mxu0 0.0
  %5635 = vmatprep.subr.mxu0 0.0
  %5636 = vmatpush1.msra.mxu0 0.0
  %5637 = vmatprep.subr.mxu0 0.0
  %5638 = vmatpush1.msra.mxu0 0.0
  %5639 = vmatprep.subr.mxu0 0.0
  %5640 = vmatpush1.msra.mxu0 0.0
  %5641 = vmatprep.subr.mxu0 0.0
  %5642 = vmatpush1.msra.mxu0 0.0
  %5643 = vmatprep.subr.mxu0 0.0
  %5644 = vmatpush1.msra.mxu0 0.0
  %5645 = vmatprep.subr.mxu0 0.0
  %5646 = vmatpush1.msra.mxu0 0.0
  %5647 = vmatprep.mubr.f32.mxu0 0.0
  %5648 = vmatmul.mubr.f32.gmra.mrb[0].mxu0 %v4200
  %v5649 = vpop.f32.mrb[0].mxu0
  %v5650 = vadd.f32 %v5368, %v5649
  %v5651 = vpop.f32.mrb[0].mxu0
  %5652 = vdwg.mxu0
  %5653 = vmatprep.subr.mxu0 0.0
  %5654 = vmatpush1.msra.mxu0 %v4149
  %5655 = vmatprep.subr.mxu0 0.0
  %5656 = vmatpush1.msra.mxu0 %v4150
  %5657 = vmatprep.subr.mxu0 0.0
  %5658 = vmatpush1.msra.mxu0 %v4151
  %5659 = vmatprep.subr.mxu0 0.0
  %5660 = vmatpush1.msra.mxu0 %v4152
  %5661 = vmatprep.subr.mxu0 0.0
  %5662 = vmatpush1.msra.mxu0 0.0
  %5663 = vmatprep.subr.mxu0 0.0
  %5664 = vmatpush1.msra.mxu0 0.0
  %5665 = vmatprep.subr.mxu0 0.0
  %5666 = vmatpush1.msra.mxu0 0.0
  %5667 = vmatprep.subr.mxu0 0.0
  %5668 = vmatpush1.msra.mxu0 0.0
  %5669 = vmatprep.subr.mxu0 0.0
  %5670 = vmatpush1.msra.mxu0 0.0
  %5671 = vmatprep.subr.mxu0 0.0
  %5672 = vmatpush1.msra.mxu0 0.0
  %5673 = vmatprep.subr.mxu0 0.0
  %5674 = vmatpush1.msra.mxu0 0.0
  %5675 = vmatprep.subr.mxu0 0.0
  %5676 = vmatpush1.msra.mxu0 0.0
  %5677 = vmatprep.subr.mxu0 0.0
  %5678 = vmatpush1.msra.mxu0 0.0
  %5679 = vmatprep.subr.mxu0 0.0
  %5680 = vmatpush1.msra.mxu0 0.0
  %5681 = vmatprep.subr.mxu0 0.0
  %5682 = vmatpush1.msra.mxu0 0.0
  %5683 = vmatprep.subr.mxu0 0.0
  %5684 = vmatpush1.msra.mxu0 0.0
  %5685 = vmatprep.subr.mxu0 0.0
  %5686 = vmatpush1.msra.mxu0 0.0
  %5687 = vmatprep.subr.mxu0 0.0
  %5688 = vmatpush1.msra.mxu0 0.0
  %5689 = vmatprep.subr.mxu0 0.0
  %5690 = vmatpush1.msra.mxu0 0.0
  %5691 = vmatprep.subr.mxu0 0.0
  %5692 = vmatpush1.msra.mxu0 0.0
  %5693 = vmatprep.subr.mxu0 0.0
  %5694 = vmatpush1.msra.mxu0 0.0
  %5695 = vmatprep.subr.mxu0 0.0
  %5696 = vmatpush1.msra.mxu0 0.0
  %5697 = vmatprep.subr.mxu0 0.0
  %5698 = vmatpush1.msra.mxu0 0.0
  %5699 = vmatprep.subr.mxu0 0.0
  %5700 = vmatpush1.msra.mxu0 0.0
  %5701 = vmatprep.subr.mxu0 0.0
  %5702 = vmatpush1.msra.mxu0 0.0
  %5703 = vmatprep.subr.mxu0 0.0
  %5704 = vmatpush1.msra.mxu0 0.0
  %5705 = vmatprep.subr.mxu0 0.0
  %5706 = vmatpush1.msra.mxu0 0.0
  %5707 = vmatprep.subr.mxu0 0.0
  %5708 = vmatpush1.msra.mxu0 0.0
  %5709 = vmatprep.subr.mxu0 0.0
  %5710 = vmatpush1.msra.mxu0 0.0
  %5711 = vmatprep.subr.mxu0 0.0
  %5712 = vmatpush1.msra.mxu0 0.0
  %5713 = vmatprep.subr.mxu0 0.0
  %5714 = vmatpush1.msra.mxu0 0.0
  %5715 = vmatprep.subr.mxu0 0.0
  %5716 = vmatpush1.msra.mxu0 0.0
  %5717 = vmatprep.mubr.f32.mxu0 0.0
  %5718 = vmatmul.mubr.f32.gmra.mrb[0].mxu0 %v4483
  %v5719 = vpop.f32.mrb[0].mxu0
  %v5720 = vadd.f32 %v5356, %v5719
  %v5721 = vpop.f32.mrb[0].mxu0
  %5722 = vdwg.mxu0
  %5723 = vmatprep.subr.mxu0 0.0
  %5724 = vmatpush1.msra.mxu0 %v4153
  %5725 = vmatprep.subr.mxu0 0.0
  %5726 = vmatpush1.msra.mxu0 %v4154
  %5727 = vmatprep.subr.mxu0 0.0
  %5728 = vmatpush1.msra.mxu0 %v4155
  %5729 = vmatprep.subr.mxu0 0.0
  %5730 = vmatpush1.msra.mxu0 %v4156
  %5731 = vmatprep.subr.mxu0 0.0
  %5732 = vmatpush1.msra.mxu0 0.0
  %5733 = vmatprep.subr.mxu0 0.0
  %5734 = vmatpush1.msra.mxu0 0.0
  %5735 = vmatprep.subr.mxu0 0.0
  %5736 = vmatpush1.msra.mxu0 0.0
  %5737 = vmatprep.subr.mxu0 0.0
  %5738 = vmatpush1.msra.mxu0 0.0
  %5739 = vmatprep.subr.mxu0 0.0
  %5740 = vmatpush1.msra.mxu0 0.0
  %5741 = vmatprep.subr.mxu0 0.0
  %5742 = vmatpush1.msra.mxu0 0.0
  %5743 = vmatprep.subr.mxu0 0.0
  %5744 = vmatpush1.msra.mxu0 0.0
  %5745 = vmatprep.subr.mxu0 0.0
  %5746 = vmatpush1.msra.mxu0 0.0
  %5747 = vmatprep.subr.mxu0 0.0
  %5748 = vmatpush1.msra.mxu0 0.0
  %5749 = vmatprep.subr.mxu0 0.0
  %5750 = vmatpush1.msra.mxu0 0.0
  %5751 = vmatprep.subr.mxu0 0.0
  %5752 = vmatpush1.msra.mxu0 0.0
  %5753 = vmatprep.subr.mxu0 0.0
  %5754 = vmatpush1.msra.mxu0 0.0
  %5755 = vmatprep.subr.mxu0 0.0
  %5756 = vmatpush1.msra.mxu0 0.0
  %5757 = vmatprep.subr.mxu0 0.0
  %5758 = vmatpush1.msra.mxu0 0.0
  %5759 = vmatprep.subr.mxu0 0.0
  %5760 = vmatpush1.msra.mxu0 0.0
  %5761 = vmatprep.subr.mxu0 0.0
  %5762 = vmatpush1.msra.mxu0 0.0
  %5763 = vmatprep.subr.mxu0 0.0
  %5764 = vmatpush1.msra.mxu0 0.0
  %5765 = vmatprep.subr.mxu0 0.0
  %5766 = vmatpush1.msra.mxu0 0.0
  %5767 = vmatprep.subr.mxu0 0.0
  %5768 = vmatpush1.msra.mxu0 0.0
  %5769 = vmatprep.subr.mxu0 0.0
  %5770 = vmatpush1.msra.mxu0 0.0
  %5771 = vmatprep.subr.mxu0 0.0
  %5772 = vmatpush1.msra.mxu0 0.0
  %5773 = vmatprep.subr.mxu0 0.0
  %5774 = vmatpush1.msra.mxu0 0.0
  %5775 = vmatprep.subr.mxu0 0.0
  %5776 = vmatpush1.msra.mxu0 0.0
  %5777 = vmatprep.subr.mxu0 0.0
  %5778 = vmatpush1.msra.mxu0 0.0
  %5779 = vmatprep.subr.mxu0 0.0
  %5780 = vmatpush1.msra.mxu0 0.0
  %5781 = vmatprep.subr.mxu0 0.0
  %5782 = vmatpush1.msra.mxu0 0.0
  %5783 = vmatprep.subr.mxu0 0.0
  %5784 = vmatpush1.msra.mxu0 0.0
  %5785 = vmatprep.subr.mxu0 0.0
  %5786 = vmatpush1.msra.mxu0 0.0
  %5787 = vmatprep.mubr.f32.mxu0 0.0
  %5788 = vmatmul.mubr.f32.gmra.mrb[0].mxu0 %v4483
  %v5789 = vpop.f32.mrb[0].mxu0
  %v5790 = vadd.f32 %v5360, %v5789
  %v5791 = vpop.f32.mrb[0].mxu0
  %5792 = vdwg.mxu0
  %5793 = vmatprep.subr.mxu0 0.0
  %5794 = vmatpush1.msra.mxu0 %v4157
  %5795 = vmatprep.subr.mxu0 0.0
  %5796 = vmatpush1.msra.mxu0 %v4158
  %5797 = vmatprep.subr.mxu0 0.0
  %5798 = vmatpush1.msra.mxu0 %v4159
  %5799 = vmatprep.subr.mxu0 0.0
  %5800 = vmatpush1.msra.mxu0 %v4160
  %5801 = vmatprep.subr.mxu0 0.0
  %5802 = vmatpush1.msra.mxu0 0.0
  %5803 = vmatprep.subr.mxu0 0.0
  %5804 = vmatpush1.msra.mxu0 0.0
  %5805 = vmatprep.subr.mxu0 0.0
  %5806 = vmatpush1.msra.mxu0 0.0
  %5807 = vmatprep.subr.mxu0 0.0
  %5808 = vmatpush1.msra.mxu0 0.0
  %5809 = vmatprep.subr.mxu0 0.0
  %5810 = vmatpush1.msra.mxu0 0.0
  %5811 = vmatprep.subr.mxu0 0.0
  %5812 = vmatpush1.msra.mxu0 0.0
  %5813 = vmatprep.subr.mxu0 0.0
  %5814 = vmatpush1.msra.mxu0 0.0
  %5815 = vmatprep.subr.mxu0 0.0
  %5816 = vmatpush1.msra.mxu0 0.0
  %5817 = vmatprep.subr.mxu0 0.0
  %5818 = vmatpush1.msra.mxu0 0.0
  %5819 = vmatprep.subr.mxu0 0.0
  %5820 = vmatpush1.msra.mxu0 0.0
  %5821 = vmatprep.subr.mxu0 0.0
  %5822 = vmatpush1.msra.mxu0 0.0
  %5823 = vmatprep.subr.mxu0 0.0
  %5824 = vmatpush1.msra.mxu0 0.0
  %5825 = vmatprep.subr.mxu0 0.0
  %5826 = vmatpush1.msra.mxu0 0.0
  %5827 = vmatprep.subr.mxu0 0.0
  %5828 = vmatpush1.msra.mxu0 0.0
  %5829 = vmatprep.subr.mxu0 0.0
  %5830 = vmatpush1.msra.mxu0 0.0
  %5831 = vmatprep.subr.mxu0 0.0
  %5832 = vmatpush1.msra.mxu0 0.0
  %5833 = vmatprep.subr.mxu0 0.0
  %5834 = vmatpush1.msra.mxu0 0.0
  %5835 = vmatprep.subr.mxu0 0.0
  %5836 = vmatpush1.msra.mxu0 0.0
  %5837 = vmatprep.subr.mxu0 0.0
  %5838 = vmatpush1.msra.mxu0 0.0
  %5839 = vmatprep.subr.mxu0 0.0
  %5840 = vmatpush1.msra.mxu0 0.0
  %5841 = vmatprep.subr.mxu0 0.0
  %5842 = vmatpush1.msra.mxu0 0.0
  %5843 = vmatprep.subr.mxu0 0.0
  %5844 = vmatpush1.msra.mxu0 0.0
  %5845 = vmatprep.subr.mxu0 0.0
  %5846 = vmatpush1.msra.mxu0 0.0
  %5847 = vmatprep.subr.mxu0 0.0
  %5848 = vmatpush1.msra.mxu0 0.0
  %5849 = vmatprep.subr.mxu0 0.0
  %5850 = vmatpush1.msra.mxu0 0.0
  %5851 = vmatprep.subr.mxu0 0.0
  %5852 = vmatpush1.msra.mxu0 0.0
  %5853 = vmatprep.subr.mxu0 0.0
  %5854 = vmatpush1.msra.mxu0 0.0
  %5855 = vmatprep.subr.mxu0 0.0
  %5856 = vmatpush1.msra.mxu0 0.0
  %5857 = vmatprep.mubr.f32.mxu0 0.0
  %5858 = vmatmul.mubr.f32.gmra.mrb[0].mxu0 %v4483
  %v5859 = vpop.f32.mrb[0].mxu0
  %v5860 = vadd.f32 %v5364, %v5859
  %v5861 = vpop.f32.mrb[0].mxu0
  %5862 = vdwg.mxu0
  %5863 = vmatprep.subr.mxu0 0.0
  %5864 = vmatpush1.msra.mxu0 %v4161
  %5865 = vmatprep.subr.mxu0 0.0
  %5866 = vmatpush1.msra.mxu0 %v4162
  %5867 = vmatprep.subr.mxu0 0.0
  %5868 = vmatpush1.msra.mxu0 %v4163
  %5869 = vmatprep.subr.mxu0 0.0
  %5870 = vmatpush1.msra.mxu0 %v4164
  %5871 = vmatprep.subr.mxu0 0.0
  %5872 = vmatpush1.msra.mxu0 0.0
  %5873 = vmatprep.subr.mxu0 0.0
  %5874 = vmatpush1.msra.mxu0 0.0
  %5875 = vmatprep.subr.mxu0 0.0
  %5876 = vmatpush1.msra.mxu0 0.0
  %5877 = vmatprep.subr.mxu0 0.0
  %5878 = vmatpush1.msra.mxu0 0.0
  %5879 = vmatprep.subr.mxu0 0.0
  %5880 = vmatpush1.msra.mxu0 0.0
  %5881 = vmatprep.subr.mxu0 0.0
  %5882 = vmatpush1.msra.mxu0 0.0
  %5883 = vmatprep.subr.mxu0 0.0
  %5884 = vmatpush1.msra.mxu0 0.0
  %5885 = vmatprep.subr.mxu0 0.0
  %5886 = vmatpush1.msra.mxu0 0.0
  %5887 = vmatprep.subr.mxu0 0.0
  %5888 = vmatpush1.msra.mxu0 0.0
  %5889 = vmatprep.subr.mxu0 0.0
  %5890 = vmatpush1.msra.mxu0 0.0
  %5891 = vmatprep.subr.mxu0 0.0
  %5892 = vmatpush1.msra.mxu0 0.0
  %5893 = vmatprep.subr.mxu0 0.0
  %5894 = vmatpush1.msra.mxu0 0.0
  %5895 = vmatprep.subr.mxu0 0.0
  %5896 = vmatpush1.msra.mxu0 0.0
  %5897 = vmatprep.subr.mxu0 0.0
  %5898 = vmatpush1.msra.mxu0 0.0
  %5899 = vmatprep.subr.mxu0 0.0
  %5900 = vmatpush1.msra.mxu0 0.0
  %5901 = vmatprep.subr.mxu0 0.0
  %5902 = vmatpush1.msra.mxu0 0.0
  %5903 = vmatprep.subr.mxu0 0.0
  %5904 = vmatpush1.msra.mxu0 0.0
  %5905 = vmatprep.subr.mxu0 0.0
  %5906 = vmatpush1.msra.mxu0 0.0
  %5907 = vmatprep.subr.mxu0 0.0
  %5908 = vmatpush1.msra.mxu0 0.0
  %5909 = vmatprep.subr.mxu0 0.0
  %5910 = vmatpush1.msra.mxu0 0.0
  %5911 = vmatprep.subr.mxu0 0.0
  %5912 = vmatpush1.msra.mxu0 0.0
  %5913 = vmatprep.subr.mxu0 0.0
  %5914 = vmatpush1.msra.mxu0 0.0
  %5915 = vmatprep.subr.mxu0 0.0
  %5916 = vmatpush1.msra.mxu0 0.0
  %5917 = vmatprep.subr.mxu0 0.0
  %5918 = vmatpush1.msra.mxu0 0.0
  %5919 = vmatprep.subr.mxu0 0.0
  %5920 = vmatpush1.msra.mxu0 0.0
  %5921 = vmatprep.subr.mxu0 0.0
  %5922 = vmatpush1.msra.mxu0 0.0
  %5923 = vmatprep.subr.mxu0 0.0
  %5924 = vmatpush1.msra.mxu0 0.0
  %5925 = vmatprep.subr.mxu0 0.0
  %5926 = vmatpush1.msra.mxu0 0.0
  %5927 = vmatprep.mubr.f32.mxu0 0.0
  %5928 = vmatmul.mubr.f32.gmra.mrb[0].mxu0 %v4483
  %v5929 = vpop.f32.mrb[0].mxu0
  %v5930 = vadd.f32 %v5368, %v5929
  %v5931 = vpop.f32.mrb[0].mxu0
  %5932 = vdwg.mxu0
  %v5934 = vsel %vm1904, %v4269, 0
  %v5937 = vsel %vm1904, %v4856, 0
  %5939 = vmatprep.subr.mxu0 0.0
  %5940 = vmatpush1.xpose.msra.mxu0 %v5937
  %5941 = vmatprep.subr.mxu0 0.0
  %5942 = vmatpush1.xpose.msra.mxu0 0.0
  %5943 = vmatprep.subr.mxu0 0.0
  %5944 = vmatpush1.xpose.msra.mxu0 0.0
  %5945 = vmatprep.subr.mxu0 0.0
  %5946 = vmatpush1.xpose.msra.mxu0 0.0
  %5947 = vmatprep.subr.mxu0 0.0
  %5948 = vmatpush1.xpose.msra.mxu0 0.0
  %5949 = vmatprep.subr.mxu0 0.0
  %5950 = vmatpush1.xpose.msra.mxu0 0.0
  %5951 = vmatprep.subr.mxu0 0.0
  %5952 = vmatpush1.xpose.msra.mxu0 0.0
  %5953 = vmatprep.subr.mxu0 0.0
  %5954 = vmatpush1.xpose.msra.mxu0 0.0
  %5955 = vmatprep.subr.mxu0 0.0
  %5956 = vmatpush1.xpose.msra.mxu0 0.0
  %5957 = vmatprep.subr.mxu0 0.0
  %5958 = vmatpush1.xpose.msra.mxu0 0.0
  %5959 = vmatprep.subr.mxu0 0.0
  %5960 = vmatpush1.xpose.msra.mxu0 0.0
  %5961 = vmatprep.subr.mxu0 0.0
  %5962 = vmatpush1.xpose.msra.mxu0 0.0
  %5963 = vmatprep.subr.mxu0 0.0
  %5964 = vmatpush1.xpose.msra.mxu0 0.0
  %5965 = vmatprep.subr.mxu0 0.0
  %5966 = vmatpush1.xpose.msra.mxu0 0.0
  %5967 = vmatprep.subr.mxu0 0.0
  %5968 = vmatpush1.xpose.msra.mxu0 0.0
  %5969 = vmatprep.subr.mxu0 0.0
  %5970 = vmatpush1.xpose.msra.mxu0 0.0
  %5971 = vmatprep.subr.mxu0 0.0
  %5972 = vmatpush1.xpose.msra.mxu0 0.0
  %5973 = vmatprep.subr.mxu0 0.0
  %5974 = vmatpush1.xpose.msra.mxu0 0.0
  %5975 = vmatprep.subr.mxu0 0.0
  %5976 = vmatpush1.xpose.msra.mxu0 0.0
  %5977 = vmatprep.subr.mxu0 0.0
  %5978 = vmatpush1.xpose.msra.mxu0 0.0
  %5979 = vmatprep.subr.mxu0 0.0
  %5980 = vmatpush1.xpose.msra.mxu0 0.0
  %5981 = vmatprep.subr.mxu0 0.0
  %5982 = vmatpush1.xpose.msra.mxu0 0.0
  %5983 = vmatprep.subr.mxu0 0.0
  %5984 = vmatpush1.xpose.msra.mxu0 0.0
  %5985 = vmatprep.subr.mxu0 0.0
  %5986 = vmatpush1.xpose.msra.mxu0 0.0
  %5987 = vmatprep.subr.mxu0 0.0
  %5988 = vmatpush1.xpose.msra.mxu0 0.0
  %5989 = vmatprep.subr.mxu0 0.0
  %5990 = vmatpush1.xpose.msra.mxu0 0.0
  %5991 = vmatprep.subr.mxu0 0.0
  %5992 = vmatpush1.xpose.msra.mxu0 0.0
  %5993 = vmatprep.subr.mxu0 0.0
  %5994 = vmatpush1.xpose.msra.mxu0 0.0
  %5995 = vmatprep.subr.mxu0 0.0
  %5996 = vmatpush1.xpose.msra.mxu0 0.0
  %5997 = vmatprep.subr.mxu0 0.0
  %5998 = vmatpush1.xpose.msra.mxu0 0.0
  %5999 = vmatprep.subr.mxu0 0.0
  %6000 = vmatpush1.xpose.msra.mxu0 0.0
  %6001 = vmatprep.subr.mxu0 0.0
  %6002 = vmatpush1.xpose.msra.mxu0 0.0
  %6003 = vmatprep.mubr.f32.mxu0 0.0
  %6004 = vmatmul.mubr.f32.gmra.mrb[0].mxu0 %v5934
  %v6005 = vpop.f32.mrb[0].mxu0
  %v6006 = vadd.f32 0.0, %v6005
  %v6007 = vpop.f32.mrb[0].mxu0
  %6008 = vdwg.mxu0
  %v6010 = vsel %vm1904, %v4339, 0
  %v6013 = vsel %vm1904, %v4926, 0
  %6015 = vmatprep.subr.mxu0 0.0
  %6016 = vmatpush1.xpose.msra.mxu0 %v6013
  %6017 = vmatprep.subr.mxu0 0.0
  %6018 = vmatpush1.xpose.msra.mxu0 0.0
  %6019 = vmatprep.subr.mxu0 0.0
  %6020 = vmatpush1.xpose.msra.mxu0 0.0
  %6021 = vmatprep.subr.mxu0 0.0
  %6022 = vmatpush1.xpose.msra.mxu0 0.0
  %6023 = vmatprep.subr.mxu0 0.0
  %6024 = vmatpush1.xpose.msra.mxu0 0.0
  %6025 = vmatprep.subr.mxu0 0.0
  %6026 = vmatpush1.xpose.msra.mxu0 0.0
  %6027 = vmatprep.subr.mxu0 0.0
  %6028 = vmatpush1.xpose.msra.mxu0 0.0
  %6029 = vmatprep.subr.mxu0 0.0
  %6030 = vmatpush1.xpose.msra.mxu0 0.0
  %6031 = vmatprep.subr.mxu0 0.0
  %6032 = vmatpush1.xpose.msra.mxu0 0.0
  %6033 = vmatprep.subr.mxu0 0.0
  %6034 = vmatpush1.xpose.msra.mxu0 0.0
  %6035 = vmatprep.subr.mxu0 0.0
  %6036 = vmatpush1.xpose.msra.mxu0 0.0
  %6037 = vmatprep.subr.mxu0 0.0
  %6038 = vmatpush1.xpose.msra.mxu0 0.0
  %6039 = vmatprep.subr.mxu0 0.0
  %6040 = vmatpush1.xpose.msra.mxu0 0.0
  %6041 = vmatprep.subr.mxu0 0.0
  %6042 = vmatpush1.xpose.msra.mxu0 0.0
  %6043 = vmatprep.subr.mxu0 0.0
  %6044 = vmatpush1.xpose.msra.mxu0 0.0
  %6045 = vmatprep.subr.mxu0 0.0
  %6046 = vmatpush1.xpose.msra.mxu0 0.0
  %6047 = vmatprep.subr.mxu0 0.0
  %6048 = vmatpush1.xpose.msra.mxu0 0.0
  %6049 = vmatprep.subr.mxu0 0.0
  %6050 = vmatpush1.xpose.msra.mxu0 0.0
  %6051 = vmatprep.subr.mxu0 0.0
  %6052 = vmatpush1.xpose.msra.mxu0 0.0
  %6053 = vmatprep.subr.mxu0 0.0
  %6054 = vmatpush1.xpose.msra.mxu0 0.0
  %6055 = vmatprep.subr.mxu0 0.0
  %6056 = vmatpush1.xpose.msra.mxu0 0.0
  %6057 = vmatprep.subr.mxu0 0.0
  %6058 = vmatpush1.xpose.msra.mxu0 0.0
  %6059 = vmatprep.subr.mxu0 0.0
  %6060 = vmatpush1.xpose.msra.mxu0 0.0
  %6061 = vmatprep.subr.mxu0 0.0
  %6062 = vmatpush1.xpose.msra.mxu0 0.0
  %6063 = vmatprep.subr.mxu0 0.0
  %6064 = vmatpush1.xpose.msra.mxu0 0.0
  %6065 = vmatprep.subr.mxu0 0.0
  %6066 = vmatpush1.xpose.msra.mxu0 0.0
  %6067 = vmatprep.subr.mxu0 0.0
  %6068 = vmatpush1.xpose.msra.mxu0 0.0
  %6069 = vmatprep.subr.mxu0 0.0
  %6070 = vmatpush1.xpose.msra.mxu0 0.0
  %6071 = vmatprep.subr.mxu0 0.0
  %6072 = vmatpush1.xpose.msra.mxu0 0.0
  %6073 = vmatprep.subr.mxu0 0.0
  %6074 = vmatpush1.xpose.msra.mxu0 0.0
  %6075 = vmatprep.subr.mxu0 0.0
  %6076 = vmatpush1.xpose.msra.mxu0 0.0
  %6077 = vmatprep.subr.mxu0 0.0
  %6078 = vmatpush1.xpose.msra.mxu0 0.0
  %6079 = vmatprep.mubr.f32.mxu0 0.0
  %6080 = vmatmul.mubr.f32.gmra.mrb[0].mxu0 %v6010
  %v6081 = vpop.f32.mrb[0].mxu0
  %v6082 = vadd.f32 0.0, %v6081
  %v6083 = vpop.f32.mrb[0].mxu0
  %6084 = vdwg.mxu0
  %v6086 = vsel %vm1904, %v4409, 0
  %v6089 = vsel %vm1904, %v4996, 0
  %6091 = vmatprep.subr.mxu0 0.0
  %6092 = vmatpush1.xpose.msra.mxu0 %v6089
  %6093 = vmatprep.subr.mxu0 0.0
  %6094 = vmatpush1.xpose.msra.mxu0 0.0
  %6095 = vmatprep.subr.mxu0 0.0
  %6096 = vmatpush1.xpose.msra.mxu0 0.0
  %6097 = vmatprep.subr.mxu0 0.0
  %6098 = vmatpush1.xpose.msra.mxu0 0.0
  %6099 = vmatprep.subr.mxu0 0.0
  %6100 = vmatpush1.xpose.msra.mxu0 0.0
  %6101 = vmatprep.subr.mxu0 0.0
  %6102 = vmatpush1.xpose.msra.mxu0 0.0
  %6103 = vmatprep.subr.mxu0 0.0
  %6104 = vmatpush1.xpose.msra.mxu0 0.0
  %6105 = vmatprep.subr.mxu0 0.0
  %6106 = vmatpush1.xpose.msra.mxu0 0.0
  %6107 = vmatprep.subr.mxu0 0.0
  %6108 = vmatpush1.xpose.msra.mxu0 0.0
  %6109 = vmatprep.subr.mxu0 0.0
  %6110 = vmatpush1.xpose.msra.mxu0 0.0
  %6111 = vmatprep.subr.mxu0 0.0
  %6112 = vmatpush1.xpose.msra.mxu0 0.0
  %6113 = vmatprep.subr.mxu0 0.0
  %6114 = vmatpush1.xpose.msra.mxu0 0.0
  %6115 = vmatprep.subr.mxu0 0.0
  %6116 = vmatpush1.xpose.msra.mxu0 0.0
  %6117 = vmatprep.subr.mxu0 0.0
  %6118 = vmatpush1.xpose.msra.mxu0 0.0
  %6119 = vmatprep.subr.mxu0 0.0
  %6120 = vmatpush1.xpose.msra.mxu0 0.0
  %6121 = vmatprep.subr.mxu0 0.0
  %6122 = vmatpush1.xpose.msra.mxu0 0.0
  %6123 = vmatprep.subr.mxu0 0.0
  %6124 = vmatpush1.xpose.msra.mxu0 0.0
  %6125 = vmatprep.subr.mxu0 0.0
  %6126 = vmatpush1.xpose.msra.mxu0 0.0
  %6127 = vmatprep.subr.mxu0 0.0
  %6128 = vmatpush1.xpose.msra.mxu0 0.0
  %6129 = vmatprep.subr.mxu0 0.0
  %6130 = vmatpush1.xpose.msra.mxu0 0.0
  %6131 = vmatprep.subr.mxu0 0.0
  %6132 = vmatpush1.xpose.msra.mxu0 0.0
  %6133 = vmatprep.subr.mxu0 0.0
  %6134 = vmatpush1.xpose.msra.mxu0 0.0
  %6135 = vmatprep.subr.mxu0 0.0
  %6136 = vmatpush1.xpose.msra.mxu0 0.0
  %6137 = vmatprep.subr.mxu0 0.0
  %6138 = vmatpush1.xpose.msra.mxu0 0.0
  %6139 = vmatprep.subr.mxu0 0.0
  %6140 = vmatpush1.xpose.msra.mxu0 0.0
  %6141 = vmatprep.subr.mxu0 0.0
  %6142 = vmatpush1.xpose.msra.mxu0 0.0
  %6143 = vmatprep.subr.mxu0 0.0
  %6144 = vmatpush1.xpose.msra.mxu0 0.0
  %6145 = vmatprep.subr.mxu0 0.0
  %6146 = vmatpush1.xpose.msra.mxu0 0.0
  %6147 = vmatprep.subr.mxu0 0.0
  %6148 = vmatpush1.xpose.msra.mxu0 0.0
  %6149 = vmatprep.subr.mxu0 0.0
  %6150 = vmatpush1.xpose.msra.mxu0 0.0
  %6151 = vmatprep.subr.mxu0 0.0
  %6152 = vmatpush1.xpose.msra.mxu0 0.0
  %6153 = vmatprep.subr.mxu0 0.0
  %6154 = vmatpush1.xpose.msra.mxu0 0.0
  %6155 = vmatprep.mubr.f32.mxu0 0.0
  %6156 = vmatmul.mubr.f32.gmra.mrb[0].mxu0 %v6086
  %v6157 = vpop.f32.mrb[0].mxu0
  %v6158 = vadd.f32 0.0, %v6157
  %v6159 = vpop.f32.mrb[0].mxu0
  %6160 = vdwg.mxu0
  %v6162 = vsel %vm1904, %v4479, 0
  %v6165 = vsel %vm1904, %v5066, 0
  %6167 = vmatprep.subr.mxu0 0.0
  %6168 = vmatpush1.xpose.msra.mxu0 %v6165
  %6169 = vmatprep.subr.mxu0 0.0
  %6170 = vmatpush1.xpose.msra.mxu0 0.0
  %6171 = vmatprep.subr.mxu0 0.0
  %6172 = vmatpush1.xpose.msra.mxu0 0.0
  %6173 = vmatprep.subr.mxu0 0.0
  %6174 = vmatpush1.xpose.msra.mxu0 0.0
  %6175 = vmatprep.subr.mxu0 0.0
  %6176 = vmatpush1.xpose.msra.mxu0 0.0
  %6177 = vmatprep.subr.mxu0 0.0
  %6178 = vmatpush1.xpose.msra.mxu0 0.0
  %6179 = vmatprep.subr.mxu0 0.0
  %6180 = vmatpush1.xpose.msra.mxu0 0.0
  %6181 = vmatprep.subr.mxu0 0.0
  %6182 = vmatpush1.xpose.msra.mxu0 0.0
  %6183 = vmatprep.subr.mxu0 0.0
  %6184 = vmatpush1.xpose.msra.mxu0 0.0
  %6185 = vmatprep.subr.mxu0 0.0
  %6186 = vmatpush1.xpose.msra.mxu0 0.0
  %6187 = vmatprep.subr.mxu0 0.0
  %6188 = vmatpush1.xpose.msra.mxu0 0.0
  %6189 = vmatprep.subr.mxu0 0.0
  %6190 = vmatpush1.xpose.msra.mxu0 0.0
  %6191 = vmatprep.subr.mxu0 0.0
  %6192 = vmatpush1.xpose.msra.mxu0 0.0
  %6193 = vmatprep.subr.mxu0 0.0
  %6194 = vmatpush1.xpose.msra.mxu0 0.0
  %6195 = vmatprep.subr.mxu0 0.0
  %6196 = vmatpush1.xpose.msra.mxu0 0.0
  %6197 = vmatprep.subr.mxu0 0.0
  %6198 = vmatpush1.xpose.msra.mxu0 0.0
  %6199 = vmatprep.subr.mxu0 0.0
  %6200 = vmatpush1.xpose.msra.mxu0 0.0
  %6201 = vmatprep.subr.mxu0 0.0
  %6202 = vmatpush1.xpose.msra.mxu0 0.0
  %6203 = vmatprep.subr.mxu0 0.0
  %6204 = vmatpush1.xpose.msra.mxu0 0.0
  %6205 = vmatprep.subr.mxu0 0.0
  %6206 = vmatpush1.xpose.msra.mxu0 0.0
  %6207 = vmatprep.subr.mxu0 0.0
  %6208 = vmatpush1.xpose.msra.mxu0 0.0
  %6209 = vmatprep.subr.mxu0 0.0
  %6210 = vmatpush1.xpose.msra.mxu0 0.0
  %6211 = vmatprep.subr.mxu0 0.0
  %6212 = vmatpush1.xpose.msra.mxu0 0.0
  %6213 = vmatprep.subr.mxu0 0.0
  %6214 = vmatpush1.xpose.msra.mxu0 0.0
  %6215 = vmatprep.subr.mxu0 0.0
  %6216 = vmatpush1.xpose.msra.mxu0 0.0
  %6217 = vmatprep.subr.mxu0 0.0
  %6218 = vmatpush1.xpose.msra.mxu0 0.0
  %6219 = vmatprep.subr.mxu0 0.0
  %6220 = vmatpush1.xpose.msra.mxu0 0.0
  %6221 = vmatprep.subr.mxu0 0.0
  %6222 = vmatpush1.xpose.msra.mxu0 0.0
  %6223 = vmatprep.subr.mxu0 0.0
  %6224 = vmatpush1.xpose.msra.mxu0 0.0
  %6225 = vmatprep.subr.mxu0 0.0
  %6226 = vmatpush1.xpose.msra.mxu0 0.0
  %6227 = vmatprep.subr.mxu0 0.0
  %6228 = vmatpush1.xpose.msra.mxu0 0.0
  %6229 = vmatprep.subr.mxu0 0.0
  %6230 = vmatpush1.xpose.msra.mxu0 0.0
  %6231 = vmatprep.mubr.f32.mxu0 0.0
  %6232 = vmatmul.mubr.f32.gmra.mrb[0].mxu0 %v6162
  %v6233 = vpop.f32.mrb[0].mxu0
  %v6234 = vadd.f32 0.0, %v6233
  %v6235 = vpop.f32.mrb[0].mxu0
  %6236 = vdwg.mxu0
  %v6238 = vsel %vm1904, %v4552, 0
  %v6241 = vsel %vm1904, %v5136, 0
  %6243 = vmatprep.subr.mxu0 0.0
  %6244 = vmatpush1.xpose.msra.mxu0 %v6241
  %6245 = vmatprep.subr.mxu0 0.0
  %6246 = vmatpush1.xpose.msra.mxu0 0.0
  %6247 = vmatprep.subr.mxu0 0.0
  %6248 = vmatpush1.xpose.msra.mxu0 0.0
  %6249 = vmatprep.subr.mxu0 0.0
  %6250 = vmatpush1.xpose.msra.mxu0 0.0
  %6251 = vmatprep.subr.mxu0 0.0
  %6252 = vmatpush1.xpose.msra.mxu0 0.0
  %6253 = vmatprep.subr.mxu0 0.0
  %6254 = vmatpush1.xpose.msra.mxu0 0.0
  %6255 = vmatprep.subr.mxu0 0.0
  %6256 = vmatpush1.xpose.msra.mxu0 0.0
  %6257 = vmatprep.subr.mxu0 0.0
  %6258 = vmatpush1.xpose.msra.mxu0 0.0
  %6259 = vmatprep.subr.mxu0 0.0
  %6260 = vmatpush1.xpose.msra.mxu0 0.0
  %6261 = vmatprep.subr.mxu0 0.0
  %6262 = vmatpush1.xpose.msra.mxu0 0.0
  %6263 = vmatprep.subr.mxu0 0.0
  %6264 = vmatpush1.xpose.msra.mxu0 0.0
  %6265 = vmatprep.subr.mxu0 0.0
  %6266 = vmatpush1.xpose.msra.mxu0 0.0
  %6267 = vmatprep.subr.mxu0 0.0
  %6268 = vmatpush1.xpose.msra.mxu0 0.0
  %6269 = vmatprep.subr.mxu0 0.0
  %6270 = vmatpush1.xpose.msra.mxu0 0.0
  %6271 = vmatprep.subr.mxu0 0.0
  %6272 = vmatpush1.xpose.msra.mxu0 0.0
  %6273 = vmatprep.subr.mxu0 0.0
  %6274 = vmatpush1.xpose.msra.mxu0 0.0
  %6275 = vmatprep.subr.mxu0 0.0
  %6276 = vmatpush1.xpose.msra.mxu0 0.0
  %6277 = vmatprep.subr.mxu0 0.0
  %6278 = vmatpush1.xpose.msra.mxu0 0.0
  %6279 = vmatprep.subr.mxu0 0.0
  %6280 = vmatpush1.xpose.msra.mxu0 0.0
  %6281 = vmatprep.subr.mxu0 0.0
  %6282 = vmatpush1.xpose.msra.mxu0 0.0
  %6283 = vmatprep.subr.mxu0 0.0
  %6284 = vmatpush1.xpose.msra.mxu0 0.0
  %6285 = vmatprep.subr.mxu0 0.0
  %6286 = vmatpush1.xpose.msra.mxu0 0.0
  %6287 = vmatprep.subr.mxu0 0.0
  %6288 = vmatpush1.xpose.msra.mxu0 0.0
  %6289 = vmatprep.subr.mxu0 0.0
  %6290 = vmatpush1.xpose.msra.mxu0 0.0
  %6291 = vmatprep.subr.mxu0 0.0
  %6292 = vmatpush1.xpose.msra.mxu0 0.0
  %6293 = vmatprep.subr.mxu0 0.0
  %6294 = vmatpush1.xpose.msra.mxu0 0.0
  %6295 = vmatprep.subr.mxu0 0.0
  %6296 = vmatpush1.xpose.msra.mxu0 0.0
  %6297 = vmatprep.subr.mxu0 0.0
  %6298 = vmatpush1.xpose.msra.mxu0 0.0
  %6299 = vmatprep.subr.mxu0 0.0
  %6300 = vmatpush1.xpose.msra.mxu0 0.0
  %6301 = vmatprep.subr.mxu0 0.0
  %6302 = vmatpush1.xpose.msra.mxu0 0.0
  %6303 = vmatprep.subr.mxu0 0.0
  %6304 = vmatpush1.xpose.msra.mxu0 0.0
  %6305 = vmatprep.subr.mxu0 0.0
  %6306 = vmatpush1.xpose.msra.mxu0 0.0
  %6307 = vmatprep.mubr.f32.mxu0 0.0
  %6308 = vmatmul.mubr.f32.gmra.mrb[0].mxu0 %v6238
  %v6309 = vpop.f32.mrb[0].mxu0
  %v6310 = vadd.f32 0.0, %v6309
  %v6311 = vpop.f32.mrb[0].mxu0
  %6312 = vdwg.mxu0
  %v6314 = vsel %vm1904, %v4622, 0
  %v6317 = vsel %vm1904, %v5206, 0
  %6319 = vmatprep.subr.mxu0 0.0
  %6320 = vmatpush1.xpose.msra.mxu0 %v6317
  %6321 = vmatprep.subr.mxu0 0.0
  %6322 = vmatpush1.xpose.msra.mxu0 0.0
  %6323 = vmatprep.subr.mxu0 0.0
  %6324 = vmatpush1.xpose.msra.mxu0 0.0
  %6325 = vmatprep.subr.mxu0 0.0
  %6326 = vmatpush1.xpose.msra.mxu0 0.0
  %6327 = vmatprep.subr.mxu0 0.0
  %6328 = vmatpush1.xpose.msra.mxu0 0.0
  %6329 = vmatprep.subr.mxu0 0.0
  %6330 = vmatpush1.xpose.msra.mxu0 0.0
  %6331 = vmatprep.subr.mxu0 0.0
  %6332 = vmatpush1.xpose.msra.mxu0 0.0
  %6333 = vmatprep.subr.mxu0 0.0
  %6334 = vmatpush1.xpose.msra.mxu0 0.0
  %6335 = vmatprep.subr.mxu0 0.0
  %6336 = vmatpush1.xpose.msra.mxu0 0.0
  %6337 = vmatprep.subr.mxu0 0.0
  %6338 = vmatpush1.xpose.msra.mxu0 0.0
  %6339 = vmatprep.subr.mxu0 0.0
  %6340 = vmatpush1.xpose.msra.mxu0 0.0
  %6341 = vmatprep.subr.mxu0 0.0
  %6342 = vmatpush1.xpose.msra.mxu0 0.0
  %6343 = vmatprep.subr.mxu0 0.0
  %6344 = vmatpush1.xpose.msra.mxu0 0.0
  %6345 = vmatprep.subr.mxu0 0.0
  %6346 = vmatpush1.xpose.msra.mxu0 0.0
  %6347 = vmatprep.subr.mxu0 0.0
  %6348 = vmatpush1.xpose.msra.mxu0 0.0
  %6349 = vmatprep.subr.mxu0 0.0
  %6350 = vmatpush1.xpose.msra.mxu0 0.0
  %6351 = vmatprep.subr.mxu0 0.0
  %6352 = vmatpush1.xpose.msra.mxu0 0.0
  %6353 = vmatprep.subr.mxu0 0.0
  %6354 = vmatpush1.xpose.msra.mxu0 0.0
  %6355 = vmatprep.subr.mxu0 0.0
  %6356 = vmatpush1.xpose.msra.mxu0 0.0
  %6357 = vmatprep.subr.mxu0 0.0
  %6358 = vmatpush1.xpose.msra.mxu0 0.0
  %6359 = vmatprep.subr.mxu0 0.0
  %6360 = vmatpush1.xpose.msra.mxu0 0.0
  %6361 = vmatprep.subr.mxu0 0.0
  %6362 = vmatpush1.xpose.msra.mxu0 0.0
  %6363 = vmatprep.subr.mxu0 0.0
  %6364 = vmatpush1.xpose.msra.mxu0 0.0
  %6365 = vmatprep.subr.mxu0 0.0
  %6366 = vmatpush1.xpose.msra.mxu0 0.0
  %6367 = vmatprep.subr.mxu0 0.0
  %6368 = vmatpush1.xpose.msra.mxu0 0.0
  %6369 = vmatprep.subr.mxu0 0.0
  %6370 = vmatpush1.xpose.msra.mxu0 0.0
  %6371 = vmatprep.subr.mxu0 0.0
  %6372 = vmatpush1.xpose.msra.mxu0 0.0
  %6373 = vmatprep.subr.mxu0 0.0
  %6374 = vmatpush1.xpose.msra.mxu0 0.0
  %6375 = vmatprep.subr.mxu0 0.0
  %6376 = vmatpush1.xpose.msra.mxu0 0.0
  %6377 = vmatprep.subr.mxu0 0.0
  %6378 = vmatpush1.xpose.msra.mxu0 0.0
  %6379 = vmatprep.subr.mxu0 0.0
  %6380 = vmatpush1.xpose.msra.mxu0 0.0
  %6381 = vmatprep.subr.mxu0 0.0
  %6382 = vmatpush1.xpose.msra.mxu0 0.0
  %6383 = vmatprep.mubr.f32.mxu0 0.0
  %6384 = vmatmul.mubr.f32.gmra.mrb[0].mxu0 %v6314
  %v6385 = vpop.f32.mrb[0].mxu0
  %v6386 = vadd.f32 0.0, %v6385
  %v6387 = vpop.f32.mrb[0].mxu0
  %6388 = vdwg.mxu0
  %v6390 = vsel %vm1904, %v4692, 0
  %v6393 = vsel %vm1904, %v5276, 0
  %6395 = vmatprep.subr.mxu0 0.0
  %6396 = vmatpush1.xpose.msra.mxu0 %v6393
  %6397 = vmatprep.subr.mxu0 0.0
  %6398 = vmatpush1.xpose.msra.mxu0 0.0
  %6399 = vmatprep.subr.mxu0 0.0
  %6400 = vmatpush1.xpose.msra.mxu0 0.0
  %6401 = vmatprep.subr.mxu0 0.0
  %6402 = vmatpush1.xpose.msra.mxu0 0.0
  %6403 = vmatprep.subr.mxu0 0.0
  %6404 = vmatpush1.xpose.msra.mxu0 0.0
  %6405 = vmatprep.subr.mxu0 0.0
  %6406 = vmatpush1.xpose.msra.mxu0 0.0
  %6407 = vmatprep.subr.mxu0 0.0
  %6408 = vmatpush1.xpose.msra.mxu0 0.0
  %6409 = vmatprep.subr.mxu0 0.0
  %6410 = vmatpush1.xpose.msra.mxu0 0.0
  %6411 = vmatprep.subr.mxu0 0.0
  %6412 = vmatpush1.xpose.msra.mxu0 0.0
  %6413 = vmatprep.subr.mxu0 0.0
  %6414 = vmatpush1.xpose.msra.mxu0 0.0
  %6415 = vmatprep.subr.mxu0 0.0
  %6416 = vmatpush1.xpose.msra.mxu0 0.0
  %6417 = vmatprep.subr.mxu0 0.0
  %6418 = vmatpush1.xpose.msra.mxu0 0.0
  %6419 = vmatprep.subr.mxu0 0.0
  %6420 = vmatpush1.xpose.msra.mxu0 0.0
  %6421 = vmatprep.subr.mxu0 0.0
  %6422 = vmatpush1.xpose.msra.mxu0 0.0
  %6423 = vmatprep.subr.mxu0 0.0
  %6424 = vmatpush1.xpose.msra.mxu0 0.0
  %6425 = vmatprep.subr.mxu0 0.0
  %6426 = vmatpush1.xpose.msra.mxu0 0.0
  %6427 = vmatprep.subr.mxu0 0.0
  %6428 = vmatpush1.xpose.msra.mxu0 0.0
  %6429 = vmatprep.subr.mxu0 0.0
  %6430 = vmatpush1.xpose.msra.mxu0 0.0
  %6431 = vmatprep.subr.mxu0 0.0
  %6432 = vmatpush1.xpose.msra.mxu0 0.0
  %6433 = vmatprep.subr.mxu0 0.0
  %6434 = vmatpush1.xpose.msra.mxu0 0.0
  %6435 = vmatprep.subr.mxu0 0.0
  %6436 = vmatpush1.xpose.msra.mxu0 0.0
  %6437 = vmatprep.subr.mxu0 0.0
  %6438 = vmatpush1.xpose.msra.mxu0 0.0
  %6439 = vmatprep.subr.mxu0 0.0
  %6440 = vmatpush1.xpose.msra.mxu0 0.0
  %6441 = vmatprep.subr.mxu0 0.0
  %6442 = vmatpush1.xpose.msra.mxu0 0.0
  %6443 = vmatprep.subr.mxu0 0.0
  %6444 = vmatpush1.xpose.msra.mxu0 0.0
  %6445 = vmatprep.subr.mxu0 0.0
  %6446 = vmatpush1.xpose.msra.mxu0 0.0
  %6447 = vmatprep.subr.mxu0 0.0
  %6448 = vmatpush1.xpose.msra.mxu0 0.0
  %6449 = vmatprep.subr.mxu0 0.0
  %6450 = vmatpush1.xpose.msra.mxu0 0.0
  %6451 = vmatprep.subr.mxu0 0.0
  %6452 = vmatpush1.xpose.msra.mxu0 0.0
  %6453 = vmatprep.subr.mxu0 0.0
  %6454 = vmatpush1.xpose.msra.mxu0 0.0
  %6455 = vmatprep.subr.mxu0 0.0
  %6456 = vmatpush1.xpose.msra.mxu0 0.0
  %6457 = vmatprep.subr.mxu0 0.0
  %6458 = vmatpush1.xpose.msra.mxu0 0.0
  %6459 = vmatprep.mubr.f32.mxu0 0.0
  %6460 = vmatmul.mubr.f32.gmra.mrb[0].mxu0 %v6390
  %v6461 = vpop.f32.mrb[0].mxu0
  %v6462 = vadd.f32 0.0, %v6461
  %v6463 = vpop.f32.mrb[0].mxu0
  %6464 = vdwg.mxu0
  %v6466 = vsel %vm1904, %v4762, 0
  %v6469 = vsel %vm1904, %v5346, 0
  %6471 = vmatprep.subr.mxu0 0.0
  %6472 = vmatpush1.xpose.msra.mxu0 %v6469
  %6473 = vmatprep.subr.mxu0 0.0
  %6474 = vmatpush1.xpose.msra.mxu0 0.0
  %6475 = vmatprep.subr.mxu0 0.0
  %6476 = vmatpush1.xpose.msra.mxu0 0.0
  %6477 = vmatprep.subr.mxu0 0.0
  %6478 = vmatpush1.xpose.msra.mxu0 0.0
  %6479 = vmatprep.subr.mxu0 0.0
  %6480 = vmatpush1.xpose.msra.mxu0 0.0
  %6481 = vmatprep.subr.mxu0 0.0
  %6482 = vmatpush1.xpose.msra.mxu0 0.0
  %6483 = vmatprep.subr.mxu0 0.0
  %6484 = vmatpush1.xpose.msra.mxu0 0.0
  %6485 = vmatprep.subr.mxu0 0.0
  %6486 = vmatpush1.xpose.msra.mxu0 0.0
  %6487 = vmatprep.subr.mxu0 0.0
  %6488 = vmatpush1.xpose.msra.mxu0 0.0
  %6489 = vmatprep.subr.mxu0 0.0
  %6490 = vmatpush1.xpose.msra.mxu0 0.0
  %6491 = vmatprep.subr.mxu0 0.0
  %6492 = vmatpush1.xpose.msra.mxu0 0.0
  %6493 = vmatprep.subr.mxu0 0.0
  %6494 = vmatpush1.xpose.msra.mxu0 0.0
  %6495 = vmatprep.subr.mxu0 0.0
  %6496 = vmatpush1.xpose.msra.mxu0 0.0
  %6497 = vmatprep.subr.mxu0 0.0
  %6498 = vmatpush1.xpose.msra.mxu0 0.0
  %6499 = vmatprep.subr.mxu0 0.0
  %6500 = vmatpush1.xpose.msra.mxu0 0.0
  %6501 = vmatprep.subr.mxu0 0.0
  %6502 = vmatpush1.xpose.msra.mxu0 0.0
  %6503 = vmatprep.subr.mxu0 0.0
  %6504 = vmatpush1.xpose.msra.mxu0 0.0
  %6505 = vmatprep.subr.mxu0 0.0
  %6506 = vmatpush1.xpose.msra.mxu0 0.0
  %6507 = vmatprep.subr.mxu0 0.0
  %6508 = vmatpush1.xpose.msra.mxu0 0.0
  %6509 = vmatprep.subr.mxu0 0.0
  %6510 = vmatpush1.xpose.msra.mxu0 0.0
  %6511 = vmatprep.subr.mxu0 0.0
  %6512 = vmatpush1.xpose.msra.mxu0 0.0
  %6513 = vmatprep.subr.mxu0 0.0
  %6514 = vmatpush1.xpose.msra.mxu0 0.0
  %6515 = vmatprep.subr.mxu0 0.0
  %6516 = vmatpush1.xpose.msra.mxu0 0.0
  %6517 = vmatprep.subr.mxu0 0.0
  %6518 = vmatpush1.xpose.msra.mxu0 0.0
  %6519 = vmatprep.subr.mxu0 0.0
  %6520 = vmatpush1.xpose.msra.mxu0 0.0
  %6521 = vmatprep.subr.mxu0 0.0
  %6522 = vmatpush1.xpose.msra.mxu0 0.0
  %6523 = vmatprep.subr.mxu0 0.0
  %6524 = vmatpush1.xpose.msra.mxu0 0.0
  %6525 = vmatprep.subr.mxu0 0.0
  %6526 = vmatpush1.xpose.msra.mxu0 0.0
  %6527 = vmatprep.subr.mxu0 0.0
  %6528 = vmatpush1.xpose.msra.mxu0 0.0
  %6529 = vmatprep.subr.mxu0 0.0
  %6530 = vmatpush1.xpose.msra.mxu0 0.0
  %6531 = vmatprep.subr.mxu0 0.0
  %6532 = vmatpush1.xpose.msra.mxu0 0.0
  %6533 = vmatprep.subr.mxu0 0.0
  %6534 = vmatpush1.xpose.msra.mxu0 0.0
  %6535 = vmatprep.mubr.f32.mxu0 0.0
  %6536 = vmatmul.mubr.f32.gmra.mrb[0].mxu0 %v6466
  %v6537 = vpop.f32.mrb[0].mxu0
  %v6538 = vadd.f32 0.0, %v6537
  %v6539 = vpop.f32.mrb[0].mxu0
  %6540 = vdwg.mxu0
  %v6541 = vmul.f32 %v6006, 0.35355338
  %v6542 = vmul.f32 %v6082, 0.35355338
  %v6543 = vmul.f32 %v6158, 0.35355338
  %v6544 = vmul.f32 %v6234, 0.35355338
  %v6545 = vmul.f32 %v6310, 0.35355338
  %v6546 = vmul.f32 %v6386, 0.35355338
  %v6547 = vmul.f32 %v6462, 0.35355338
  %v6548 = vmul.f32 %v6538, 0.35355338
  %v6549 = vadd.f32 %v6541, %v2526
  %v6550 = vadd.f32 %v6542, %v2526
  %v6551 = vadd.f32 %v6543, %v2526
  %v6552 = vadd.f32 %v6544, %v2526
  %v6553 = vadd.f32 %v6545, %v2530
  %v6554 = vadd.f32 %v6546, %v2530
  %v6555 = vadd.f32 %v6547, %v2530
  %v6556 = vadd.f32 %v6548, %v2530
  %v6557 = vsel %vm1904, %v6549, -inf
  %6558 = vmax.xlane.f32.xlu0 %v6557
  %v6559 = vpop.xlane.xlu0 %6558
  %v6560 = vsel %vm1904, %v6550, -inf
  %6561 = vmax.xlane.f32.xlu0 %v6560
  %v6562 = vpop.xlane.xlu0 %6561
  %v6563 = vsel %vm1904, %v6551, -inf
  %6564 = vmax.xlane.f32.xlu0 %v6563
  %v6565 = vpop.xlane.xlu0 %6564
  %v6566 = vsel %vm1904, %v6552, -inf
  %6567 = vmax.xlane.f32.xlu0 %v6566
  %v6568 = vpop.xlane.xlu0 %6567
  %v6569 = vsel %vm1904, %v6553, -inf
  %6570 = vmax.xlane.f32.xlu0 %v6569
  %v6571 = vpop.xlane.xlu0 %6570
  %v6572 = vsel %vm1904, %v6554, -inf
  %6573 = vmax.xlane.f32.xlu0 %v6572
  %v6574 = vpop.xlane.xlu0 %6573
  %v6575 = vsel %vm1904, %v6555, -inf
  %6576 = vmax.xlane.f32.xlu0 %v6575
  %v6577 = vpop.xlane.xlu0 %6576
  %v6578 = vsel %vm1904, %v6556, -inf
  %6579 = vmax.xlane.f32.xlu0 %v6578
  %v6580 = vpop.xlane.xlu0 %6579
  %v6581 = vsub.f32 %v6549, %v6559
  %v6582 = vsub.f32 %v6550, %v6562
  %v6583 = vsub.f32 %v6551, %v6565
  %v6584 = vsub.f32 %v6552, %v6568
  %v6585 = vsub.f32 %v6553, %v6571
  %v6586 = vsub.f32 %v6554, %v6574
  %v6587 = vsub.f32 %v6555, %v6577
  %v6588 = vsub.f32 %v6556, %v6580
  %v6589 = vmul.f32 %v6581, 1.442695
  %v6590 = vpow.pop %v6589
  %v6591 = vmul.f32 %v6582, 1.442695
  %v6592 = vpow.pop %v6591
  %v6593 = vmul.f32 %v6583, 1.442695
  %v6594 = vpow.pop %v6593
  %v6595 = vmul.f32 %v6584, 1.442695
  %v6596 = vpow.pop %v6595
  %v6597 = vmul.f32 %v6585, 1.442695
  %v6598 = vpow.pop %v6597
  %v6599 = vmul.f32 %v6586, 1.442695
  %v6600 = vpow.pop %v6599
  %v6601 = vmul.f32 %v6587, 1.442695
  %v6602 = vpow.pop %v6601
  %v6603 = vmul.f32 %v6588, 1.442695
  %v6604 = vpow.pop %v6603
  %v6605 = vsel %vm1904, %v6590, 0.0
  %6606 = vadd.xlane.f32.xlu0 %v6605
  %v6607 = vpop.xlane.xlu0 %6606
  %v6608 = vsel %vm1904, %v6592, 0.0
  %6609 = vadd.xlane.f32.xlu0 %v6608
  %v6610 = vpop.xlane.xlu0 %6609
  %v6611 = vsel %vm1904, %v6594, 0.0
  %6612 = vadd.xlane.f32.xlu0 %v6611
  %v6613 = vpop.xlane.xlu0 %6612
  %v6614 = vsel %vm1904, %v6596, 0.0
  %6615 = vadd.xlane.f32.xlu0 %v6614
  %v6616 = vpop.xlane.xlu0 %6615
  %v6617 = vsel %vm1904, %v6598, 0.0
  %6618 = vadd.xlane.f32.xlu0 %v6617
  %v6619 = vpop.xlane.xlu0 %6618
  %v6620 = vsel %vm1904, %v6600, 0.0
  %6621 = vadd.xlane.f32.xlu0 %v6620
  %v6622 = vpop.xlane.xlu0 %6621
  %v6623 = vsel %vm1904, %v6602, 0.0
  %6624 = vadd.xlane.f32.xlu0 %v6623
  %v6625 = vpop.xlane.xlu0 %6624
  %v6626 = vsel %vm1904, %v6604, 0.0
  %6627 = vadd.xlane.f32.xlu0 %v6626
  %v6628 = vpop.xlane.xlu0 %6627
  %v6629 = vrcp.pop %v6607
  %v6630 = vrcp.pop %v6610
  %v6631 = vrcp.pop %v6613
  %v6632 = vrcp.pop %v6616
  %v6633 = vrcp.pop %v6619
  %v6634 = vrcp.pop %v6622
  %v6635 = vrcp.pop %v6625
  %v6636 = vrcp.pop %v6628
  %v6637 = vmul.f32 %v6590, %v6629
  %v6638 = vmul.f32 %v6592, %v6630
  %v6639 = vmul.f32 %v6594, %v6631
  %v6640 = vmul.f32 %v6596, %v6632
  %v6641 = vmul.f32 %v6598, %v6633
  %v6642 = vmul.f32 %v6600, %v6634
  %v6643 = vmul.f32 %v6602, %v6635
  %v6644 = vmul.f32 %v6604, %v6636
  %v6646 = vsel %vm1904, %v6637, 0
  %6648 = vmatprep.subr.mxu0 0.0
  %6649 = vmatpush1.msra.mxu0 %v5440
  %6650 = vmatprep.subr.mxu0 0.0
  %6651 = vmatpush1.msra.mxu0 0.0
  %6652 = vmatprep.subr.mxu0 0.0
  %6653 = vmatpush1.msra.mxu0 0.0
  %6654 = vmatprep.subr.mxu0 0.0
  %6655 = vmatpush1.msra.mxu0 0.0
  %6656 = vmatprep.subr.mxu0 0.0
  %6657 = vmatpush1.msra.mxu0 0.0
  %6658 = vmatprep.subr.mxu0 0.0
  %6659 = vmatpush1.msra.mxu0 0.0
  %6660 = vmatprep.subr.mxu0 0.0
  %6661 = vmatpush1.msra.mxu0 0.0
  %6662 = vmatprep.subr.mxu0 0.0
  %6663 = vmatpush1.msra.mxu0 0.0
  %6664 = vmatprep.subr.mxu0 0.0
  %6665 = vmatpush1.msra.mxu0 0.0
  %6666 = vmatprep.subr.mxu0 0.0
  %6667 = vmatpush1.msra.mxu0 0.0
  %6668 = vmatprep.subr.mxu0 0.0
  %6669 = vmatpush1.msra.mxu0 0.0
  %6670 = vmatprep.subr.mxu0 0.0
  %6671 = vmatpush1.msra.mxu0 0.0
  %6672 = vmatprep.subr.mxu0 0.0
  %6673 = vmatpush1.msra.mxu0 0.0
  %6674 = vmatprep.subr.mxu0 0.0
  %6675 = vmatpush1.msra.mxu0 0.0
  %6676 = vmatprep.subr.mxu0 0.0
  %6677 = vmatpush1.msra.mxu0 0.0
  %6678 = vmatprep.subr.mxu0 0.0
  %6679 = vmatpush1.msra.mxu0 0.0
  %6680 = vmatprep.subr.mxu0 0.0
  %6681 = vmatpush1.msra.mxu0 0.0
  %6682 = vmatprep.subr.mxu0 0.0
  %6683 = vmatpush1.msra.mxu0 0.0
  %6684 = vmatprep.subr.mxu0 0.0
  %6685 = vmatpush1.msra.mxu0 0.0
  %6686 = vmatprep.subr.mxu0 0.0
  %6687 = vmatpush1.msra.mxu0 0.0
  %6688 = vmatprep.subr.mxu0 0.0
  %6689 = vmatpush1.msra.mxu0 0.0
  %6690 = vmatprep.subr.mxu0 0.0
  %6691 = vmatpush1.msra.mxu0 0.0
  %6692 = vmatprep.subr.mxu0 0.0
  %6693 = vmatpush1.msra.mxu0 0.0
  %6694 = vmatprep.subr.mxu0 0.0
  %6695 = vmatpush1.msra.mxu0 0.0
  %6696 = vmatprep.subr.mxu0 0.0
  %6697 = vmatpush1.msra.mxu0 0.0
  %6698 = vmatprep.subr.mxu0 0.0
  %6699 = vmatpush1.msra.mxu0 0.0
  %6700 = vmatprep.subr.mxu0 0.0
  %6701 = vmatpush1.msra.mxu0 0.0
  %6702 = vmatprep.subr.mxu0 0.0
  %6703 = vmatpush1.msra.mxu0 0.0
  %6704 = vmatprep.subr.mxu0 0.0
  %6705 = vmatpush1.msra.mxu0 0.0
  %6706 = vmatprep.subr.mxu0 0.0
  %6707 = vmatpush1.msra.mxu0 0.0
  %6708 = vmatprep.subr.mxu0 0.0
  %6709 = vmatpush1.msra.mxu0 0.0
  %6710 = vmatprep.subr.mxu0 0.0
  %6711 = vmatpush1.msra.mxu0 0.0
  %6712 = vmatprep.mubr.f32.mxu0 0.0
  %6713 = vmatmul.mubr.f32.gmra.mrb[0].mxu0 %v6646
  %v6714 = vpop.f32.mrb[0].mxu0
  %v6715 = vadd.f32 0.0, %v6714
  %v6716 = vpop.f32.mrb[0].mxu0
  %6717 = vdwg.mxu0
  %v6719 = vsel %vm1904, %v6638, 0
  %6721 = vmatprep.subr.mxu0 0.0
  %6722 = vmatpush1.msra.mxu0 %v5510
  %6723 = vmatprep.subr.mxu0 0.0
  %6724 = vmatpush1.msra.mxu0 0.0
  %6725 = vmatprep.subr.mxu0 0.0
  %6726 = vmatpush1.msra.mxu0 0.0
  %6727 = vmatprep.subr.mxu0 0.0
  %6728 = vmatpush1.msra.mxu0 0.0
  %6729 = vmatprep.subr.mxu0 0.0
  %6730 = vmatpush1.msra.mxu0 0.0
  %6731 = vmatprep.subr.mxu0 0.0
  %6732 = vmatpush1.msra.mxu0 0.0
  %6733 = vmatprep.subr.mxu0 0.0
  %6734 = vmatpush1.msra.mxu0 0.0
  %6735 = vmatprep.subr.mxu0 0.0
  %6736 = vmatpush1.msra.mxu0 0.0
  %6737 = vmatprep.subr.mxu0 0.0
  %6738 = vmatpush1.msra.mxu0 0.0
  %6739 = vmatprep.subr.mxu0 0.0
  %6740 = vmatpush1.msra.mxu0 0.0
  %6741 = vmatprep.subr.mxu0 0.0
  %6742 = vmatpush1.msra.mxu0 0.0
  %6743 = vmatprep.subr.mxu0 0.0
  %6744 = vmatpush1.msra.mxu0 0.0
  %6745 = vmatprep.subr.mxu0 0.0
  %6746 = vmatpush1.msra.mxu0 0.0
  %6747 = vmatprep.subr.mxu0 0.0
  %6748 = vmatpush1.msra.mxu0 0.0
  %6749 = vmatprep.subr.mxu0 0.0
  %6750 = vmatpush1.msra.mxu0 0.0
  %6751 = vmatprep.subr.mxu0 0.0
  %6752 = vmatpush1.msra.mxu0 0.0
  %6753 = vmatprep.subr.mxu0 0.0
  %6754 = vmatpush1.msra.mxu0 0.0
  %6755 = vmatprep.subr.mxu0 0.0
  %6756 = vmatpush1.msra.mxu0 0.0
  %6757 = vmatprep.subr.mxu0 0.0
  %6758 = vmatpush1.msra.mxu0 0.0
  %6759 = vmatprep.subr.mxu0 0.0
  %6760 = vmatpush1.msra.mxu0 0.0
  %6761 = vmatprep.subr.mxu0 0.0
  %6762 = vmatpush1.msra.mxu0 0.0
  %6763 = vmatprep.subr.mxu0 0.0
  %6764 = vmatpush1.msra.mxu0 0.0
  %6765 = vmatprep.subr.mxu0 0.0
  %6766 = vmatpush1.msra.mxu0 0.0
  %6767 = vmatprep.subr.mxu0 0.0
  %6768 = vmatpush1.msra.mxu0 0.0
  %6769 = vmatprep.subr.mxu0 0.0
  %6770 = vmatpush1.msra.mxu0 0.0
  %6771 = vmatprep.subr.mxu0 0.0
  %6772 = vmatpush1.msra.mxu0 0.0
  %6773 = vmatprep.subr.mxu0 0.0
  %6774 = vmatpush1.msra.mxu0 0.0
  %6775 = vmatprep.subr.mxu0 0.0
  %6776 = vmatpush1.msra.mxu0 0.0
  %6777 = vmatprep.subr.mxu0 0.0
  %6778 = vmatpush1.msra.mxu0 0.0
  %6779 = vmatprep.subr.mxu0 0.0
  %6780 = vmatpush1.msra.mxu0 0.0
  %6781 = vmatprep.subr.mxu0 0.0
  %6782 = vmatpush1.msra.mxu0 0.0
  %6783 = vmatprep.subr.mxu0 0.0
  %6784 = vmatpush1.msra.mxu0 0.0
  %6785 = vmatprep.mubr.f32.mxu0 0.0
  %6786 = vmatmul.mubr.f32.gmra.mrb[0].mxu0 %v6719
  %v6787 = vpop.f32.mrb[0].mxu0
  %v6788 = vadd.f32 0.0, %v6787
  %v6789 = vpop.f32.mrb[0].mxu0
  %6790 = vdwg.mxu0
  %v6792 = vsel %vm1904, %v6639, 0
  %6794 = vmatprep.subr.mxu0 0.0
  %6795 = vmatpush1.msra.mxu0 %v5580
  %6796 = vmatprep.subr.mxu0 0.0
  %6797 = vmatpush1.msra.mxu0 0.0
  %6798 = vmatprep.subr.mxu0 0.0
  %6799 = vmatpush1.msra.mxu0 0.0
  %6800 = vmatprep.subr.mxu0 0.0
  %6801 = vmatpush1.msra.mxu0 0.0
  %6802 = vmatprep.subr.mxu0 0.0
  %6803 = vmatpush1.msra.mxu0 0.0
  %6804 = vmatprep.subr.mxu0 0.0
  %6805 = vmatpush1.msra.mxu0 0.0
  %6806 = vmatprep.subr.mxu0 0.0
  %6807 = vmatpush1.msra.mxu0 0.0
  %6808 = vmatprep.subr.mxu0 0.0
  %6809 = vmatpush1.msra.mxu0 0.0
  %6810 = vmatprep.subr.mxu0 0.0
  %6811 = vmatpush1.msra.mxu0 0.0
  %6812 = vmatprep.subr.mxu0 0.0
  %6813 = vmatpush1.msra.mxu0 0.0
  %6814 = vmatprep.subr.mxu0 0.0
  %6815 = vmatpush1.msra.mxu0 0.0
  %6816 = vmatprep.subr.mxu0 0.0
  %6817 = vmatpush1.msra.mxu0 0.0
  %6818 = vmatprep.subr.mxu0 0.0
  %6819 = vmatpush1.msra.mxu0 0.0
  %6820 = vmatprep.subr.mxu0 0.0
  %6821 = vmatpush1.msra.mxu0 0.0
  %6822 = vmatprep.subr.mxu0 0.0
  %6823 = vmatpush1.msra.mxu0 0.0
  %6824 = vmatprep.subr.mxu0 0.0
  %6825 = vmatpush1.msra.mxu0 0.0
  %6826 = vmatprep.subr.mxu0 0.0
  %6827 = vmatpush1.msra.mxu0 0.0
  %6828 = vmatprep.subr.mxu0 0.0
  %6829 = vmatpush1.msra.mxu0 0.0
  %6830 = vmatprep.subr.mxu0 0.0
  %6831 = vmatpush1.msra.mxu0 0.0
  %6832 = vmatprep.subr.mxu0 0.0
  %6833 = vmatpush1.msra.mxu0 0.0
  %6834 = vmatprep.subr.mxu0 0.0
  %6835 = vmatpush1.msra.mxu0 0.0
  %6836 = vmatprep.subr.mxu0 0.0
  %6837 = vmatpush1.msra.mxu0 0.0
  %6838 = vmatprep.subr.mxu0 0.0
  %6839 = vmatpush1.msra.mxu0 0.0
  %6840 = vmatprep.subr.mxu0 0.0
  %6841 = vmatpush1.msra.mxu0 0.0
  %6842 = vmatprep.subr.mxu0 0.0
  %6843 = vmatpush1.msra.mxu0 0.0
  %6844 = vmatprep.subr.mxu0 0.0
  %6845 = vmatpush1.msra.mxu0 0.0
  %6846 = vmatprep.subr.mxu0 0.0
  %6847 = vmatpush1.msra.mxu0 0.0
  %6848 = vmatprep.subr.mxu0 0.0
  %6849 = vmatpush1.msra.mxu0 0.0
  %6850 = vmatprep.subr.mxu0 0.0
  %6851 = vmatpush1.msra.mxu0 0.0
  %6852 = vmatprep.subr.mxu0 0.0
  %6853 = vmatpush1.msra.mxu0 0.0
  %6854 = vmatprep.subr.mxu0 0.0
  %6855 = vmatpush1.msra.mxu0 0.0
  %6856 = vmatprep.subr.mxu0 0.0
  %6857 = vmatpush1.msra.mxu0 0.0
  %6858 = vmatprep.mubr.f32.mxu0 0.0
  %6859 = vmatmul.mubr.f32.gmra.mrb[0].mxu0 %v6792
  %v6860 = vpop.f32.mrb[0].mxu0
  %v6861 = vadd.f32 0.0, %v6860
  %v6862 = vpop.f32.mrb[0].mxu0
  %6863 = vdwg.mxu0
  %v6865 = vsel %vm1904, %v6640, 0
  %6867 = vmatprep.subr.mxu0 0.0
  %6868 = vmatpush1.msra.mxu0 %v5650
  %6869 = vmatprep.subr.mxu0 0.0
  %6870 = vmatpush1.msra.mxu0 0.0
  %6871 = vmatprep.subr.mxu0 0.0
  %6872 = vmatpush1.msra.mxu0 0.0
  %6873 = vmatprep.subr.mxu0 0.0
  %6874 = vmatpush1.msra.mxu0 0.0
  %6875 = vmatprep.subr.mxu0 0.0
  %6876 = vmatpush1.msra.mxu0 0.0
  %6877 = vmatprep.subr.mxu0 0.0
  %6878 = vmatpush1.msra.mxu0 0.0
  %6879 = vmatprep.subr.mxu0 0.0
  %6880 = vmatpush1.msra.mxu0 0.0
  %6881 = vmatprep.subr.mxu0 0.0
  %6882 = vmatpush1.msra.mxu0 0.0
  %6883 = vmatprep.subr.mxu0 0.0
  %6884 = vmatpush1.msra.mxu0 0.0
  %6885 = vmatprep.subr.mxu0 0.0
  %6886 = vmatpush1.msra.mxu0 0.0
  %6887 = vmatprep.subr.mxu0 0.0
  %6888 = vmatpush1.msra.mxu0 0.0
  %6889 = vmatprep.subr.mxu0 0.0
  %6890 = vmatpush1.msra.mxu0 0.0
  %6891 = vmatprep.subr.mxu0 0.0
  %6892 = vmatpush1.msra.mxu0 0.0
  %6893 = vmatprep.subr.mxu0 0.0
  %6894 = vmatpush1.msra.mxu0 0.0
  %6895 = vmatprep.subr.mxu0 0.0
  %6896 = vmatpush1.msra.mxu0 0.0
  %6897 = vmatprep.subr.mxu0 0.0
  %6898 = vmatpush1.msra.mxu0 0.0
  %6899 = vmatprep.subr.mxu0 0.0
  %6900 = vmatpush1.msra.mxu0 0.0
  %6901 = vmatprep.subr.mxu0 0.0
  %6902 = vmatpush1.msra.mxu0 0.0
  %6903 = vmatprep.subr.mxu0 0.0
  %6904 = vmatpush1.msra.mxu0 0.0
  %6905 = vmatprep.subr.mxu0 0.0
  %6906 = vmatpush1.msra.mxu0 0.0
  %6907 = vmatprep.subr.mxu0 0.0
  %6908 = vmatpush1.msra.mxu0 0.0
  %6909 = vmatprep.subr.mxu0 0.0
  %6910 = vmatpush1.msra.mxu0 0.0
  %6911 = vmatprep.subr.mxu0 0.0
  %6912 = vmatpush1.msra.mxu0 0.0
  %6913 = vmatprep.subr.mxu0 0.0
  %6914 = vmatpush1.msra.mxu0 0.0
  %6915 = vmatprep.subr.mxu0 0.0
  %6916 = vmatpush1.msra.mxu0 0.0
  %6917 = vmatprep.subr.mxu0 0.0
  %6918 = vmatpush1.msra.mxu0 0.0
  %6919 = vmatprep.subr.mxu0 0.0
  %6920 = vmatpush1.msra.mxu0 0.0
  %6921 = vmatprep.subr.mxu0 0.0
  %6922 = vmatpush1.msra.mxu0 0.0
  %6923 = vmatprep.subr.mxu0 0.0
  %6924 = vmatpush1.msra.mxu0 0.0
  %6925 = vmatprep.subr.mxu0 0.0
  %6926 = vmatpush1.msra.mxu0 0.0
  %6927 = vmatprep.subr.mxu0 0.0
  %6928 = vmatpush1.msra.mxu0 0.0
  %6929 = vmatprep.subr.mxu0 0.0
  %6930 = vmatpush1.msra.mxu0 0.0
  %6931 = vmatprep.mubr.f32.mxu0 0.0
  %6932 = vmatmul.mubr.f32.gmra.mrb[0].mxu0 %v6865
  %v6933 = vpop.f32.mrb[0].mxu0
  %v6934 = vadd.f32 0.0, %v6933
  %v6935 = vpop.f32.mrb[0].mxu0
  %6936 = vdwg.mxu0
  %v6938 = vsel %vm1904, %v6641, 0
  %6940 = vmatprep.subr.mxu0 0.0
  %6941 = vmatpush1.msra.mxu0 %v5720
  %6942 = vmatprep.subr.mxu0 0.0
  %6943 = vmatpush1.msra.mxu0 0.0
  %6944 = vmatprep.subr.mxu0 0.0
  %6945 = vmatpush1.msra.mxu0 0.0
  %6946 = vmatprep.subr.mxu0 0.0
  %6947 = vmatpush1.msra.mxu0 0.0
  %6948 = vmatprep.subr.mxu0 0.0
  %6949 = vmatpush1.msra.mxu0 0.0
  %6950 = vmatprep.subr.mxu0 0.0
  %6951 = vmatpush1.msra.mxu0 0.0
  %6952 = vmatprep.subr.mxu0 0.0
  %6953 = vmatpush1.msra.mxu0 0.0
  %6954 = vmatprep.subr.mxu0 0.0
  %6955 = vmatpush1.msra.mxu0 0.0
  %6956 = vmatprep.subr.mxu0 0.0
  %6957 = vmatpush1.msra.mxu0 0.0
  %6958 = vmatprep.subr.mxu0 0.0
  %6959 = vmatpush1.msra.mxu0 0.0
  %6960 = vmatprep.subr.mxu0 0.0
  %6961 = vmatpush1.msra.mxu0 0.0
  %6962 = vmatprep.subr.mxu0 0.0
  %6963 = vmatpush1.msra.mxu0 0.0
  %6964 = vmatprep.subr.mxu0 0.0
  %6965 = vmatpush1.msra.mxu0 0.0
  %6966 = vmatprep.subr.mxu0 0.0
  %6967 = vmatpush1.msra.mxu0 0.0
  %6968 = vmatprep.subr.mxu0 0.0
  %6969 = vmatpush1.msra.mxu0 0.0
  %6970 = vmatprep.subr.mxu0 0.0
  %6971 = vmatpush1.msra.mxu0 0.0
  %6972 = vmatprep.subr.mxu0 0.0
  %6973 = vmatpush1.msra.mxu0 0.0
  %6974 = vmatprep.subr.mxu0 0.0
  %6975 = vmatpush1.msra.mxu0 0.0
  %6976 = vmatprep.subr.mxu0 0.0
  %6977 = vmatpush1.msra.mxu0 0.0
  %6978 = vmatprep.subr.mxu0 0.0
  %6979 = vmatpush1.msra.mxu0 0.0
  %6980 = vmatprep.subr.mxu0 0.0
  %6981 = vmatpush1.msra.mxu0 0.0
  %6982 = vmatprep.subr.mxu0 0.0
  %6983 = vmatpush1.msra.mxu0 0.0
  %6984 = vmatprep.subr.mxu0 0.0
  %6985 = vmatpush1.msra.mxu0 0.0
  %6986 = vmatprep.subr.mxu0 0.0
  %6987 = vmatpush1.msra.mxu0 0.0
  %6988 = vmatprep.subr.mxu0 0.0
  %6989 = vmatpush1.msra.mxu0 0.0
  %6990 = vmatprep.subr.mxu0 0.0
  %6991 = vmatpush1.msra.mxu0 0.0
  %6992 = vmatprep.subr.mxu0 0.0
  %6993 = vmatpush1.msra.mxu0 0.0
  %6994 = vmatprep.subr.mxu0 0.0
  %6995 = vmatpush1.msra.mxu0 0.0
  %6996 = vmatprep.subr.mxu0 0.0
  %6997 = vmatpush1.msra.mxu0 0.0
  %6998 = vmatprep.subr.mxu0 0.0
  %6999 = vmatpush1.msra.mxu0 0.0
  %7000 = vmatprep.subr.mxu0 0.0
  %7001 = vmatpush1.msra.mxu0 0.0
  %7002 = vmatprep.subr.mxu0 0.0
  %7003 = vmatpush1.msra.mxu0 0.0
  %7004 = vmatprep.mubr.f32.mxu0 0.0
  %7005 = vmatmul.mubr.f32.gmra.mrb[0].mxu0 %v6938
  %v7006 = vpop.f32.mrb[0].mxu0
  %v7007 = vadd.f32 0.0, %v7006
  %v7008 = vpop.f32.mrb[0].mxu0
  %7009 = vdwg.mxu0
  %v7011 = vsel %vm1904, %v6642, 0
  %7013 = vmatprep.subr.mxu0 0.0
  %7014 = vmatpush1.msra.mxu0 %v5790
  %7015 = vmatprep.subr.mxu0 0.0
  %7016 = vmatpush1.msra.mxu0 0.0
  %7017 = vmatprep.subr.mxu0 0.0
  %7018 = vmatpush1.msra.mxu0 0.0
  %7019 = vmatprep.subr.mxu0 0.0
  %7020 = vmatpush1.msra.mxu0 0.0
  %7021 = vmatprep.subr.mxu0 0.0
  %7022 = vmatpush1.msra.mxu0 0.0
  %7023 = vmatprep.subr.mxu0 0.0
  %7024 = vmatpush1.msra.mxu0 0.0
  %7025 = vmatprep.subr.mxu0 0.0
  %7026 = vmatpush1.msra.mxu0 0.0
  %7027 = vmatprep.subr.mxu0 0.0
  %7028 = vmatpush1.msra.mxu0 0.0
  %7029 = vmatprep.subr.mxu0 0.0
  %7030 = vmatpush1.msra.mxu0 0.0
  %7031 = vmatprep.subr.mxu0 0.0
  %7032 = vmatpush1.msra.mxu0 0.0
  %7033 = vmatprep.subr.mxu0 0.0
  %7034 = vmatpush1.msra.mxu0 0.0
  %7035 = vmatprep.subr.mxu0 0.0
  %7036 = vmatpush1.msra.mxu0 0.0
  %7037 = vmatprep.subr.mxu0 0.0
  %7038 = vmatpush1.msra.mxu0 0.0
  %7039 = vmatprep.subr.mxu0 0.0
  %7040 = vmatpush1.msra.mxu0 0.0
  %7041 = vmatprep.subr.mxu0 0.0
  %7042 = vmatpush1.msra.mxu0 0.0
  %7043 = vmatprep.subr.mxu0 0.0
  %7044 = vmatpush1.msra.mxu0 0.0
  %7045 = vmatprep.subr.mxu0 0.0
  %7046 = vmatpush1.msra.mxu0 0.0
  %7047 = vmatprep.subr.mxu0 0.0
  %7048 = vmatpush1.msra.mxu0 0.0
  %7049 = vmatprep.subr.mxu0 0.0
  %7050 = vmatpush1.msra.mxu0 0.0
  %7051 = vmatprep.subr.mxu0 0.0
  %7052 = vmatpush1.msra.mxu0 0.0
  %7053 = vmatprep.subr.mxu0 0.0
  %7054 = vmatpush1.msra.mxu0 0.0
  %7055 = vmatprep.subr.mxu0 0.0
  %7056 = vmatpush1.msra.mxu0 0.0
  %7057 = vmatprep.subr.mxu0 0.0
  %7058 = vmatpush1.msra.mxu0 0.0
  %7059 = vmatprep.subr.mxu0 0.0
  %7060 = vmatpush1.msra.mxu0 0.0
  %7061 = vmatprep.subr.mxu0 0.0
  %7062 = vmatpush1.msra.mxu0 0.0
  %7063 = vmatprep.subr.mxu0 0.0
  %7064 = vmatpush1.msra.mxu0 0.0
  %7065 = vmatprep.subr.mxu0 0.0
  %7066 = vmatpush1.msra.mxu0 0.0
  %7067 = vmatprep.subr.mxu0 0.0
  %7068 = vmatpush1.msra.mxu0 0.0
  %7069 = vmatprep.subr.mxu0 0.0
  %7070 = vmatpush1.msra.mxu0 0.0
  %7071 = vmatprep.subr.mxu0 0.0
  %7072 = vmatpush1.msra.mxu0 0.0
  %7073 = vmatprep.subr.mxu0 0.0
  %7074 = vmatpush1.msra.mxu0 0.0
  %7075 = vmatprep.subr.mxu0 0.0
  %7076 = vmatpush1.msra.mxu0 0.0
  %7077 = vmatprep.mubr.f32.mxu0 0.0
  %7078 = vmatmul.mubr.f32.gmra.mrb[0].mxu0 %v7011
  %v7079 = vpop.f32.mrb[0].mxu0
  %v7080 = vadd.f32 0.0, %v7079
  %v7081 = vpop.f32.mrb[0].mxu0
  %7082 = vdwg.mxu0
  %v7084 = vsel %vm1904, %v6643, 0
  %7086 = vmatprep.subr.mxu0 0.0
  %7087 = vmatpush1.msra.mxu0 %v5860
  %7088 = vmatprep.subr.mxu0 0.0
  %7089 = vmatpush1.msra.mxu0 0.0
  %7090 = vmatprep.subr.mxu0 0.0
  %7091 = vmatpush1.msra.mxu0 0.0
  %7092 = vmatprep.subr.mxu0 0.0
  %7093 = vmatpush1.msra.mxu0 0.0
  %7094 = vmatprep.subr.mxu0 0.0
  %7095 = vmatpush1.msra.mxu0 0.0
  %7096 = vmatprep.subr.mxu0 0.0
  %7097 = vmatpush1.msra.mxu0 0.0
  %7098 = vmatprep.subr.mxu0 0.0
  %7099 = vmatpush1.msra.mxu0 0.0
  %7100 = vmatprep.subr.mxu0 0.0
  %7101 = vmatpush1.msra.mxu0 0.0
  %7102 = vmatprep.subr.mxu0 0.0
  %7103 = vmatpush1.msra.mxu0 0.0
  %7104 = vmatprep.subr.mxu0 0.0
  %7105 = vmatpush1.msra.mxu0 0.0
  %7106 = vmatprep.subr.mxu0 0.0
  %7107 = vmatpush1.msra.mxu0 0.0
  %7108 = vmatprep.subr.mxu0 0.0
  %7109 = vmatpush1.msra.mxu0 0.0
  %7110 = vmatprep.subr.mxu0 0.0
  %7111 = vmatpush1.msra.mxu0 0.0
  %7112 = vmatprep.subr.mxu0 0.0
  %7113 = vmatpush1.msra.mxu0 0.0
  %7114 = vmatprep.subr.mxu0 0.0
  %7115 = vmatpush1.msra.mxu0 0.0
  %7116 = vmatprep.subr.mxu0 0.0
  %7117 = vmatpush1.msra.mxu0 0.0
  %7118 = vmatprep.subr.mxu0 0.0
  %7119 = vmatpush1.msra.mxu0 0.0
  %7120 = vmatprep.subr.mxu0 0.0
  %7121 = vmatpush1.msra.mxu0 0.0
  %7122 = vmatprep.subr.mxu0 0.0
  %7123 = vmatpush1.msra.mxu0 0.0
  %7124 = vmatprep.subr.mxu0 0.0
  %7125 = vmatpush1.msra.mxu0 0.0
  %7126 = vmatprep.subr.mxu0 0.0
  %7127 = vmatpush1.msra.mxu0 0.0
  %7128 = vmatprep.subr.mxu0 0.0
  %7129 = vmatpush1.msra.mxu0 0.0
  %7130 = vmatprep.subr.mxu0 0.0
  %7131 = vmatpush1.msra.mxu0 0.0
  %7132 = vmatprep.subr.mxu0 0.0
  %7133 = vmatpush1.msra.mxu0 0.0
  %7134 = vmatprep.subr.mxu0 0.0
  %7135 = vmatpush1.msra.mxu0 0.0
  %7136 = vmatprep.subr.mxu0 0.0
  %7137 = vmatpush1.msra.mxu0 0.0
  %7138 = vmatprep.subr.mxu0 0.0
  %7139 = vmatpush1.msra.mxu0 0.0
  %7140 = vmatprep.subr.mxu0 0.0
  %7141 = vmatpush1.msra.mxu0 0.0
  %7142 = vmatprep.subr.mxu0 0.0
  %7143 = vmatpush1.msra.mxu0 0.0
  %7144 = vmatprep.subr.mxu0 0.0
  %7145 = vmatpush1.msra.mxu0 0.0
  %7146 = vmatprep.subr.mxu0 0.0
  %7147 = vmatpush1.msra.mxu0 0.0
  %7148 = vmatprep.subr.mxu0 0.0
  %7149 = vmatpush1.msra.mxu0 0.0
  %7150 = vmatprep.mubr.f32.mxu0 0.0
  %7151 = vmatmul.mubr.f32.gmra.mrb[0].mxu0 %v7084
  %v7152 = vpop.f32.mrb[0].mxu0
  %v7153 = vadd.f32 0.0, %v7152
  %v7154 = vpop.f32.mrb[0].mxu0
  %7155 = vdwg.mxu0
  %v7157 = vsel %vm1904, %v6644, 0
  %7159 = vmatprep.subr.mxu0 0.0
  %7160 = vmatpush1.msra.mxu0 %v5930
  %7161 = vmatprep.subr.mxu0 0.0
  %7162 = vmatpush1.msra.mxu0 0.0
  %7163 = vmatprep.subr.mxu0 0.0
  %7164 = vmatpush1.msra.mxu0 0.0
  %7165 = vmatprep.subr.mxu0 0.0
  %7166 = vmatpush1.msra.mxu0 0.0
  %7167 = vmatprep.subr.mxu0 0.0
  %7168 = vmatpush1.msra.mxu0 0.0
  %7169 = vmatprep.subr.mxu0 0.0
  %7170 = vmatpush1.msra.mxu0 0.0
  %7171 = vmatprep.subr.mxu0 0.0
  %7172 = vmatpush1.msra.mxu0 0.0
  %7173 = vmatprep.subr.mxu0 0.0
  %7174 = vmatpush1.msra.mxu0 0.0
  %7175 = vmatprep.subr.mxu0 0.0
  %7176 = vmatpush1.msra.mxu0 0.0
  %7177 = vmatprep.subr.mxu0 0.0
  %7178 = vmatpush1.msra.mxu0 0.0
  %7179 = vmatprep.subr.mxu0 0.0
  %7180 = vmatpush1.msra.mxu0 0.0
  %7181 = vmatprep.subr.mxu0 0.0
  %7182 = vmatpush1.msra.mxu0 0.0
  %7183 = vmatprep.subr.mxu0 0.0
  %7184 = vmatpush1.msra.mxu0 0.0
  %7185 = vmatprep.subr.mxu0 0.0
  %7186 = vmatpush1.msra.mxu0 0.0
  %7187 = vmatprep.subr.mxu0 0.0
  %7188 = vmatpush1.msra.mxu0 0.0
  %7189 = vmatprep.subr.mxu0 0.0
  %7190 = vmatpush1.msra.mxu0 0.0
  %7191 = vmatprep.subr.mxu0 0.0
  %7192 = vmatpush1.msra.mxu0 0.0
  %7193 = vmatprep.subr.mxu0 0.0
  %7194 = vmatpush1.msra.mxu0 0.0
  %7195 = vmatprep.subr.mxu0 0.0
  %7196 = vmatpush1.msra.mxu0 0.0
  %7197 = vmatprep.subr.mxu0 0.0
  %7198 = vmatpush1.msra.mxu0 0.0
  %7199 = vmatprep.subr.mxu0 0.0
  %7200 = vmatpush1.msra.mxu0 0.0
  %7201 = vmatprep.subr.mxu0 0.0
  %7202 = vmatpush1.msra.mxu0 0.0
  %7203 = vmatprep.subr.mxu0 0.0
  %7204 = vmatpush1.msra.mxu0 0.0
  %7205 = vmatprep.subr.mxu0 0.0
  %7206 = vmatpush1.msra.mxu0 0.0
  %7207 = vmatprep.subr.mxu0 0.0
  %7208 = vmatpush1.msra.mxu0 0.0
  %7209 = vmatprep.subr.mxu0 0.0
  %7210 = vmatpush1.msra.mxu0 0.0
  %7211 = vmatprep.subr.mxu0 0.0
  %7212 = vmatpush1.msra.mxu0 0.0
  %7213 = vmatprep.subr.mxu0 0.0
  %7214 = vmatpush1.msra.mxu0 0.0
  %7215 = vmatprep.subr.mxu0 0.0
  %7216 = vmatpush1.msra.mxu0 0.0
  %7217 = vmatprep.subr.mxu0 0.0
  %7218 = vmatpush1.msra.mxu0 0.0
  %7219 = vmatprep.subr.mxu0 0.0
  %7220 = vmatpush1.msra.mxu0 0.0
  %7221 = vmatprep.subr.mxu0 0.0
  %7222 = vmatpush1.msra.mxu0 0.0
  %7223 = vmatprep.mubr.f32.mxu0 0.0
  %7224 = vmatmul.mubr.f32.gmra.mrb[0].mxu0 %v7157
  %v7225 = vpop.f32.mrb[0].mxu0
  %v7226 = vadd.f32 0.0, %v7225
  %v7227 = vpop.f32.mrb[0].mxu0
  %7228 = vdwg.mxu0
  %v7230 = vsel %vm1904, %v6715, 0
  %7232 = vmatprep.subr.mxu0 0.0
  %7233 = vmatpush1.msra.mxu0 %v4171
  %7234 = vmatprep.subr.mxu0 0.0
  %7235 = vmatpush1.msra.mxu0 0.0
  %7236 = vmatprep.subr.mxu0 0.0
  %7237 = vmatpush1.msra.mxu0 0.0
  %7238 = vmatprep.subr.mxu0 0.0
  %7239 = vmatpush1.msra.mxu0 0.0
  %7240 = vmatprep.subr.mxu0 0.0
  %7241 = vmatpush1.msra.mxu0 0.0
  %7242 = vmatprep.subr.mxu0 0.0
  %7243 = vmatpush1.msra.mxu0 0.0
  %7244 = vmatprep.subr.mxu0 0.0
  %7245 = vmatpush1.msra.mxu0 0.0
  %7246 = vmatprep.subr.mxu0 0.0
  %7247 = vmatpush1.msra.mxu0 0.0
  %7248 = vmatprep.subr.mxu0 0.0
  %7249 = vmatpush1.msra.mxu0 0.0
  %7250 = vmatprep.subr.mxu0 0.0
  %7251 = vmatpush1.msra.mxu0 0.0
  %7252 = vmatprep.subr.mxu0 0.0
  %7253 = vmatpush1.msra.mxu0 0.0
  %7254 = vmatprep.subr.mxu0 0.0
  %7255 = vmatpush1.msra.mxu0 0.0
  %7256 = vmatprep.subr.mxu0 0.0
  %7257 = vmatpush1.msra.mxu0 0.0
  %7258 = vmatprep.subr.mxu0 0.0
  %7259 = vmatpush1.msra.mxu0 0.0
  %7260 = vmatprep.subr.mxu0 0.0
  %7261 = vmatpush1.msra.mxu0 0.0
  %7262 = vmatprep.subr.mxu0 0.0
  %7263 = vmatpush1.msra.mxu0 0.0
  %7264 = vmatprep.subr.mxu0 0.0
  %7265 = vmatpush1.msra.mxu0 0.0
  %7266 = vmatprep.subr.mxu0 0.0
  %7267 = vmatpush1.msra.mxu0 0.0
  %7268 = vmatprep.subr.mxu0 0.0
  %7269 = vmatpush1.msra.mxu0 0.0
  %7270 = vmatprep.subr.mxu0 0.0
  %7271 = vmatpush1.msra.mxu0 0.0
  %7272 = vmatprep.subr.mxu0 0.0
  %7273 = vmatpush1.msra.mxu0 0.0
  %7274 = vmatprep.subr.mxu0 0.0
  %7275 = vmatpush1.msra.mxu0 0.0
  %7276 = vmatprep.subr.mxu0 0.0
  %7277 = vmatpush1.msra.mxu0 0.0
  %7278 = vmatprep.subr.mxu0 0.0
  %7279 = vmatpush1.msra.mxu0 0.0
  %7280 = vmatprep.subr.mxu0 0.0
  %7281 = vmatpush1.msra.mxu0 0.0
  %7282 = vmatprep.subr.mxu0 0.0
  %7283 = vmatpush1.msra.mxu0 0.0
  %7284 = vmatprep.subr.mxu0 0.0
  %7285 = vmatpush1.msra.mxu0 0.0
  %7286 = vmatprep.subr.mxu0 0.0
  %7287 = vmatpush1.msra.mxu0 0.0
  %7288 = vmatprep.subr.mxu0 0.0
  %7289 = vmatpush1.msra.mxu0 0.0
  %7290 = vmatprep.subr.mxu0 0.0
  %7291 = vmatpush1.msra.mxu0 0.0
  %7292 = vmatprep.subr.mxu0 0.0
  %7293 = vmatpush1.msra.mxu0 0.0
  %7294 = vmatprep.subr.mxu0 0.0
  %7295 = vmatpush1.msra.mxu0 0.0
  %7296 = vmatprep.mubr.f32.mxu0 0.0
  %7297 = vmatmul.mubr.f32.gmra.mrb[0].mxu0 %v7230
  %v7298 = vpop.f32.mrb[0].mxu0
  %v7299 = vadd.f32 0.0, %v7298
  %v7300 = vpop.f32.mrb[0].mxu0
  %7301 = vdwg.mxu0
  %v7303 = vsel %vm1904, %v6788, 0
  %7305 = vmatprep.subr.mxu0 0.0
  %7306 = vmatpush1.msra.mxu0 %v4172
  %7307 = vmatprep.subr.mxu0 0.0
  %7308 = vmatpush1.msra.mxu0 0.0
  %7309 = vmatprep.subr.mxu0 0.0
  %7310 = vmatpush1.msra.mxu0 0.0
  %7311 = vmatprep.subr.mxu0 0.0
  %7312 = vmatpush1.msra.mxu0 0.0
  %7313 = vmatprep.subr.mxu0 0.0
  %7314 = vmatpush1.msra.mxu0 0.0
  %7315 = vmatprep.subr.mxu0 0.0
  %7316 = vmatpush1.msra.mxu0 0.0
  %7317 = vmatprep.subr.mxu0 0.0
  %7318 = vmatpush1.msra.mxu0 0.0
  %7319 = vmatprep.subr.mxu0 0.0
  %7320 = vmatpush1.msra.mxu0 0.0
  %7321 = vmatprep.subr.mxu0 0.0
  %7322 = vmatpush1.msra.mxu0 0.0
  %7323 = vmatprep.subr.mxu0 0.0
  %7324 = vmatpush1.msra.mxu0 0.0
  %7325 = vmatprep.subr.mxu0 0.0
  %7326 = vmatpush1.msra.mxu0 0.0
  %7327 = vmatprep.subr.mxu0 0.0
  %7328 = vmatpush1.msra.mxu0 0.0
  %7329 = vmatprep.subr.mxu0 0.0
  %7330 = vmatpush1.msra.mxu0 0.0
  %7331 = vmatprep.subr.mxu0 0.0
  %7332 = vmatpush1.msra.mxu0 0.0
  %7333 = vmatprep.subr.mxu0 0.0
  %7334 = vmatpush1.msra.mxu0 0.0
  %7335 = vmatprep.subr.mxu0 0.0
  %7336 = vmatpush1.msra.mxu0 0.0
  %7337 = vmatprep.subr.mxu0 0.0
  %7338 = vmatpush1.msra.mxu0 0.0
  %7339 = vmatprep.subr.mxu0 0.0
  %7340 = vmatpush1.msra.mxu0 0.0
  %7341 = vmatprep.subr.mxu0 0.0
  %7342 = vmatpush1.msra.mxu0 0.0
  %7343 = vmatprep.subr.mxu0 0.0
  %7344 = vmatpush1.msra.mxu0 0.0
  %7345 = vmatprep.subr.mxu0 0.0
  %7346 = vmatpush1.msra.mxu0 0.0
  %7347 = vmatprep.subr.mxu0 0.0
  %7348 = vmatpush1.msra.mxu0 0.0
  %7349 = vmatprep.subr.mxu0 0.0
  %7350 = vmatpush1.msra.mxu0 0.0
  %7351 = vmatprep.subr.mxu0 0.0
  %7352 = vmatpush1.msra.mxu0 0.0
  %7353 = vmatprep.subr.mxu0 0.0
  %7354 = vmatpush1.msra.mxu0 0.0
  %7355 = vmatprep.subr.mxu0 0.0
  %7356 = vmatpush1.msra.mxu0 0.0
  %7357 = vmatprep.subr.mxu0 0.0
  %7358 = vmatpush1.msra.mxu0 0.0
  %7359 = vmatprep.subr.mxu0 0.0
  %7360 = vmatpush1.msra.mxu0 0.0
  %7361 = vmatprep.subr.mxu0 0.0
  %7362 = vmatpush1.msra.mxu0 0.0
  %7363 = vmatprep.subr.mxu0 0.0
  %7364 = vmatpush1.msra.mxu0 0.0
  %7365 = vmatprep.subr.mxu0 0.0
  %7366 = vmatpush1.msra.mxu0 0.0
  %7367 = vmatprep.subr.mxu0 0.0
  %7368 = vmatpush1.msra.mxu0 0.0
  %7369 = vmatprep.mubr.f32.mxu0 0.0
  %7370 = vmatmul.mubr.f32.gmra.mrb[0].mxu0 %v7303
  %v7371 = vpop.f32.mrb[0].mxu0
  %v7372 = vadd.f32 0.0, %v7371
  %v7373 = vpop.f32.mrb[0].mxu0
  %7374 = vdwg.mxu0
  %v7376 = vsel %vm1904, %v6861, 0
  %7378 = vmatprep.subr.mxu0 0.0
  %7379 = vmatpush1.msra.mxu0 %v4173
  %7380 = vmatprep.subr.mxu0 0.0
  %7381 = vmatpush1.msra.mxu0 0.0
  %7382 = vmatprep.subr.mxu0 0.0
  %7383 = vmatpush1.msra.mxu0 0.0
  %7384 = vmatprep.subr.mxu0 0.0
  %7385 = vmatpush1.msra.mxu0 0.0
  %7386 = vmatprep.subr.mxu0 0.0
  %7387 = vmatpush1.msra.mxu0 0.0
  %7388 = vmatprep.subr.mxu0 0.0
  %7389 = vmatpush1.msra.mxu0 0.0
  %7390 = vmatprep.subr.mxu0 0.0
  %7391 = vmatpush1.msra.mxu0 0.0
  %7392 = vmatprep.subr.mxu0 0.0
  %7393 = vmatpush1.msra.mxu0 0.0
  %7394 = vmatprep.subr.mxu0 0.0
  %7395 = vmatpush1.msra.mxu0 0.0
  %7396 = vmatprep.subr.mxu0 0.0
  %7397 = vmatpush1.msra.mxu0 0.0
  %7398 = vmatprep.subr.mxu0 0.0
  %7399 = vmatpush1.msra.mxu0 0.0
  %7400 = vmatprep.subr.mxu0 0.0
  %7401 = vmatpush1.msra.mxu0 0.0
  %7402 = vmatprep.subr.mxu0 0.0
  %7403 = vmatpush1.msra.mxu0 0.0
  %7404 = vmatprep.subr.mxu0 0.0
  %7405 = vmatpush1.msra.mxu0 0.0
  %7406 = vmatprep.subr.mxu0 0.0
  %7407 = vmatpush1.msra.mxu0 0.0
  %7408 = vmatprep.subr.mxu0 0.0
  %7409 = vmatpush1.msra.mxu0 0.0
  %7410 = vmatprep.subr.mxu0 0.0
  %7411 = vmatpush1.msra.mxu0 0.0
  %7412 = vmatprep.subr.mxu0 0.0
  %7413 = vmatpush1.msra.mxu0 0.0
  %7414 = vmatprep.subr.mxu0 0.0
  %7415 = vmatpush1.msra.mxu0 0.0
  %7416 = vmatprep.subr.mxu0 0.0
  %7417 = vmatpush1.msra.mxu0 0.0
  %7418 = vmatprep.subr.mxu0 0.0
  %7419 = vmatpush1.msra.mxu0 0.0
  %7420 = vmatprep.subr.mxu0 0.0
  %7421 = vmatpush1.msra.mxu0 0.0
  %7422 = vmatprep.subr.mxu0 0.0
  %7423 = vmatpush1.msra.mxu0 0.0
  %7424 = vmatprep.subr.mxu0 0.0
  %7425 = vmatpush1.msra.mxu0 0.0
  %7426 = vmatprep.subr.mxu0 0.0
  %7427 = vmatpush1.msra.mxu0 0.0
  %7428 = vmatprep.subr.mxu0 0.0
  %7429 = vmatpush1.msra.mxu0 0.0
  %7430 = vmatprep.subr.mxu0 0.0
  %7431 = vmatpush1.msra.mxu0 0.0
  %7432 = vmatprep.subr.mxu0 0.0
  %7433 = vmatpush1.msra.mxu0 0.0
  %7434 = vmatprep.subr.mxu0 0.0
  %7435 = vmatpush1.msra.mxu0 0.0
  %7436 = vmatprep.subr.mxu0 0.0
  %7437 = vmatpush1.msra.mxu0 0.0
  %7438 = vmatprep.subr.mxu0 0.0
  %7439 = vmatpush1.msra.mxu0 0.0
  %7440 = vmatprep.subr.mxu0 0.0
  %7441 = vmatpush1.msra.mxu0 0.0
  %7442 = vmatprep.mubr.f32.mxu0 0.0
  %7443 = vmatmul.mubr.f32.gmra.mrb[0].mxu0 %v7376
  %v7444 = vpop.f32.mrb[0].mxu0
  %v7445 = vadd.f32 0.0, %v7444
  %v7446 = vpop.f32.mrb[0].mxu0
  %7447 = vdwg.mxu0
  %v7449 = vsel %vm1904, %v6934, 0
  %7451 = vmatprep.subr.mxu0 0.0
  %7452 = vmatpush1.msra.mxu0 %v4174
  %7453 = vmatprep.subr.mxu0 0.0
  %7454 = vmatpush1.msra.mxu0 0.0
  %7455 = vmatprep.subr.mxu0 0.0
  %7456 = vmatpush1.msra.mxu0 0.0
  %7457 = vmatprep.subr.mxu0 0.0
  %7458 = vmatpush1.msra.mxu0 0.0
  %7459 = vmatprep.subr.mxu0 0.0
  %7460 = vmatpush1.msra.mxu0 0.0
  %7461 = vmatprep.subr.mxu0 0.0
  %7462 = vmatpush1.msra.mxu0 0.0
  %7463 = vmatprep.subr.mxu0 0.0
  %7464 = vmatpush1.msra.mxu0 0.0
  %7465 = vmatprep.subr.mxu0 0.0
  %7466 = vmatpush1.msra.mxu0 0.0
  %7467 = vmatprep.subr.mxu0 0.0
  %7468 = vmatpush1.msra.mxu0 0.0
  %7469 = vmatprep.subr.mxu0 0.0
  %7470 = vmatpush1.msra.mxu0 0.0
  %7471 = vmatprep.subr.mxu0 0.0
  %7472 = vmatpush1.msra.mxu0 0.0
  %7473 = vmatprep.subr.mxu0 0.0
  %7474 = vmatpush1.msra.mxu0 0.0
  %7475 = vmatprep.subr.mxu0 0.0
  %7476 = vmatpush1.msra.mxu0 0.0
  %7477 = vmatprep.subr.mxu0 0.0
  %7478 = vmatpush1.msra.mxu0 0.0
  %7479 = vmatprep.subr.mxu0 0.0
  %7480 = vmatpush1.msra.mxu0 0.0
  %7481 = vmatprep.subr.mxu0 0.0
  %7482 = vmatpush1.msra.mxu0 0.0
  %7483 = vmatprep.subr.mxu0 0.0
  %7484 = vmatpush1.msra.mxu0 0.0
  %7485 = vmatprep.subr.mxu0 0.0
  %7486 = vmatpush1.msra.mxu0 0.0
  %7487 = vmatprep.subr.mxu0 0.0
  %7488 = vmatpush1.msra.mxu0 0.0
  %7489 = vmatprep.subr.mxu0 0.0
  %7490 = vmatpush1.msra.mxu0 0.0
  %7491 = vmatprep.subr.mxu0 0.0
  %7492 = vmatpush1.msra.mxu0 0.0
  %7493 = vmatprep.subr.mxu0 0.0
  %7494 = vmatpush1.msra.mxu0 0.0
  %7495 = vmatprep.subr.mxu0 0.0
  %7496 = vmatpush1.msra.mxu0 0.0
  %7497 = vmatprep.subr.mxu0 0.0
  %7498 = vmatpush1.msra.mxu0 0.0
  %7499 = vmatprep.subr.mxu0 0.0
  %7500 = vmatpush1.msra.mxu0 0.0
  %7501 = vmatprep.subr.mxu0 0.0
  %7502 = vmatpush1.msra.mxu0 0.0
  %7503 = vmatprep.subr.mxu0 0.0
  %7504 = vmatpush1.msra.mxu0 0.0
  %7505 = vmatprep.subr.mxu0 0.0
  %7506 = vmatpush1.msra.mxu0 0.0
  %7507 = vmatprep.subr.mxu0 0.0
  %7508 = vmatpush1.msra.mxu0 0.0
  %7509 = vmatprep.subr.mxu0 0.0
  %7510 = vmatpush1.msra.mxu0 0.0
  %7511 = vmatprep.subr.mxu0 0.0
  %7512 = vmatpush1.msra.mxu0 0.0
  %7513 = vmatprep.subr.mxu0 0.0
  %7514 = vmatpush1.msra.mxu0 0.0
  %7515 = vmatprep.mubr.f32.mxu0 0.0
  %7516 = vmatmul.mubr.f32.gmra.mrb[0].mxu0 %v7449
  %v7517 = vpop.f32.mrb[0].mxu0
  %v7518 = vadd.f32 0.0, %v7517
  %v7519 = vpop.f32.mrb[0].mxu0
  %7520 = vdwg.mxu0
  %v7522 = vsel %vm1904, %v7007, 0
  %7524 = vmatprep.subr.mxu0 0.0
  %7525 = vmatpush1.msra.mxu0 %v4171
  %7526 = vmatprep.subr.mxu0 0.0
  %7527 = vmatpush1.msra.mxu0 0.0
  %7528 = vmatprep.subr.mxu0 0.0
  %7529 = vmatpush1.msra.mxu0 0.0
  %7530 = vmatprep.subr.mxu0 0.0
  %7531 = vmatpush1.msra.mxu0 0.0
  %7532 = vmatprep.subr.mxu0 0.0
  %7533 = vmatpush1.msra.mxu0 0.0
  %7534 = vmatprep.subr.mxu0 0.0
  %7535 = vmatpush1.msra.mxu0 0.0
  %7536 = vmatprep.subr.mxu0 0.0
  %7537 = vmatpush1.msra.mxu0 0.0
  %7538 = vmatprep.subr.mxu0 0.0
  %7539 = vmatpush1.msra.mxu0 0.0
  %7540 = vmatprep.subr.mxu0 0.0
  %7541 = vmatpush1.msra.mxu0 0.0
  %7542 = vmatprep.subr.mxu0 0.0
  %7543 = vmatpush1.msra.mxu0 0.0
  %7544 = vmatprep.subr.mxu0 0.0
  %7545 = vmatpush1.msra.mxu0 0.0
  %7546 = vmatprep.subr.mxu0 0.0
  %7547 = vmatpush1.msra.mxu0 0.0
  %7548 = vmatprep.subr.mxu0 0.0
  %7549 = vmatpush1.msra.mxu0 0.0
  %7550 = vmatprep.subr.mxu0 0.0
  %7551 = vmatpush1.msra.mxu0 0.0
  %7552 = vmatprep.subr.mxu0 0.0
  %7553 = vmatpush1.msra.mxu0 0.0
  %7554 = vmatprep.subr.mxu0 0.0
  %7555 = vmatpush1.msra.mxu0 0.0
  %7556 = vmatprep.subr.mxu0 0.0
  %7557 = vmatpush1.msra.mxu0 0.0
  %7558 = vmatprep.subr.mxu0 0.0
  %7559 = vmatpush1.msra.mxu0 0.0
  %7560 = vmatprep.subr.mxu0 0.0
  %7561 = vmatpush1.msra.mxu0 0.0
  %7562 = vmatprep.subr.mxu0 0.0
  %7563 = vmatpush1.msra.mxu0 0.0
  %7564 = vmatprep.subr.mxu0 0.0
  %7565 = vmatpush1.msra.mxu0 0.0
  %7566 = vmatprep.subr.mxu0 0.0
  %7567 = vmatpush1.msra.mxu0 0.0
  %7568 = vmatprep.subr.mxu0 0.0
  %7569 = vmatpush1.msra.mxu0 0.0
  %7570 = vmatprep.subr.mxu0 0.0
  %7571 = vmatpush1.msra.mxu0 0.0
  %7572 = vmatprep.subr.mxu0 0.0
  %7573 = vmatpush1.msra.mxu0 0.0
  %7574 = vmatprep.subr.mxu0 0.0
  %7575 = vmatpush1.msra.mxu0 0.0
  %7576 = vmatprep.subr.mxu0 0.0
  %7577 = vmatpush1.msra.mxu0 0.0
  %7578 = vmatprep.subr.mxu0 0.0
  %7579 = vmatpush1.msra.mxu0 0.0
  %7580 = vmatprep.subr.mxu0 0.0
  %7581 = vmatpush1.msra.mxu0 0.0
  %7582 = vmatprep.subr.mxu0 0.0
  %7583 = vmatpush1.msra.mxu0 0.0
  %7584 = vmatprep.subr.mxu0 0.0
  %7585 = vmatpush1.msra.mxu0 0.0
  %7586 = vmatprep.subr.mxu0 0.0
  %7587 = vmatpush1.msra.mxu0 0.0
  %7588 = vmatprep.mubr.f32.mxu0 0.0
  %7589 = vmatmul.mubr.f32.gmra.mrb[0].mxu0 %v7522
  %v7590 = vpop.f32.mrb[0].mxu0
  %v7591 = vadd.f32 0.0, %v7590
  %v7592 = vpop.f32.mrb[0].mxu0
  %7593 = vdwg.mxu0
  %v7595 = vsel %vm1904, %v7080, 0
  %7597 = vmatprep.subr.mxu0 0.0
  %7598 = vmatpush1.msra.mxu0 %v4172
  %7599 = vmatprep.subr.mxu0 0.0
  %7600 = vmatpush1.msra.mxu0 0.0
  %7601 = vmatprep.subr.mxu0 0.0
  %7602 = vmatpush1.msra.mxu0 0.0
  %7603 = vmatprep.subr.mxu0 0.0
  %7604 = vmatpush1.msra.mxu0 0.0
  %7605 = vmatprep.subr.mxu0 0.0
  %7606 = vmatpush1.msra.mxu0 0.0
  %7607 = vmatprep.subr.mxu0 0.0
  %7608 = vmatpush1.msra.mxu0 0.0
  %7609 = vmatprep.subr.mxu0 0.0
  %7610 = vmatpush1.msra.mxu0 0.0
  %7611 = vmatprep.subr.mxu0 0.0
  %7612 = vmatpush1.msra.mxu0 0.0
  %7613 = vmatprep.subr.mxu0 0.0
  %7614 = vmatpush1.msra.mxu0 0.0
  %7615 = vmatprep.subr.mxu0 0.0
  %7616 = vmatpush1.msra.mxu0 0.0
  %7617 = vmatprep.subr.mxu0 0.0
  %7618 = vmatpush1.msra.mxu0 0.0
  %7619 = vmatprep.subr.mxu0 0.0
  %7620 = vmatpush1.msra.mxu0 0.0
  %7621 = vmatprep.subr.mxu0 0.0
  %7622 = vmatpush1.msra.mxu0 0.0
  %7623 = vmatprep.subr.mxu0 0.0
  %7624 = vmatpush1.msra.mxu0 0.0
  %7625 = vmatprep.subr.mxu0 0.0
  %7626 = vmatpush1.msra.mxu0 0.0
  %7627 = vmatprep.subr.mxu0 0.0
  %7628 = vmatpush1.msra.mxu0 0.0
  %7629 = vmatprep.subr.mxu0 0.0
  %7630 = vmatpush1.msra.mxu0 0.0
  %7631 = vmatprep.subr.mxu0 0.0
  %7632 = vmatpush1.msra.mxu0 0.0
  %7633 = vmatprep.subr.mxu0 0.0
  %7634 = vmatpush1.msra.mxu0 0.0
  %7635 = vmatprep.subr.mxu0 0.0
  %7636 = vmatpush1.msra.mxu0 0.0
  %7637 = vmatprep.subr.mxu0 0.0
  %7638 = vmatpush1.msra.mxu0 0.0
  %7639 = vmatprep.subr.mxu0 0.0
  %7640 = vmatpush1.msra.mxu0 0.0
  %7641 = vmatprep.subr.mxu0 0.0
  %7642 = vmatpush1.msra.mxu0 0.0
  %7643 = vmatprep.subr.mxu0 0.0
  %7644 = vmatpush1.msra.mxu0 0.0
  %7645 = vmatprep.subr.mxu0 0.0
  %7646 = vmatpush1.msra.mxu0 0.0
  %7647 = vmatprep.subr.mxu0 0.0
  %7648 = vmatpush1.msra.mxu0 0.0
  %7649 = vmatprep.subr.mxu0 0.0
  %7650 = vmatpush1.msra.mxu0 0.0
  %7651 = vmatprep.subr.mxu0 0.0
  %7652 = vmatpush1.msra.mxu0 0.0
  %7653 = vmatprep.subr.mxu0 0.0
  %7654 = vmatpush1.msra.mxu0 0.0
  %7655 = vmatprep.subr.mxu0 0.0
  %7656 = vmatpush1.msra.mxu0 0.0
  %7657 = vmatprep.subr.mxu0 0.0
  %7658 = vmatpush1.msra.mxu0 0.0
  %7659 = vmatprep.subr.mxu0 0.0
  %7660 = vmatpush1.msra.mxu0 0.0
  %7661 = vmatprep.mubr.f32.mxu0 0.0
  %7662 = vmatmul.mubr.f32.gmra.mrb[0].mxu0 %v7595
  %v7663 = vpop.f32.mrb[0].mxu0
  %v7664 = vadd.f32 0.0, %v7663
  %v7665 = vpop.f32.mrb[0].mxu0
  %7666 = vdwg.mxu0
  %v7668 = vsel %vm1904, %v7153, 0
  %7670 = vmatprep.subr.mxu0 0.0
  %7671 = vmatpush1.msra.mxu0 %v4173
  %7672 = vmatprep.subr.mxu0 0.0
  %7673 = vmatpush1.msra.mxu0 0.0
  %7674 = vmatprep.subr.mxu0 0.0
  %7675 = vmatpush1.msra.mxu0 0.0
  %7676 = vmatprep.subr.mxu0 0.0
  %7677 = vmatpush1.msra.mxu0 0.0
  %7678 = vmatprep.subr.mxu0 0.0
  %7679 = vmatpush1.msra.mxu0 0.0
  %7680 = vmatprep.subr.mxu0 0.0
  %7681 = vmatpush1.msra.mxu0 0.0
  %7682 = vmatprep.subr.mxu0 0.0
  %7683 = vmatpush1.msra.mxu0 0.0
  %7684 = vmatprep.subr.mxu0 0.0
  %7685 = vmatpush1.msra.mxu0 0.0
  %7686 = vmatprep.subr.mxu0 0.0
  %7687 = vmatpush1.msra.mxu0 0.0
  %7688 = vmatprep.subr.mxu0 0.0
  %7689 = vmatpush1.msra.mxu0 0.0
  %7690 = vmatprep.subr.mxu0 0.0
  %7691 = vmatpush1.msra.mxu0 0.0
  %7692 = vmatprep.subr.mxu0 0.0
  %7693 = vmatpush1.msra.mxu0 0.0
  %7694 = vmatprep.subr.mxu0 0.0
  %7695 = vmatpush1.msra.mxu0 0.0
  %7696 = vmatprep.subr.mxu0 0.0
  %7697 = vmatpush1.msra.mxu0 0.0
  %7698 = vmatprep.subr.mxu0 0.0
  %7699 = vmatpush1.msra.mxu0 0.0
  %7700 = vmatprep.subr.mxu0 0.0
  %7701 = vmatpush1.msra.mxu0 0.0
  %7702 = vmatprep.subr.mxu0 0.0
  %7703 = vmatpush1.msra.mxu0 0.0
  %7704 = vmatprep.subr.mxu0 0.0
  %7705 = vmatpush1.msra.mxu0 0.0
  %7706 = vmatprep.subr.mxu0 0.0
  %7707 = vmatpush1.msra.mxu0 0.0
  %7708 = vmatprep.subr.mxu0 0.0
  %7709 = vmatpush1.msra.mxu0 0.0
  %7710 = vmatprep.subr.mxu0 0.0
  %7711 = vmatpush1.msra.mxu0 0.0
  %7712 = vmatprep.subr.mxu0 0.0
  %7713 = vmatpush1.msra.mxu0 0.0
  %7714 = vmatprep.subr.mxu0 0.0
  %7715 = vmatpush1.msra.mxu0 0.0
  %7716 = vmatprep.subr.mxu0 0.0
  %7717 = vmatpush1.msra.mxu0 0.0
  %7718 = vmatprep.subr.mxu0 0.0
  %7719 = vmatpush1.msra.mxu0 0.0
  %7720 = vmatprep.subr.mxu0 0.0
  %7721 = vmatpush1.msra.mxu0 0.0
  %7722 = vmatprep.subr.mxu0 0.0
  %7723 = vmatpush1.msra.mxu0 0.0
  %7724 = vmatprep.subr.mxu0 0.0
  %7725 = vmatpush1.msra.mxu0 0.0
  %7726 = vmatprep.subr.mxu0 0.0
  %7727 = vmatpush1.msra.mxu0 0.0
  %7728 = vmatprep.subr.mxu0 0.0
  %7729 = vmatpush1.msra.mxu0 0.0
  %7730 = vmatprep.subr.mxu0 0.0
  %7731 = vmatpush1.msra.mxu0 0.0
  %7732 = vmatprep.subr.mxu0 0.0
  %7733 = vmatpush1.msra.mxu0 0.0
  %7734 = vmatprep.mubr.f32.mxu0 0.0
  %7735 = vmatmul.mubr.f32.gmra.mrb[0].mxu0 %v7668
  %v7736 = vpop.f32.mrb[0].mxu0
  %v7737 = vadd.f32 0.0, %v7736
  %v7738 = vpop.f32.mrb[0].mxu0
  %7739 = vdwg.mxu0
  %v7741 = vsel %vm1904, %v7226, 0
  %7743 = vmatprep.subr.mxu0 0.0
  %7744 = vmatpush1.msra.mxu0 %v4174
  %7745 = vmatprep.subr.mxu0 0.0
  %7746 = vmatpush1.msra.mxu0 0.0
  %7747 = vmatprep.subr.mxu0 0.0
  %7748 = vmatpush1.msra.mxu0 0.0
  %7749 = vmatprep.subr.mxu0 0.0
  %7750 = vmatpush1.msra.mxu0 0.0
  %7751 = vmatprep.subr.mxu0 0.0
  %7752 = vmatpush1.msra.mxu0 0.0
  %7753 = vmatprep.subr.mxu0 0.0
  %7754 = vmatpush1.msra.mxu0 0.0
  %7755 = vmatprep.subr.mxu0 0.0
  %7756 = vmatpush1.msra.mxu0 0.0
  %7757 = vmatprep.subr.mxu0 0.0
  %7758 = vmatpush1.msra.mxu0 0.0
  %7759 = vmatprep.subr.mxu0 0.0
  %7760 = vmatpush1.msra.mxu0 0.0
  %7761 = vmatprep.subr.mxu0 0.0
  %7762 = vmatpush1.msra.mxu0 0.0
  %7763 = vmatprep.subr.mxu0 0.0
  %7764 = vmatpush1.msra.mxu0 0.0
  %7765 = vmatprep.subr.mxu0 0.0
  %7766 = vmatpush1.msra.mxu0 0.0
  %7767 = vmatprep.subr.mxu0 0.0
  %7768 = vmatpush1.msra.mxu0 0.0
  %7769 = vmatprep.subr.mxu0 0.0
  %7770 = vmatpush1.msra.mxu0 0.0
  %7771 = vmatprep.subr.mxu0 0.0
  %7772 = vmatpush1.msra.mxu0 0.0
  %7773 = vmatprep.subr.mxu0 0.0
  %7774 = vmatpush1.msra.mxu0 0.0
  %7775 = vmatprep.subr.mxu0 0.0
  %7776 = vmatpush1.msra.mxu0 0.0
  %7777 = vmatprep.subr.mxu0 0.0
  %7778 = vmatpush1.msra.mxu0 0.0
  %7779 = vmatprep.subr.mxu0 0.0
  %7780 = vmatpush1.msra.mxu0 0.0
  %7781 = vmatprep.subr.mxu0 0.0
  %7782 = vmatpush1.msra.mxu0 0.0
  %7783 = vmatprep.subr.mxu0 0.0
  %7784 = vmatpush1.msra.mxu0 0.0
  %7785 = vmatprep.subr.mxu0 0.0
  %7786 = vmatpush1.msra.mxu0 0.0
  %7787 = vmatprep.subr.mxu0 0.0
  %7788 = vmatpush1.msra.mxu0 0.0
  %7789 = vmatprep.subr.mxu0 0.0
  %7790 = vmatpush1.msra.mxu0 0.0
  %7791 = vmatprep.subr.mxu0 0.0
  %7792 = vmatpush1.msra.mxu0 0.0
  %7793 = vmatprep.subr.mxu0 0.0
  %7794 = vmatpush1.msra.mxu0 0.0
  %7795 = vmatprep.subr.mxu0 0.0
  %7796 = vmatpush1.msra.mxu0 0.0
  %7797 = vmatprep.subr.mxu0 0.0
  %7798 = vmatpush1.msra.mxu0 0.0
  %7799 = vmatprep.subr.mxu0 0.0
  %7800 = vmatpush1.msra.mxu0 0.0
  %7801 = vmatprep.subr.mxu0 0.0
  %7802 = vmatpush1.msra.mxu0 0.0
  %7803 = vmatprep.subr.mxu0 0.0
  %7804 = vmatpush1.msra.mxu0 0.0
  %7805 = vmatprep.subr.mxu0 0.0
  %7806 = vmatpush1.msra.mxu0 0.0
  %7807 = vmatprep.mubr.f32.mxu0 0.0
  %7808 = vmatmul.mubr.f32.gmra.mrb[0].mxu0 %v7741
  %v7809 = vpop.f32.mrb[0].mxu0
  %v7810 = vadd.f32 0.0, %v7809
  %v7811 = vpop.f32.mrb[0].mxu0
  %7812 = vdwg.mxu0
  %v7813 = vsel %vm169, %v7299, 0.0
  %v7814 = vsel %vm169, %v7372, 0.0
  %v7815 = vadd.f32 %v7813, %v7814
  %v7816 = vsel %vm169, %v7445, 0.0
  %v7817 = vadd.f32 %v7815, %v7816
  %v7818 = vsel %vm169, %v7518, 0.0
  %v7819 = vadd.f32 %v7817, %v7818
  %v7820 = vsel %vm169, %v7591, 0.0
  %v7821 = vsel %vm169, %v7664, 0.0
  %v7822 = vadd.f32 %v7820, %v7821
  %v7823 = vsel %vm169, %v7737, 0.0
  %v7824 = vadd.f32 %v7822, %v7823
  %v7825 = vsel %vm169, %v7810, 0.0
  %v7826 = vadd.f32 %v7824, %v7825
  %s7827 = scalar_lea.vmem %s9, 1
  %v7828 = vld [vmem:[%s7827] sm:$0x1]
  %v7830 = vlaneseq
  %v7831 = vshrl.u32 %v7830, 7
  %v7832 = vsub.s32 0, %v7831
  %v7833 = vrot.slane %v7828, %v7832
  %v7835 = vadd.f32 %v7819, %v7833
  %v7836 = vadd.f32 %v7826, %v7833
  %v7837 = vadd.f32 %v4102, %v7835
  %v7838 = vadd.f32 %v4103, %v7836
  %s7839 = scalar_lea.vmem %s10, 1
  %v7840 = vld [vmem:[%s7839] sm:$0x1]
  %s7841 = scalar_lea.vmem %s11, 1
  %v7842 = vld [vmem:[%s7841] sm:$0x1]
  %v7843 = vsel %vm169, %v7837, 0.0
  %7844 = vadd.xlane.f32.xlu0 %v7843
  %v7845 = vpop.xlane.xlu0 %7844
  %v7846 = vsel %vm169, %v7838, 0.0
  %7847 = vadd.xlane.f32.xlu0 %v7846
  %v7848 = vpop.xlane.xlu0 %7847
  %v7849 = vmul.f32 %v7845, %v3830
  %v7850 = vmul.f32 %v7848, %v3830
  %v7851 = vsub.f32 %v7837, %v7849
  %v7852 = vsub.f32 %v7838, %v7850
  %v7853 = vmul.f32 %v7851, %v7851
  %v7854 = vmul.f32 %v7852, %v7852
  %v7855 = vsel %vm169, %v7853, 0.0
  %7856 = vadd.xlane.f32.xlu0 %v7855
  %v7857 = vpop.xlane.xlu0 %7856
  %v7858 = vsel %vm169, %v7854, 0.0
  %7859 = vadd.xlane.f32.xlu0 %v7858
  %v7860 = vpop.xlane.xlu0 %7859
  %v7861 = vmul.f32 %v7857, %v3830
  %v7862 = vmul.f32 %v7860, %v3830
  %v7863 = vadd.f32 %v7861, 1e-05
  %v7864 = vadd.f32 %v7862, 1e-05
  %v7865 = vrsqrt.pop %v7863
  %v7866 = vrsqrt.pop %v7864
  %v7867 = vmul.f32 %v7851, %v7865
  %v7868 = vmul.f32 %v7852, %v7866
  %v7870 = vlaneseq
  %v7871 = vshrl.u32 %v7870, 7
  %v7872 = vsub.s32 0, %v7871
  %v7873 = vrot.slane %v7840, %v7872
  %v7875 = vmul.f32 %v7867, %v7873
  %v7876 = vmul.f32 %v7868, %v7873
  %v7878 = vlaneseq
  %v7879 = vshrl.u32 %v7878, 7
  %v7880 = vsub.s32 0, %v7879
  %v7881 = vrot.slane %v7842, %v7880
  %v7883 = vadd.f32 %v7875, %v7881
  %v7884 = vadd.f32 %v7876, %v7881
  %s7885 = scalar_lea.vmem %s12, 32
  %v7886 = vld [vmem:[%s7885] sm:$0xff]
  %v7887 = vld [vmem:[%s7885 + $0x8] sm:$0xff]
  %v7888 = vld [vmem:[%s7885 + $0x10] sm:$0xff]
  %v7889 = vld [vmem:[%s7885 + $0x18] sm:$0xff]
  %s7890 = scalar_lea.vmem %s13, 1
  %v7891 = vld [vmem:[%s7890] sm:$0x1]
  %v7893 = vlaneseq
  %v7894 = vshrl.u32 %v7893, 7
  %v7895 = vsub.s32 0, %v7894
  %v7896 = vrot.slane %v7891, %v7895
  %v7899 = vsel %vm169, %v7883, 0
  %v7902 = vsel %vm169, %v7884, 0
  %7904 = vmatprep.subr.mxu0 0.0
  %7905 = vmatpush1.msra.mxu0 %v7886
  %7906 = vmatprep.subr.mxu0 0.0
  %7907 = vmatpush1.msra.mxu0 %v7887
  %7908 = vmatprep.subr.mxu0 0.0
  %7909 = vmatpush1.msra.mxu0 %v7888
  %7910 = vmatprep.subr.mxu0 0.0
  %7911 = vmatpush1.msra.mxu0 %v7889
  %7912 = vmatprep.subr.mxu0 0.0
  %7913 = vmatpush1.msra.mxu0 0.0
  %7914 = vmatprep.subr.mxu0 0.0
  %7915 = vmatpush1.msra.mxu0 0.0
  %7916 = vmatprep.subr.mxu0 0.0
  %7917 = vmatpush1.msra.mxu0 0.0
  %7918 = vmatprep.subr.mxu0 0.0
  %7919 = vmatpush1.msra.mxu0 0.0
  %7920 = vmatprep.subr.mxu0 0.0
  %7921 = vmatpush1.msra.mxu0 0.0
  %7922 = vmatprep.subr.mxu0 0.0
  %7923 = vmatpush1.msra.mxu0 0.0
  %7924 = vmatprep.subr.mxu0 0.0
  %7925 = vmatpush1.msra.mxu0 0.0
  %7926 = vmatprep.subr.mxu0 0.0
  %7927 = vmatpush1.msra.mxu0 0.0
  %7928 = vmatprep.subr.mxu0 0.0
  %7929 = vmatpush1.msra.mxu0 0.0
  %7930 = vmatprep.subr.mxu0 0.0
  %7931 = vmatpush1.msra.mxu0 0.0
  %7932 = vmatprep.subr.mxu0 0.0
  %7933 = vmatpush1.msra.mxu0 0.0
  %7934 = vmatprep.subr.mxu0 0.0
  %7935 = vmatpush1.msra.mxu0 0.0
  %7936 = vmatprep.subr.mxu0 0.0
  %7937 = vmatpush1.msra.mxu0 0.0
  %7938 = vmatprep.subr.mxu0 0.0
  %7939 = vmatpush1.msra.mxu0 0.0
  %7940 = vmatprep.subr.mxu0 0.0
  %7941 = vmatpush1.msra.mxu0 0.0
  %7942 = vmatprep.subr.mxu0 0.0
  %7943 = vmatpush1.msra.mxu0 0.0
  %7944 = vmatprep.subr.mxu0 0.0
  %7945 = vmatpush1.msra.mxu0 0.0
  %7946 = vmatprep.subr.mxu0 0.0
  %7947 = vmatpush1.msra.mxu0 0.0
  %7948 = vmatprep.subr.mxu0 0.0
  %7949 = vmatpush1.msra.mxu0 0.0
  %7950 = vmatprep.subr.mxu0 0.0
  %7951 = vmatpush1.msra.mxu0 0.0
  %7952 = vmatprep.subr.mxu0 0.0
  %7953 = vmatpush1.msra.mxu0 0.0
  %7954 = vmatprep.subr.mxu0 0.0
  %7955 = vmatpush1.msra.mxu0 0.0
  %7956 = vmatprep.subr.mxu0 0.0
  %7957 = vmatpush1.msra.mxu0 0.0
  %7958 = vmatprep.subr.mxu0 0.0
  %7959 = vmatpush1.msra.mxu0 0.0
  %7960 = vmatprep.subr.mxu0 0.0
  %7961 = vmatpush1.msra.mxu0 0.0
  %7962 = vmatprep.subr.mxu0 0.0
  %7963 = vmatpush1.msra.mxu0 0.0
  %7964 = vmatprep.subr.mxu0 0.0
  %7965 = vmatpush1.msra.mxu0 0.0
  %7966 = vmatprep.subr.mxu0 0.0
  %7967 = vmatpush1.msra.mxu0 0.0
  %7968 = vmatprep.mubr.f32.mxu0 0.0
  %7969 = vmatmul.mubr.f32.gmra.mrb[0].mxu0 %v7899
  %v7970 = vpop.f32.mrb[0].mxu0
  %v7971 = vadd.f32 %v7896, %v7970
  %v7972 = vpop.f32.mrb[0].mxu0
  %7973 = vmatprep.mubr.f32.mxu0 0.0
  %7974 = vmatmul.mubr.f32.gmra.mrb[0].mxu0 %v7902
  %v7975 = vpop.f32.mrb[0].mxu0
  %v7976 = vadd.f32 %v7896, %v7975
  %v7977 = vpop.f32.mrb[0].mxu0
  %7978 = vdwg.mxu0
  %v7979 = vmax.f32 %v7971, 0.0
  %v7980 = vmax.f32 %v7976, 0.0
  %s7981 = scalar_lea.vmem %s14, 64
  %v7982 = vld [vmem:[%s7981] sm:$0xff]
  %v7983 = vld [vmem:[%s7981 + $0x8] sm:$0xff]
  %v7984 = vld [vmem:[%s7981 + $0x10] sm:$0xff]
  %v7985 = vld [vmem:[%s7981 + $0x18] sm:$0xff]
  %v7986 = vld [vmem:[%s7981 + $0x20] sm:$0xff]
  %v7987 = vld [vmem:[%s7981 + $0x28] sm:$0xff]
  %v7988 = vld [vmem:[%s7981 + $0x30] sm:$0xff]
  %v7989 = vld [vmem:[%s7981 + $0x38] sm:$0xff]
  %s7990 = scalar_lea.vmem %s15, 1
  %v7991 = vld [vmem:[%s7990] sm:$0x1]
  %v7993 = vlaneseq
  %v7994 = vshrl.u32 %v7993, 7
  %v7995 = vsub.s32 0, %v7994
  %v7996 = vrot.slane %v7991, %v7995
  %v7999 = vsel %vm3976, %v7979, 0
  %v8002 = vsel %vm3976, %v7980, 0
  %8004 = vmatprep.subr.mxu0 0.0
  %8005 = vmatpush1.msra.mxu0 %v7982
  %8006 = vmatprep.subr.mxu0 0.0
  %8007 = vmatpush1.msra.mxu0 %v7983
  %8008 = vmatprep.subr.mxu0 0.0
  %8009 = vmatpush1.msra.mxu0 %v7984
  %8010 = vmatprep.subr.mxu0 0.0
  %8011 = vmatpush1.msra.mxu0 %v7985
  %8012 = vmatprep.subr.mxu0 0.0
  %8013 = vmatpush1.msra.mxu0 %v7986
  %8014 = vmatprep.subr.mxu0 0.0
  %8015 = vmatpush1.msra.mxu0 %v7987
  %8016 = vmatprep.subr.mxu0 0.0
  %8017 = vmatpush1.msra.mxu0 %v7988
  %8018 = vmatprep.subr.mxu0 0.0
  %8019 = vmatpush1.msra.mxu0 %v7989
  %8020 = vmatprep.subr.mxu0 0.0
  %8021 = vmatpush1.msra.mxu0 0.0
  %8022 = vmatprep.subr.mxu0 0.0
  %8023 = vmatpush1.msra.mxu0 0.0
  %8024 = vmatprep.subr.mxu0 0.0
  %8025 = vmatpush1.msra.mxu0 0.0
  %8026 = vmatprep.subr.mxu0 0.0
  %8027 = vmatpush1.msra.mxu0 0.0
  %8028 = vmatprep.subr.mxu0 0.0
  %8029 = vmatpush1.msra.mxu0 0.0
  %8030 = vmatprep.subr.mxu0 0.0
  %8031 = vmatpush1.msra.mxu0 0.0
  %8032 = vmatprep.subr.mxu0 0.0
  %8033 = vmatpush1.msra.mxu0 0.0
  %8034 = vmatprep.subr.mxu0 0.0
  %8035 = vmatpush1.msra.mxu0 0.0
  %8036 = vmatprep.subr.mxu0 0.0
  %8037 = vmatpush1.msra.mxu0 0.0
  %8038 = vmatprep.subr.mxu0 0.0
  %8039 = vmatpush1.msra.mxu0 0.0
  %8040 = vmatprep.subr.mxu0 0.0
  %8041 = vmatpush1.msra.mxu0 0.0
  %8042 = vmatprep.subr.mxu0 0.0
  %8043 = vmatpush1.msra.mxu0 0.0
  %8044 = vmatprep.subr.mxu0 0.0
  %8045 = vmatpush1.msra.mxu0 0.0
  %8046 = vmatprep.subr.mxu0 0.0
  %8047 = vmatpush1.msra.mxu0 0.0
  %8048 = vmatprep.subr.mxu0 0.0
  %8049 = vmatpush1.msra.mxu0 0.0
  %8050 = vmatprep.subr.mxu0 0.0
  %8051 = vmatpush1.msra.mxu0 0.0
  %8052 = vmatprep.subr.mxu0 0.0
  %8053 = vmatpush1.msra.mxu0 0.0
  %8054 = vmatprep.subr.mxu0 0.0
  %8055 = vmatpush1.msra.mxu0 0.0
  %8056 = vmatprep.subr.mxu0 0.0
  %8057 = vmatpush1.msra.mxu0 0.0
  %8058 = vmatprep.subr.mxu0 0.0
  %8059 = vmatpush1.msra.mxu0 0.0
  %8060 = vmatprep.subr.mxu0 0.0
  %8061 = vmatpush1.msra.mxu0 0.0
  %8062 = vmatprep.subr.mxu0 0.0
  %8063 = vmatpush1.msra.mxu0 0.0
  %8064 = vmatprep.subr.mxu0 0.0
  %8065 = vmatpush1.msra.mxu0 0.0
  %8066 = vmatprep.subr.mxu0 0.0
  %8067 = vmatpush1.msra.mxu0 0.0
  %8068 = vmatprep.mubr.f32.mxu0 0.0
  %8069 = vmatmul.mubr.f32.gmra.mrb[0].mxu0 %v7999
  %v8070 = vpop.f32.mrb[0].mxu0
  %v8071 = vadd.f32 %v7996, %v8070
  %v8072 = vpop.f32.mrb[0].mxu0
  %8073 = vmatprep.mubr.f32.mxu0 0.0
  %8074 = vmatmul.mubr.f32.gmra.mrb[0].mxu0 %v8002
  %v8075 = vpop.f32.mrb[0].mxu0
  %v8076 = vadd.f32 %v7996, %v8075
  %v8077 = vpop.f32.mrb[0].mxu0
  %8078 = vdwg.mxu0
  %v8079 = vadd.f32 %v7883, %v8071
  %v8080 = vadd.f32 %v7884, %v8076
  %s8081 = scalar_lea.vmem %s16, 1
  %v8082 = vld [vmem:[%s8081] sm:$0x1]
  %s8083 = scalar_lea.vmem %s17, 1
  %v8084 = vld [vmem:[%s8083] sm:$0x1]
  %v8085 = vsel %vm169, %v8079, 0.0
  %8086 = vadd.xlane.f32.xlu0 %v8085
  %v8087 = vpop.xlane.xlu0 %8086
  %v8088 = vsel %vm169, %v8080, 0.0
  %8089 = vadd.xlane.f32.xlu0 %v8088
  %v8090 = vpop.xlane.xlu0 %8089
  %v8091 = vmul.f32 %v8087, %v3830
  %v8092 = vmul.f32 %v8090, %v3830
  %v8093 = vsub.f32 %v8079, %v8091
  %v8094 = vsub.f32 %v8080, %v8092
  %v8095 = vmul.f32 %v8093, %v8093
  %v8096 = vmul.f32 %v8094, %v8094
  %v8097 = vsel %vm169, %v8095, 0.0
  %8098 = vadd.xlane.f32.xlu0 %v8097
  %v8099 = vpop.xlane.xlu0 %8098
  %v8100 = vsel %vm169, %v8096, 0.0
  %8101 = vadd.xlane.f32.xlu0 %v8100
  %v8102 = vpop.xlane.xlu0 %8101
  %v8103 = vmul.f32 %v8099, %v3830
  %v8104 = vmul.f32 %v8102, %v3830
  %v8105 = vadd.f32 %v8103, 1e-05
  %v8106 = vadd.f32 %v8104, 1e-05
  %v8107 = vrsqrt.pop %v8105
  %v8108 = vrsqrt.pop %v8106
  %v8109 = vmul.f32 %v8093, %v8107
  %v8110 = vmul.f32 %v8094, %v8108
  %v8112 = vlaneseq
  %v8113 = vshrl.u32 %v8112, 7
  %v8114 = vsub.s32 0, %v8113
  %v8115 = vrot.slane %v8082, %v8114
  %v8117 = vmul.f32 %v8109, %v8115
  %v8118 = vmul.f32 %v8110, %v8115
  %v8120 = vlaneseq
  %v8121 = vshrl.u32 %v8120, 7
  %v8122 = vsub.s32 0, %v8121
  %v8123 = vrot.slane %v8084, %v8122
  %v8125 = vadd.f32 %v8117, %v8123
  %v8126 = vadd.f32 %v8118, %v8123
  %v8127 = vld [vmem:[%s18] sm:$0x1]
  %v8128 = vld [vmem:[%s19] sm:$0x1]
  %v8129 = vsel %vm169, %v8125, 0.0
  %8130 = vadd.xlane.f32.xlu0 %v8129
  %v8131 = vpop.xlane.xlu0 %8130
  %v8132 = vsel %vm169, %v8126, 0.0
  %8133 = vadd.xlane.f32.xlu0 %v8132
  %v8134 = vpop.xlane.xlu0 %8133
  %v8135 = vmul.f32 %v8131, %v3830
  %v8136 = vmul.f32 %v8134, %v3830
  %v8137 = vsub.f32 %v8125, %v8135
  %v8138 = vsub.f32 %v8126, %v8136
  %v8139 = vmul.f32 %v8137, %v8137
  %v8140 = vmul.f32 %v8138, %v8138
  %v8141 = vsel %vm169, %v8139, 0.0
  %8142 = vadd.xlane.f32.xlu0 %v8141
  %v8143 = vpop.xlane.xlu0 %8142
  %v8144 = vsel %vm169, %v8140, 0.0
  %8145 = vadd.xlane.f32.xlu0 %v8144
  %v8146 = vpop.xlane.xlu0 %8145
  %v8147 = vmul.f32 %v8143, %v3830
  %v8148 = vmul.f32 %v8146, %v3830
  %v8149 = vadd.f32 %v8147, 1e-05
  %v8150 = vadd.f32 %v8148, 1e-05
  %v8151 = vrsqrt.pop %v8149
  %v8152 = vrsqrt.pop %v8150
  %v8153 = vmul.f32 %v8137, %v8151
  %v8154 = vmul.f32 %v8138, %v8152
  %v8156 = vlaneseq
  %v8157 = vshrl.u32 %v8156, 7
  %v8158 = vsub.s32 0, %v8157
  %v8159 = vrot.slane %v8127, %v8158
  %v8161 = vmul.f32 %v8153, %v8159
  %v8162 = vmul.f32 %v8154, %v8159
  %v8164 = vlaneseq
  %v8165 = vshrl.u32 %v8164, 7
  %v8166 = vsub.s32 0, %v8165
  %v8167 = vrot.slane %v8128, %v8166
  %v8169 = vadd.f32 %v8161, %v8167
  %v8170 = vadd.f32 %v8162, %v8167
  %v8171 = vld [vmem:[%s20] sm:$0xff]
  %v8172 = vld [vmem:[%s20 + $0x8] sm:$0xff]
  %v8173 = vld [vmem:[%s20 + $0x10] sm:$0xff]
  %v8174 = vld [vmem:[%s20 + $0x18] sm:$0xff]
  %v8175 = vld [vmem:[%s21] sm:$0x1]
  %v8177 = vlaneseq
  %v8178 = vshrl.u32 %v8177, 7
  %v8179 = vsub.s32 0, %v8178
  %v8180 = vrot.slane %v8175, %v8179
  %v8183 = vsel %vm169, %v8169, 0
  %v8186 = vsel %vm169, %v8170, 0
  %8188 = vmatprep.subr.mxu0 0.0
  %8189 = vmatpush1.msra.mxu0 %v8171
  %8190 = vmatprep.subr.mxu0 0.0
  %8191 = vmatpush1.msra.mxu0 %v8172
  %8192 = vmatprep.subr.mxu0 0.0
  %8193 = vmatpush1.msra.mxu0 %v8173
  %8194 = vmatprep.subr.mxu0 0.0
  %8195 = vmatpush1.msra.mxu0 %v8174
  %8196 = vmatprep.subr.mxu0 0.0
  %8197 = vmatpush1.msra.mxu0 0.0
  %8198 = vmatprep.subr.mxu0 0.0
  %8199 = vmatpush1.msra.mxu0 0.0
  %8200 = vmatprep.subr.mxu0 0.0
  %8201 = vmatpush1.msra.mxu0 0.0
  %8202 = vmatprep.subr.mxu0 0.0
  %8203 = vmatpush1.msra.mxu0 0.0
  %8204 = vmatprep.subr.mxu0 0.0
  %8205 = vmatpush1.msra.mxu0 0.0
  %8206 = vmatprep.subr.mxu0 0.0
  %8207 = vmatpush1.msra.mxu0 0.0
  %8208 = vmatprep.subr.mxu0 0.0
  %8209 = vmatpush1.msra.mxu0 0.0
  %8210 = vmatprep.subr.mxu0 0.0
  %8211 = vmatpush1.msra.mxu0 0.0
  %8212 = vmatprep.subr.mxu0 0.0
  %8213 = vmatpush1.msra.mxu0 0.0
  %8214 = vmatprep.subr.mxu0 0.0
  %8215 = vmatpush1.msra.mxu0 0.0
  %8216 = vmatprep.subr.mxu0 0.0
  %8217 = vmatpush1.msra.mxu0 0.0
  %8218 = vmatprep.subr.mxu0 0.0
  %8219 = vmatpush1.msra.mxu0 0.0
  %8220 = vmatprep.subr.mxu0 0.0
  %8221 = vmatpush1.msra.mxu0 0.0
  %8222 = vmatprep.subr.mxu0 0.0
  %8223 = vmatpush1.msra.mxu0 0.0
  %8224 = vmatprep.subr.mxu0 0.0
  %8225 = vmatpush1.msra.mxu0 0.0
  %8226 = vmatprep.subr.mxu0 0.0
  %8227 = vmatpush1.msra.mxu0 0.0
  %8228 = vmatprep.subr.mxu0 0.0
  %8229 = vmatpush1.msra.mxu0 0.0
  %8230 = vmatprep.subr.mxu0 0.0
  %8231 = vmatpush1.msra.mxu0 0.0
  %8232 = vmatprep.subr.mxu0 0.0
  %8233 = vmatpush1.msra.mxu0 0.0
  %8234 = vmatprep.subr.mxu0 0.0
  %8235 = vmatpush1.msra.mxu0 0.0
  %8236 = vmatprep.subr.mxu0 0.0
  %8237 = vmatpush1.msra.mxu0 0.0
  %8238 = vmatprep.subr.mxu0 0.0
  %8239 = vmatpush1.msra.mxu0 0.0
  %8240 = vmatprep.subr.mxu0 0.0
  %8241 = vmatpush1.msra.mxu0 0.0
  %8242 = vmatprep.subr.mxu0 0.0
  %8243 = vmatpush1.msra.mxu0 0.0
  %8244 = vmatprep.subr.mxu0 0.0
  %8245 = vmatpush1.msra.mxu0 0.0
  %8246 = vmatprep.subr.mxu0 0.0
  %8247 = vmatpush1.msra.mxu0 0.0
  %8248 = vmatprep.subr.mxu0 0.0
  %8249 = vmatpush1.msra.mxu0 0.0
  %8250 = vmatprep.subr.mxu0 0.0
  %8251 = vmatpush1.msra.mxu0 0.0
  %8252 = vmatprep.mubr.f32.mxu0 0.0
  %8253 = vmatmul.mubr.f32.gmra.mrb[0].mxu0 %v8183
  %v8254 = vpop.f32.mrb[0].mxu0
  %v8255 = vadd.f32 %v8180, %v8254
  %v8256 = vpop.f32.mrb[0].mxu0
  %8257 = vmatprep.mubr.f32.mxu0 0.0
  %8258 = vmatmul.mubr.f32.gmra.mrb[0].mxu0 %v8186
  %v8259 = vpop.f32.mrb[0].mxu0
  %v8260 = vadd.f32 %v8180, %v8259
  %v8261 = vpop.f32.mrb[0].mxu0
  %8262 = vdwg.mxu0
  %v8263 = vmul.f32 %v8255, 0.5
  %v8264 = vmul.f32 %v8260, 0.5
  %v8265 = vmul.f32 %v8255, 0.70710677
  %v8266 = vmul.f32 %v8260, 0.70710677
  %v8267 = verf.f32.pop %v8265
  %v8268 = verf.f32.pop %v8266
  %v8269 = vadd.f32 %v8267, 1.0
  %v8270 = vadd.f32 %v8268, 1.0
  %v8271 = vmul.f32 %v8263, %v8269
  %v8272 = vmul.f32 %v8264, %v8270
  %v8273 = vld [vmem:[%s22] sm:$0xff]
  %v8274 = vld [vmem:[%s22 + $0x8] sm:$0xff]
  %v8275 = vld [vmem:[%s22 + $0x10] sm:$0xff]
  %v8276 = vld [vmem:[%s22 + $0x18] sm:$0xff]
  %v8277 = vld [vmem:[%s22 + $0x20] sm:$0xff]
  %v8278 = vld [vmem:[%s22 + $0x28] sm:$0xff]
  %v8279 = vld [vmem:[%s22 + $0x30] sm:$0xff]
  %v8280 = vld [vmem:[%s22 + $0x38] sm:$0xff]
  %v8281 = vld [vmem:[%s23] sm:$0x1]
  %v8283 = vlaneseq
  %v8284 = vshrl.u32 %v8283, 7
  %v8285 = vsub.s32 0, %v8284
  %v8286 = vrot.slane %v8281, %v8285
  %v8289 = vsel %vm3976, %v8271, 0
  %v8292 = vsel %vm3976, %v8272, 0
  %8294 = vmatprep.subr.mxu0 0.0
  %8295 = vmatpush1.msra.mxu0 %v8273
  %8296 = vmatprep.subr.mxu0 0.0
  %8297 = vmatpush1.msra.mxu0 %v8274
  %8298 = vmatprep.subr.mxu0 0.0
  %8299 = vmatpush1.msra.mxu0 %v8275
  %8300 = vmatprep.subr.mxu0 0.0
  %8301 = vmatpush1.msra.mxu0 %v8276
  %8302 = vmatprep.subr.mxu0 0.0
  %8303 = vmatpush1.msra.mxu0 %v8277
  %8304 = vmatprep.subr.mxu0 0.0
  %8305 = vmatpush1.msra.mxu0 %v8278
  %8306 = vmatprep.subr.mxu0 0.0
  %8307 = vmatpush1.msra.mxu0 %v8279
  %8308 = vmatprep.subr.mxu0 0.0
  %8309 = vmatpush1.msra.mxu0 %v8280
  %8310 = vmatprep.subr.mxu0 0.0
  %8311 = vmatpush1.msra.mxu0 0.0
  %8312 = vmatprep.subr.mxu0 0.0
  %8313 = vmatpush1.msra.mxu0 0.0
  %8314 = vmatprep.subr.mxu0 0.0
  %8315 = vmatpush1.msra.mxu0 0.0
  %8316 = vmatprep.subr.mxu0 0.0
  %8317 = vmatpush1.msra.mxu0 0.0
  %8318 = vmatprep.subr.mxu0 0.0
  %8319 = vmatpush1.msra.mxu0 0.0
  %8320 = vmatprep.subr.mxu0 0.0
  %8321 = vmatpush1.msra.mxu0 0.0
  %8322 = vmatprep.subr.mxu0 0.0
  %8323 = vmatpush1.msra.mxu0 0.0
  %8324 = vmatprep.subr.mxu0 0.0
  %8325 = vmatpush1.msra.mxu0 0.0
  %8326 = vmatprep.subr.mxu0 0.0
  %8327 = vmatpush1.msra.mxu0 0.0
  %8328 = vmatprep.subr.mxu0 0.0
  %8329 = vmatpush1.msra.mxu0 0.0
  %8330 = vmatprep.subr.mxu0 0.0
  %8331 = vmatpush1.msra.mxu0 0.0
  %8332 = vmatprep.subr.mxu0 0.0
  %8333 = vmatpush1.msra.mxu0 0.0
  %8334 = vmatprep.subr.mxu0 0.0
  %8335 = vmatpush1.msra.mxu0 0.0
  %8336 = vmatprep.subr.mxu0 0.0
  %8337 = vmatpush1.msra.mxu0 0.0
  %8338 = vmatprep.subr.mxu0 0.0
  %8339 = vmatpush1.msra.mxu0 0.0
  %8340 = vmatprep.subr.mxu0 0.0
  %8341 = vmatpush1.msra.mxu0 0.0
  %8342 = vmatprep.subr.mxu0 0.0
  %8343 = vmatpush1.msra.mxu0 0.0
  %8344 = vmatprep.subr.mxu0 0.0
  %8345 = vmatpush1.msra.mxu0 0.0
  %8346 = vmatprep.subr.mxu0 0.0
  %8347 = vmatpush1.msra.mxu0 0.0
  %8348 = vmatprep.subr.mxu0 0.0
  %8349 = vmatpush1.msra.mxu0 0.0
  %8350 = vmatprep.subr.mxu0 0.0
  %8351 = vmatpush1.msra.mxu0 0.0
  %8352 = vmatprep.subr.mxu0 0.0
  %8353 = vmatpush1.msra.mxu0 0.0
  %8354 = vmatprep.subr.mxu0 0.0
  %8355 = vmatpush1.msra.mxu0 0.0
  %8356 = vmatprep.subr.mxu0 0.0
  %8357 = vmatpush1.msra.mxu0 0.0
  %8358 = vmatprep.mubr.f32.mxu0 0.0
  %8359 = vmatmul.mubr.f32.gmra.mrb[0].mxu0 %v8289
  %v8360 = vpop.f32.mrb[0].mxu0
  %v8361 = vadd.f32 %v8286, %v8360
  %v8362 = vpop.f32.mrb[0].mxu0
  %8363 = vmatprep.mubr.f32.mxu0 0.0
  %8364 = vmatmul.mubr.f32.gmra.mrb[0].mxu0 %v8292
  %v8365 = vpop.f32.mrb[0].mxu0
  %v8366 = vadd.f32 %v8286, %v8365
  %v8367 = vpop.f32.mrb[0].mxu0
  %8368 = vdwg.mxu0
  %8369 = vst.msk [vmem:[%s24] sm:$0xff] %vm1904, %v8361
  %8370 = vst.msk [vmem:[%s24 + $0x8] sm:$0xff] %vm1904, %v8366
  // Predicated region
  $region98: #{tpu_custom_call.1} parent=0 // pred_check
    _
  $region99: #{tpu_custom_call.1} parent=0 // pred_check_branch
    %8372 = sbr.rel (0) target = $region101
  $region100: #{tpu_custom_call.1} parent=0 // pred_region
    _
  $region101: #{tpu_custom_call.1} parent=0 // pred_fallthru
    _
  // Predicated region
  $region102: #{tpu_custom_call.1} parent=0 // pred_check
    _
  $region103: #{tpu_custom_call.1} parent=0 // pred_check_branch
    %8374 = sbr.rel (0) target = $region105
  $region104: #{tpu_custom_call.1} parent=0 // pred_region
    _
  $region105: #{tpu_custom_call.1} parent=0 // pred_fallthru
    _

</llo_original>
